<compile_context>
chip_gen: v7x
topology: tpu7x:2x2x1
jax: 0.10.0
libtpu: 0.0.40
codegen_flags: <defaults>
</compile_context>

<pallas_src>
import functools

import jax
import jax.numpy as jnp
from jax import lax
from jax.experimental import pallas as pl
from jax.experimental.pallas import tpu as pltpu


def _round_up(n, m):
    return ((n + m - 1) // m) * m


def _softmax(x, axis):
    m = jnp.max(x, axis=axis, keepdims=True)
    e = jnp.exp(x - m)
    s = jnp.sum(e, axis=axis, keepdims=True)
    return e * pl.reciprocal(s, approx=True)


# ----------------------------------------------------------------------------
# Fused kernel: co-attention + BiLSTM over one batch block.
# ----------------------------------------------------------------------------
def coattn_bilstm_kernel(q_ref, c_ref,
                         wihT_f_ref, whhT_f_ref, bf_ref,
                         wihT_b_ref, whhT_b_ref, bb_ref,
                         u_ref, gxf_ref, gxb_ref,
                         *, Lq1, Lc1, H):
    BB, Lcp, _ = c_ref.shape
    Lqp = q_ref.shape[1]

    qws = q_ref[...]                      # (BB, Lqp, D), padded rows are zero
    cws = c_ref[...]                      # (BB, Lcp, D), padded rows are zero

    # ---------------- co-attention (batched over the block) -----------------
    # L[b, c, q] = <context_with_sentinel[b, c], question_with_sentinel[b, q]>
    L = lax.dot_general(cws, qws, (((2,), (2,)), ((0,), (0,))),
                        preferred_element_type=jnp.float32)       # (BB, Lcp, Lqp)

    neg = jnp.float32(-1e30)
    L_q = L
    if Lqp > Lq1:   # mask padded question columns before softmax over q
        qid = lax.broadcasted_iota(jnp.int32, (BB, Lcp, Lqp), 2)
        L_q = jnp.where(qid < Lq1, L, neg)
    L_c = L
    if Lcp > Lc1:   # mask padded context rows before softmax over c
        cid = lax.broadcasted_iota(jnp.int32, (BB, Lcp, Lqp), 1)
        L_c = jnp.where(cid < Lc1, L, neg)

    aq = _softmax(L_q, axis=2)    # attention_question_dist            (BB, Lcp, Lqp)
    acT = _softmax(L_c, axis=1)   # attention_context_dist, transposed (BB, Lcp, Lqp)

    # attention_question[b, q, :] = sum_c aq[b, c, q] * cws[b, c, :]
    attn_q = lax.dot_general(aq, cws, (((1,), (1,)), ((0,), (0,))),
                             preferred_element_type=jnp.float32)   # (BB, Lqp, D)

    # attention_context = acT @ [qws | attn_q]  -- single fused N=2D matmul.
    cat = jnp.concatenate([qws, attn_q], axis=-1)                  # (BB, Lqp, 2D)
    attn_c = lax.dot_general(acT, cat, (((2,), (1,)), ((0,), (0,))),
                             preferred_element_type=jnp.float32)   # (BB, Lcp, 2D)

    # BiLSTM input stays in VMEM (no HBM round trip): (BB, Lcp, 3D)
    lstm_in = jnp.concatenate([cws, attn_c], axis=-1)

    # -------- hoisted LSTM input projections (all timesteps, both dirs) ------
    wih_f = wihT_f_ref[...]
    wih_b = wihT_b_ref[...]
    bias_f = bf_ref[...]
    bias_b = bb_ref[...]
    for b in range(BB):
        x_b = lstm_in[b]                                            # (Lcp, 3D)
        gxf_ref[b] = jnp.dot(x_b, wih_f, preferred_element_type=jnp.float32) + bias_f
        gxb_ref[b] = jnp.dot(x_b, wih_b, preferred_element_type=jnp.float32) + bias_b

    whh_f = whhT_f_ref[...]
    whh_b = whhT_b_ref[...]

    def cell(gates, c):
        i = jax.nn.sigmoid(gates[:, 0:H])
        f = jax.nn.sigmoid(gates[:, H:2 * H])
        g = jnp.tanh(gates[:, 2 * H:3 * H])
        o = jax.nn.sigmoid(gates[:, 3 * H:4 * H])
        c = f * c + i * g
        return o * jnp.tanh(c), c

    hf = jnp.zeros((BB, H), jnp.float32)
    cf = jnp.zeros((BB, H), jnp.float32)
    hb = jnp.zeros((BB, H), jnp.float32)
    cb = jnp.zeros((BB, H), jnp.float32)

    # Forward and backward chains interleaved in ONE loop (two independent
    # carries).  Fully unrolled because Lc1 is small & static here; the loop
    # bound is the real (unpadded) length so zero-padded timesteps never enter
    # the recurrence.  For long sequences switch to a lax.fori_loop + pl.ds.
    for s in range(Lc1):
        tf = s
        tb = Lc1 - 1 - s
        gf = (gxf_ref[:, tf:tf + 1, :][:, 0, :]
              + jnp.dot(hf, whh_f, preferred_element_type=jnp.float32))
        gb = (gxb_ref[:, tb:tb + 1, :][:, 0, :]
              + jnp.dot(hb, whh_b, preferred_element_type=jnp.float32))
        hf, cf = cell(gf, cf)
        hb, cb = cell(gb, cb)
        u_ref[:, tf:tf + 1, 0:H] = hf[:, None, :]
        u_ref[:, tb:tb + 1, H:2 * H] = hb[:, None, :]


# ----------------------------------------------------------------------------
# Full forward pass: one fused pallas_call.
# ----------------------------------------------------------------------------
@functools.partial(jax.jit, static_argnames=("block_b",))
def co_attention_forward(question, context, params, block_b=None):
    B, Lq, D = question.shape
    Lc = context.shape[1]
    H = D                       # LSTM hidden size = 2 * hidden_dim
    G = 4 * H
    In = 3 * D
    Lq1, Lc1 = Lq + 1, Lc + 1
    Lqp, Lcp = _round_up(Lq1, 8), _round_up(Lc1, 8)

    # sentinel rows + pad up to a sublane multiple (zero padding, masked in-kernel)
    qws = jnp.concatenate(
        [question, jnp.broadcast_to(params["q0"][None, None, :], (B, 1, D))], axis=1)
    cws = jnp.concatenate(
        [context, jnp.broadcast_to(params["c0"][None, None, :], (B, 1, D))], axis=1)
    qws = jnp.pad(qws, ((0, 0), (0, Lqp - Lq1), (0, 0)))
    cws = jnp.pad(cws, ((0, 0), (0, Lcp - Lc1), (0, 0)))

    if block_b is None:
        # keep at least two parallel grid steps (v7x has 2 TensorCores) while
        # batching the attention matmuls and LSTM recurrence within each step.
        block_b = max(1, B // 2)
    while B % block_b:
        block_b -= 1

    bf = (params["b_ih_f"] + params["b_hh_f"]).reshape(1, G).astype(jnp.float32)
    bb = (params["b_ih_b"] + params["b_hh_b"]).reshape(1, G).astype(jnp.float32)

    kernel = functools.partial(coattn_bilstm_kernel, Lq1=Lq1, Lc1=Lc1, H=H)

    U = pl.pallas_call(
        kernel,
        out_shape=jax.ShapeDtypeStruct((B, Lcp, 2 * H), jnp.float32),
        grid=(B // block_b,),
        in_specs=[
            pl.BlockSpec((block_b, Lqp, D), lambda i: (i, 0, 0)),
            pl.BlockSpec((block_b, Lcp, D), lambda i: (i, 0, 0)),
            pl.BlockSpec((In, G), lambda i: (0, 0)),
            pl.BlockSpec((H, G), lambda i: (0, 0)),
            pl.BlockSpec((1, G), lambda i: (0, 0)),
            pl.BlockSpec((In, G), lambda i: (0, 0)),
            pl.BlockSpec((H, G), lambda i: (0, 0)),
            pl.BlockSpec((1, G), lambda i: (0, 0)),
        ],
        out_specs=pl.BlockSpec((block_b, Lcp, 2 * H), lambda i: (i, 0, 0)),
        scratch_shapes=[pltpu.VMEM((block_b, Lcp, G), jnp.float32),
                        pltpu.VMEM((block_b, Lcp, G), jnp.float32)],
        compiler_params=pltpu.CompilerParams(
            dimension_semantics=("parallel",)),
    )(qws, cws,
      params["W_ih_f"].T, params["W_hh_f"].T, bf,
      params["W_ih_b"].T, params["W_hh_b"].T, bb)

    # drop sentinel row (U[:, :-1] in the original) and the sublane padding
    return U[:, :Lc, :]


# ----------------------------------------------------------------------------
# Pure-JAX reference (for correctness check).
# ----------------------------------------------------------------------------
def reference_forward(question, context, params):
    hp = lax.Precision.HIGHEST
    b, Lq, D = question.shape
    qws = jnp.concatenate(
        [question, jnp.broadcast_to(params["q0"][None, None, :], (b, 1, D))], axis=1)
    cws = jnp.concatenate(
        [context, jnp.broadcast_to(params["c0"][None, None, :], (b, 1, D))], axis=1)
    L = jnp.einsum("bcd,bqd->bcq", cws, qws, precision=hp)
    aq = jax.nn.softmax(L, axis=2)
    acd = jax.nn.softmax(jnp.swapaxes(L, 1, 2), axis=2)
    attn_q = jnp.einsum("bcq,bcd->bqd", aq, cws, precision=hp)
    attn_c = jnp.einsum("bqc,bqd->bcd", acd,
                        jnp.concatenate([qws, attn_q], -1), precision=hp)
    lstm_in = jnp.concatenate([cws, attn_c], -1)

    def run_dir(wih, whh, bih, bhh, reverse):
        H2 = whh.shape[1]

        def step(carry, x_t):
            h, c = carry
            gates = (x_t @ wih.T + bih + h @ whh.T + bhh)
            i, f, g, o = jnp.split(gates, 4, axis=-1)
            c = jax.nn.sigmoid(f) * c + jax.nn.sigmoid(i) * jnp.tanh(g)
            h = jax.nn.sigmoid(o) * jnp.tanh(c)
            return (h, c), h

        xs = jnp.swapaxes(lstm_in, 0, 1)
        if reverse:
            xs = xs[::-1]
        h0 = jnp.zeros((b, H2), jnp.float32)
        _, hs = lax.scan(step, (h0, h0), xs)
        if reverse:
            hs = hs[::-1]
        return jnp.swapaxes(hs, 0, 1)

    uf = run_dir(params["W_ih_f"], params["W_hh_f"],
                 params["b_ih_f"], params["b_hh_f"], False)
    ub = run_dir(params["W_ih_b"], params["W_hh_b"],
                 params["b_ih_b"], params["b_hh_b"], True)
    U = jnp.concatenate([uf, ub], axis=-1)
    return U[:, :-1, :]


# ----------------------------------------------------------------------------
def make_params(hidden_dim, key):
    D = 2 * hidden_dim
    ks = jax.random.split(key, 12)
    k = 1.0 / jnp.sqrt(jnp.float32(D))
    u = lambda kk, shp, s: jax.random.uniform(kk, shp, jnp.float32, -s, s)
    return {
        # Wqj is part of the module but its output is dead; kept for fidelity,
        # never passed to the kernel.
        "Wqj_w": u(ks[0], (D, D), k),
        "Wqj_b": u(ks[1], (D,), k),
        "c0": jax.random.uniform(ks[2], (D,), jnp.float32),
        "q0": jax.random.uniform(ks[3], (D,), jnp.float32),
        # BiLSTM(6*hidden -> 2*hidden, bidirectional): gates = 4*D
        "W_ih_f": u(ks[4], (4 * D, 3 * D), k),
        "W_hh_f": u(ks[5], (4 * D, D), k),
        "b_ih_f": u(ks[6], (4 * D,), k),
        "b_hh_f": u(ks[7], (4 * D,), k),
        "W_ih_b": u(ks[8], (4 * D, 3 * D), k),
        "W_hh_b": u(ks[9], (4 * D, D), k),
        "b_ih_b": u(ks[10], (4 * D,), k),
        "b_hh_b": u(ks[11], (4 * D,), k),
    }


if __name__ == "__main__":
    hidden_dim = 64
    D = 2 * hidden_dim          # 128 (lane aligned)
    B, Lq, Lc = 2, 8, 10

    key = jax.random.PRNGKey(0)
    kq, kc, kp = jax.random.split(key, 3)
    question = 0.1 * jax.random.normal(kq, (B, Lq, D), jnp.float32)
    context = 0.1 * jax.random.normal(kc, (B, Lc, D), jnp.float32)
    params = make_params(hidden_dim, kp)

    ref = reference_forward(question, context, params)

    # default: block_b=1 -> grid=(2,), keeps a parallel axis for v7x's 2 TCs
    out = jax.block_until_ready(co_attention_forward(question, context, params))
    assert out.shape == (B, Lc, 2 * D), out.shape
    assert jnp.allclose(out, ref, rtol=2e-2, atol=2e-2), float(
        jnp.max(jnp.abs(out - ref)))

    # fully batched path: whole batch (and its LSTM recurrence) in one grid step
    out_full = jax.block_until_ready(
        co_attention_forward(question, context, params, block_b=B))
    assert jnp.allclose(out_full, ref, rtol=2e-2, atol=2e-2), float(
        jnp.max(jnp.abs(out_full - ref)))

    print("KERNEL_OK")
</pallas_src>

<mosaic_0001>
module attributes {stable_mosaic.version = 11 : i64} {
  func.func @coattn_bilstm_kernel(%arg0: i32, %arg1: memref<1x16x128xf32, #tpu.memory_space<vmem>>, %arg2: memref<1x16x128xf32, #tpu.memory_space<vmem>>, %arg3: memref<384x512xf32, #tpu.memory_space<vmem>>, %arg4: memref<128x512xf32, #tpu.memory_space<vmem>>, %arg5: memref<1x512xf32, #tpu.memory_space<vmem>>, %arg6: memref<384x512xf32, #tpu.memory_space<vmem>>, %arg7: memref<128x512xf32, #tpu.memory_space<vmem>>, %arg8: memref<1x512xf32, #tpu.memory_space<vmem>>, %arg9: memref<1x16x256xf32, #tpu.memory_space<vmem>>, %arg10: memref<1x16x512xf32, #tpu.memory_space<vmem>>, %arg11: memref<1x16x512xf32, #tpu.memory_space<vmem>>) attributes {dimension_semantics = [#tpu.dimension_semantics<parallel>], iteration_bounds = array<i64: 2>, scalar_prefetch = 0 : i64, scratch_operands = 2 : i64, tpu.core_type = #tpu.core_type<tc>, window_params = [{transform_indices = @transform_0, window_bounds = array<i64: 1, 16, 128>}, {transform_indices = @transform_1, window_bounds = array<i64: 1, 16, 128>}, {pipeline_mode = #tpu.pipeline_mode<synchronous>, transform_indices = @transform_2, window_bounds = array<i64: 384, 512>}, {pipeline_mode = #tpu.pipeline_mode<synchronous>, transform_indices = @transform_3, window_bounds = array<i64: 128, 512>}, {pipeline_mode = #tpu.pipeline_mode<synchronous>, transform_indices = @transform_4, window_bounds = array<i64: 1, 512>}, {pipeline_mode = #tpu.pipeline_mode<synchronous>, transform_indices = @transform_5, window_bounds = array<i64: 384, 512>}, {pipeline_mode = #tpu.pipeline_mode<synchronous>, transform_indices = @transform_6, window_bounds = array<i64: 128, 512>}, {pipeline_mode = #tpu.pipeline_mode<synchronous>, transform_indices = @transform_7, window_bounds = array<i64: 1, 512>}, {transform_indices = @transform_8, window_bounds = array<i64: 1, 16, 256>}]} {
    %c0 = arith.constant 0 : index
    %c0_0 = arith.constant 0 : index
    %c0_1 = arith.constant 0 : index
    %0 = vector.load %arg1[%c0, %c0_0, %c0_1] : memref<1x16x128xf32, #tpu.memory_space<vmem>>, vector<1x16x128xf32>
    %c0_2 = arith.constant 0 : index
    %c0_3 = arith.constant 0 : index
    %c0_4 = arith.constant 0 : index
    %1 = vector.load %arg2[%c0_2, %c0_3, %c0_4] : memref<1x16x128xf32, #tpu.memory_space<vmem>>, vector<1x16x128xf32>
    %cst = arith.constant dense<0.000000e+00> : vector<1x16x16xf32>
    %2 = tpu.matmul %1, %0, %cst {dimension_numbers = #tpu.dot_dimension_numbers<[2], [2], [1], [1], [0, 0, 0, 1, 1, 1], [0], [0]>} : vector<1x16x128xf32>, vector<1x16x128xf32>, vector<1x16x16xf32> -> vector<1x16x16xf32>
    %3 = tpu.iota {dimensions = array<i32: 2>} : vector<1x16x16xi32>
    %c9_i32 = arith.constant 9 : i32
    %4 = vector.broadcast %c9_i32 : i32 to vector<1x16x16xi32>
    %5 = arith.cmpi slt, %3, %4 : vector<1x16x16xi32>
    %cst_5 = arith.constant -1.000000e+30 : f32
    %6 = vector.broadcast %cst_5 : f32 to vector<1x16x16xf32>
    %7 = arith.select %5, %2, %6 : vector<1x16x16xi1>, vector<1x16x16xf32>
    %8 = tpu.iota {dimensions = array<i32: 1>} : vector<1x16x16xi32>
    %c11_i32 = arith.constant 11 : i32
    %9 = vector.broadcast %c11_i32 : i32 to vector<1x16x16xi32>
    %10 = arith.cmpi slt, %8, %9 : vector<1x16x16xi32>
    %cst_6 = arith.constant -1.000000e+30 : f32
    %11 = vector.broadcast %cst_6 : f32 to vector<1x16x16xf32>
    %12 = arith.select %10, %2, %11 : vector<1x16x16xi1>, vector<1x16x16xf32>
    %cst_7 = arith.constant dense<0xFF800000> : vector<1x16xf32>
    %13 = vector.multi_reduction <maximumf>, %7, %cst_7 [2] : vector<1x16x16xf32> to vector<1x16xf32>
    %14 = vector.shape_cast %13 : vector<1x16xf32> to vector<1x16x1xf32>
    %15 = vector.broadcast %14 : vector<1x16x1xf32> to vector<1x16x16xf32>
    %16 = arith.subf %7, %15 : vector<1x16x16xf32>
    %17 = math.exp %16 : vector<1x16x16xf32>
    %cst_8 = arith.constant dense<0.000000e+00> : vector<1x16xf32>
    %18 = vector.multi_reduction <add>, %17, %cst_8 [2] : vector<1x16x16xf32> to vector<1x16xf32>
    %19 = vector.shape_cast %18 : vector<1x16xf32> to vector<1x16x1xf32>
    %20 = tpu.reciprocal %19 {approx = true} : vector<1x16x1xf32> -> vector<1x16x1xf32>
    %21 = vector.broadcast %20 : vector<1x16x1xf32> to vector<1x16x16xf32>
    %22 = arith.mulf %17, %21 : vector<1x16x16xf32>
    %cst_9 = arith.constant dense<0xFF800000> : vector<1x16xf32>
    %23 = vector.multi_reduction <maximumf>, %12, %cst_9 [1] : vector<1x16x16xf32> to vector<1x16xf32>
    %24 = vector.shape_cast %23 : vector<1x16xf32> to vector<1x1x16xf32>
    %25 = vector.broadcast %24 : vector<1x1x16xf32> to vector<1x16x16xf32>
    %26 = arith.subf %12, %25 : vector<1x16x16xf32>
    %27 = math.exp %26 : vector<1x16x16xf32>
    %cst_10 = arith.constant dense<0.000000e+00> : vector<1x16xf32>
    %28 = vector.multi_reduction <add>, %27, %cst_10 [1] : vector<1x16x16xf32> to vector<1x16xf32>
    %29 = vector.shape_cast %28 : vector<1x16xf32> to vector<1x1x16xf32>
    %30 = tpu.reciprocal %29 {approx = true} : vector<1x1x16xf32> -> vector<1x1x16xf32>
    %31 = vector.broadcast %30 : vector<1x1x16xf32> to vector<1x16x16xf32>
    %32 = arith.mulf %27, %31 : vector<1x16x16xf32>
    %cst_11 = arith.constant dense<0.000000e+00> : vector<1x16x128xf32>
    %33 = tpu.matmul %22, %1, %cst_11 {dimension_numbers = #tpu.dot_dimension_numbers<[1], [1], [2], [2], [0, 0, 0, 2, 1, 2], [0], [0]>} : vector<1x16x16xf32>, vector<1x16x128xf32>, vector<1x16x128xf32> -> vector<1x16x128xf32>
    %34 = tpu.concatenate %0, %33 in 2 : vector<1x16x128xf32>, vector<1x16x128xf32> -> vector<1x16x256xf32>
    %cst_12 = arith.constant dense<0.000000e+00> : vector<1x16x256xf32>
    %35 = tpu.matmul %32, %34, %cst_12 {dimension_numbers = #tpu.dot_dimension_numbers<[2], [1], [1], [2], [0, 0, 0, 1, 1, 2], [0], [0]>} : vector<1x16x16xf32>, vector<1x16x256xf32>, vector<1x16x256xf32> -> vector<1x16x256xf32>
    %36 = tpu.concatenate %1, %35 in 2 : vector<1x16x128xf32>, vector<1x16x256xf32> -> vector<1x16x384xf32>
    %c0_13 = arith.constant 0 : index
    %c0_14 = arith.constant 0 : index
    %37 = vector.load %arg3[%c0_13, %c0_14] : memref<384x512xf32, #tpu.memory_space<vmem>>, vector<384x512xf32>
    %c0_15 = arith.constant 0 : index
    %c0_16 = arith.constant 0 : index
    %38 = vector.load %arg6[%c0_15, %c0_16] : memref<384x512xf32, #tpu.memory_space<vmem>>, vector<384x512xf32>
    %c0_17 = arith.constant 0 : index
    %c0_18 = arith.constant 0 : index
    %39 = vector.load %arg5[%c0_17, %c0_18] : memref<1x512xf32, #tpu.memory_space<vmem>>, vector<1x512xf32>
    %c0_19 = arith.constant 0 : index
    %c0_20 = arith.constant 0 : index
    %40 = vector.load %arg8[%c0_19, %c0_20] : memref<1x512xf32, #tpu.memory_space<vmem>>, vector<1x512xf32>
    %41 = vector.shape_cast %36 : vector<1x16x384xf32> to vector<16x384xf32>
    %cst_21 = arith.constant dense<0.000000e+00> : vector<16x512xf32>
    %42 = tpu.matmul %41, %37, %cst_21 {dimension_numbers = #tpu.dot_dimension_numbers<[1], [0], [0], [1], [0, 0, 1, 1], [], []>} : vector<16x384xf32>, vector<384x512xf32>, vector<16x512xf32> -> vector<16x512xf32>
    %43 = vector.broadcast %39 : vector<1x512xf32> to vector<16x512xf32>
    %44 = arith.addf %42, %43 : vector<16x512xf32>
    %c0_22 = arith.constant 0 : index
    %c0_23 = arith.constant 0 : index
    %c0_24 = arith.constant 0 : index
    %45 = vector.load %arg10[%c0_22, %c0_23, %c0_24] : memref<1x16x512xf32, #tpu.memory_space<vmem>>, vector<1x16x512xf32>
    %46 = vector.shape_cast %45 : vector<1x16x512xf32> to vector<16x512xf32>
    %47 = vector.shape_cast %44 : vector<16x512xf32> to vector<1x16x512xf32>
    tpu.vector_store %arg10[%c0_22, %c0_23, %c0_24], %47 {strides = array<i32>} : memref<1x16x512xf32, #tpu.memory_space<vmem>>, vector<1x16x512xf32>,
    %cst_25 = arith.constant dense<0.000000e+00> : vector<16x512xf32>
    %48 = tpu.matmul %41, %38, %cst_25 {dimension_numbers = #tpu.dot_dimension_numbers<[1], [0], [0], [1], [0, 0, 1, 1], [], []>} : vector<16x384xf32>, vector<384x512xf32>, vector<16x512xf32> -> vector<16x512xf32>
    %49 = vector.broadcast %40 : vector<1x512xf32> to vector<16x512xf32>
    %50 = arith.addf %48, %49 : vector<16x512xf32>
    %c0_26 = arith.constant 0 : index
    %c0_27 = arith.constant 0 : index
    %c0_28 = arith.constant 0 : index
    %51 = vector.load %arg11[%c0_26, %c0_27, %c0_28] : memref<1x16x512xf32, #tpu.memory_space<vmem>>, vector<1x16x512xf32>
    %52 = vector.shape_cast %51 : vector<1x16x512xf32> to vector<16x512xf32>
    %53 = vector.shape_cast %50 : vector<16x512xf32> to vector<1x16x512xf32>
    tpu.vector_store %arg11[%c0_26, %c0_27, %c0_28], %53 {strides = array<i32>} : memref<1x16x512xf32, #tpu.memory_space<vmem>>, vector<1x16x512xf32>,
    %c0_29 = arith.constant 0 : index
    %c0_30 = arith.constant 0 : index
    %54 = vector.load %arg4[%c0_29, %c0_30] : memref<128x512xf32, #tpu.memory_space<vmem>>, vector<128x512xf32>
    %c0_31 = arith.constant 0 : index
    %c0_32 = arith.constant 0 : index
    %55 = vector.load %arg7[%c0_31, %c0_32] : memref<128x512xf32, #tpu.memory_space<vmem>>, vector<128x512xf32>
    %cst_33 = arith.constant 0.000000e+00 : f32
    %56 = vector.broadcast %cst_33 : f32 to vector<1x128xf32>
    %cst_34 = arith.constant 0.000000e+00 : f32
    %57 = vector.broadcast %cst_34 : f32 to vector<1x128xf32>
    %cst_35 = arith.constant 0.000000e+00 : f32
    %58 = vector.broadcast %cst_35 : f32 to vector<1x128xf32>
    %cst_36 = arith.constant 0.000000e+00 : f32
    %59 = vector.broadcast %cst_36 : f32 to vector<1x128xf32>
    %c0_37 = arith.constant 0 : index
    %c0_38 = arith.constant 0 : index
    %c0_39 = arith.constant 0 : index
    %60 = vector.load %arg10[%c0_37, %c0_38, %c0_39] : memref<1x16x512xf32, #tpu.memory_space<vmem>>, vector<1x1x512xf32>
    %61 = vector.shape_cast %60 : vector<1x1x512xf32> to vector<1x512xf32>
    %cst_40 = arith.constant dense<0.000000e+00> : vector<1x512xf32>
    %62 = tpu.matmul %56, %54, %cst_40 {dimension_numbers = #tpu.dot_dimension_numbers<[1], [0], [0], [1], [0, 0, 1, 1], [], []>} : vector<1x128xf32>, vector<128x512xf32>, vector<1x512xf32> -> vector<1x512xf32>
    %63 = arith.addf %61, %62 : vector<1x512xf32>
    %c0_41 = arith.constant 0 : index
    %c10 = arith.constant 10 : index
    %c0_42 = arith.constant 0 : index
    %64 = vector.load %arg11[%c0_41, %c10, %c0_42] : memref<1x16x512xf32, #tpu.memory_space<vmem>>, vector<1x1x512xf32>
    %65 = vector.shape_cast %64 : vector<1x1x512xf32> to vector<1x512xf32>
    %cst_43 = arith.constant dense<0.000000e+00> : vector<1x512xf32>
    %66 = tpu.matmul %58, %55, %cst_43 {dimension_numbers = #tpu.dot_dimension_numbers<[1], [0], [0], [1], [0, 0, 1, 1], [], []>} : vector<1x128xf32>, vector<128x512xf32>, vector<1x512xf32> -> vector<1x512xf32>
    %67 = arith.addf %65, %66 : vector<1x512xf32>
    %68 = vector.extract_strided_slice %63 {offsets = [0, 0], sizes = [1, 128], strides = [1, 1]} : vector<1x512xf32> to vector<1x128xf32>
    %69 = arith.negf %68 : vector<1x128xf32>
    %70 = math.exp %69 : vector<1x128xf32>
    %cst_44 = arith.constant 1.000000e+00 : f32
    %71 = vector.broadcast %cst_44 : f32 to vector<1x128xf32>
    %72 = arith.addf %71, %70 : vector<1x128xf32>
    %73 = arith.divf %71, %72 : vector<1x128xf32>
    %74 = vector.extract_strided_slice %63 {offsets = [0, 128], sizes = [1, 128], strides = [1, 1]} : vector<1x512xf32> to vector<1x128xf32>
    %75 = arith.negf %74 : vector<1x128xf32>
    %76 = math.exp %75 : vector<1x128xf32>
    %cst_45 = arith.constant 1.000000e+00 : f32
    %77 = vector.broadcast %cst_45 : f32 to vector<1x128xf32>
    %78 = arith.addf %77, %76 : vector<1x128xf32>
    %79 = arith.divf %77, %78 : vector<1x128xf32>
    %80 = vector.extract_strided_slice %63 {offsets = [0, 256], sizes = [1, 128], strides = [1, 1]} : vector<1x512xf32> to vector<1x128xf32>
    %81 = math.tanh %80 : vector<1x128xf32>
    %82 = vector.extract_strided_slice %63 {offsets = [0, 384], sizes = [1, 128], strides = [1, 1]} : vector<1x512xf32> to vector<1x128xf32>
    %83 = arith.negf %82 : vector<1x128xf32>
    %84 = math.exp %83 : vector<1x128xf32>
    %cst_46 = arith.constant 1.000000e+00 : f32
    %85 = vector.broadcast %cst_46 : f32 to vector<1x128xf32>
    %86 = arith.addf %85, %84 : vector<1x128xf32>
    %87 = arith.divf %85, %86 : vector<1x128xf32>
    %88 = arith.mulf %79, %57 : vector<1x128xf32>
    %89 = arith.mulf %73, %81 : vector<1x128xf32>
    %90 = arith.addf %88, %89 : vector<1x128xf32>
    %91 = math.tanh %90 : vector<1x128xf32>
    %92 = arith.mulf %87, %91 : vector<1x128xf32>
    %93 = vector.extract_strided_slice %67 {offsets = [0, 0], sizes = [1, 128], strides = [1, 1]} : vector<1x512xf32> to vector<1x128xf32>
    %94 = arith.negf %93 : vector<1x128xf32>
    %95 = math.exp %94 : vector<1x128xf32>
    %cst_47 = arith.constant 1.000000e+00 : f32
    %96 = vector.broadcast %cst_47 : f32 to vector<1x128xf32>
    %97 = arith.addf %96, %95 : vector<1x128xf32>
    %98 = arith.divf %96, %97 : vector<1x128xf32>
    %99 = vector.extract_strided_slice %67 {offsets = [0, 128], sizes = [1, 128], strides = [1, 1]} : vector<1x512xf32> to vector<1x128xf32>
    %100 = arith.negf %99 : vector<1x128xf32>
    %101 = math.exp %100 : vector<1x128xf32>
    %cst_48 = arith.constant 1.000000e+00 : f32
    %102 = vector.broadcast %cst_48 : f32 to vector<1x128xf32>
    %103 = arith.addf %102, %101 : vector<1x128xf32>
    %104 = arith.divf %102, %103 : vector<1x128xf32>
    %105 = vector.extract_strided_slice %67 {offsets = [0, 256], sizes = [1, 128], strides = [1, 1]} : vector<1x512xf32> to vector<1x128xf32>
    %106 = math.tanh %105 : vector<1x128xf32>
    %107 = vector.extract_strided_slice %67 {offsets = [0, 384], sizes = [1, 128], strides = [1, 1]} : vector<1x512xf32> to vector<1x128xf32>
    %108 = arith.negf %107 : vector<1x128xf32>
    %109 = math.exp %108 : vector<1x128xf32>
    %cst_49 = arith.constant 1.000000e+00 : f32
    %110 = vector.broadcast %cst_49 : f32 to vector<1x128xf32>
    %111 = arith.addf %110, %109 : vector<1x128xf32>
    %112 = arith.divf %110, %111 : vector<1x128xf32>
    %113 = arith.mulf %104, %59 : vector<1x128xf32>
    %114 = arith.mulf %98, %106 : vector<1x128xf32>
    %115 = arith.addf %113, %114 : vector<1x128xf32>
    %116 = math.tanh %115 : vector<1x128xf32>
    %117 = arith.mulf %112, %116 : vector<1x128xf32>
    %118 = vector.shape_cast %92 : vector<1x128xf32> to vector<1x1x128xf32>
    %c0_50 = arith.constant 0 : index
    %c0_51 = arith.constant 0 : index
    %c0_52 = arith.constant 0 : index
    %119 = vector.load %arg9[%c0_50, %c0_51, %c0_52] : memref<1x16x256xf32, #tpu.memory_space<vmem>>, vector<1x1x128xf32>
    tpu.vector_store %arg9[%c0_50, %c0_51, %c0_52], %118 {strides = array<i32>} : memref<1x16x256xf32, #tpu.memory_space<vmem>>, vector<1x1x128xf32>,
    %120 = vector.shape_cast %117 : vector<1x128xf32> to vector<1x1x128xf32>
    %c0_53 = arith.constant 0 : index
    %c10_54 = arith.constant 10 : index
    %c128 = arith.constant 128 : index
    %121 = vector.load %arg9[%c0_53, %c10_54, %c128] : memref<1x16x256xf32, #tpu.memory_space<vmem>>, vector<1x1x128xf32>
    tpu.vector_store %arg9[%c0_53, %c10_54, %c128], %120 {strides = array<i32>} : memref<1x16x256xf32, #tpu.memory_space<vmem>>, vector<1x1x128xf32>,
    %c0_55 = arith.constant 0 : index
    %c1 = arith.constant 1 : index
    %c0_56 = arith.constant 0 : index
    %122 = vector.load %arg10[%c0_55, %c1, %c0_56] : memref<1x16x512xf32, #tpu.memory_space<vmem>>, vector<1x1x512xf32>
    %123 = vector.shape_cast %122 : vector<1x1x512xf32> to vector<1x512xf32>
    %cst_57 = arith.constant dense<0.000000e+00> : vector<1x512xf32>
    %124 = tpu.matmul %92, %54, %cst_57 {dimension_numbers = #tpu.dot_dimension_numbers<[1], [0], [0], [1], [0, 0, 1, 1], [], []>} : vector<1x128xf32>, vector<128x512xf32>, vector<1x512xf32> -> vector<1x512xf32>
    %125 = arith.addf %123, %124 : vector<1x512xf32>
    %c0_58 = arith.constant 0 : index
    %c9 = arith.constant 9 : index
    %c0_59 = arith.constant 0 : index
    %126 = vector.load %arg11[%c0_58, %c9, %c0_59] : memref<1x16x512xf32, #tpu.memory_space<vmem>>, vector<1x1x512xf32>
    %127 = vector.shape_cast %126 : vector<1x1x512xf32> to vector<1x512xf32>
    %cst_60 = arith.constant dense<0.000000e+00> : vector<1x512xf32>
    %128 = tpu.matmul %117, %55, %cst_60 {dimension_numbers = #tpu.dot_dimension_numbers<[1], [0], [0], [1], [0, 0, 1, 1], [], []>} : vector<1x128xf32>, vector<128x512xf32>, vector<1x512xf32> -> vector<1x512xf32>
    %129 = arith.addf %127, %128 : vector<1x512xf32>
    %130 = vector.extract_strided_slice %125 {offsets = [0, 0], sizes = [1, 128], strides = [1, 1]} : vector<1x512xf32> to vector<1x128xf32>
    %131 = arith.negf %130 : vector<1x128xf32>
    %132 = math.exp %131 : vector<1x128xf32>
    %cst_61 = arith.constant 1.000000e+00 : f32
    %133 = vector.broadcast %cst_61 : f32 to vector<1x128xf32>
    %134 = arith.addf %133, %132 : vector<1x128xf32>
    %135 = arith.divf %133, %134 : vector<1x128xf32>
    %136 = vector.extract_strided_slice %125 {offsets = [0, 128], sizes = [1, 128], strides = [1, 1]} : vector<1x512xf32> to vector<1x128xf32>
    %137 = arith.negf %136 : vector<1x128xf32>
    %138 = math.exp %137 : vector<1x128xf32>
    %cst_62 = arith.constant 1.000000e+00 : f32
    %139 = vector.broadcast %cst_62 : f32 to vector<1x128xf32>
    %140 = arith.addf %139, %138 : vector<1x128xf32>
    %141 = arith.divf %139, %140 : vector<1x128xf32>
    %142 = vector.extract_strided_slice %125 {offsets = [0, 256], sizes = [1, 128], strides = [1, 1]} : vector<1x512xf32> to vector<1x128xf32>
    %143 = math.tanh %142 : vector<1x128xf32>
    %144 = vector.extract_strided_slice %125 {offsets = [0, 384], sizes = [1, 128], strides = [1, 1]} : vector<1x512xf32> to vector<1x128xf32>
    %145 = arith.negf %144 : vector<1x128xf32>
    %146 = math.exp %145 : vector<1x128xf32>
    %cst_63 = arith.constant 1.000000e+00 : f32
    %147 = vector.broadcast %cst_63 : f32 to vector<1x128xf32>
    %148 = arith.addf %147, %146 : vector<1x128xf32>
    %149 = arith.divf %147, %148 : vector<1x128xf32>
    %150 = arith.mulf %141, %90 : vector<1x128xf32>
    %151 = arith.mulf %135, %143 : vector<1x128xf32>
    %152 = arith.addf %150, %151 : vector<1x128xf32>
    %153 = math.tanh %152 : vector<1x128xf32>
    %154 = arith.mulf %149, %153 : vector<1x128xf32>
    %155 = vector.extract_strided_slice %129 {offsets = [0, 0], sizes = [1, 128], strides = [1, 1]} : vector<1x512xf32> to vector<1x128xf32>
    %156 = arith.negf %155 : vector<1x128xf32>
    %157 = math.exp %156 : vector<1x128xf32>
    %cst_64 = arith.constant 1.000000e+00 : f32
    %158 = vector.broadcast %cst_64 : f32 to vector<1x128xf32>
    %159 = arith.addf %158, %157 : vector<1x128xf32>
    %160 = arith.divf %158, %159 : vector<1x128xf32>
    %161 = vector.extract_strided_slice %129 {offsets = [0, 128], sizes = [1, 128], strides = [1, 1]} : vector<1x512xf32> to vector<1x128xf32>
    %162 = arith.negf %161 : vector<1x128xf32>
    %163 = math.exp %162 : vector<1x128xf32>
    %cst_65 = arith.constant 1.000000e+00 : f32
    %164 = vector.broadcast %cst_65 : f32 to vector<1x128xf32>
    %165 = arith.addf %164, %163 : vector<1x128xf32>
    %166 = arith.divf %164, %165 : vector<1x128xf32>
    %167 = vector.extract_strided_slice %129 {offsets = [0, 256], sizes = [1, 128], strides = [1, 1]} : vector<1x512xf32> to vector<1x128xf32>
    %168 = math.tanh %167 : vector<1x128xf32>
    %169 = vector.extract_strided_slice %129 {offsets = [0, 384], sizes = [1, 128], strides = [1, 1]} : vector<1x512xf32> to vector<1x128xf32>
    %170 = arith.negf %169 : vector<1x128xf32>
    %171 = math.exp %170 : vector<1x128xf32>
    %cst_66 = arith.constant 1.000000e+00 : f32
    %172 = vector.broadcast %cst_66 : f32 to vector<1x128xf32>
    %173 = arith.addf %172, %171 : vector<1x128xf32>
    %174 = arith.divf %172, %173 : vector<1x128xf32>
    %175 = arith.mulf %166, %115 : vector<1x128xf32>
    %176 = arith.mulf %160, %168 : vector<1x128xf32>
    %177 = arith.addf %175, %176 : vector<1x128xf32>
    %178 = math.tanh %177 : vector<1x128xf32>
    %179 = arith.mulf %174, %178 : vector<1x128xf32>
    %180 = vector.shape_cast %154 : vector<1x128xf32> to vector<1x1x128xf32>
    %c0_67 = arith.constant 0 : index
    %c1_68 = arith.constant 1 : index
    %c0_69 = arith.constant 0 : index
    %181 = vector.load %arg9[%c0_67, %c1_68, %c0_69] : memref<1x16x256xf32, #tpu.memory_space<vmem>>, vector<1x1x128xf32>
    tpu.vector_store %arg9[%c0_67, %c1_68, %c0_69], %180 {strides = array<i32>} : memref<1x16x256xf32, #tpu.memory_space<vmem>>, vector<1x1x128xf32>,
    %182 = vector.shape_cast %179 : vector<1x128xf32> to vector<1x1x128xf32>
    %c0_70 = arith.constant 0 : index
    %c9_71 = arith.constant 9 : index
    %c128_72 = arith.constant 128 : index
    %183 = vector.load %arg9[%c0_70, %c9_71, %c128_72] : memref<1x16x256xf32, #tpu.memory_space<vmem>>, vector<1x1x128xf32>
    tpu.vector_store %arg9[%c0_70, %c9_71, %c128_72], %182 {strides = array<i32>} : memref<1x16x256xf32, #tpu.memory_space<vmem>>, vector<1x1x128xf32>,
    %c0_73 = arith.constant 0 : index
    %c2 = arith.constant 2 : index
    %c0_74 = arith.constant 0 : index
    %184 = vector.load %arg10[%c0_73, %c2, %c0_74] : memref<1x16x512xf32, #tpu.memory_space<vmem>>, vector<1x1x512xf32>
    %185 = vector.shape_cast %184 : vector<1x1x512xf32> to vector<1x512xf32>
    %cst_75 = arith.constant dense<0.000000e+00> : vector<1x512xf32>
    %186 = tpu.matmul %154, %54, %cst_75 {dimension_numbers = #tpu.dot_dimension_numbers<[1], [0], [0], [1], [0, 0, 1, 1], [], []>} : vector<1x128xf32>, vector<128x512xf32>, vector<1x512xf32> -> vector<1x512xf32>
    %187 = arith.addf %185, %186 : vector<1x512xf32>
    %c0_76 = arith.constant 0 : index
    %c8 = arith.constant 8 : index
    %c0_77 = arith.constant 0 : index
    %188 = vector.load %arg11[%c0_76, %c8, %c0_77] : memref<1x16x512xf32, #tpu.memory_space<vmem>>, vector<1x1x512xf32>
    %189 = vector.shape_cast %188 : vector<1x1x512xf32> to vector<1x512xf32>
    %cst_78 = arith.constant dense<0.000000e+00> : vector<1x512xf32>
    %190 = tpu.matmul %179, %55, %cst_78 {dimension_numbers = #tpu.dot_dimension_numbers<[1], [0], [0], [1], [0, 0, 1, 1], [], []>} : vector<1x128xf32>, vector<128x512xf32>, vector<1x512xf32> -> vector<1x512xf32>
    %191 = arith.addf %189, %190 : vector<1x512xf32>
    %192 = vector.extract_strided_slice %187 {offsets = [0, 0], sizes = [1, 128], strides = [1, 1]} : vector<1x512xf32> to vector<1x128xf32>
    %193 = arith.negf %192 : vector<1x128xf32>
    %194 = math.exp %193 : vector<1x128xf32>
    %cst_79 = arith.constant 1.000000e+00 : f32
    %195 = vector.broadcast %cst_79 : f32 to vector<1x128xf32>
    %196 = arith.addf %195, %194 : vector<1x128xf32>
    %197 = arith.divf %195, %196 : vector<1x128xf32>
    %198 = vector.extract_strided_slice %187 {offsets = [0, 128], sizes = [1, 128], strides = [1, 1]} : vector<1x512xf32> to vector<1x128xf32>
    %199 = arith.negf %198 : vector<1x128xf32>
    %200 = math.exp %199 : vector<1x128xf32>
    %cst_80 = arith.constant 1.000000e+00 : f32
    %201 = vector.broadcast %cst_80 : f32 to vector<1x128xf32>
    %202 = arith.addf %201, %200 : vector<1x128xf32>
    %203 = arith.divf %201, %202 : vector<1x128xf32>
    %204 = vector.extract_strided_slice %187 {offsets = [0, 256], sizes = [1, 128], strides = [1, 1]} : vector<1x512xf32> to vector<1x128xf32>
    %205 = math.tanh %204 : vector<1x128xf32>
    %206 = vector.extract_strided_slice %187 {offsets = [0, 384], sizes = [1, 128], strides = [1, 1]} : vector<1x512xf32> to vector<1x128xf32>
    %207 = arith.negf %206 : vector<1x128xf32>
    %208 = math.exp %207 : vector<1x128xf32>
    %cst_81 = arith.constant 1.000000e+00 : f32
    %209 = vector.broadcast %cst_81 : f32 to vector<1x128xf32>
    %210 = arith.addf %209, %208 : vector<1x128xf32>
    %211 = arith.divf %209, %210 : vector<1x128xf32>
    %212 = arith.mulf %203, %152 : vector<1x128xf32>
    %213 = arith.mulf %197, %205 : vector<1x128xf32>
    %214 = arith.addf %212, %213 : vector<1x128xf32>
    %215 = math.tanh %214 : vector<1x128xf32>
    %216 = arith.mulf %211, %215 : vector<1x128xf32>
    %217 = vector.extract_strided_slice %191 {offsets = [0, 0], sizes = [1, 128], strides = [1, 1]} : vector<1x512xf32> to vector<1x128xf32>
    %218 = arith.negf %217 : vector<1x128xf32>
    %219 = math.exp %218 : vector<1x128xf32>
    %cst_82 = arith.constant 1.000000e+00 : f32
    %220 = vector.broadcast %cst_82 : f32 to vector<1x128xf32>
    %221 = arith.addf %220, %219 : vector<1x128xf32>
    %222 = arith.divf %220, %221 : vector<1x128xf32>
    %223 = vector.extract_strided_slice %191 {offsets = [0, 128], sizes = [1, 128], strides = [1, 1]} : vector<1x512xf32> to vector<1x128xf32>
    %224 = arith.negf %223 : vector<1x128xf32>
    %225 = math.exp %224 : vector<1x128xf32>
    %cst_83 = arith.constant 1.000000e+00 : f32
    %226 = vector.broadcast %cst_83 : f32 to vector<1x128xf32>
    %227 = arith.addf %226, %225 : vector<1x128xf32>
    %228 = arith.divf %226, %227 : vector<1x128xf32>
    %229 = vector.extract_strided_slice %191 {offsets = [0, 256], sizes = [1, 128], strides = [1, 1]} : vector<1x512xf32> to vector<1x128xf32>
    %230 = math.tanh %229 : vector<1x128xf32>
    %231 = vector.extract_strided_slice %191 {offsets = [0, 384], sizes = [1, 128], strides = [1, 1]} : vector<1x512xf32> to vector<1x128xf32>
    %232 = arith.negf %231 : vector<1x128xf32>
    %233 = math.exp %232 : vector<1x128xf32>
    %cst_84 = arith.constant 1.000000e+00 : f32
    %234 = vector.broadcast %cst_84 : f32 to vector<1x128xf32>
    %235 = arith.addf %234, %233 : vector<1x128xf32>
    %236 = arith.divf %234, %235 : vector<1x128xf32>
    %237 = arith.mulf %228, %177 : vector<1x128xf32>
    %238 = arith.mulf %222, %230 : vector<1x128xf32>
    %239 = arith.addf %237, %238 : vector<1x128xf32>
    %240 = math.tanh %239 : vector<1x128xf32>
    %241 = arith.mulf %236, %240 : vector<1x128xf32>
    %242 = vector.shape_cast %216 : vector<1x128xf32> to vector<1x1x128xf32>
    %c0_85 = arith.constant 0 : index
    %c2_86 = arith.constant 2 : index
    %c0_87 = arith.constant 0 : index
    %243 = vector.load %arg9[%c0_85, %c2_86, %c0_87] : memref<1x16x256xf32, #tpu.memory_space<vmem>>, vector<1x1x128xf32>
    tpu.vector_store %arg9[%c0_85, %c2_86, %c0_87], %242 {strides = array<i32>} : memref<1x16x256xf32, #tpu.memory_space<vmem>>, vector<1x1x128xf32>,
    %244 = vector.shape_cast %241 : vector<1x128xf32> to vector<1x1x128xf32>
    %c0_88 = arith.constant 0 : index
    %c8_89 = arith.constant 8 : index
    %c128_90 = arith.constant 128 : index
    %245 = vector.load %arg9[%c0_88, %c8_89, %c128_90] : memref<1x16x256xf32, #tpu.memory_space<vmem>>, vector<1x1x128xf32>
    tpu.vector_store %arg9[%c0_88, %c8_89, %c128_90], %244 {strides = array<i32>} : memref<1x16x256xf32, #tpu.memory_space<vmem>>, vector<1x1x128xf32>,
    %c0_91 = arith.constant 0 : index
    %c3 = arith.constant 3 : index
    %c0_92 = arith.constant 0 : index
    %246 = vector.load %arg10[%c0_91, %c3, %c0_92] : memref<1x16x512xf32, #tpu.memory_space<vmem>>, vector<1x1x512xf32>
    %247 = vector.shape_cast %246 : vector<1x1x512xf32> to vector<1x512xf32>
    %cst_93 = arith.constant dense<0.000000e+00> : vector<1x512xf32>
    %248 = tpu.matmul %216, %54, %cst_93 {dimension_numbers = #tpu.dot_dimension_numbers<[1], [0], [0], [1], [0, 0, 1, 1], [], []>} : vector<1x128xf32>, vector<128x512xf32>, vector<1x512xf32> -> vector<1x512xf32>
    %249 = arith.addf %247, %248 : vector<1x512xf32>
    %c0_94 = arith.constant 0 : index
    %c7 = arith.constant 7 : index
    %c0_95 = arith.constant 0 : index
    %250 = vector.load %arg11[%c0_94, %c7, %c0_95] : memref<1x16x512xf32, #tpu.memory_space<vmem>>, vector<1x1x512xf32>
    %251 = vector.shape_cast %250 : vector<1x1x512xf32> to vector<1x512xf32>
    %cst_96 = arith.constant dense<0.000000e+00> : vector<1x512xf32>
    %252 = tpu.matmul %241, %55, %cst_96 {dimension_numbers = #tpu.dot_dimension_numbers<[1], [0], [0], [1], [0, 0, 1, 1], [], []>} : vector<1x128xf32>, vector<128x512xf32>, vector<1x512xf32> -> vector<1x512xf32>
    %253 = arith.addf %251, %252 : vector<1x512xf32>
    %254 = vector.extract_strided_slice %249 {offsets = [0, 0], sizes = [1, 128], strides = [1, 1]} : vector<1x512xf32> to vector<1x128xf32>
    %255 = arith.negf %254 : vector<1x128xf32>
    %256 = math.exp %255 : vector<1x128xf32>
    %cst_97 = arith.constant 1.000000e+00 : f32
    %257 = vector.broadcast %cst_97 : f32 to vector<1x128xf32>
    %258 = arith.addf %257, %256 : vector<1x128xf32>
    %259 = arith.divf %257, %258 : vector<1x128xf32>
    %260 = vector.extract_strided_slice %249 {offsets = [0, 128], sizes = [1, 128], strides = [1, 1]} : vector<1x512xf32> to vector<1x128xf32>
    %261 = arith.negf %260 : vector<1x128xf32>
    %262 = math.exp %261 : vector<1x128xf32>
    %cst_98 = arith.constant 1.000000e+00 : f32
    %263 = vector.broadcast %cst_98 : f32 to vector<1x128xf32>
    %264 = arith.addf %263, %262 : vector<1x128xf32>
    %265 = arith.divf %263, %264 : vector<1x128xf32>
    %266 = vector.extract_strided_slice %249 {offsets = [0, 256], sizes = [1, 128], strides = [1, 1]} : vector<1x512xf32> to vector<1x128xf32>
    %267 = math.tanh %266 : vector<1x128xf32>
    %268 = vector.extract_strided_slice %249 {offsets = [0, 384], sizes = [1, 128], strides = [1, 1]} : vector<1x512xf32> to vector<1x128xf32>
    %269 = arith.negf %268 : vector<1x128xf32>
    %270 = math.exp %269 : vector<1x128xf32>
    %cst_99 = arith.constant 1.000000e+00 : f32
    %271 = vector.broadcast %cst_99 : f32 to vector<1x128xf32>
    %272 = arith.addf %271, %270 : vector<1x128xf32>
    %273 = arith.divf %271, %272 : vector<1x128xf32>
    %274 = arith.mulf %265, %214 : vector<1x128xf32>
    %275 = arith.mulf %259, %267 : vector<1x128xf32>
    %276 = arith.addf %274, %275 : vector<1x128xf32>
    %277 = math.tanh %276 : vector<1x128xf32>
    %278 = arith.mulf %273, %277 : vector<1x128xf32>
    %279 = vector.extract_strided_slice %253 {offsets = [0, 0], sizes = [1, 128], strides = [1, 1]} : vector<1x512xf32> to vector<1x128xf32>
    %280 = arith.negf %279 : vector<1x128xf32>
    %281 = math.exp %280 : vector<1x128xf32>
    %cst_100 = arith.constant 1.000000e+00 : f32
    %282 = vector.broadcast %cst_100 : f32 to vector<1x128xf32>
    %283 = arith.addf %282, %281 : vector<1x128xf32>
    %284 = arith.divf %282, %283 : vector<1x128xf32>
    %285 = vector.extract_strided_slice %253 {offsets = [0, 128], sizes = [1, 128], strides = [1, 1]} : vector<1x512xf32> to vector<1x128xf32>
    %286 = arith.negf %285 : vector<1x128xf32>
    %287 = math.exp %286 : vector<1x128xf32>
    %cst_101 = arith.constant 1.000000e+00 : f32
    %288 = vector.broadcast %cst_101 : f32 to vector<1x128xf32>
    %289 = arith.addf %288, %287 : vector<1x128xf32>
    %290 = arith.divf %288, %289 : vector<1x128xf32>
    %291 = vector.extract_strided_slice %253 {offsets = [0, 256], sizes = [1, 128], strides = [1, 1]} : vector<1x512xf32> to vector<1x128xf32>
    %292 = math.tanh %291 : vector<1x128xf32>
    %293 = vector.extract_strided_slice %253 {offsets = [0, 384], sizes = [1, 128], strides = [1, 1]} : vector<1x512xf32> to vector<1x128xf32>
    %294 = arith.negf %293 : vector<1x128xf32>
    %295 = math.exp %294 : vector<1x128xf32>
    %cst_102 = arith.constant 1.000000e+00 : f32
    %296 = vector.broadcast %cst_102 : f32 to vector<1x128xf32>
    %297 = arith.addf %296, %295 : vector<1x128xf32>
    %298 = arith.divf %296, %297 : vector<1x128xf32>
    %299 = arith.mulf %290, %239 : vector<1x128xf32>
    %300 = arith.mulf %284, %292 : vector<1x128xf32>
    %301 = arith.addf %299, %300 : vector<1x128xf32>
    %302 = math.tanh %301 : vector<1x128xf32>
    %303 = arith.mulf %298, %302 : vector<1x128xf32>
    %304 = vector.shape_cast %278 : vector<1x128xf32> to vector<1x1x128xf32>
    %c0_103 = arith.constant 0 : index
    %c3_104 = arith.constant 3 : index
    %c0_105 = arith.constant 0 : index
    %305 = vector.load %arg9[%c0_103, %c3_104, %c0_105] : memref<1x16x256xf32, #tpu.memory_space<vmem>>, vector<1x1x128xf32>
    tpu.vector_store %arg9[%c0_103, %c3_104, %c0_105], %304 {strides = array<i32>} : memref<1x16x256xf32, #tpu.memory_space<vmem>>, vector<1x1x128xf32>,
    %306 = vector.shape_cast %303 : vector<1x128xf32> to vector<1x1x128xf32>
    %c0_106 = arith.constant 0 : index
    %c7_107 = arith.constant 7 : index
    %c128_108 = arith.constant 128 : index
    %307 = vector.load %arg9[%c0_106, %c7_107, %c128_108] : memref<1x16x256xf32, #tpu.memory_space<vmem>>, vector<1x1x128xf32>
    tpu.vector_store %arg9[%c0_106, %c7_107, %c128_108], %306 {strides = array<i32>} : memref<1x16x256xf32, #tpu.memory_space<vmem>>, vector<1x1x128xf32>,
    %c0_109 = arith.constant 0 : index
    %c4 = arith.constant 4 : index
    %c0_110 = arith.constant 0 : index
    %308 = vector.load %arg10[%c0_109, %c4, %c0_110] : memref<1x16x512xf32, #tpu.memory_space<vmem>>, vector<1x1x512xf32>
    %309 = vector.shape_cast %308 : vector<1x1x512xf32> to vector<1x512xf32>
    %cst_111 = arith.constant dense<0.000000e+00> : vector<1x512xf32>
    %310 = tpu.matmul %278, %54, %cst_111 {dimension_numbers = #tpu.dot_dimension_numbers<[1], [0], [0], [1], [0, 0, 1, 1], [], []>} : vector<1x128xf32>, vector<128x512xf32>, vector<1x512xf32> -> vector<1x512xf32>
    %311 = arith.addf %309, %310 : vector<1x512xf32>
    %c0_112 = arith.constant 0 : index
    %c6 = arith.constant 6 : index
    %c0_113 = arith.constant 0 : index
    %312 = vector.load %arg11[%c0_112, %c6, %c0_113] : memref<1x16x512xf32, #tpu.memory_space<vmem>>, vector<1x1x512xf32>
    %313 = vector.shape_cast %312 : vector<1x1x512xf32> to vector<1x512xf32>
    %cst_114 = arith.constant dense<0.000000e+00> : vector<1x512xf32>
    %314 = tpu.matmul %303, %55, %cst_114 {dimension_numbers = #tpu.dot_dimension_numbers<[1], [0], [0], [1], [0, 0, 1, 1], [], []>} : vector<1x128xf32>, vector<128x512xf32>, vector<1x512xf32> -> vector<1x512xf32>
    %315 = arith.addf %313, %314 : vector<1x512xf32>
    %316 = vector.extract_strided_slice %311 {offsets = [0, 0], sizes = [1, 128], strides = [1, 1]} : vector<1x512xf32> to vector<1x128xf32>
    %317 = arith.negf %316 : vector<1x128xf32>
    %318 = math.exp %317 : vector<1x128xf32>
    %cst_115 = arith.constant 1.000000e+00 : f32
    %319 = vector.broadcast %cst_115 : f32 to vector<1x128xf32>
    %320 = arith.addf %319, %318 : vector<1x128xf32>
    %321 = arith.divf %319, %320 : vector<1x128xf32>
    %322 = vector.extract_strided_slice %311 {offsets = [0, 128], sizes = [1, 128], strides = [1, 1]} : vector<1x512xf32> to vector<1x128xf32>
    %323 = arith.negf %322 : vector<1x128xf32>
    %324 = math.exp %323 : vector<1x128xf32>
    %cst_116 = arith.constant 1.000000e+00 : f32
    %325 = vector.broadcast %cst_116 : f32 to vector<1x128xf32>
    %326 = arith.addf %325, %324 : vector<1x128xf32>
    %327 = arith.divf %325, %326 : vector<1x128xf32>
    %328 = vector.extract_strided_slice %311 {offsets = [0, 256], sizes = [1, 128], strides = [1, 1]} : vector<1x512xf32> to vector<1x128xf32>
    %329 = math.tanh %328 : vector<1x128xf32>
    %330 = vector.extract_strided_slice %311 {offsets = [0, 384], sizes = [1, 128], strides = [1, 1]} : vector<1x512xf32> to vector<1x128xf32>
    %331 = arith.negf %330 : vector<1x128xf32>
    %332 = math.exp %331 : vector<1x128xf32>
    %cst_117 = arith.constant 1.000000e+00 : f32
    %333 = vector.broadcast %cst_117 : f32 to vector<1x128xf32>
    %334 = arith.addf %333, %332 : vector<1x128xf32>
    %335 = arith.divf %333, %334 : vector<1x128xf32>
    %336 = arith.mulf %327, %276 : vector<1x128xf32>
    %337 = arith.mulf %321, %329 : vector<1x128xf32>
    %338 = arith.addf %336, %337 : vector<1x128xf32>
    %339 = math.tanh %338 : vector<1x128xf32>
    %340 = arith.mulf %335, %339 : vector<1x128xf32>
    %341 = vector.extract_strided_slice %315 {offsets = [0, 0], sizes = [1, 128], strides = [1, 1]} : vector<1x512xf32> to vector<1x128xf32>
    %342 = arith.negf %341 : vector<1x128xf32>
    %343 = math.exp %342 : vector<1x128xf32>
    %cst_118 = arith.constant 1.000000e+00 : f32
    %344 = vector.broadcast %cst_118 : f32 to vector<1x128xf32>
    %345 = arith.addf %344, %343 : vector<1x128xf32>
    %346 = arith.divf %344, %345 : vector<1x128xf32>
    %347 = vector.extract_strided_slice %315 {offsets = [0, 128], sizes = [1, 128], strides = [1, 1]} : vector<1x512xf32> to vector<1x128xf32>
    %348 = arith.negf %347 : vector<1x128xf32>
    %349 = math.exp %348 : vector<1x128xf32>
    %cst_119 = arith.constant 1.000000e+00 : f32
    %350 = vector.broadcast %cst_119 : f32 to vector<1x128xf32>
    %351 = arith.addf %350, %349 : vector<1x128xf32>
    %352 = arith.divf %350, %351 : vector<1x128xf32>
    %353 = vector.extract_strided_slice %315 {offsets = [0, 256], sizes = [1, 128], strides = [1, 1]} : vector<1x512xf32> to vector<1x128xf32>
    %354 = math.tanh %353 : vector<1x128xf32>
    %355 = vector.extract_strided_slice %315 {offsets = [0, 384], sizes = [1, 128], strides = [1, 1]} : vector<1x512xf32> to vector<1x128xf32>
    %356 = arith.negf %355 : vector<1x128xf32>
    %357 = math.exp %356 : vector<1x128xf32>
    %cst_120 = arith.constant 1.000000e+00 : f32
    %358 = vector.broadcast %cst_120 : f32 to vector<1x128xf32>
    %359 = arith.addf %358, %357 : vector<1x128xf32>
    %360 = arith.divf %358, %359 : vector<1x128xf32>
    %361 = arith.mulf %352, %301 : vector<1x128xf32>
    %362 = arith.mulf %346, %354 : vector<1x128xf32>
    %363 = arith.addf %361, %362 : vector<1x128xf32>
    %364 = math.tanh %363 : vector<1x128xf32>
    %365 = arith.mulf %360, %364 : vector<1x128xf32>
    %366 = vector.shape_cast %340 : vector<1x128xf32> to vector<1x1x128xf32>
    %c0_121 = arith.constant 0 : index
    %c4_122 = arith.constant 4 : index
    %c0_123 = arith.constant 0 : index
    %367 = vector.load %arg9[%c0_121, %c4_122, %c0_123] : memref<1x16x256xf32, #tpu.memory_space<vmem>>, vector<1x1x128xf32>
    tpu.vector_store %arg9[%c0_121, %c4_122, %c0_123], %366 {strides = array<i32>} : memref<1x16x256xf32, #tpu.memory_space<vmem>>, vector<1x1x128xf32>,
    %368 = vector.shape_cast %365 : vector<1x128xf32> to vector<1x1x128xf32>
    %c0_124 = arith.constant 0 : index
    %c6_125 = arith.constant 6 : index
    %c128_126 = arith.constant 128 : index
    %369 = vector.load %arg9[%c0_124, %c6_125, %c128_126] : memref<1x16x256xf32, #tpu.memory_space<vmem>>, vector<1x1x128xf32>
    tpu.vector_store %arg9[%c0_124, %c6_125, %c128_126], %368 {strides = array<i32>} : memref<1x16x256xf32, #tpu.memory_space<vmem>>, vector<1x1x128xf32>,
    %c0_127 = arith.constant 0 : index
    %c5 = arith.constant 5 : index
    %c0_128 = arith.constant 0 : index
    %370 = vector.load %arg10[%c0_127, %c5, %c0_128] : memref<1x16x512xf32, #tpu.memory_space<vmem>>, vector<1x1x512xf32>
    %371 = vector.shape_cast %370 : vector<1x1x512xf32> to vector<1x512xf32>
    %cst_129 = arith.constant dense<0.000000e+00> : vector<1x512xf32>
    %372 = tpu.matmul %340, %54, %cst_129 {dimension_numbers = #tpu.dot_dimension_numbers<[1], [0], [0], [1], [0, 0, 1, 1], [], []>} : vector<1x128xf32>, vector<128x512xf32>, vector<1x512xf32> -> vector<1x512xf32>
    %373 = arith.addf %371, %372 : vector<1x512xf32>
    %c0_130 = arith.constant 0 : index
    %c5_131 = arith.constant 5 : index
    %c0_132 = arith.constant 0 : index
    %374 = vector.load %arg11[%c0_130, %c5_131, %c0_132] : memref<1x16x512xf32, #tpu.memory_space<vmem>>, vector<1x1x512xf32>
    %375 = vector.shape_cast %374 : vector<1x1x512xf32> to vector<1x512xf32>
    %cst_133 = arith.constant dense<0.000000e+00> : vector<1x512xf32>
    %376 = tpu.matmul %365, %55, %cst_133 {dimension_numbers = #tpu.dot_dimension_numbers<[1], [0], [0], [1], [0, 0, 1, 1], [], []>} : vector<1x128xf32>, vector<128x512xf32>, vector<1x512xf32> -> vector<1x512xf32>
    %377 = arith.addf %375, %376 : vector<1x512xf32>
    %378 = vector.extract_strided_slice %373 {offsets = [0, 0], sizes = [1, 128], strides = [1, 1]} : vector<1x512xf32> to vector<1x128xf32>
    %379 = arith.negf %378 : vector<1x128xf32>
    %380 = math.exp %379 : vector<1x128xf32>
    %cst_134 = arith.constant 1.000000e+00 : f32
    %381 = vector.broadcast %cst_134 : f32 to vector<1x128xf32>
    %382 = arith.addf %381, %380 : vector<1x128xf32>
    %383 = arith.divf %381, %382 : vector<1x128xf32>
    %384 = vector.extract_strided_slice %373 {offsets = [0, 128], sizes = [1, 128], strides = [1, 1]} : vector<1x512xf32> to vector<1x128xf32>
    %385 = arith.negf %384 : vector<1x128xf32>
    %386 = math.exp %385 : vector<1x128xf32>
    %cst_135 = arith.constant 1.000000e+00 : f32
    %387 = vector.broadcast %cst_135 : f32 to vector<1x128xf32>
    %388 = arith.addf %387, %386 : vector<1x128xf32>
    %389 = arith.divf %387, %388 : vector<1x128xf32>
    %390 = vector.extract_strided_slice %373 {offsets = [0, 256], sizes = [1, 128], strides = [1, 1]} : vector<1x512xf32> to vector<1x128xf32>
    %391 = math.tanh %390 : vector<1x128xf32>
    %392 = vector.extract_strided_slice %373 {offsets = [0, 384], sizes = [1, 128], strides = [1, 1]} : vector<1x512xf32> to vector<1x128xf32>
    %393 = arith.negf %392 : vector<1x128xf32>
    %394 = math.exp %393 : vector<1x128xf32>
    %cst_136 = arith.constant 1.000000e+00 : f32
    %395 = vector.broadcast %cst_136 : f32 to vector<1x128xf32>
    %396 = arith.addf %395, %394 : vector<1x128xf32>
    %397 = arith.divf %395, %396 : vector<1x128xf32>
    %398 = arith.mulf %389, %338 : vector<1x128xf32>
    %399 = arith.mulf %383, %391 : vector<1x128xf32>
    %400 = arith.addf %398, %399 : vector<1x128xf32>
    %401 = math.tanh %400 : vector<1x128xf32>
    %402 = arith.mulf %397, %401 : vector<1x128xf32>
    %403 = vector.extract_strided_slice %377 {offsets = [0, 0], sizes = [1, 128], strides = [1, 1]} : vector<1x512xf32> to vector<1x128xf32>
    %404 = arith.negf %403 : vector<1x128xf32>
    %405 = math.exp %404 : vector<1x128xf32>
    %cst_137 = arith.constant 1.000000e+00 : f32
    %406 = vector.broadcast %cst_137 : f32 to vector<1x128xf32>
    %407 = arith.addf %406, %405 : vector<1x128xf32>
    %408 = arith.divf %406, %407 : vector<1x128xf32>
    %409 = vector.extract_strided_slice %377 {offsets = [0, 128], sizes = [1, 128], strides = [1, 1]} : vector<1x512xf32> to vector<1x128xf32>
    %410 = arith.negf %409 : vector<1x128xf32>
    %411 = math.exp %410 : vector<1x128xf32>
    %cst_138 = arith.constant 1.000000e+00 : f32
    %412 = vector.broadcast %cst_138 : f32 to vector<1x128xf32>
    %413 = arith.addf %412, %411 : vector<1x128xf32>
    %414 = arith.divf %412, %413 : vector<1x128xf32>
    %415 = vector.extract_strided_slice %377 {offsets = [0, 256], sizes = [1, 128], strides = [1, 1]} : vector<1x512xf32> to vector<1x128xf32>
    %416 = math.tanh %415 : vector<1x128xf32>
    %417 = vector.extract_strided_slice %377 {offsets = [0, 384], sizes = [1, 128], strides = [1, 1]} : vector<1x512xf32> to vector<1x128xf32>
    %418 = arith.negf %417 : vector<1x128xf32>
    %419 = math.exp %418 : vector<1x128xf32>
    %cst_139 = arith.constant 1.000000e+00 : f32
    %420 = vector.broadcast %cst_139 : f32 to vector<1x128xf32>
    %421 = arith.addf %420, %419 : vector<1x128xf32>
    %422 = arith.divf %420, %421 : vector<1x128xf32>
    %423 = arith.mulf %414, %363 : vector<1x128xf32>
    %424 = arith.mulf %408, %416 : vector<1x128xf32>
    %425 = arith.addf %423, %424 : vector<1x128xf32>
    %426 = math.tanh %425 : vector<1x128xf32>
    %427 = arith.mulf %422, %426 : vector<1x128xf32>
    %428 = vector.shape_cast %402 : vector<1x128xf32> to vector<1x1x128xf32>
    %c0_140 = arith.constant 0 : index
    %c5_141 = arith.constant 5 : index
    %c0_142 = arith.constant 0 : index
    %429 = vector.load %arg9[%c0_140, %c5_141, %c0_142] : memref<1x16x256xf32, #tpu.memory_space<vmem>>, vector<1x1x128xf32>
    tpu.vector_store %arg9[%c0_140, %c5_141, %c0_142], %428 {strides = array<i32>} : memref<1x16x256xf32, #tpu.memory_space<vmem>>, vector<1x1x128xf32>,
    %430 = vector.shape_cast %427 : vector<1x128xf32> to vector<1x1x128xf32>
    %c0_143 = arith.constant 0 : index
    %c5_144 = arith.constant 5 : index
    %c128_145 = arith.constant 128 : index
    %431 = vector.load %arg9[%c0_143, %c5_144, %c128_145] : memref<1x16x256xf32, #tpu.memory_space<vmem>>, vector<1x1x128xf32>
    tpu.vector_store %arg9[%c0_143, %c5_144, %c128_145], %430 {strides = array<i32>} : memref<1x16x256xf32, #tpu.memory_space<vmem>>, vector<1x1x128xf32>,
    %c0_146 = arith.constant 0 : index
    %c6_147 = arith.constant 6 : index
    %c0_148 = arith.constant 0 : index
    %432 = vector.load %arg10[%c0_146, %c6_147, %c0_148] : memref<1x16x512xf32, #tpu.memory_space<vmem>>, vector<1x1x512xf32>
    %433 = vector.shape_cast %432 : vector<1x1x512xf32> to vector<1x512xf32>
    %cst_149 = arith.constant dense<0.000000e+00> : vector<1x512xf32>
    %434 = tpu.matmul %402, %54, %cst_149 {dimension_numbers = #tpu.dot_dimension_numbers<[1], [0], [0], [1], [0, 0, 1, 1], [], []>} : vector<1x128xf32>, vector<128x512xf32>, vector<1x512xf32> -> vector<1x512xf32>
    %435 = arith.addf %433, %434 : vector<1x512xf32>
    %c0_150 = arith.constant 0 : index
    %c4_151 = arith.constant 4 : index
    %c0_152 = arith.constant 0 : index
    %436 = vector.load %arg11[%c0_150, %c4_151, %c0_152] : memref<1x16x512xf32, #tpu.memory_space<vmem>>, vector<1x1x512xf32>
    %437 = vector.shape_cast %436 : vector<1x1x512xf32> to vector<1x512xf32>
    %cst_153 = arith.constant dense<0.000000e+00> : vector<1x512xf32>
    %438 = tpu.matmul %427, %55, %cst_153 {dimension_numbers = #tpu.dot_dimension_numbers<[1], [0], [0], [1], [0, 0, 1, 1], [], []>} : vector<1x128xf32>, vector<128x512xf32>, vector<1x512xf32> -> vector<1x512xf32>
    %439 = arith.addf %437, %438 : vector<1x512xf32>
    %440 = vector.extract_strided_slice %435 {offsets = [0, 0], sizes = [1, 128], strides = [1, 1]} : vector<1x512xf32> to vector<1x128xf32>
    %441 = arith.negf %440 : vector<1x128xf32>
    %442 = math.exp %441 : vector<1x128xf32>
    %cst_154 = arith.constant 1.000000e+00 : f32
    %443 = vector.broadcast %cst_154 : f32 to vector<1x128xf32>
    %444 = arith.addf %443, %442 : vector<1x128xf32>
    %445 = arith.divf %443, %444 : vector<1x128xf32>
    %446 = vector.extract_strided_slice %435 {offsets = [0, 128], sizes = [1, 128], strides = [1, 1]} : vector<1x512xf32> to vector<1x128xf32>
    %447 = arith.negf %446 : vector<1x128xf32>
    %448 = math.exp %447 : vector<1x128xf32>
    %cst_155 = arith.constant 1.000000e+00 : f32
    %449 = vector.broadcast %cst_155 : f32 to vector<1x128xf32>
    %450 = arith.addf %449, %448 : vector<1x128xf32>
    %451 = arith.divf %449, %450 : vector<1x128xf32>
    %452 = vector.extract_strided_slice %435 {offsets = [0, 256], sizes = [1, 128], strides = [1, 1]} : vector<1x512xf32> to vector<1x128xf32>
    %453 = math.tanh %452 : vector<1x128xf32>
    %454 = vector.extract_strided_slice %435 {offsets = [0, 384], sizes = [1, 128], strides = [1, 1]} : vector<1x512xf32> to vector<1x128xf32>
    %455 = arith.negf %454 : vector<1x128xf32>
    %456 = math.exp %455 : vector<1x128xf32>
    %cst_156 = arith.constant 1.000000e+00 : f32
    %457 = vector.broadcast %cst_156 : f32 to vector<1x128xf32>
    %458 = arith.addf %457, %456 : vector<1x128xf32>
    %459 = arith.divf %457, %458 : vector<1x128xf32>
    %460 = arith.mulf %451, %400 : vector<1x128xf32>
    %461 = arith.mulf %445, %453 : vector<1x128xf32>
    %462 = arith.addf %460, %461 : vector<1x128xf32>
    %463 = math.tanh %462 : vector<1x128xf32>
    %464 = arith.mulf %459, %463 : vector<1x128xf32>
    %465 = vector.extract_strided_slice %439 {offsets = [0, 0], sizes = [1, 128], strides = [1, 1]} : vector<1x512xf32> to vector<1x128xf32>
    %466 = arith.negf %465 : vector<1x128xf32>
    %467 = math.exp %466 : vector<1x128xf32>
    %cst_157 = arith.constant 1.000000e+00 : f32
    %468 = vector.broadcast %cst_157 : f32 to vector<1x128xf32>
    %469 = arith.addf %468, %467 : vector<1x128xf32>
    %470 = arith.divf %468, %469 : vector<1x128xf32>
    %471 = vector.extract_strided_slice %439 {offsets = [0, 128], sizes = [1, 128], strides = [1, 1]} : vector<1x512xf32> to vector<1x128xf32>
    %472 = arith.negf %471 : vector<1x128xf32>
    %473 = math.exp %472 : vector<1x128xf32>
    %cst_158 = arith.constant 1.000000e+00 : f32
    %474 = vector.broadcast %cst_158 : f32 to vector<1x128xf32>
    %475 = arith.addf %474, %473 : vector<1x128xf32>
    %476 = arith.divf %474, %475 : vector<1x128xf32>
    %477 = vector.extract_strided_slice %439 {offsets = [0, 256], sizes = [1, 128], strides = [1, 1]} : vector<1x512xf32> to vector<1x128xf32>
    %478 = math.tanh %477 : vector<1x128xf32>
    %479 = vector.extract_strided_slice %439 {offsets = [0, 384], sizes = [1, 128], strides = [1, 1]} : vector<1x512xf32> to vector<1x128xf32>
    %480 = arith.negf %479 : vector<1x128xf32>
    %481 = math.exp %480 : vector<1x128xf32>
    %cst_159 = arith.constant 1.000000e+00 : f32
    %482 = vector.broadcast %cst_159 : f32 to vector<1x128xf32>
    %483 = arith.addf %482, %481 : vector<1x128xf32>
    %484 = arith.divf %482, %483 : vector<1x128xf32>
    %485 = arith.mulf %476, %425 : vector<1x128xf32>
    %486 = arith.mulf %470, %478 : vector<1x128xf32>
    %487 = arith.addf %485, %486 : vector<1x128xf32>
    %488 = math.tanh %487 : vector<1x128xf32>
    %489 = arith.mulf %484, %488 : vector<1x128xf32>
    %490 = vector.shape_cast %464 : vector<1x128xf32> to vector<1x1x128xf32>
    %c0_160 = arith.constant 0 : index
    %c6_161 = arith.constant 6 : index
    %c0_162 = arith.constant 0 : index
    %491 = vector.load %arg9[%c0_160, %c6_161, %c0_162] : memref<1x16x256xf32, #tpu.memory_space<vmem>>, vector<1x1x128xf32>
    tpu.vector_store %arg9[%c0_160, %c6_161, %c0_162], %490 {strides = array<i32>} : memref<1x16x256xf32, #tpu.memory_space<vmem>>, vector<1x1x128xf32>,
    %492 = vector.shape_cast %489 : vector<1x128xf32> to vector<1x1x128xf32>
    %c0_163 = arith.constant 0 : index
    %c4_164 = arith.constant 4 : index
    %c128_165 = arith.constant 128 : index
    %493 = vector.load %arg9[%c0_163, %c4_164, %c128_165] : memref<1x16x256xf32, #tpu.memory_space<vmem>>, vector<1x1x128xf32>
    tpu.vector_store %arg9[%c0_163, %c4_164, %c128_165], %492 {strides = array<i32>} : memref<1x16x256xf32, #tpu.memory_space<vmem>>, vector<1x1x128xf32>,
    %c0_166 = arith.constant 0 : index
    %c7_167 = arith.constant 7 : index
    %c0_168 = arith.constant 0 : index
    %494 = vector.load %arg10[%c0_166, %c7_167, %c0_168] : memref<1x16x512xf32, #tpu.memory_space<vmem>>, vector<1x1x512xf32>
    %495 = vector.shape_cast %494 : vector<1x1x512xf32> to vector<1x512xf32>
    %cst_169 = arith.constant dense<0.000000e+00> : vector<1x512xf32>
    %496 = tpu.matmul %464, %54, %cst_169 {dimension_numbers = #tpu.dot_dimension_numbers<[1], [0], [0], [1], [0, 0, 1, 1], [], []>} : vector<1x128xf32>, vector<128x512xf32>, vector<1x512xf32> -> vector<1x512xf32>
    %497 = arith.addf %495, %496 : vector<1x512xf32>
    %c0_170 = arith.constant 0 : index
    %c3_171 = arith.constant 3 : index
    %c0_172 = arith.constant 0 : index
    %498 = vector.load %arg11[%c0_170, %c3_171, %c0_172] : memref<1x16x512xf32, #tpu.memory_space<vmem>>, vector<1x1x512xf32>
    %499 = vector.shape_cast %498 : vector<1x1x512xf32> to vector<1x512xf32>
    %cst_173 = arith.constant dense<0.000000e+00> : vector<1x512xf32>
    %500 = tpu.matmul %489, %55, %cst_173 {dimension_numbers = #tpu.dot_dimension_numbers<[1], [0], [0], [1], [0, 0, 1, 1], [], []>} : vector<1x128xf32>, vector<128x512xf32>, vector<1x512xf32> -> vector<1x512xf32>
    %501 = arith.addf %499, %500 : vector<1x512xf32>
    %502 = vector.extract_strided_slice %497 {offsets = [0, 0], sizes = [1, 128], strides = [1, 1]} : vector<1x512xf32> to vector<1x128xf32>
    %503 = arith.negf %502 : vector<1x128xf32>
    %504 = math.exp %503 : vector<1x128xf32>
    %cst_174 = arith.constant 1.000000e+00 : f32
    %505 = vector.broadcast %cst_174 : f32 to vector<1x128xf32>
    %506 = arith.addf %505, %504 : vector<1x128xf32>
    %507 = arith.divf %505, %506 : vector<1x128xf32>
    %508 = vector.extract_strided_slice %497 {offsets = [0, 128], sizes = [1, 128], strides = [1, 1]} : vector<1x512xf32> to vector<1x128xf32>
    %509 = arith.negf %508 : vector<1x128xf32>
    %510 = math.exp %509 : vector<1x128xf32>
    %cst_175 = arith.constant 1.000000e+00 : f32
    %511 = vector.broadcast %cst_175 : f32 to vector<1x128xf32>
    %512 = arith.addf %511, %510 : vector<1x128xf32>
    %513 = arith.divf %511, %512 : vector<1x128xf32>
    %514 = vector.extract_strided_slice %497 {offsets = [0, 256], sizes = [1, 128], strides = [1, 1]} : vector<1x512xf32> to vector<1x128xf32>
    %515 = math.tanh %514 : vector<1x128xf32>
    %516 = vector.extract_strided_slice %497 {offsets = [0, 384], sizes = [1, 128], strides = [1, 1]} : vector<1x512xf32> to vector<1x128xf32>
    %517 = arith.negf %516 : vector<1x128xf32>
    %518 = math.exp %517 : vector<1x128xf32>
    %cst_176 = arith.constant 1.000000e+00 : f32
    %519 = vector.broadcast %cst_176 : f32 to vector<1x128xf32>
    %520 = arith.addf %519, %518 : vector<1x128xf32>
    %521 = arith.divf %519, %520 : vector<1x128xf32>
    %522 = arith.mulf %513, %462 : vector<1x128xf32>
    %523 = arith.mulf %507, %515 : vector<1x128xf32>
    %524 = arith.addf %522, %523 : vector<1x128xf32>
    %525 = math.tanh %524 : vector<1x128xf32>
    %526 = arith.mulf %521, %525 : vector<1x128xf32>
    %527 = vector.extract_strided_slice %501 {offsets = [0, 0], sizes = [1, 128], strides = [1, 1]} : vector<1x512xf32> to vector<1x128xf32>
    %528 = arith.negf %527 : vector<1x128xf32>
    %529 = math.exp %528 : vector<1x128xf32>
    %cst_177 = arith.constant 1.000000e+00 : f32
    %530 = vector.broadcast %cst_177 : f32 to vector<1x128xf32>
    %531 = arith.addf %530, %529 : vector<1x128xf32>
    %532 = arith.divf %530, %531 : vector<1x128xf32>
    %533 = vector.extract_strided_slice %501 {offsets = [0, 128], sizes = [1, 128], strides = [1, 1]} : vector<1x512xf32> to vector<1x128xf32>
    %534 = arith.negf %533 : vector<1x128xf32>
    %535 = math.exp %534 : vector<1x128xf32>
    %cst_178 = arith.constant 1.000000e+00 : f32
    %536 = vector.broadcast %cst_178 : f32 to vector<1x128xf32>
    %537 = arith.addf %536, %535 : vector<1x128xf32>
    %538 = arith.divf %536, %537 : vector<1x128xf32>
    %539 = vector.extract_strided_slice %501 {offsets = [0, 256], sizes = [1, 128], strides = [1, 1]} : vector<1x512xf32> to vector<1x128xf32>
    %540 = math.tanh %539 : vector<1x128xf32>
    %541 = vector.extract_strided_slice %501 {offsets = [0, 384], sizes = [1, 128], strides = [1, 1]} : vector<1x512xf32> to vector<1x128xf32>
    %542 = arith.negf %541 : vector<1x128xf32>
    %543 = math.exp %542 : vector<1x128xf32>
    %cst_179 = arith.constant 1.000000e+00 : f32
    %544 = vector.broadcast %cst_179 : f32 to vector<1x128xf32>
    %545 = arith.addf %544, %543 : vector<1x128xf32>
    %546 = arith.divf %544, %545 : vector<1x128xf32>
    %547 = arith.mulf %538, %487 : vector<1x128xf32>
    %548 = arith.mulf %532, %540 : vector<1x128xf32>
    %549 = arith.addf %547, %548 : vector<1x128xf32>
    %550 = math.tanh %549 : vector<1x128xf32>
    %551 = arith.mulf %546, %550 : vector<1x128xf32>
    %552 = vector.shape_cast %526 : vector<1x128xf32> to vector<1x1x128xf32>
    %c0_180 = arith.constant 0 : index
    %c7_181 = arith.constant 7 : index
    %c0_182 = arith.constant 0 : index
    %553 = vector.load %arg9[%c0_180, %c7_181, %c0_182] : memref<1x16x256xf32, #tpu.memory_space<vmem>>, vector<1x1x128xf32>
    tpu.vector_store %arg9[%c0_180, %c7_181, %c0_182], %552 {strides = array<i32>} : memref<1x16x256xf32, #tpu.memory_space<vmem>>, vector<1x1x128xf32>,
    %554 = vector.shape_cast %551 : vector<1x128xf32> to vector<1x1x128xf32>
    %c0_183 = arith.constant 0 : index
    %c3_184 = arith.constant 3 : index
    %c128_185 = arith.constant 128 : index
    %555 = vector.load %arg9[%c0_183, %c3_184, %c128_185] : memref<1x16x256xf32, #tpu.memory_space<vmem>>, vector<1x1x128xf32>
    tpu.vector_store %arg9[%c0_183, %c3_184, %c128_185], %554 {strides = array<i32>} : memref<1x16x256xf32, #tpu.memory_space<vmem>>, vector<1x1x128xf32>,
    %c0_186 = arith.constant 0 : index
    %c8_187 = arith.constant 8 : index
    %c0_188 = arith.constant 0 : index
    %556 = vector.load %arg10[%c0_186, %c8_187, %c0_188] : memref<1x16x512xf32, #tpu.memory_space<vmem>>, vector<1x1x512xf32>
    %557 = vector.shape_cast %556 : vector<1x1x512xf32> to vector<1x512xf32>
    %cst_189 = arith.constant dense<0.000000e+00> : vector<1x512xf32>
    %558 = tpu.matmul %526, %54, %cst_189 {dimension_numbers = #tpu.dot_dimension_numbers<[1], [0], [0], [1], [0, 0, 1, 1], [], []>} : vector<1x128xf32>, vector<128x512xf32>, vector<1x512xf32> -> vector<1x512xf32>
    %559 = arith.addf %557, %558 : vector<1x512xf32>
    %c0_190 = arith.constant 0 : index
    %c2_191 = arith.constant 2 : index
    %c0_192 = arith.constant 0 : index
    %560 = vector.load %arg11[%c0_190, %c2_191, %c0_192] : memref<1x16x512xf32, #tpu.memory_space<vmem>>, vector<1x1x512xf32>
    %561 = vector.shape_cast %560 : vector<1x1x512xf32> to vector<1x512xf32>
    %cst_193 = arith.constant dense<0.000000e+00> : vector<1x512xf32>
    %562 = tpu.matmul %551, %55, %cst_193 {dimension_numbers = #tpu.dot_dimension_numbers<[1], [0], [0], [1], [0, 0, 1, 1], [], []>} : vector<1x128xf32>, vector<128x512xf32>, vector<1x512xf32> -> vector<1x512xf32>
    %563 = arith.addf %561, %562 : vector<1x512xf32>
    %564 = vector.extract_strided_slice %559 {offsets = [0, 0], sizes = [1, 128], strides = [1, 1]} : vector<1x512xf32> to vector<1x128xf32>
    %565 = arith.negf %564 : vector<1x128xf32>
    %566 = math.exp %565 : vector<1x128xf32>
    %cst_194 = arith.constant 1.000000e+00 : f32
    %567 = vector.broadcast %cst_194 : f32 to vector<1x128xf32>
    %568 = arith.addf %567, %566 : vector<1x128xf32>
    %569 = arith.divf %567, %568 : vector<1x128xf32>
    %570 = vector.extract_strided_slice %559 {offsets = [0, 128], sizes = [1, 128], strides = [1, 1]} : vector<1x512xf32> to vector<1x128xf32>
    %571 = arith.negf %570 : vector<1x128xf32>
    %572 = math.exp %571 : vector<1x128xf32>
    %cst_195 = arith.constant 1.000000e+00 : f32
    %573 = vector.broadcast %cst_195 : f32 to vector<1x128xf32>
    %574 = arith.addf %573, %572 : vector<1x128xf32>
    %575 = arith.divf %573, %574 : vector<1x128xf32>
    %576 = vector.extract_strided_slice %559 {offsets = [0, 256], sizes = [1, 128], strides = [1, 1]} : vector<1x512xf32> to vector<1x128xf32>
    %577 = math.tanh %576 : vector<1x128xf32>
    %578 = vector.extract_strided_slice %559 {offsets = [0, 384], sizes = [1, 128], strides = [1, 1]} : vector<1x512xf32> to vector<1x128xf32>
    %579 = arith.negf %578 : vector<1x128xf32>
    %580 = math.exp %579 : vector<1x128xf32>
    %cst_196 = arith.constant 1.000000e+00 : f32
    %581 = vector.broadcast %cst_196 : f32 to vector<1x128xf32>
    %582 = arith.addf %581, %580 : vector<1x128xf32>
    %583 = arith.divf %581, %582 : vector<1x128xf32>
    %584 = arith.mulf %575, %524 : vector<1x128xf32>
    %585 = arith.mulf %569, %577 : vector<1x128xf32>
    %586 = arith.addf %584, %585 : vector<1x128xf32>
    %587 = math.tanh %586 : vector<1x128xf32>
    %588 = arith.mulf %583, %587 : vector<1x128xf32>
    %589 = vector.extract_strided_slice %563 {offsets = [0, 0], sizes = [1, 128], strides = [1, 1]} : vector<1x512xf32> to vector<1x128xf32>
    %590 = arith.negf %589 : vector<1x128xf32>
    %591 = math.exp %590 : vector<1x128xf32>
    %cst_197 = arith.constant 1.000000e+00 : f32
    %592 = vector.broadcast %cst_197 : f32 to vector<1x128xf32>
    %593 = arith.addf %592, %591 : vector<1x128xf32>
    %594 = arith.divf %592, %593 : vector<1x128xf32>
    %595 = vector.extract_strided_slice %563 {offsets = [0, 128], sizes = [1, 128], strides = [1, 1]} : vector<1x512xf32> to vector<1x128xf32>
    %596 = arith.negf %595 : vector<1x128xf32>
    %597 = math.exp %596 : vector<1x128xf32>
    %cst_198 = arith.constant 1.000000e+00 : f32
    %598 = vector.broadcast %cst_198 : f32 to vector<1x128xf32>
    %599 = arith.addf %598, %597 : vector<1x128xf32>
    %600 = arith.divf %598, %599 : vector<1x128xf32>
    %601 = vector.extract_strided_slice %563 {offsets = [0, 256], sizes = [1, 128], strides = [1, 1]} : vector<1x512xf32> to vector<1x128xf32>
    %602 = math.tanh %601 : vector<1x128xf32>
    %603 = vector.extract_strided_slice %563 {offsets = [0, 384], sizes = [1, 128], strides = [1, 1]} : vector<1x512xf32> to vector<1x128xf32>
    %604 = arith.negf %603 : vector<1x128xf32>
    %605 = math.exp %604 : vector<1x128xf32>
    %cst_199 = arith.constant 1.000000e+00 : f32
    %606 = vector.broadcast %cst_199 : f32 to vector<1x128xf32>
    %607 = arith.addf %606, %605 : vector<1x128xf32>
    %608 = arith.divf %606, %607 : vector<1x128xf32>
    %609 = arith.mulf %600, %549 : vector<1x128xf32>
    %610 = arith.mulf %594, %602 : vector<1x128xf32>
    %611 = arith.addf %609, %610 : vector<1x128xf32>
    %612 = math.tanh %611 : vector<1x128xf32>
    %613 = arith.mulf %608, %612 : vector<1x128xf32>
    %614 = vector.shape_cast %588 : vector<1x128xf32> to vector<1x1x128xf32>
    %c0_200 = arith.constant 0 : index
    %c8_201 = arith.constant 8 : index
    %c0_202 = arith.constant 0 : index
    %615 = vector.load %arg9[%c0_200, %c8_201, %c0_202] : memref<1x16x256xf32, #tpu.memory_space<vmem>>, vector<1x1x128xf32>
    tpu.vector_store %arg9[%c0_200, %c8_201, %c0_202], %614 {strides = array<i32>} : memref<1x16x256xf32, #tpu.memory_space<vmem>>, vector<1x1x128xf32>,
    %616 = vector.shape_cast %613 : vector<1x128xf32> to vector<1x1x128xf32>
    %c0_203 = arith.constant 0 : index
    %c2_204 = arith.constant 2 : index
    %c128_205 = arith.constant 128 : index
    %617 = vector.load %arg9[%c0_203, %c2_204, %c128_205] : memref<1x16x256xf32, #tpu.memory_space<vmem>>, vector<1x1x128xf32>
    tpu.vector_store %arg9[%c0_203, %c2_204, %c128_205], %616 {strides = array<i32>} : memref<1x16x256xf32, #tpu.memory_space<vmem>>, vector<1x1x128xf32>,
    %c0_206 = arith.constant 0 : index
    %c9_207 = arith.constant 9 : index
    %c0_208 = arith.constant 0 : index
    %618 = vector.load %arg10[%c0_206, %c9_207, %c0_208] : memref<1x16x512xf32, #tpu.memory_space<vmem>>, vector<1x1x512xf32>
    %619 = vector.shape_cast %618 : vector<1x1x512xf32> to vector<1x512xf32>
    %cst_209 = arith.constant dense<0.000000e+00> : vector<1x512xf32>
    %620 = tpu.matmul %588, %54, %cst_209 {dimension_numbers = #tpu.dot_dimension_numbers<[1], [0], [0], [1], [0, 0, 1, 1], [], []>} : vector<1x128xf32>, vector<128x512xf32>, vector<1x512xf32> -> vector<1x512xf32>
    %621 = arith.addf %619, %620 : vector<1x512xf32>
    %c0_210 = arith.constant 0 : index
    %c1_211 = arith.constant 1 : index
    %c0_212 = arith.constant 0 : index
    %622 = vector.load %arg11[%c0_210, %c1_211, %c0_212] : memref<1x16x512xf32, #tpu.memory_space<vmem>>, vector<1x1x512xf32>
    %623 = vector.shape_cast %622 : vector<1x1x512xf32> to vector<1x512xf32>
    %cst_213 = arith.constant dense<0.000000e+00> : vector<1x512xf32>
    %624 = tpu.matmul %613, %55, %cst_213 {dimension_numbers = #tpu.dot_dimension_numbers<[1], [0], [0], [1], [0, 0, 1, 1], [], []>} : vector<1x128xf32>, vector<128x512xf32>, vector<1x512xf32> -> vector<1x512xf32>
    %625 = arith.addf %623, %624 : vector<1x512xf32>
    %626 = vector.extract_strided_slice %621 {offsets = [0, 0], sizes = [1, 128], strides = [1, 1]} : vector<1x512xf32> to vector<1x128xf32>
    %627 = arith.negf %626 : vector<1x128xf32>
    %628 = math.exp %627 : vector<1x128xf32>
    %cst_214 = arith.constant 1.000000e+00 : f32
    %629 = vector.broadcast %cst_214 : f32 to vector<1x128xf32>
    %630 = arith.addf %629, %628 : vector<1x128xf32>
    %631 = arith.divf %629, %630 : vector<1x128xf32>
    %632 = vector.extract_strided_slice %621 {offsets = [0, 128], sizes = [1, 128], strides = [1, 1]} : vector<1x512xf32> to vector<1x128xf32>
    %633 = arith.negf %632 : vector<1x128xf32>
    %634 = math.exp %633 : vector<1x128xf32>
    %cst_215 = arith.constant 1.000000e+00 : f32
    %635 = vector.broadcast %cst_215 : f32 to vector<1x128xf32>
    %636 = arith.addf %635, %634 : vector<1x128xf32>
    %637 = arith.divf %635, %636 : vector<1x128xf32>
    %638 = vector.extract_strided_slice %621 {offsets = [0, 256], sizes = [1, 128], strides = [1, 1]} : vector<1x512xf32> to vector<1x128xf32>
    %639 = math.tanh %638 : vector<1x128xf32>
    %640 = vector.extract_strided_slice %621 {offsets = [0, 384], sizes = [1, 128], strides = [1, 1]} : vector<1x512xf32> to vector<1x128xf32>
    %641 = arith.negf %640 : vector<1x128xf32>
    %642 = math.exp %641 : vector<1x128xf32>
    %cst_216 = arith.constant 1.000000e+00 : f32
    %643 = vector.broadcast %cst_216 : f32 to vector<1x128xf32>
    %644 = arith.addf %643, %642 : vector<1x128xf32>
    %645 = arith.divf %643, %644 : vector<1x128xf32>
    %646 = arith.mulf %637, %586 : vector<1x128xf32>
    %647 = arith.mulf %631, %639 : vector<1x128xf32>
    %648 = arith.addf %646, %647 : vector<1x128xf32>
    %649 = math.tanh %648 : vector<1x128xf32>
    %650 = arith.mulf %645, %649 : vector<1x128xf32>
    %651 = vector.extract_strided_slice %625 {offsets = [0, 0], sizes = [1, 128], strides = [1, 1]} : vector<1x512xf32> to vector<1x128xf32>
    %652 = arith.negf %651 : vector<1x128xf32>
    %653 = math.exp %652 : vector<1x128xf32>
    %cst_217 = arith.constant 1.000000e+00 : f32
    %654 = vector.broadcast %cst_217 : f32 to vector<1x128xf32>
    %655 = arith.addf %654, %653 : vector<1x128xf32>
    %656 = arith.divf %654, %655 : vector<1x128xf32>
    %657 = vector.extract_strided_slice %625 {offsets = [0, 128], sizes = [1, 128], strides = [1, 1]} : vector<1x512xf32> to vector<1x128xf32>
    %658 = arith.negf %657 : vector<1x128xf32>
    %659 = math.exp %658 : vector<1x128xf32>
    %cst_218 = arith.constant 1.000000e+00 : f32
    %660 = vector.broadcast %cst_218 : f32 to vector<1x128xf32>
    %661 = arith.addf %660, %659 : vector<1x128xf32>
    %662 = arith.divf %660, %661 : vector<1x128xf32>
    %663 = vector.extract_strided_slice %625 {offsets = [0, 256], sizes = [1, 128], strides = [1, 1]} : vector<1x512xf32> to vector<1x128xf32>
    %664 = math.tanh %663 : vector<1x128xf32>
    %665 = vector.extract_strided_slice %625 {offsets = [0, 384], sizes = [1, 128], strides = [1, 1]} : vector<1x512xf32> to vector<1x128xf32>
    %666 = arith.negf %665 : vector<1x128xf32>
    %667 = math.exp %666 : vector<1x128xf32>
    %cst_219 = arith.constant 1.000000e+00 : f32
    %668 = vector.broadcast %cst_219 : f32 to vector<1x128xf32>
    %669 = arith.addf %668, %667 : vector<1x128xf32>
    %670 = arith.divf %668, %669 : vector<1x128xf32>
    %671 = arith.mulf %662, %611 : vector<1x128xf32>
    %672 = arith.mulf %656, %664 : vector<1x128xf32>
    %673 = arith.addf %671, %672 : vector<1x128xf32>
    %674 = math.tanh %673 : vector<1x128xf32>
    %675 = arith.mulf %670, %674 : vector<1x128xf32>
    %676 = vector.shape_cast %650 : vector<1x128xf32> to vector<1x1x128xf32>
    %c0_220 = arith.constant 0 : index
    %c9_221 = arith.constant 9 : index
    %c0_222 = arith.constant 0 : index
    %677 = vector.load %arg9[%c0_220, %c9_221, %c0_222] : memref<1x16x256xf32, #tpu.memory_space<vmem>>, vector<1x1x128xf32>
    tpu.vector_store %arg9[%c0_220, %c9_221, %c0_222], %676 {strides = array<i32>} : memref<1x16x256xf32, #tpu.memory_space<vmem>>, vector<1x1x128xf32>,
    %678 = vector.shape_cast %675 : vector<1x128xf32> to vector<1x1x128xf32>
    %c0_223 = arith.constant 0 : index
    %c1_224 = arith.constant 1 : index
    %c128_225 = arith.constant 128 : index
    %679 = vector.load %arg9[%c0_223, %c1_224, %c128_225] : memref<1x16x256xf32, #tpu.memory_space<vmem>>, vector<1x1x128xf32>
    tpu.vector_store %arg9[%c0_223, %c1_224, %c128_225], %678 {strides = array<i32>} : memref<1x16x256xf32, #tpu.memory_space<vmem>>, vector<1x1x128xf32>,
    %c0_226 = arith.constant 0 : index
    %c10_227 = arith.constant 10 : index
    %c0_228 = arith.constant 0 : index
    %680 = vector.load %arg10[%c0_226, %c10_227, %c0_228] : memref<1x16x512xf32, #tpu.memory_space<vmem>>, vector<1x1x512xf32>
    %681 = vector.shape_cast %680 : vector<1x1x512xf32> to vector<1x512xf32>
    %cst_229 = arith.constant dense<0.000000e+00> : vector<1x512xf32>
    %682 = tpu.matmul %650, %54, %cst_229 {dimension_numbers = #tpu.dot_dimension_numbers<[1], [0], [0], [1], [0, 0, 1, 1], [], []>} : vector<1x128xf32>, vector<128x512xf32>, vector<1x512xf32> -> vector<1x512xf32>
    %683 = arith.addf %681, %682 : vector<1x512xf32>
    %c0_230 = arith.constant 0 : index
    %c0_231 = arith.constant 0 : index
    %c0_232 = arith.constant 0 : index
    %684 = vector.load %arg11[%c0_230, %c0_231, %c0_232] : memref<1x16x512xf32, #tpu.memory_space<vmem>>, vector<1x1x512xf32>
    %685 = vector.shape_cast %684 : vector<1x1x512xf32> to vector<1x512xf32>
    %cst_233 = arith.constant dense<0.000000e+00> : vector<1x512xf32>
    %686 = tpu.matmul %675, %55, %cst_233 {dimension_numbers = #tpu.dot_dimension_numbers<[1], [0], [0], [1], [0, 0, 1, 1], [], []>} : vector<1x128xf32>, vector<128x512xf32>, vector<1x512xf32> -> vector<1x512xf32>
    %687 = arith.addf %685, %686 : vector<1x512xf32>
    %688 = vector.extract_strided_slice %683 {offsets = [0, 0], sizes = [1, 128], strides = [1, 1]} : vector<1x512xf32> to vector<1x128xf32>
    %689 = arith.negf %688 : vector<1x128xf32>
    %690 = math.exp %689 : vector<1x128xf32>
    %cst_234 = arith.constant 1.000000e+00 : f32
    %691 = vector.broadcast %cst_234 : f32 to vector<1x128xf32>
    %692 = arith.addf %691, %690 : vector<1x128xf32>
    %693 = arith.divf %691, %692 : vector<1x128xf32>
    %694 = vector.extract_strided_slice %683 {offsets = [0, 128], sizes = [1, 128], strides = [1, 1]} : vector<1x512xf32> to vector<1x128xf32>
    %695 = arith.negf %694 : vector<1x128xf32>
    %696 = math.exp %695 : vector<1x128xf32>
    %cst_235 = arith.constant 1.000000e+00 : f32
    %697 = vector.broadcast %cst_235 : f32 to vector<1x128xf32>
    %698 = arith.addf %697, %696 : vector<1x128xf32>
    %699 = arith.divf %697, %698 : vector<1x128xf32>
    %700 = vector.extract_strided_slice %683 {offsets = [0, 256], sizes = [1, 128], strides = [1, 1]} : vector<1x512xf32> to vector<1x128xf32>
    %701 = math.tanh %700 : vector<1x128xf32>
    %702 = vector.extract_strided_slice %683 {offsets = [0, 384], sizes = [1, 128], strides = [1, 1]} : vector<1x512xf32> to vector<1x128xf32>
    %703 = arith.negf %702 : vector<1x128xf32>
    %704 = math.exp %703 : vector<1x128xf32>
    %cst_236 = arith.constant 1.000000e+00 : f32
    %705 = vector.broadcast %cst_236 : f32 to vector<1x128xf32>
    %706 = arith.addf %705, %704 : vector<1x128xf32>
    %707 = arith.divf %705, %706 : vector<1x128xf32>
    %708 = arith.mulf %699, %648 : vector<1x128xf32>
    %709 = arith.mulf %693, %701 : vector<1x128xf32>
    %710 = arith.addf %708, %709 : vector<1x128xf32>
    %711 = math.tanh %710 : vector<1x128xf32>
    %712 = arith.mulf %707, %711 : vector<1x128xf32>
    %713 = vector.extract_strided_slice %687 {offsets = [0, 0], sizes = [1, 128], strides = [1, 1]} : vector<1x512xf32> to vector<1x128xf32>
    %714 = arith.negf %713 : vector<1x128xf32>
    %715 = math.exp %714 : vector<1x128xf32>
    %cst_237 = arith.constant 1.000000e+00 : f32
    %716 = vector.broadcast %cst_237 : f32 to vector<1x128xf32>
    %717 = arith.addf %716, %715 : vector<1x128xf32>
    %718 = arith.divf %716, %717 : vector<1x128xf32>
    %719 = vector.extract_strided_slice %687 {offsets = [0, 128], sizes = [1, 128], strides = [1, 1]} : vector<1x512xf32> to vector<1x128xf32>
    %720 = arith.negf %719 : vector<1x128xf32>
    %721 = math.exp %720 : vector<1x128xf32>
    %cst_238 = arith.constant 1.000000e+00 : f32
    %722 = vector.broadcast %cst_238 : f32 to vector<1x128xf32>
    %723 = arith.addf %722, %721 : vector<1x128xf32>
    %724 = arith.divf %722, %723 : vector<1x128xf32>
    %725 = vector.extract_strided_slice %687 {offsets = [0, 256], sizes = [1, 128], strides = [1, 1]} : vector<1x512xf32> to vector<1x128xf32>
    %726 = math.tanh %725 : vector<1x128xf32>
    %727 = vector.extract_strided_slice %687 {offsets = [0, 384], sizes = [1, 128], strides = [1, 1]} : vector<1x512xf32> to vector<1x128xf32>
    %728 = arith.negf %727 : vector<1x128xf32>
    %729 = math.exp %728 : vector<1x128xf32>
    %cst_239 = arith.constant 1.000000e+00 : f32
    %730 = vector.broadcast %cst_239 : f32 to vector<1x128xf32>
    %731 = arith.addf %730, %729 : vector<1x128xf32>
    %732 = arith.divf %730, %731 : vector<1x128xf32>
    %733 = arith.mulf %724, %673 : vector<1x128xf32>
    %734 = arith.mulf %718, %726 : vector<1x128xf32>
    %735 = arith.addf %733, %734 : vector<1x128xf32>
    %736 = math.tanh %735 : vector<1x128xf32>
    %737 = arith.mulf %732, %736 : vector<1x128xf32>
    %738 = vector.shape_cast %712 : vector<1x128xf32> to vector<1x1x128xf32>
    %c0_240 = arith.constant 0 : index
    %c10_241 = arith.constant 10 : index
    %c0_242 = arith.constant 0 : index
    %739 = vector.load %arg9[%c0_240, %c10_241, %c0_242] : memref<1x16x256xf32, #tpu.memory_space<vmem>>, vector<1x1x128xf32>
    tpu.vector_store %arg9[%c0_240, %c10_241, %c0_242], %738 {strides = array<i32>} : memref<1x16x256xf32, #tpu.memory_space<vmem>>, vector<1x1x128xf32>,
    %740 = vector.shape_cast %737 : vector<1x128xf32> to vector<1x1x128xf32>
    %c0_243 = arith.constant 0 : index
    %c0_244 = arith.constant 0 : index
    %c128_245 = arith.constant 128 : index
    %741 = vector.load %arg9[%c0_243, %c0_244, %c128_245] : memref<1x16x256xf32, #tpu.memory_space<vmem>>, vector<1x1x128xf32>
    tpu.vector_store %arg9[%c0_243, %c0_244, %c128_245], %740 {strides = array<i32>} : memref<1x16x256xf32, #tpu.memory_space<vmem>>, vector<1x1x128xf32>,
    return
  }
  func.func @transform_0(%arg0: i32) -> (i32, i32, i32) {
    %c0_i32 = arith.constant 0 : i32
    %c0_i32_0 = arith.constant 0 : i32
    %c0_i32_1 = arith.constant 0 : i32
    return %arg0, %c0_i32, %c0_i32_0 : i32, i32, i32
  }
  func.func @transform_1(%arg0: i32) -> (i32, i32, i32) {
    %c0_i32 = arith.constant 0 : i32
    %c0_i32_0 = arith.constant 0 : i32
    %c0_i32_1 = arith.constant 0 : i32
    return %arg0, %c0_i32, %c0_i32_0 : i32, i32, i32
  }
  func.func @transform_2(%arg0: i32) -> (i32, i32) {
    %c0_i32 = arith.constant 0 : i32
    %c0_i32_0 = arith.constant 0 : i32
    %c0_i32_1 = arith.constant 0 : i32
    return %c0_i32, %c0_i32_0 : i32, i32
  }
  func.func @transform_3(%arg0: i32) -> (i32, i32) {
    %c0_i32 = arith.constant 0 : i32
    %c0_i32_0 = arith.constant 0 : i32
    %c0_i32_1 = arith.constant 0 : i32
    return %c0_i32, %c0_i32_0 : i32, i32
  }
  func.func @transform_4(%arg0: i32) -> (i32, i32) {
    %c0_i32 = arith.constant 0 : i32
    %c0_i32_0 = arith.constant 0 : i32
    %c0_i32_1 = arith.constant 0 : i32
    return %c0_i32, %c0_i32_0 : i32, i32
  }
  func.func @transform_5(%arg0: i32) -> (i32, i32) {
    %c0_i32 = arith.constant 0 : i32
    %c0_i32_0 = arith.constant 0 : i32
    %c0_i32_1 = arith.constant 0 : i32
    return %c0_i32, %c0_i32_0 : i32, i32
  }
  func.func @transform_6(%arg0: i32) -> (i32, i32) {
    %c0_i32 = arith.constant 0 : i32
    %c0_i32_0 = arith.constant 0 : i32
    %c0_i32_1 = arith.constant 0 : i32
    return %c0_i32, %c0_i32_0 : i32, i32
  }
  func.func @transform_7(%arg0: i32) -> (i32, i32) {
    %c0_i32 = arith.constant 0 : i32
    %c0_i32_0 = arith.constant 0 : i32
    %c0_i32_1 = arith.constant 0 : i32
    return %c0_i32, %c0_i32_0 : i32, i32
  }
  func.func @transform_8(%arg0: i32) -> (i32, i32, i32) {
    %c0_i32 = arith.constant 0 : i32
    %c0_i32_0 = arith.constant 0 : i32
    %c0_i32_1 = arith.constant 0 : i32
    return %arg0, %c0_i32, %c0_i32_0 : i32, i32, i32
  }
}

</mosaic_0001>

<llo_original>
// kernel: co_attention_forward.1
$region0: #{co_attention_forward.1}
  #allocation0 [shape = 'u32[]', space=smem, size = 0x4, offset = 0x4, fixed_abs, tag = 'smem constant byte address 0x4 - core index']
  #allocation1 [shape = 'u32[144,128]{1,0:T(1,128)}', space=vmem, size = 0x12000, scoped, tag = 'internal scratch']
  #allocation2 [shape = 'f32[1,16,512]{2,1,0:T(8,128)}', space=vmem, size = 0x8000, scoped, tag = 'scratch operand']
  #allocation3 [shape = 'f32[1,16,512]{2,1,0:T(8,128)}', space=vmem, size = 0x8000, scoped, tag = 'scratch operand']
  %s0 = inlined_call_operand.vmem [shape: f32[2,16,128], index: 0, kind: input, shape index: {}]
  %s1 = inlined_call_operand.vmem [shape: f32[2,16,128], index: 1, kind: input, shape index: {}]
  %s2 = inlined_call_operand.vmem [shape: f32[384,512], index: 2, kind: input, shape index: {}]
  %s3 = inlined_call_operand.vmem [shape: f32[128,512], index: 3, kind: input, shape index: {}]
  %s4 = inlined_call_operand.vmem [shape: f32[1,512], index: 4, kind: input, shape index: {}]
  %s5 = inlined_call_operand.vmem [shape: f32[384,512], index: 5, kind: input, shape index: {}]
  %s6 = inlined_call_operand.vmem [shape: f32[128,512], index: 6, kind: input, shape index: {}]
  %s7 = inlined_call_operand.vmem [shape: f32[1,512], index: 7, kind: input, shape index: {}]
  %s8 = inlined_call_operand.vmem [shape: f32[2,16,256], index: 8, kind: output, shape index: {}]
  %s9 = sld [smem:[#allocation0]]
  $region65: #{co_attention_forward.1} parent=0
    _
  %s11 = ssub.s32 1, %s9
  %s12 = scalar_select 0, %s11, %s9
  loop: start=0, step=1, limit=4
  $region2: #{co_attention_forward.1} parent=0 // loop_pre_header
    _
  $region3: #{co_attention_forward.1} parent=0 // loop_header
    %s14 = sphi 0, %s18
    %p15 = scmp.ge.s32.totalorder %s14, 4
    %s24 = sphi 0, %s26
    %s27 = sphi 0, %s24
    %s28 = sphi 0, %s27
    %s44 = sphi 0, %s28
    %s50 = sphi 0, %s52
    %s53 = sphi 0, %s50
    %s54 = sphi 0, %s53
    %s70 = sphi 0, %s54
    %s74 = sphi 0, %s74
    %s76 = sphi 0, %s74
    %s77 = sphi 0, %s76
    %s91 = sphi 0, %s77
    %s95 = sphi 0, %s95
    %s97 = sphi 0, %s95
    %s98 = sphi 0, %s97
    %s112 = sphi 0, %s98
    %s116 = sphi 0, %s116
    %s118 = sphi 0, %s116
    %s119 = sphi 0, %s118
    %s133 = sphi 0, %s119
    %s137 = sphi 0, %s137
    %s139 = sphi 0, %s137
    %s140 = sphi 0, %s139
    %s154 = sphi 0, %s140
    %s158 = sphi 0, %s158
    %s160 = sphi 0, %s158
    %s161 = sphi 0, %s160
    %s175 = sphi 0, %s161
    %s179 = sphi 0, %s179
    %s181 = sphi 0, %s179
    %s182 = sphi 0, %s181
    %s196 = sphi 0, %s182
    %s202 = sphi 0, %s204
    %s205 = sphi 0, %s202
    %s206 = sphi 0, %s205
    %s222 = sphi 0, %s206
  $region4: #{co_attention_forward.1} parent=0 // loop_header_branch
    %17 = sbr.rel (%p15) target = $region8
  $region5: #{co_attention_forward.1} parent=0 // loop_body
    %s19 = ssub.s32 %s14, 1
    %s20 = ssub.s32 %s14, 2
    %s21 = sadd.s32 %s14, 1
    %s22 = ssub.s32 %s14, %s21
    %p23 = scmp.eq.s32.totalorder %s22, 0
    %s25 = sadd.s32 %s24, 1
    %s26 = scalar_select %p23, %s24, %s25
    %p29 = pneg %p23
    %p30 = scmp.eq.s32.totalorder %s14, 1
    %p31 = por %p29, %p30
    %p32 = scmp.ne.s32.totalorder %s24, %s27
    %p33 = scmp.eq.s32.totalorder %s14, 0
    %p34 = por %p32, %p33
    %p35 = scmp.ne.s32.totalorder %s24, %s27
    %p36 = scmp.eq.s32.totalorder %s19, 1
    %p37 = por %p35, %p36
    %p38 = scmp.ne.s32.totalorder %s27, %s28
    %p39 = scmp.eq.s32.totalorder %s19, 0
    %p40 = por %p38, %p39
    %p41 = scmp.ne.s32.totalorder %s27, %s28
    %p42 = scmp.eq.s32.totalorder %s20, 1
    %p43 = por %p41, %p42
    %p45 = scmp.ne.s32.totalorder %s28, %s44
    %p46 = scmp.eq.s32.totalorder %s20, 0
    %p47 = por %p45, %p46
    %s48 = ssub.s32 %s14, %s21
    %p49 = scmp.eq.s32.totalorder %s48, 0
    %s51 = sadd.s32 %s50, 1
    %s52 = scalar_select %p49, %s50, %s51
    %p55 = pneg %p49
    %p56 = scmp.eq.s32.totalorder %s14, 1
    %p57 = por %p55, %p56
    %p58 = scmp.ne.s32.totalorder %s50, %s53
    %p59 = scmp.eq.s32.totalorder %s14, 0
    %p60 = por %p58, %p59
    %p61 = scmp.ne.s32.totalorder %s50, %s53
    %p62 = scmp.eq.s32.totalorder %s19, 1
    %p63 = por %p61, %p62
    %p64 = scmp.ne.s32.totalorder %s53, %s54
    %p65 = scmp.eq.s32.totalorder %s19, 0
    %p66 = por %p64, %p65
    %p67 = scmp.ne.s32.totalorder %s53, %s54
    %p68 = scmp.eq.s32.totalorder %s20, 1
    %p69 = por %p67, %p68
    %p71 = scmp.ne.s32.totalorder %s54, %s70
    %p72 = scmp.eq.s32.totalorder %s20, 0
    %p73 = por %p71, %p72
    %s75 = sadd.s32 %s74, 1
    %p78 = scmp.eq.s32.totalorder %s14, 1
    %p79 = scmp.ne.s32.totalorder %s74, %s76
    %p80 = scmp.eq.s32.totalorder %s14, 0
    %p81 = por %p79, %p80
    %p82 = scmp.ne.s32.totalorder %s74, %s76
    %p83 = scmp.eq.s32.totalorder %s19, 1
    %p84 = por %p82, %p83
    %p85 = scmp.ne.s32.totalorder %s76, %s77
    %p86 = scmp.eq.s32.totalorder %s19, 0
    %p87 = por %p85, %p86
    %p88 = scmp.ne.s32.totalorder %s76, %s77
    %p89 = scmp.eq.s32.totalorder %s20, 1
    %p90 = por %p88, %p89
    %p92 = scmp.ne.s32.totalorder %s77, %s91
    %p93 = scmp.eq.s32.totalorder %s20, 0
    %p94 = por %p92, %p93
    %s96 = sadd.s32 %s95, 1
    %p99 = scmp.eq.s32.totalorder %s14, 1
    %p100 = scmp.ne.s32.totalorder %s95, %s97
    %p101 = scmp.eq.s32.totalorder %s14, 0
    %p102 = por %p100, %p101
    %p103 = scmp.ne.s32.totalorder %s95, %s97
    %p104 = scmp.eq.s32.totalorder %s19, 1
    %p105 = por %p103, %p104
    %p106 = scmp.ne.s32.totalorder %s97, %s98
    %p107 = scmp.eq.s32.totalorder %s19, 0
    %p108 = por %p106, %p107
    %p109 = scmp.ne.s32.totalorder %s97, %s98
    %p110 = scmp.eq.s32.totalorder %s20, 1
    %p111 = por %p109, %p110
    %p113 = scmp.ne.s32.totalorder %s98, %s112
    %p114 = scmp.eq.s32.totalorder %s20, 0
    %p115 = por %p113, %p114
    %s117 = sadd.s32 %s116, 1
    %p120 = scmp.eq.s32.totalorder %s14, 1
    %p121 = scmp.ne.s32.totalorder %s116, %s118
    %p122 = scmp.eq.s32.totalorder %s14, 0
    %p123 = por %p121, %p122
    %p124 = scmp.ne.s32.totalorder %s116, %s118
    %p125 = scmp.eq.s32.totalorder %s19, 1
    %p126 = por %p124, %p125
    %p127 = scmp.ne.s32.totalorder %s118, %s119
    %p128 = scmp.eq.s32.totalorder %s19, 0
    %p129 = por %p127, %p128
    %p130 = scmp.ne.s32.totalorder %s118, %s119
    %p131 = scmp.eq.s32.totalorder %s20, 1
    %p132 = por %p130, %p131
    %p134 = scmp.ne.s32.totalorder %s119, %s133
    %p135 = scmp.eq.s32.totalorder %s20, 0
    %p136 = por %p134, %p135
    %s138 = sadd.s32 %s137, 1
    %p141 = scmp.eq.s32.totalorder %s14, 1
    %p142 = scmp.ne.s32.totalorder %s137, %s139
    %p143 = scmp.eq.s32.totalorder %s14, 0
    %p144 = por %p142, %p143
    %p145 = scmp.ne.s32.totalorder %s137, %s139
    %p146 = scmp.eq.s32.totalorder %s19, 1
    %p147 = por %p145, %p146
    %p148 = scmp.ne.s32.totalorder %s139, %s140
    %p149 = scmp.eq.s32.totalorder %s19, 0
    %p150 = por %p148, %p149
    %p151 = scmp.ne.s32.totalorder %s139, %s140
    %p152 = scmp.eq.s32.totalorder %s20, 1
    %p153 = por %p151, %p152
    %p155 = scmp.ne.s32.totalorder %s140, %s154
    %p156 = scmp.eq.s32.totalorder %s20, 0
    %p157 = por %p155, %p156
    %s159 = sadd.s32 %s158, 1
    %p162 = scmp.eq.s32.totalorder %s14, 1
    %p163 = scmp.ne.s32.totalorder %s158, %s160
    %p164 = scmp.eq.s32.totalorder %s14, 0
    %p165 = por %p163, %p164
    %p166 = scmp.ne.s32.totalorder %s158, %s160
    %p167 = scmp.eq.s32.totalorder %s19, 1
    %p168 = por %p166, %p167
    %p169 = scmp.ne.s32.totalorder %s160, %s161
    %p170 = scmp.eq.s32.totalorder %s19, 0
    %p171 = por %p169, %p170
    %p172 = scmp.ne.s32.totalorder %s160, %s161
    %p173 = scmp.eq.s32.totalorder %s20, 1
    %p174 = por %p172, %p173
    %p176 = scmp.ne.s32.totalorder %s161, %s175
    %p177 = scmp.eq.s32.totalorder %s20, 0
    %p178 = por %p176, %p177
    %s180 = sadd.s32 %s179, 1
    %p183 = scmp.eq.s32.totalorder %s14, 1
    %p184 = scmp.ne.s32.totalorder %s179, %s181
    %p185 = scmp.eq.s32.totalorder %s14, 0
    %p186 = por %p184, %p185
    %p187 = scmp.ne.s32.totalorder %s179, %s181
    %p188 = scmp.eq.s32.totalorder %s19, 1
    %p189 = por %p187, %p188
    %p190 = scmp.ne.s32.totalorder %s181, %s182
    %p191 = scmp.eq.s32.totalorder %s19, 0
    %p192 = por %p190, %p191
    %p193 = scmp.ne.s32.totalorder %s181, %s182
    %p194 = scmp.eq.s32.totalorder %s20, 1
    %p195 = por %p193, %p194
    %p197 = scmp.ne.s32.totalorder %s182, %s196
    %p198 = scmp.eq.s32.totalorder %s20, 0
    %p199 = por %p197, %p198
    %s200 = ssub.s32 %s14, %s21
    %p201 = scmp.eq.s32.totalorder %s200, 0
    %s203 = sadd.s32 %s202, 1
    %s204 = scalar_select %p201, %s202, %s203
    %p207 = pneg %p201
    %p208 = scmp.eq.s32.totalorder %s14, 1
    %p209 = por %p207, %p208
    %p210 = scmp.ne.s32.totalorder %s202, %s205
    %p211 = scmp.eq.s32.totalorder %s14, 0
    %p212 = por %p210, %p211
    %p213 = scmp.ne.s32.totalorder %s202, %s205
    %p214 = scmp.eq.s32.totalorder %s19, 1
    %p215 = por %p213, %p214
    %p216 = scmp.ne.s32.totalorder %s205, %s206
    %p217 = scmp.eq.s32.totalorder %s19, 0
    %p218 = por %p216, %p217
    %p219 = scmp.ne.s32.totalorder %s205, %s206
    %p220 = scmp.eq.s32.totalorder %s20, 1
    %p221 = por %p219, %p220
    %p223 = scmp.ne.s32.totalorder %s206, %s222
    %p224 = scmp.eq.s32.totalorder %s20, 0
    %p225 = por %p223, %p224
    %p226 = scmp.le.s32.totalorder 1, %s14
    %p227 = scmp.lt.s32.totalorder %s14, 3
    %p228 = pnand %p226, %p227
    %p229 = pneg %p228
    // Predicated region
    $region9: #{co_attention_forward.1} parent=5 // pred_check
      _
    $region10: #{co_attention_forward.1} parent=5 // pred_check_branch
      %231 = sbr.rel (%p228) target = $region12
    $region11: #{co_attention_forward.1} parent=5 // pred_region
      %s232 = ssub.s32 %s14, 1
      // Predicated region
      $region13: #{co_attention_forward.1} parent=11 // pred_check
        %p233 = pneg %p87
      $region14: #{co_attention_forward.1} parent=11 // pred_check_branch
        %235 = sbr.rel (%p233) target = $region16
      $region15: #{co_attention_forward.1} parent=11 // pred_region
        _
      $region16: #{co_attention_forward.1} parent=11 // pred_fallthru
        _
      // Predicated region
      $region17: #{co_attention_forward.1} parent=11 // pred_check
        %p236 = pneg %p108
      $region18: #{co_attention_forward.1} parent=11 // pred_check_branch
        %238 = sbr.rel (%p236) target = $region20
      $region19: #{co_attention_forward.1} parent=11 // pred_region
        _
      $region20: #{co_attention_forward.1} parent=11 // pred_fallthru
        _
      // Predicated region
      $region21: #{co_attention_forward.1} parent=11 // pred_check
        %p239 = pneg %p129
      $region22: #{co_attention_forward.1} parent=11 // pred_check_branch
        %241 = sbr.rel (%p239) target = $region24
      $region23: #{co_attention_forward.1} parent=11 // pred_region
        _
      $region24: #{co_attention_forward.1} parent=11 // pred_fallthru
        _
      // Predicated region
      $region25: #{co_attention_forward.1} parent=11 // pred_check
        %p242 = pneg %p150
      $region26: #{co_attention_forward.1} parent=11 // pred_check_branch
        %244 = sbr.rel (%p242) target = $region28
      $region27: #{co_attention_forward.1} parent=11 // pred_region
        _
      $region28: #{co_attention_forward.1} parent=11 // pred_fallthru
        _
      // Predicated region
      $region29: #{co_attention_forward.1} parent=11 // pred_check
        %p245 = pneg %p171
      $region30: #{co_attention_forward.1} parent=11 // pred_check_branch
        %247 = sbr.rel (%p245) target = $region32
      $region31: #{co_attention_forward.1} parent=11 // pred_region
        _
      $region32: #{co_attention_forward.1} parent=11 // pred_fallthru
        _
      // Predicated region
      $region33: #{co_attention_forward.1} parent=11 // pred_check
        %p248 = pneg %p192
      $region34: #{co_attention_forward.1} parent=11 // pred_check_branch
        %250 = sbr.rel (%p248) target = $region36
      $region35: #{co_attention_forward.1} parent=11 // pred_region
        _
      $region36: #{co_attention_forward.1} parent=11 // pred_fallthru
        _
    $region12: #{co_attention_forward.1} parent=5 // pred_fallthru
      _
    %p251 = scmp.lt.s32.totalorder %s14, 2
    // Predicated region
    $region37: #{co_attention_forward.1} parent=5 // pred_check
      %p252 = pneg %p251
    $region38: #{co_attention_forward.1} parent=5 // pred_check_branch
      %254 = sbr.rel (%p252) target = $region40
    $region39: #{co_attention_forward.1} parent=5 // pred_region
      // Predicated region
      $region41: #{co_attention_forward.1} parent=39 // pred_check
        %p255 = pneg %p34
      $region42: #{co_attention_forward.1} parent=39 // pred_check_branch
        %257 = sbr.rel (%p255) target = $region44
      $region43: #{co_attention_forward.1} parent=39 // pred_region
        %p258 = scmp.lt.s32.totalorder %s14, 1
        %s259 = scalar_select %p258, %s14, 1
        %s260 = smul.addr %s259, 2
        %s261 = smul.addr %s260, 8
        %s262 = scalar_lea.vmem %s0, %s261
      $region44: #{co_attention_forward.1} parent=39 // pred_fallthru
        _
      // Predicated region
      $region45: #{co_attention_forward.1} parent=39 // pred_check
        %p263 = pneg %p60
      $region46: #{co_attention_forward.1} parent=39 // pred_check_branch
        %265 = sbr.rel (%p263) target = $region48
      $region47: #{co_attention_forward.1} parent=39 // pred_region
        %p266 = scmp.lt.s32.totalorder %s14, 1
        %s267 = scalar_select %p266, %s14, 1
        %s268 = smul.addr %s267, 2
        %s269 = smul.addr %s268, 8
        %s270 = scalar_lea.vmem %s1, %s269
      $region48: #{co_attention_forward.1} parent=39 // pred_fallthru
        _
    $region40: #{co_attention_forward.1} parent=5 // pred_fallthru
      _
    %p271 = scmp.le.s32.totalorder 1, %s14
    %p272 = scmp.lt.s32.totalorder %s14, 3
    %p273 = pnand %p271, %p272
    %p274 = pneg %p273
    // Predicated region
    $region49: #{co_attention_forward.1} parent=5 // pred_check
      _
    $region50: #{co_attention_forward.1} parent=5 // pred_check_branch
      %276 = sbr.rel (%p273) target = $region52
    $region51: #{co_attention_forward.1} parent=5 // pred_region
      %s277 = ssub.s32 %s14, 1
      %p278 = scmp.lt.s32.totalorder %s19, 1
      %s279 = scalar_select %p278, %s19, 1
      %s280 = smul.addr %s279, 2
      %s281 = smul.addr %s280, 8
      %s282 = scalar_lea.vmem %s0, %s281
      %p283 = pneg %p40
      %p284 = pneg %p37
      %p285 = scmp.lt.s32.totalorder %s19, 1
      %s286 = scalar_select %p285, %s19, 1
      %s287 = smul.addr %s286, 2
      %s288 = smul.addr %s287, 8
      %s289 = scalar_lea.vmem %s1, %s288
      %p290 = pneg %p66
      %p291 = pneg %p63
      %p292 = pneg %p87
      %p293 = pneg %p84
      %p294 = pneg %p108
      %p295 = pneg %p105
      %p296 = pneg %p129
      %p297 = pneg %p126
      %p298 = pneg %p150
      %p299 = pneg %p147
      %p300 = pneg %p171
      %p301 = pneg %p168
      %p302 = pneg %p192
      %p303 = pneg %p189
      %p304 = pneg %p218
      %p305 = pneg %p215
      %p306 = scmp.lt.s32.totalorder %s19, 1
      %s307 = scalar_select %p306, %s19, 1
      %s308 = smul.addr %s307, 4
      %s309 = smul.addr %s308, 8
      %s310 = scalar_lea.vmem %s8, %s309
      %p311 = scmp.lt.s32.totalorder %s19, 1
      %s312 = scalar_select %p311, %s19, 1
      %s313 = smul.addr %s312, 2
      %s314 = smul.addr %s313, 8
      %s315 = scalar_lea.vmem %s0, %s314
      %p316 = scmp.lt.s32.totalorder %s19, 1
      %s317 = scalar_select %p316, %s19, 1
      %s318 = smul.addr %s317, 2
      %s319 = smul.addr %s318, 8
      %s320 = scalar_lea.vmem %s1, %s319
      %p321 = scmp.lt.s32.totalorder %s19, 1
      %s322 = scalar_select %p321, %s19, 1
      %s323 = smul.addr %s322, 4
      %s324 = smul.addr %s323, 8
      %s325 = scalar_lea.vmem %s8, %s324
      %v326 = vld [vmem:[%s315] sm:$0xff]
      %v327 = vld [vmem:[%s315 + $0x8] sm:$0xff]
      %v328 = vld [vmem:[%s320] sm:$0xff]
      %v329 = vld [vmem:[%s320 + $0x8] sm:$0xff]
      %330 = vmatprep.subr.mxu0 0.0
      %331 = vmatpush1.xpose.msra.mxu0 %v326
      %332 = vmatprep.subr.mxu0 0.0
      %333 = vmatpush1.xpose.msra.mxu0 %v327
      %334 = vmatprep.subr.mxu0 0.0
      %335 = vmatpush1.xpose.msra.mxu0 0.0
      %336 = vmatprep.subr.mxu0 0.0
      %337 = vmatpush1.xpose.msra.mxu0 0.0
      %338 = vmatprep.subr.mxu0 0.0
      %339 = vmatpush1.xpose.msra.mxu0 0.0
      %340 = vmatprep.subr.mxu0 0.0
      %341 = vmatpush1.xpose.msra.mxu0 0.0
      %342 = vmatprep.subr.mxu0 0.0
      %343 = vmatpush1.xpose.msra.mxu0 0.0
      %344 = vmatprep.subr.mxu0 0.0
      %345 = vmatpush1.xpose.msra.mxu0 0.0
      %346 = vmatprep.subr.mxu0 0.0
      %347 = vmatpush1.xpose.msra.mxu0 0.0
      %348 = vmatprep.subr.mxu0 0.0
      %349 = vmatpush1.xpose.msra.mxu0 0.0
      %350 = vmatprep.subr.mxu0 0.0
      %351 = vmatpush1.xpose.msra.mxu0 0.0
      %352 = vmatprep.subr.mxu0 0.0
      %353 = vmatpush1.xpose.msra.mxu0 0.0
      %354 = vmatprep.subr.mxu0 0.0
      %355 = vmatpush1.xpose.msra.mxu0 0.0
      %356 = vmatprep.subr.mxu0 0.0
      %357 = vmatpush1.xpose.msra.mxu0 0.0
      %358 = vmatprep.subr.mxu0 0.0
      %359 = vmatpush1.xpose.msra.mxu0 0.0
      %360 = vmatprep.subr.mxu0 0.0
      %361 = vmatpush1.xpose.msra.mxu0 0.0
      %362 = vmatprep.subr.mxu0 0.0
      %363 = vmatpush1.xpose.msra.mxu0 0.0
      %364 = vmatprep.subr.mxu0 0.0
      %365 = vmatpush1.xpose.msra.mxu0 0.0
      %366 = vmatprep.subr.mxu0 0.0
      %367 = vmatpush1.xpose.msra.mxu0 0.0
      %368 = vmatprep.subr.mxu0 0.0
      %369 = vmatpush1.xpose.msra.mxu0 0.0
      %370 = vmatprep.subr.mxu0 0.0
      %371 = vmatpush1.xpose.msra.mxu0 0.0
      %372 = vmatprep.subr.mxu0 0.0
      %373 = vmatpush1.xpose.msra.mxu0 0.0
      %374 = vmatprep.subr.mxu0 0.0
      %375 = vmatpush1.xpose.msra.mxu0 0.0
      %376 = vmatprep.subr.mxu0 0.0
      %377 = vmatpush1.xpose.msra.mxu0 0.0
      %378 = vmatprep.subr.mxu0 0.0
      %379 = vmatpush1.xpose.msra.mxu0 0.0
      %380 = vmatprep.subr.mxu0 0.0
      %381 = vmatpush1.xpose.msra.mxu0 0.0
      %382 = vmatprep.subr.mxu0 0.0
      %383 = vmatpush1.xpose.msra.mxu0 0.0
      %384 = vmatprep.subr.mxu0 0.0
      %385 = vmatpush1.xpose.msra.mxu0 0.0
      %386 = vmatprep.subr.mxu0 0.0
      %387 = vmatpush1.xpose.msra.mxu0 0.0
      %388 = vmatprep.subr.mxu0 0.0
      %389 = vmatpush1.xpose.msra.mxu0 0.0
      %390 = vmatprep.subr.mxu0 0.0
      %391 = vmatpush1.xpose.msra.mxu0 0.0
      %392 = vmatprep.subr.mxu0 0.0
      %393 = vmatpush1.xpose.msra.mxu0 0.0
      %394 = vmatprep.mubr.f32.mxu0 0.0
      %395 = vmatmul.mubr.f32.gmra.mrb[0].mxu0 %v328
      %v396 = vpop.f32.mrb[0].mxu0
      %v397 = vadd.f32 0.0, %v396
      %v398 = vpop.f32.mrb[0].mxu0
      %399 = vmatprep.mubr.f32.mxu0 0.0
      %400 = vmatmul.mubr.f32.gmra.mrb[0].mxu0 %v329
      %v401 = vpop.f32.mrb[0].mxu0
      %v402 = vadd.f32 0.0, %v401
      %v403 = vpop.f32.mrb[0].mxu0
      %404 = vdwg.mxu0
      %v405 = vlaneseq
      %v406 = vand.u32 %v405, 127
      %vm407 = vcmp.lt.s32.totalorder %v406, 9
      %v408 = vsel %vm407, %v397, -1e+30
      %v409 = vsel %vm407, %v402, -1e+30
      %v410 = vlaneseq
      %v411 = vshrl.u32 %v410, 7
      %v412 = vadd.s32 %v411, 8
      %vm413 = vcmp.lt.s32.totalorder %v411, 11
      %vm414 = vcmp.lt.s32.totalorder %v412, 11
      %v415 = vsel %vm413, %v397, -1e+30
      %v416 = vsel %vm414, %v402, -1e+30
      %vm417 = vcmask 130048
      %v418 = vsel %vm417, %v408, -inf
      %419 = vmax.xlane.f32.xlu0 %v418
      %v420 = vpop.xlane.xlu0 %419
      %v421 = vsel %vm417, %v409, -inf
      %422 = vmax.xlane.f32.xlu0 %v421
      %v423 = vpop.xlane.xlu0 %422
      %v424 = vsub.f32 %v408, %v420
      %v425 = vsub.f32 %v409, %v423
      %v426 = vmul.f32 %v424, 1.442695
      %v427 = vpow.pop %v426
      %v428 = vmul.f32 %v425, 1.442695
      %v429 = vpow.pop %v428
      %v430 = vsel %vm417, %v427, 0.0
      %431 = vadd.xlane.f32.xlu0 %v430
      %v432 = vpop.xlane.xlu0 %431
      %v433 = vsel %vm417, %v429, 0.0
      %434 = vadd.xlane.f32.xlu0 %v433
      %v435 = vpop.xlane.xlu0 %434
      %v436 = vrcp.pop %v432
      %v437 = vrcp.pop %v435
      %v438 = vmul.f32 %v427, %v436
      %v439 = vmul.f32 %v429, %v437
      %v440 = vsel %vm417, %v415, -inf
      %v441 = vsel %vm417, %v416, -inf
      %v442 = vmax.f32 %v440, %v441
      %v443 = vrot.slane %v442, 4
      %v444 = vmax.f32 %v442, %v443
      %v445 = vrot.slane %v444, 2
      %v446 = vmax.f32 %v444, %v445
      %v447 = vrot.slane %v446, 1
      %v448 = vmax.f32 %v446, %v447
      %v449 = vsub.f32 %v415, %v448
      %v450 = vsub.f32 %v416, %v448
      %v451 = vmul.f32 %v449, 1.442695
      %v452 = vpow.pop %v451
      %v453 = vmul.f32 %v450, 1.442695
      %v454 = vpow.pop %v453
      %v455 = vsel %vm417, %v452, 0.0
      %v456 = vsel %vm417, %v454, 0.0
      %v457 = vadd.f32 %v455, %v456
      %v458 = vrot.slane %v457, 4
      %v459 = vadd.f32 %v457, %v458
      %v460 = vrot.slane %v459, 2
      %v461 = vadd.f32 %v459, %v460
      %v462 = vrot.slane %v461, 1
      %v463 = vadd.f32 %v461, %v462
      %v464 = vrcp.pop %v463
      %v465 = vmul.f32 %v452, %v464
      %v466 = vmul.f32 %v454, %v464
      %467 = vxpose.xlu0.b32.start [1/16] %v438, 128
      %468 = vxpose.xlu0.b32.cont [2/16] %v439, 128
      %469 = vxpose.xlu0.b32.cont [3/16] 0.0, 128
      %470 = vxpose.xlu0.b32.cont [4/16] 0.0, 128
      %471 = vxpose.xlu0.b32.cont [5/16] 0.0, 128
      %472 = vxpose.xlu0.b32.cont [6/16] 0.0, 128
      %473 = vxpose.xlu0.b32.cont [7/16] 0.0, 128
      %474 = vxpose.xlu0.b32.cont [8/16] 0.0, 128
      %475 = vxpose.xlu0.b32.cont [9/16] 0.0, 128
      %476 = vxpose.xlu0.b32.cont [10/16] 0.0, 128
      %477 = vxpose.xlu0.b32.cont [11/16] 0.0, 128
      %478 = vxpose.xlu0.b32.cont [12/16] 0.0, 128
      %479 = vxpose.xlu0.b32.cont [13/16] 0.0, 128
      %480 = vxpose.xlu0.b32.cont [14/16] 0.0, 128
      %481 = vxpose.xlu0.b32.cont [15/16] 0.0, 128
      %482 = vxpose.xlu0.b32.end [16/16] 0.0, 128
      %v483 = vpop.trf.xlu0
      %v484 = vpop.trf.xlu0
      %v485 = vpop.trf.xlu0
      %v486 = vpop.trf.xlu0
      %v487 = vpop.trf.xlu0
      %v488 = vpop.trf.xlu0
      %v489 = vpop.trf.xlu0
      %v490 = vpop.trf.xlu0
      %v491 = vpop.trf.xlu0
      %v492 = vpop.trf.xlu0
      %v493 = vpop.trf.xlu0
      %v494 = vpop.trf.xlu0
      %v495 = vpop.trf.xlu0
      %v496 = vpop.trf.xlu0
      %v497 = vpop.trf.xlu0
      %v498 = vpop.trf.xlu0
      %v500 = vsel %vm417, %v483, 0
      %v503 = vsel %vm417, %v484, 0
      %505 = vmatprep.subr.mxu0 0.0
      %506 = vmatpush1.msra.mxu0 %v328
      %507 = vmatprep.subr.mxu0 0.0
      %508 = vmatpush1.msra.mxu0 %v329
      %509 = vmatprep.subr.mxu0 0.0
      %510 = vmatpush1.msra.mxu0 0.0
      %511 = vmatprep.subr.mxu0 0.0
      %512 = vmatpush1.msra.mxu0 0.0
      %513 = vmatprep.subr.mxu0 0.0
      %514 = vmatpush1.msra.mxu0 0.0
      %515 = vmatprep.subr.mxu0 0.0
      %516 = vmatpush1.msra.mxu0 0.0
      %517 = vmatprep.subr.mxu0 0.0
      %518 = vmatpush1.msra.mxu0 0.0
      %519 = vmatprep.subr.mxu0 0.0
      %520 = vmatpush1.msra.mxu0 0.0
      %521 = vmatprep.subr.mxu0 0.0
      %522 = vmatpush1.msra.mxu0 0.0
      %523 = vmatprep.subr.mxu0 0.0
      %524 = vmatpush1.msra.mxu0 0.0
      %525 = vmatprep.subr.mxu0 0.0
      %526 = vmatpush1.msra.mxu0 0.0
      %527 = vmatprep.subr.mxu0 0.0
      %528 = vmatpush1.msra.mxu0 0.0
      %529 = vmatprep.subr.mxu0 0.0
      %530 = vmatpush1.msra.mxu0 0.0
      %531 = vmatprep.subr.mxu0 0.0
      %532 = vmatpush1.msra.mxu0 0.0
      %533 = vmatprep.subr.mxu0 0.0
      %534 = vmatpush1.msra.mxu0 0.0
      %535 = vmatprep.subr.mxu0 0.0
      %536 = vmatpush1.msra.mxu0 0.0
      %537 = vmatprep.subr.mxu0 0.0
      %538 = vmatpush1.msra.mxu0 0.0
      %539 = vmatprep.subr.mxu0 0.0
      %540 = vmatpush1.msra.mxu0 0.0
      %541 = vmatprep.subr.mxu0 0.0
      %542 = vmatpush1.msra.mxu0 0.0
      %543 = vmatprep.subr.mxu0 0.0
      %544 = vmatpush1.msra.mxu0 0.0
      %545 = vmatprep.subr.mxu0 0.0
      %546 = vmatpush1.msra.mxu0 0.0
      %547 = vmatprep.subr.mxu0 0.0
      %548 = vmatpush1.msra.mxu0 0.0
      %549 = vmatprep.subr.mxu0 0.0
      %550 = vmatpush1.msra.mxu0 0.0
      %551 = vmatprep.subr.mxu0 0.0
      %552 = vmatpush1.msra.mxu0 0.0
      %553 = vmatprep.subr.mxu0 0.0
      %554 = vmatpush1.msra.mxu0 0.0
      %555 = vmatprep.subr.mxu0 0.0
      %556 = vmatpush1.msra.mxu0 0.0
      %557 = vmatprep.subr.mxu0 0.0
      %558 = vmatpush1.msra.mxu0 0.0
      %559 = vmatprep.subr.mxu0 0.0
      %560 = vmatpush1.msra.mxu0 0.0
      %561 = vmatprep.subr.mxu0 0.0
      %562 = vmatpush1.msra.mxu0 0.0
      %563 = vmatprep.subr.mxu0 0.0
      %564 = vmatpush1.msra.mxu0 0.0
      %565 = vmatprep.subr.mxu0 0.0
      %566 = vmatpush1.msra.mxu0 0.0
      %567 = vmatprep.subr.mxu0 0.0
      %568 = vmatpush1.msra.mxu0 0.0
      %569 = vmatprep.mubr.f32.mxu0 0.0
      %570 = vmatmul.mubr.f32.gmra.mrb[0].mxu0 %v500
      %v571 = vpop.f32.mrb[0].mxu0
      %v572 = vadd.f32 0.0, %v571
      %v573 = vpop.f32.mrb[0].mxu0
      %574 = vmatprep.mubr.f32.mxu0 0.0
      %575 = vmatmul.mubr.f32.gmra.mrb[0].mxu0 %v503
      %v576 = vpop.f32.mrb[0].mxu0
      %v577 = vadd.f32 0.0, %v576
      %v578 = vpop.f32.mrb[0].mxu0
      %579 = vdwg.mxu0
      %v581 = vsel %vm417, %v465, 0
      %v584 = vsel %vm417, %v466, 0
      %586 = vmatprep.subr.mxu0 %v572
      %587 = vmatpush1.msra.mxu0 %v326
      %588 = vmatprep.subr.mxu0 %v577
      %589 = vmatpush1.msra.mxu0 %v327
      %590 = vmatprep.subr.mxu0 0.0
      %591 = vmatpush1.msra.mxu0 0.0
      %592 = vmatprep.subr.mxu0 0.0
      %593 = vmatpush1.msra.mxu0 0.0
      %594 = vmatprep.subr.mxu0 0.0
      %595 = vmatpush1.msra.mxu0 0.0
      %596 = vmatprep.subr.mxu0 0.0
      %597 = vmatpush1.msra.mxu0 0.0
      %598 = vmatprep.subr.mxu0 0.0
      %599 = vmatpush1.msra.mxu0 0.0
      %600 = vmatprep.subr.mxu0 0.0
      %601 = vmatpush1.msra.mxu0 0.0
      %602 = vmatprep.subr.mxu0 0.0
      %603 = vmatpush1.msra.mxu0 0.0
      %604 = vmatprep.subr.mxu0 0.0
      %605 = vmatpush1.msra.mxu0 0.0
      %606 = vmatprep.subr.mxu0 0.0
      %607 = vmatpush1.msra.mxu0 0.0
      %608 = vmatprep.subr.mxu0 0.0
      %609 = vmatpush1.msra.mxu0 0.0
      %610 = vmatprep.subr.mxu0 0.0
      %611 = vmatpush1.msra.mxu0 0.0
      %612 = vmatprep.subr.mxu0 0.0
      %613 = vmatpush1.msra.mxu0 0.0
      %614 = vmatprep.subr.mxu0 0.0
      %615 = vmatpush1.msra.mxu0 0.0
      %616 = vmatprep.subr.mxu0 0.0
      %617 = vmatpush1.msra.mxu0 0.0
      %618 = vmatprep.subr.mxu0 0.0
      %619 = vmatpush1.msra.mxu0 0.0
      %620 = vmatprep.subr.mxu0 0.0
      %621 = vmatpush1.msra.mxu0 0.0
      %622 = vmatprep.subr.mxu0 0.0
      %623 = vmatpush1.msra.mxu0 0.0
      %624 = vmatprep.subr.mxu0 0.0
      %625 = vmatpush1.msra.mxu0 0.0
      %626 = vmatprep.subr.mxu0 0.0
      %627 = vmatpush1.msra.mxu0 0.0
      %628 = vmatprep.subr.mxu0 0.0
      %629 = vmatpush1.msra.mxu0 0.0
      %630 = vmatprep.subr.mxu0 0.0
      %631 = vmatpush1.msra.mxu0 0.0
      %632 = vmatprep.subr.mxu0 0.0
      %633 = vmatpush1.msra.mxu0 0.0
      %634 = vmatprep.subr.mxu0 0.0
      %635 = vmatpush1.msra.mxu0 0.0
      %636 = vmatprep.subr.mxu0 0.0
      %637 = vmatpush1.msra.mxu0 0.0
      %638 = vmatprep.subr.mxu0 0.0
      %639 = vmatpush1.msra.mxu0 0.0
      %640 = vmatprep.subr.mxu0 0.0
      %641 = vmatpush1.msra.mxu0 0.0
      %642 = vmatprep.subr.mxu0 0.0
      %643 = vmatpush1.msra.mxu0 0.0
      %644 = vmatprep.subr.mxu0 0.0
      %645 = vmatpush1.msra.mxu0 0.0
      %646 = vmatprep.subr.mxu0 0.0
      %647 = vmatpush1.msra.mxu0 0.0
      %648 = vmatprep.subr.mxu0 0.0
      %649 = vmatpush1.msra.mxu0 0.0
      %650 = vmatprep.mubr.f32.mxu0 0.0
      %651 = vmatmul.mubr.f32.gmra.mrb[0].mxu0 %v581
      %v652 = vpop.f32.mrb[0].mxu0
      %v653 = vadd.f32 0.0, %v652
      %v654 = vpop.f32.mrb[0].mxu0
      %v655 = vadd.f32 0.0, %v654
      %656 = vmatprep.mubr.f32.mxu0 0.0
      %657 = vmatmul.mubr.f32.gmra.mrb[0].mxu0 %v584
      %v658 = vpop.f32.mrb[0].mxu0
      %v659 = vadd.f32 0.0, %v658
      %v660 = vpop.f32.mrb[0].mxu0
      %v661 = vadd.f32 0.0, %v660
      %662 = vdwg.mxu0
      %v663 = vld [vmem:[%s2] sm:$0xff]
      %v664 = vld [vmem:[%s2 + $0x8] sm:$0xff]
      %v665 = vld [vmem:[%s2 + $0x10] sm:$0xff]
      %v666 = vld [vmem:[%s2 + $0x18] sm:$0xff]
      %v667 = vld [vmem:[%s2 + $0x20] sm:$0xff]
      %v668 = vld [vmem:[%s2 + $0x28] sm:$0xff]
      %v669 = vld [vmem:[%s2 + $0x30] sm:$0xff]
      %v670 = vld [vmem:[%s2 + $0x38] sm:$0xff]
      %v671 = vld [vmem:[%s2 + $0x40] sm:$0xff]
      %v672 = vld [vmem:[%s2 + $0x48] sm:$0xff]
      %v673 = vld [vmem:[%s2 + $0x50] sm:$0xff]
      %v674 = vld [vmem:[%s2 + $0x58] sm:$0xff]
      %v675 = vld [vmem:[%s2 + $0x60] sm:$0xff]
      %v676 = vld [vmem:[%s2 + $0x68] sm:$0xff]
      %v677 = vld [vmem:[%s2 + $0x70] sm:$0xff]
      %v678 = vld [vmem:[%s2 + $0x78] sm:$0xff]
      %v679 = vld [vmem:[%s2 + $0x80] sm:$0xff]
      %v680 = vld [vmem:[%s2 + $0x88] sm:$0xff]
      %v681 = vld [vmem:[%s2 + $0x90] sm:$0xff]
      %v682 = vld [vmem:[%s2 + $0x98] sm:$0xff]
      %v683 = vld [vmem:[%s2 + $0xa0] sm:$0xff]
      %v684 = vld [vmem:[%s2 + $0xa8] sm:$0xff]
      %v685 = vld [vmem:[%s2 + $0xb0] sm:$0xff]
      %v686 = vld [vmem:[%s2 + $0xb8] sm:$0xff]
      %v687 = vld [vmem:[%s2 + $0xc0] sm:$0xff]
      %v688 = vld [vmem:[%s2 + $0xc8] sm:$0xff]
      %v689 = vld [vmem:[%s2 + $0xd0] sm:$0xff]
      %v690 = vld [vmem:[%s2 + $0xd8] sm:$0xff]
      %v691 = vld [vmem:[%s2 + $0xe0] sm:$0xff]
      %v692 = vld [vmem:[%s2 + $0xe8] sm:$0xff]
      %v693 = vld [vmem:[%s2 + $0xf0] sm:$0xff]
      %v694 = vld [vmem:[%s2 + $0xf8] sm:$0xff]
      %v695 = vld [vmem:[%s2 + $0x100] sm:$0xff]
      %v696 = vld [vmem:[%s2 + $0x108] sm:$0xff]
      %v697 = vld [vmem:[%s2 + $0x110] sm:$0xff]
      %v698 = vld [vmem:[%s2 + $0x118] sm:$0xff]
      %v699 = vld [vmem:[%s2 + $0x120] sm:$0xff]
      %v700 = vld [vmem:[%s2 + $0x128] sm:$0xff]
      %v701 = vld [vmem:[%s2 + $0x130] sm:$0xff]
      %v702 = vld [vmem:[%s2 + $0x138] sm:$0xff]
      %v703 = vld [vmem:[%s2 + $0x140] sm:$0xff]
      %v704 = vld [vmem:[%s2 + $0x148] sm:$0xff]
      %v705 = vld [vmem:[%s2 + $0x150] sm:$0xff]
      %v706 = vld [vmem:[%s2 + $0x158] sm:$0xff]
      %v707 = vld [vmem:[%s2 + $0x160] sm:$0xff]
      %v708 = vld [vmem:[%s2 + $0x168] sm:$0xff]
      %v709 = vld [vmem:[%s2 + $0x170] sm:$0xff]
      %v710 = vld [vmem:[%s2 + $0x178] sm:$0xff]
      %v711 = vld [vmem:[%s2 + $0x180] sm:$0xff]
      %v712 = vld [vmem:[%s2 + $0x188] sm:$0xff]
      %v713 = vld [vmem:[%s2 + $0x190] sm:$0xff]
      %v714 = vld [vmem:[%s2 + $0x198] sm:$0xff]
      %v715 = vld [vmem:[%s2 + $0x1a0] sm:$0xff]
      %v716 = vld [vmem:[%s2 + $0x1a8] sm:$0xff]
      %v717 = vld [vmem:[%s2 + $0x1b0] sm:$0xff]
      %v718 = vld [vmem:[%s2 + $0x1b8] sm:$0xff]
      %v719 = vld [vmem:[%s2 + $0x1c0] sm:$0xff]
      %v720 = vld [vmem:[%s2 + $0x1c8] sm:$0xff]
      %v721 = vld [vmem:[%s2 + $0x1d0] sm:$0xff]
      %v722 = vld [vmem:[%s2 + $0x1d8] sm:$0xff]
      %v723 = vld [vmem:[%s2 + $0x1e0] sm:$0xff]
      %v724 = vld [vmem:[%s2 + $0x1e8] sm:$0xff]
      %v725 = vld [vmem:[%s2 + $0x1f0] sm:$0xff]
      %v726 = vld [vmem:[%s2 + $0x1f8] sm:$0xff]
      %v727 = vld [vmem:[%s2 + $0x200] sm:$0xff]
      %v728 = vld [vmem:[%s2 + $0x208] sm:$0xff]
      %v729 = vld [vmem:[%s2 + $0x210] sm:$0xff]
      %v730 = vld [vmem:[%s2 + $0x218] sm:$0xff]
      %v731 = vld [vmem:[%s2 + $0x220] sm:$0xff]
      %v732 = vld [vmem:[%s2 + $0x228] sm:$0xff]
      %v733 = vld [vmem:[%s2 + $0x230] sm:$0xff]
      %v734 = vld [vmem:[%s2 + $0x238] sm:$0xff]
      %v735 = vld [vmem:[%s2 + $0x240] sm:$0xff]
      %v736 = vld [vmem:[%s2 + $0x248] sm:$0xff]
      %v737 = vld [vmem:[%s2 + $0x250] sm:$0xff]
      %v738 = vld [vmem:[%s2 + $0x258] sm:$0xff]
      %v739 = vld [vmem:[%s2 + $0x260] sm:$0xff]
      %v740 = vld [vmem:[%s2 + $0x268] sm:$0xff]
      %v741 = vld [vmem:[%s2 + $0x270] sm:$0xff]
      %v742 = vld [vmem:[%s2 + $0x278] sm:$0xff]
      %v743 = vld [vmem:[%s2 + $0x280] sm:$0xff]
      %v744 = vld [vmem:[%s2 + $0x288] sm:$0xff]
      %v745 = vld [vmem:[%s2 + $0x290] sm:$0xff]
      %v746 = vld [vmem:[%s2 + $0x298] sm:$0xff]
      %v747 = vld [vmem:[%s2 + $0x2a0] sm:$0xff]
      %v748 = vld [vmem:[%s2 + $0x2a8] sm:$0xff]
      %v749 = vld [vmem:[%s2 + $0x2b0] sm:$0xff]
      %v750 = vld [vmem:[%s2 + $0x2b8] sm:$0xff]
      %v751 = vld [vmem:[%s2 + $0x2c0] sm:$0xff]
      %v752 = vld [vmem:[%s2 + $0x2c8] sm:$0xff]
      %v753 = vld [vmem:[%s2 + $0x2d0] sm:$0xff]
      %v754 = vld [vmem:[%s2 + $0x2d8] sm:$0xff]
      %v755 = vld [vmem:[%s2 + $0x2e0] sm:$0xff]
      %v756 = vld [vmem:[%s2 + $0x2e8] sm:$0xff]
      %v757 = vld [vmem:[%s2 + $0x2f0] sm:$0xff]
      %v758 = vld [vmem:[%s2 + $0x2f8] sm:$0xff]
      %v759 = vld [vmem:[%s2 + $0x300] sm:$0xff]
      %v760 = vld [vmem:[%s2 + $0x308] sm:$0xff]
      %v761 = vld [vmem:[%s2 + $0x310] sm:$0xff]
      %v762 = vld [vmem:[%s2 + $0x318] sm:$0xff]
      %v763 = vld [vmem:[%s2 + $0x320] sm:$0xff]
      %v764 = vld [vmem:[%s2 + $0x328] sm:$0xff]
      %v765 = vld [vmem:[%s2 + $0x330] sm:$0xff]
      %v766 = vld [vmem:[%s2 + $0x338] sm:$0xff]
      %v767 = vld [vmem:[%s2 + $0x340] sm:$0xff]
      %v768 = vld [vmem:[%s2 + $0x348] sm:$0xff]
      %v769 = vld [vmem:[%s2 + $0x350] sm:$0xff]
      %v770 = vld [vmem:[%s2 + $0x358] sm:$0xff]
      %v771 = vld [vmem:[%s2 + $0x360] sm:$0xff]
      %v772 = vld [vmem:[%s2 + $0x368] sm:$0xff]
      %v773 = vld [vmem:[%s2 + $0x370] sm:$0xff]
      %v774 = vld [vmem:[%s2 + $0x378] sm:$0xff]
      %v775 = vld [vmem:[%s2 + $0x380] sm:$0xff]
      %v776 = vld [vmem:[%s2 + $0x388] sm:$0xff]
      %v777 = vld [vmem:[%s2 + $0x390] sm:$0xff]
      %v778 = vld [vmem:[%s2 + $0x398] sm:$0xff]
      %v779 = vld [vmem:[%s2 + $0x3a0] sm:$0xff]
      %v780 = vld [vmem:[%s2 + $0x3a8] sm:$0xff]
      %v781 = vld [vmem:[%s2 + $0x3b0] sm:$0xff]
      %v782 = vld [vmem:[%s2 + $0x3b8] sm:$0xff]
      %v783 = vld [vmem:[%s2 + $0x3c0] sm:$0xff]
      %v784 = vld [vmem:[%s2 + $0x3c8] sm:$0xff]
      %v785 = vld [vmem:[%s2 + $0x3d0] sm:$0xff]
      %v786 = vld [vmem:[%s2 + $0x3d8] sm:$0xff]
      %v787 = vld [vmem:[%s2 + $0x3e0] sm:$0xff]
      %v788 = vld [vmem:[%s2 + $0x3e8] sm:$0xff]
      %v789 = vld [vmem:[%s2 + $0x3f0] sm:$0xff]
      %v790 = vld [vmem:[%s2 + $0x3f8] sm:$0xff]
      %v791 = vld [vmem:[%s2 + $0x400] sm:$0xff]
      %v792 = vld [vmem:[%s2 + $0x408] sm:$0xff]
      %v793 = vld [vmem:[%s2 + $0x410] sm:$0xff]
      %v794 = vld [vmem:[%s2 + $0x418] sm:$0xff]
      %v795 = vld [vmem:[%s2 + $0x420] sm:$0xff]
      %v796 = vld [vmem:[%s2 + $0x428] sm:$0xff]
      %v797 = vld [vmem:[%s2 + $0x430] sm:$0xff]
      %v798 = vld [vmem:[%s2 + $0x438] sm:$0xff]
      %v799 = vld [vmem:[%s2 + $0x440] sm:$0xff]
      %v800 = vld [vmem:[%s2 + $0x448] sm:$0xff]
      %v801 = vld [vmem:[%s2 + $0x450] sm:$0xff]
      %v802 = vld [vmem:[%s2 + $0x458] sm:$0xff]
      %v803 = vld [vmem:[%s2 + $0x460] sm:$0xff]
      %v804 = vld [vmem:[%s2 + $0x468] sm:$0xff]
      %v805 = vld [vmem:[%s2 + $0x470] sm:$0xff]
      %v806 = vld [vmem:[%s2 + $0x478] sm:$0xff]
      %v807 = vld [vmem:[%s2 + $0x480] sm:$0xff]
      %v808 = vld [vmem:[%s2 + $0x488] sm:$0xff]
      %v809 = vld [vmem:[%s2 + $0x490] sm:$0xff]
      %v810 = vld [vmem:[%s2 + $0x498] sm:$0xff]
      %v811 = vld [vmem:[%s2 + $0x4a0] sm:$0xff]
      %v812 = vld [vmem:[%s2 + $0x4a8] sm:$0xff]
      %v813 = vld [vmem:[%s2 + $0x4b0] sm:$0xff]
      %v814 = vld [vmem:[%s2 + $0x4b8] sm:$0xff]
      %v815 = vld [vmem:[%s2 + $0x4c0] sm:$0xff]
      %v816 = vld [vmem:[%s2 + $0x4c8] sm:$0xff]
      %v817 = vld [vmem:[%s2 + $0x4d0] sm:$0xff]
      %v818 = vld [vmem:[%s2 + $0x4d8] sm:$0xff]
      %v819 = vld [vmem:[%s2 + $0x4e0] sm:$0xff]
      %v820 = vld [vmem:[%s2 + $0x4e8] sm:$0xff]
      %v821 = vld [vmem:[%s2 + $0x4f0] sm:$0xff]
      %v822 = vld [vmem:[%s2 + $0x4f8] sm:$0xff]
      %v823 = vld [vmem:[%s2 + $0x500] sm:$0xff]
      %v824 = vld [vmem:[%s2 + $0x508] sm:$0xff]
      %v825 = vld [vmem:[%s2 + $0x510] sm:$0xff]
      %v826 = vld [vmem:[%s2 + $0x518] sm:$0xff]
      %v827 = vld [vmem:[%s2 + $0x520] sm:$0xff]
      %v828 = vld [vmem:[%s2 + $0x528] sm:$0xff]
      %v829 = vld [vmem:[%s2 + $0x530] sm:$0xff]
      %v830 = vld [vmem:[%s2 + $0x538] sm:$0xff]
      %v831 = vld [vmem:[%s2 + $0x540] sm:$0xff]
      %v832 = vld [vmem:[%s2 + $0x548] sm:$0xff]
      %v833 = vld [vmem:[%s2 + $0x550] sm:$0xff]
      %v834 = vld [vmem:[%s2 + $0x558] sm:$0xff]
      %v835 = vld [vmem:[%s2 + $0x560] sm:$0xff]
      %v836 = vld [vmem:[%s2 + $0x568] sm:$0xff]
      %v837 = vld [vmem:[%s2 + $0x570] sm:$0xff]
      %v838 = vld [vmem:[%s2 + $0x578] sm:$0xff]
      %v839 = vld [vmem:[%s2 + $0x580] sm:$0xff]
      %v840 = vld [vmem:[%s2 + $0x588] sm:$0xff]
      %v841 = vld [vmem:[%s2 + $0x590] sm:$0xff]
      %v842 = vld [vmem:[%s2 + $0x598] sm:$0xff]
      %v843 = vld [vmem:[%s2 + $0x5a0] sm:$0xff]
      %v844 = vld [vmem:[%s2 + $0x5a8] sm:$0xff]
      %v845 = vld [vmem:[%s2 + $0x5b0] sm:$0xff]
      %v846 = vld [vmem:[%s2 + $0x5b8] sm:$0xff]
      %v847 = vld [vmem:[%s2 + $0x5c0] sm:$0xff]
      %v848 = vld [vmem:[%s2 + $0x5c8] sm:$0xff]
      %v849 = vld [vmem:[%s2 + $0x5d0] sm:$0xff]
      %v850 = vld [vmem:[%s2 + $0x5d8] sm:$0xff]
      %v851 = vld [vmem:[%s2 + $0x5e0] sm:$0xff]
      %v852 = vld [vmem:[%s2 + $0x5e8] sm:$0xff]
      %v853 = vld [vmem:[%s2 + $0x5f0] sm:$0xff]
      %v854 = vld [vmem:[%s2 + $0x5f8] sm:$0xff]
      %v855 = vld [vmem:[%s5] sm:$0xff]
      %v856 = vld [vmem:[%s5 + $0x8] sm:$0xff]
      %v857 = vld [vmem:[%s5 + $0x10] sm:$0xff]
      %v858 = vld [vmem:[%s5 + $0x18] sm:$0xff]
      %v859 = vld [vmem:[%s5 + $0x20] sm:$0xff]
      %v860 = vld [vmem:[%s5 + $0x28] sm:$0xff]
      %v861 = vld [vmem:[%s5 + $0x30] sm:$0xff]
      %v862 = vld [vmem:[%s5 + $0x38] sm:$0xff]
      %v863 = vld [vmem:[%s5 + $0x40] sm:$0xff]
      %v864 = vld [vmem:[%s5 + $0x48] sm:$0xff]
      %v865 = vld [vmem:[%s5 + $0x50] sm:$0xff]
      %v866 = vld [vmem:[%s5 + $0x58] sm:$0xff]
      %v867 = vld [vmem:[%s5 + $0x60] sm:$0xff]
      %v868 = vld [vmem:[%s5 + $0x68] sm:$0xff]
      %v869 = vld [vmem:[%s5 + $0x70] sm:$0xff]
      %v870 = vld [vmem:[%s5 + $0x78] sm:$0xff]
      %v871 = vld [vmem:[%s5 + $0x80] sm:$0xff]
      %v872 = vld [vmem:[%s5 + $0x88] sm:$0xff]
      %v873 = vld [vmem:[%s5 + $0x90] sm:$0xff]
      %v874 = vld [vmem:[%s5 + $0x98] sm:$0xff]
      %v875 = vld [vmem:[%s5 + $0xa0] sm:$0xff]
      %v876 = vld [vmem:[%s5 + $0xa8] sm:$0xff]
      %v877 = vld [vmem:[%s5 + $0xb0] sm:$0xff]
      %v878 = vld [vmem:[%s5 + $0xb8] sm:$0xff]
      %v879 = vld [vmem:[%s5 + $0xc0] sm:$0xff]
      %v880 = vld [vmem:[%s5 + $0xc8] sm:$0xff]
      %v881 = vld [vmem:[%s5 + $0xd0] sm:$0xff]
      %v882 = vld [vmem:[%s5 + $0xd8] sm:$0xff]
      %v883 = vld [vmem:[%s5 + $0xe0] sm:$0xff]
      %v884 = vld [vmem:[%s5 + $0xe8] sm:$0xff]
      %v885 = vld [vmem:[%s5 + $0xf0] sm:$0xff]
      %v886 = vld [vmem:[%s5 + $0xf8] sm:$0xff]
      %v887 = vld [vmem:[%s5 + $0x100] sm:$0xff]
      %v888 = vld [vmem:[%s5 + $0x108] sm:$0xff]
      %v889 = vld [vmem:[%s5 + $0x110] sm:$0xff]
      %v890 = vld [vmem:[%s5 + $0x118] sm:$0xff]
      %v891 = vld [vmem:[%s5 + $0x120] sm:$0xff]
      %v892 = vld [vmem:[%s5 + $0x128] sm:$0xff]
      %v893 = vld [vmem:[%s5 + $0x130] sm:$0xff]
      %v894 = vld [vmem:[%s5 + $0x138] sm:$0xff]
      %v895 = vld [vmem:[%s5 + $0x140] sm:$0xff]
      %v896 = vld [vmem:[%s5 + $0x148] sm:$0xff]
      %v897 = vld [vmem:[%s5 + $0x150] sm:$0xff]
      %v898 = vld [vmem:[%s5 + $0x158] sm:$0xff]
      %v899 = vld [vmem:[%s5 + $0x160] sm:$0xff]
      %v900 = vld [vmem:[%s5 + $0x168] sm:$0xff]
      %v901 = vld [vmem:[%s5 + $0x170] sm:$0xff]
      %v902 = vld [vmem:[%s5 + $0x178] sm:$0xff]
      %v903 = vld [vmem:[%s5 + $0x180] sm:$0xff]
      %v904 = vld [vmem:[%s5 + $0x188] sm:$0xff]
      %v905 = vld [vmem:[%s5 + $0x190] sm:$0xff]
      %v906 = vld [vmem:[%s5 + $0x198] sm:$0xff]
      %v907 = vld [vmem:[%s5 + $0x1a0] sm:$0xff]
      %v908 = vld [vmem:[%s5 + $0x1a8] sm:$0xff]
      %v909 = vld [vmem:[%s5 + $0x1b0] sm:$0xff]
      %v910 = vld [vmem:[%s5 + $0x1b8] sm:$0xff]
      %v911 = vld [vmem:[%s5 + $0x1c0] sm:$0xff]
      %v912 = vld [vmem:[%s5 + $0x1c8] sm:$0xff]
      %v913 = vld [vmem:[%s5 + $0x1d0] sm:$0xff]
      %v914 = vld [vmem:[%s5 + $0x1d8] sm:$0xff]
      %v915 = vld [vmem:[%s5 + $0x1e0] sm:$0xff]
      %v916 = vld [vmem:[%s5 + $0x1e8] sm:$0xff]
      %v917 = vld [vmem:[%s5 + $0x1f0] sm:$0xff]
      %v918 = vld [vmem:[%s5 + $0x1f8] sm:$0xff]
      %v919 = vld [vmem:[%s5 + $0x200] sm:$0xff]
      %v920 = vld [vmem:[%s5 + $0x208] sm:$0xff]
      %v921 = vld [vmem:[%s5 + $0x210] sm:$0xff]
      %v922 = vld [vmem:[%s5 + $0x218] sm:$0xff]
      %v923 = vld [vmem:[%s5 + $0x220] sm:$0xff]
      %v924 = vld [vmem:[%s5 + $0x228] sm:$0xff]
      %v925 = vld [vmem:[%s5 + $0x230] sm:$0xff]
      %v926 = vld [vmem:[%s5 + $0x238] sm:$0xff]
      %v927 = vld [vmem:[%s5 + $0x240] sm:$0xff]
      %v928 = vld [vmem:[%s5 + $0x248] sm:$0xff]
      %v929 = vld [vmem:[%s5 + $0x250] sm:$0xff]
      %v930 = vld [vmem:[%s5 + $0x258] sm:$0xff]
      %v931 = vld [vmem:[%s5 + $0x260] sm:$0xff]
      %v932 = vld [vmem:[%s5 + $0x268] sm:$0xff]
      %v933 = vld [vmem:[%s5 + $0x270] sm:$0xff]
      %v934 = vld [vmem:[%s5 + $0x278] sm:$0xff]
      %v935 = vld [vmem:[%s5 + $0x280] sm:$0xff]
      %v936 = vld [vmem:[%s5 + $0x288] sm:$0xff]
      %v937 = vld [vmem:[%s5 + $0x290] sm:$0xff]
      %v938 = vld [vmem:[%s5 + $0x298] sm:$0xff]
      %v939 = vld [vmem:[%s5 + $0x2a0] sm:$0xff]
      %v940 = vld [vmem:[%s5 + $0x2a8] sm:$0xff]
      %v941 = vld [vmem:[%s5 + $0x2b0] sm:$0xff]
      %v942 = vld [vmem:[%s5 + $0x2b8] sm:$0xff]
      %v943 = vld [vmem:[%s5 + $0x2c0] sm:$0xff]
      %v944 = vld [vmem:[%s5 + $0x2c8] sm:$0xff]
      %v945 = vld [vmem:[%s5 + $0x2d0] sm:$0xff]
      %v946 = vld [vmem:[%s5 + $0x2d8] sm:$0xff]
      %v947 = vld [vmem:[%s5 + $0x2e0] sm:$0xff]
      %v948 = vld [vmem:[%s5 + $0x2e8] sm:$0xff]
      %v949 = vld [vmem:[%s5 + $0x2f0] sm:$0xff]
      %v950 = vld [vmem:[%s5 + $0x2f8] sm:$0xff]
      %v951 = vld [vmem:[%s5 + $0x300] sm:$0xff]
      %v952 = vld [vmem:[%s5 + $0x308] sm:$0xff]
      %v953 = vld [vmem:[%s5 + $0x310] sm:$0xff]
      %v954 = vld [vmem:[%s5 + $0x318] sm:$0xff]
      %v955 = vld [vmem:[%s5 + $0x320] sm:$0xff]
      %v956 = vld [vmem:[%s5 + $0x328] sm:$0xff]
      %v957 = vld [vmem:[%s5 + $0x330] sm:$0xff]
      %v958 = vld [vmem:[%s5 + $0x338] sm:$0xff]
      %v959 = vld [vmem:[%s5 + $0x340] sm:$0xff]
      %v960 = vld [vmem:[%s5 + $0x348] sm:$0xff]
      %v961 = vld [vmem:[%s5 + $0x350] sm:$0xff]
      %v962 = vld [vmem:[%s5 + $0x358] sm:$0xff]
      %v963 = vld [vmem:[%s5 + $0x360] sm:$0xff]
      %v964 = vld [vmem:[%s5 + $0x368] sm:$0xff]
      %v965 = vld [vmem:[%s5 + $0x370] sm:$0xff]
      %v966 = vld [vmem:[%s5 + $0x378] sm:$0xff]
      %v967 = vld [vmem:[%s5 + $0x380] sm:$0xff]
      %v968 = vld [vmem:[%s5 + $0x388] sm:$0xff]
      %v969 = vld [vmem:[%s5 + $0x390] sm:$0xff]
      %v970 = vld [vmem:[%s5 + $0x398] sm:$0xff]
      %v971 = vld [vmem:[%s5 + $0x3a0] sm:$0xff]
      %v972 = vld [vmem:[%s5 + $0x3a8] sm:$0xff]
      %v973 = vld [vmem:[%s5 + $0x3b0] sm:$0xff]
      %v974 = vld [vmem:[%s5 + $0x3b8] sm:$0xff]
      %v975 = vld [vmem:[%s5 + $0x3c0] sm:$0xff]
      %v976 = vld [vmem:[%s5 + $0x3c8] sm:$0xff]
      %v977 = vld [vmem:[%s5 + $0x3d0] sm:$0xff]
      %v978 = vld [vmem:[%s5 + $0x3d8] sm:$0xff]
      %v979 = vld [vmem:[%s5 + $0x3e0] sm:$0xff]
      %v980 = vld [vmem:[%s5 + $0x3e8] sm:$0xff]
      %v981 = vld [vmem:[%s5 + $0x3f0] sm:$0xff]
      %v982 = vld [vmem:[%s5 + $0x3f8] sm:$0xff]
      %v983 = vld [vmem:[%s5 + $0x400] sm:$0xff]
      %v984 = vld [vmem:[%s5 + $0x408] sm:$0xff]
      %v985 = vld [vmem:[%s5 + $0x410] sm:$0xff]
      %v986 = vld [vmem:[%s5 + $0x418] sm:$0xff]
      %v987 = vld [vmem:[%s5 + $0x420] sm:$0xff]
      %v988 = vld [vmem:[%s5 + $0x428] sm:$0xff]
      %v989 = vld [vmem:[%s5 + $0x430] sm:$0xff]
      %v990 = vld [vmem:[%s5 + $0x438] sm:$0xff]
      %v991 = vld [vmem:[%s5 + $0x440] sm:$0xff]
      %v992 = vld [vmem:[%s5 + $0x448] sm:$0xff]
      %v993 = vld [vmem:[%s5 + $0x450] sm:$0xff]
      %v994 = vld [vmem:[%s5 + $0x458] sm:$0xff]
      %v995 = vld [vmem:[%s5 + $0x460] sm:$0xff]
      %v996 = vld [vmem:[%s5 + $0x468] sm:$0xff]
      %v997 = vld [vmem:[%s5 + $0x470] sm:$0xff]
      %v998 = vld [vmem:[%s5 + $0x478] sm:$0xff]
      %v999 = vld [vmem:[%s5 + $0x480] sm:$0xff]
      %v1000 = vld [vmem:[%s5 + $0x488] sm:$0xff]
      %v1001 = vld [vmem:[%s5 + $0x490] sm:$0xff]
      %v1002 = vld [vmem:[%s5 + $0x498] sm:$0xff]
      %v1003 = vld [vmem:[%s5 + $0x4a0] sm:$0xff]
      %v1004 = vld [vmem:[%s5 + $0x4a8] sm:$0xff]
      %v1005 = vld [vmem:[%s5 + $0x4b0] sm:$0xff]
      %v1006 = vld [vmem:[%s5 + $0x4b8] sm:$0xff]
      %v1007 = vld [vmem:[%s5 + $0x4c0] sm:$0xff]
      %v1008 = vld [vmem:[%s5 + $0x4c8] sm:$0xff]
      %v1009 = vld [vmem:[%s5 + $0x4d0] sm:$0xff]
      %v1010 = vld [vmem:[%s5 + $0x4d8] sm:$0xff]
      %v1011 = vld [vmem:[%s5 + $0x4e0] sm:$0xff]
      %v1012 = vld [vmem:[%s5 + $0x4e8] sm:$0xff]
      %v1013 = vld [vmem:[%s5 + $0x4f0] sm:$0xff]
      %v1014 = vld [vmem:[%s5 + $0x4f8] sm:$0xff]
      %v1015 = vld [vmem:[%s5 + $0x500] sm:$0xff]
      %v1016 = vld [vmem:[%s5 + $0x508] sm:$0xff]
      %v1017 = vld [vmem:[%s5 + $0x510] sm:$0xff]
      %v1018 = vld [vmem:[%s5 + $0x518] sm:$0xff]
      %v1019 = vld [vmem:[%s5 + $0x520] sm:$0xff]
      %v1020 = vld [vmem:[%s5 + $0x528] sm:$0xff]
      %v1021 = vld [vmem:[%s5 + $0x530] sm:$0xff]
      %v1022 = vld [vmem:[%s5 + $0x538] sm:$0xff]
      %v1023 = vld [vmem:[%s5 + $0x540] sm:$0xff]
      %v1024 = vld [vmem:[%s5 + $0x548] sm:$0xff]
      %v1025 = vld [vmem:[%s5 + $0x550] sm:$0xff]
      %v1026 = vld [vmem:[%s5 + $0x558] sm:$0xff]
      %v1027 = vld [vmem:[%s5 + $0x560] sm:$0xff]
      %v1028 = vld [vmem:[%s5 + $0x568] sm:$0xff]
      %v1029 = vld [vmem:[%s5 + $0x570] sm:$0xff]
      %v1030 = vld [vmem:[%s5 + $0x578] sm:$0xff]
      %v1031 = vld [vmem:[%s5 + $0x580] sm:$0xff]
      %v1032 = vld [vmem:[%s5 + $0x588] sm:$0xff]
      %v1033 = vld [vmem:[%s5 + $0x590] sm:$0xff]
      %v1034 = vld [vmem:[%s5 + $0x598] sm:$0xff]
      %v1035 = vld [vmem:[%s5 + $0x5a0] sm:$0xff]
      %v1036 = vld [vmem:[%s5 + $0x5a8] sm:$0xff]
      %v1037 = vld [vmem:[%s5 + $0x5b0] sm:$0xff]
      %v1038 = vld [vmem:[%s5 + $0x5b8] sm:$0xff]
      %v1039 = vld [vmem:[%s5 + $0x5c0] sm:$0xff]
      %v1040 = vld [vmem:[%s5 + $0x5c8] sm:$0xff]
      %v1041 = vld [vmem:[%s5 + $0x5d0] sm:$0xff]
      %v1042 = vld [vmem:[%s5 + $0x5d8] sm:$0xff]
      %v1043 = vld [vmem:[%s5 + $0x5e0] sm:$0xff]
      %v1044 = vld [vmem:[%s5 + $0x5e8] sm:$0xff]
      %v1045 = vld [vmem:[%s5 + $0x5f0] sm:$0xff]
      %v1046 = vld [vmem:[%s5 + $0x5f8] sm:$0xff]
      %v1047 = vld [vmem:[%s4] sm:$0xf]
      %v1048 = vld [vmem:[%s7] sm:$0xf]
      %v1050 = vlaneseq
      %v1051 = vshrl.u32 %v1050, 7
      %v1052 = vsub.s32 0, %v1051
      %v1053 = vrot.slane %v1047, %v1052
      %v1054 = vlaneseq
      %v1055 = vshrl.u32 %v1054, 7
      %v1056 = vsub.s32 1, %v1055
      %v1057 = vrot.slane %v1047, %v1056
      %v1058 = vlaneseq
      %v1059 = vshrl.u32 %v1058, 7
      %v1060 = vsub.s32 2, %v1059
      %v1061 = vrot.slane %v1047, %v1060
      %v1062 = vlaneseq
      %v1063 = vshrl.u32 %v1062, 7
      %v1064 = vsub.s32 3, %v1063
      %v1065 = vrot.slane %v1047, %v1064
      %1070 = vmatprep.subr.mxu0 %v664
      %1071 = vmatpush1.msra.mxu0 %v663
      %1072 = vmatprep.subr.mxu0 %v668
      %1073 = vmatpush1.msra.mxu0 %v667
      %1074 = vmatprep.subr.mxu0 %v672
      %1075 = vmatpush1.msra.mxu0 %v671
      %1076 = vmatprep.subr.mxu0 %v676
      %1077 = vmatpush1.msra.mxu0 %v675
      %1078 = vmatprep.subr.mxu0 %v680
      %1079 = vmatpush1.msra.mxu0 %v679
      %1080 = vmatprep.subr.mxu0 %v684
      %1081 = vmatpush1.msra.mxu0 %v683
      %1082 = vmatprep.subr.mxu0 %v688
      %1083 = vmatpush1.msra.mxu0 %v687
      %1084 = vmatprep.subr.mxu0 %v692
      %1085 = vmatpush1.msra.mxu0 %v691
      %1086 = vmatprep.subr.mxu0 %v696
      %1087 = vmatpush1.msra.mxu0 %v695
      %1088 = vmatprep.subr.mxu0 %v700
      %1089 = vmatpush1.msra.mxu0 %v699
      %1090 = vmatprep.subr.mxu0 %v704
      %1091 = vmatpush1.msra.mxu0 %v703
      %1092 = vmatprep.subr.mxu0 %v708
      %1093 = vmatpush1.msra.mxu0 %v707
      %1094 = vmatprep.subr.mxu0 %v712
      %1095 = vmatpush1.msra.mxu0 %v711
      %1096 = vmatprep.subr.mxu0 %v716
      %1097 = vmatpush1.msra.mxu0 %v715
      %1098 = vmatprep.subr.mxu0 %v720
      %1099 = vmatpush1.msra.mxu0 %v719
      %1100 = vmatprep.subr.mxu0 %v724
      %1101 = vmatpush1.msra.mxu0 %v723
      %1102 = vmatprep.subr.mxu0 %v728
      %1103 = vmatpush1.msra.mxu0 %v727
      %1104 = vmatprep.subr.mxu0 %v732
      %1105 = vmatpush1.msra.mxu0 %v731
      %1106 = vmatprep.subr.mxu0 %v736
      %1107 = vmatpush1.msra.mxu0 %v735
      %1108 = vmatprep.subr.mxu0 %v740
      %1109 = vmatpush1.msra.mxu0 %v739
      %1110 = vmatprep.subr.mxu0 %v744
      %1111 = vmatpush1.msra.mxu0 %v743
      %1112 = vmatprep.subr.mxu0 %v748
      %1113 = vmatpush1.msra.mxu0 %v747
      %1114 = vmatprep.subr.mxu0 %v752
      %1115 = vmatpush1.msra.mxu0 %v751
      %1116 = vmatprep.subr.mxu0 %v756
      %1117 = vmatpush1.msra.mxu0 %v755
      %1118 = vmatprep.subr.mxu0 %v760
      %1119 = vmatpush1.msra.mxu0 %v759
      %1120 = vmatprep.subr.mxu0 %v764
      %1121 = vmatpush1.msra.mxu0 %v763
      %1122 = vmatprep.subr.mxu0 %v768
      %1123 = vmatpush1.msra.mxu0 %v767
      %1124 = vmatprep.subr.mxu0 %v772
      %1125 = vmatpush1.msra.mxu0 %v771
      %1126 = vmatprep.subr.mxu0 %v776
      %1127 = vmatpush1.msra.mxu0 %v775
      %1128 = vmatprep.subr.mxu0 %v780
      %1129 = vmatpush1.msra.mxu0 %v779
      %1130 = vmatprep.subr.mxu0 %v784
      %1131 = vmatpush1.msra.mxu0 %v783
      %1132 = vmatprep.subr.mxu0 %v788
      %1133 = vmatpush1.msra.mxu0 %v787
      %1134 = vmatprep.mubr.f32.mxu0 %v653
      %1135 = vmatmul.mubr.f32.gmra.mrb[0].mxu0 %v328
      %v1136 = vpop.f32.mrb[0].mxu0
      %v1137 = vadd.f32 %v1053, %v1136
      %v1138 = vpop.f32.mrb[0].mxu0
      %v1139 = vadd.f32 %v1057, %v1138
      %1140 = vmatprep.mubr.f32.mxu0 %v659
      %1141 = vmatmul.mubr.f32.gmra.mrb[0].mxu0 %v329
      %v1142 = vpop.f32.mrb[0].mxu0
      %v1143 = vadd.f32 %v1053, %v1142
      %v1144 = vpop.f32.mrb[0].mxu0
      %v1145 = vadd.f32 %v1057, %v1144
      %1146 = vdwg.mxu0
      %1147 = vmatprep.subr.mxu0 %v792
      %1148 = vmatpush1.msra.mxu0 %v791
      %1149 = vmatprep.subr.mxu0 %v796
      %1150 = vmatpush1.msra.mxu0 %v795
      %1151 = vmatprep.subr.mxu0 %v800
      %1152 = vmatpush1.msra.mxu0 %v799
      %1153 = vmatprep.subr.mxu0 %v804
      %1154 = vmatpush1.msra.mxu0 %v803
      %1155 = vmatprep.subr.mxu0 %v808
      %1156 = vmatpush1.msra.mxu0 %v807
      %1157 = vmatprep.subr.mxu0 %v812
      %1158 = vmatpush1.msra.mxu0 %v811
      %1159 = vmatprep.subr.mxu0 %v816
      %1160 = vmatpush1.msra.mxu0 %v815
      %1161 = vmatprep.subr.mxu0 %v820
      %1162 = vmatpush1.msra.mxu0 %v819
      %1163 = vmatprep.subr.mxu0 %v824
      %1164 = vmatpush1.msra.mxu0 %v823
      %1165 = vmatprep.subr.mxu0 %v828
      %1166 = vmatpush1.msra.mxu0 %v827
      %1167 = vmatprep.subr.mxu0 %v832
      %1168 = vmatpush1.msra.mxu0 %v831
      %1169 = vmatprep.subr.mxu0 %v836
      %1170 = vmatpush1.msra.mxu0 %v835
      %1171 = vmatprep.subr.mxu0 %v840
      %1172 = vmatpush1.msra.mxu0 %v839
      %1173 = vmatprep.subr.mxu0 %v844
      %1174 = vmatpush1.msra.mxu0 %v843
      %1175 = vmatprep.subr.mxu0 %v848
      %1176 = vmatpush1.msra.mxu0 %v847
      %1177 = vmatprep.subr.mxu0 %v852
      %1178 = vmatpush1.msra.mxu0 %v851
      %1179 = vmatprep.subr.mxu0 0.0
      %1180 = vmatpush1.msra.mxu0 0.0
      %1181 = vmatprep.subr.mxu0 0.0
      %1182 = vmatpush1.msra.mxu0 0.0
      %1183 = vmatprep.subr.mxu0 0.0
      %1184 = vmatpush1.msra.mxu0 0.0
      %1185 = vmatprep.subr.mxu0 0.0
      %1186 = vmatpush1.msra.mxu0 0.0
      %1187 = vmatprep.subr.mxu0 0.0
      %1188 = vmatpush1.msra.mxu0 0.0
      %1189 = vmatprep.subr.mxu0 0.0
      %1190 = vmatpush1.msra.mxu0 0.0
      %1191 = vmatprep.subr.mxu0 0.0
      %1192 = vmatpush1.msra.mxu0 0.0
      %1193 = vmatprep.subr.mxu0 0.0
      %1194 = vmatpush1.msra.mxu0 0.0
      %1195 = vmatprep.subr.mxu0 0.0
      %1196 = vmatpush1.msra.mxu0 0.0
      %1197 = vmatprep.subr.mxu0 0.0
      %1198 = vmatpush1.msra.mxu0 0.0
      %1199 = vmatprep.subr.mxu0 0.0
      %1200 = vmatpush1.msra.mxu0 0.0
      %1201 = vmatprep.subr.mxu0 0.0
      %1202 = vmatpush1.msra.mxu0 0.0
      %1203 = vmatprep.subr.mxu0 0.0
      %1204 = vmatpush1.msra.mxu0 0.0
      %1205 = vmatprep.subr.mxu0 0.0
      %1206 = vmatpush1.msra.mxu0 0.0
      %1207 = vmatprep.subr.mxu0 0.0
      %1208 = vmatpush1.msra.mxu0 0.0
      %1209 = vmatprep.subr.mxu0 0.0
      %1210 = vmatpush1.msra.mxu0 0.0
      %1211 = vmatprep.mubr.f32.mxu0 0.0
      %1212 = vmatmul.mubr.f32.gmra.mrb[0].mxu0 %v655
      %v1213 = vpop.f32.mrb[0].mxu0
      %v1214 = vadd.f32 %v1137, %v1213
      %v1215 = vpop.f32.mrb[0].mxu0
      %v1216 = vadd.f32 %v1139, %v1215
      %1217 = vmatprep.mubr.f32.mxu0 0.0
      %1218 = vmatmul.mubr.f32.gmra.mrb[0].mxu0 %v661
      %v1219 = vpop.f32.mrb[0].mxu0
      %v1220 = vadd.f32 %v1143, %v1219
      %v1221 = vpop.f32.mrb[0].mxu0
      %v1222 = vadd.f32 %v1145, %v1221
      %1223 = vdwg.mxu0
      %1224 = vmatprep.subr.mxu0 %v666
      %1225 = vmatpush1.msra.mxu0 %v665
      %1226 = vmatprep.subr.mxu0 %v670
      %1227 = vmatpush1.msra.mxu0 %v669
      %1228 = vmatprep.subr.mxu0 %v674
      %1229 = vmatpush1.msra.mxu0 %v673
      %1230 = vmatprep.subr.mxu0 %v678
      %1231 = vmatpush1.msra.mxu0 %v677
      %1232 = vmatprep.subr.mxu0 %v682
      %1233 = vmatpush1.msra.mxu0 %v681
      %1234 = vmatprep.subr.mxu0 %v686
      %1235 = vmatpush1.msra.mxu0 %v685
      %1236 = vmatprep.subr.mxu0 %v690
      %1237 = vmatpush1.msra.mxu0 %v689
      %1238 = vmatprep.subr.mxu0 %v694
      %1239 = vmatpush1.msra.mxu0 %v693
      %1240 = vmatprep.subr.mxu0 %v698
      %1241 = vmatpush1.msra.mxu0 %v697
      %1242 = vmatprep.subr.mxu0 %v702
      %1243 = vmatpush1.msra.mxu0 %v701
      %1244 = vmatprep.subr.mxu0 %v706
      %1245 = vmatpush1.msra.mxu0 %v705
      %1246 = vmatprep.subr.mxu0 %v710
      %1247 = vmatpush1.msra.mxu0 %v709
      %1248 = vmatprep.subr.mxu0 %v714
      %1249 = vmatpush1.msra.mxu0 %v713
      %1250 = vmatprep.subr.mxu0 %v718
      %1251 = vmatpush1.msra.mxu0 %v717
      %1252 = vmatprep.subr.mxu0 %v722
      %1253 = vmatpush1.msra.mxu0 %v721
      %1254 = vmatprep.subr.mxu0 %v726
      %1255 = vmatpush1.msra.mxu0 %v725
      %1256 = vmatprep.subr.mxu0 %v730
      %1257 = vmatpush1.msra.mxu0 %v729
      %1258 = vmatprep.subr.mxu0 %v734
      %1259 = vmatpush1.msra.mxu0 %v733
      %1260 = vmatprep.subr.mxu0 %v738
      %1261 = vmatpush1.msra.mxu0 %v737
      %1262 = vmatprep.subr.mxu0 %v742
      %1263 = vmatpush1.msra.mxu0 %v741
      %1264 = vmatprep.subr.mxu0 %v746
      %1265 = vmatpush1.msra.mxu0 %v745
      %1266 = vmatprep.subr.mxu0 %v750
      %1267 = vmatpush1.msra.mxu0 %v749
      %1268 = vmatprep.subr.mxu0 %v754
      %1269 = vmatpush1.msra.mxu0 %v753
      %1270 = vmatprep.subr.mxu0 %v758
      %1271 = vmatpush1.msra.mxu0 %v757
      %1272 = vmatprep.subr.mxu0 %v762
      %1273 = vmatpush1.msra.mxu0 %v761
      %1274 = vmatprep.subr.mxu0 %v766
      %1275 = vmatpush1.msra.mxu0 %v765
      %1276 = vmatprep.subr.mxu0 %v770
      %1277 = vmatpush1.msra.mxu0 %v769
      %1278 = vmatprep.subr.mxu0 %v774
      %1279 = vmatpush1.msra.mxu0 %v773
      %1280 = vmatprep.subr.mxu0 %v778
      %1281 = vmatpush1.msra.mxu0 %v777
      %1282 = vmatprep.subr.mxu0 %v782
      %1283 = vmatpush1.msra.mxu0 %v781
      %1284 = vmatprep.subr.mxu0 %v786
      %1285 = vmatpush1.msra.mxu0 %v785
      %1286 = vmatprep.subr.mxu0 %v790
      %1287 = vmatpush1.msra.mxu0 %v789
      %1288 = vmatprep.mubr.f32.mxu0 %v653
      %1289 = vmatmul.mubr.f32.gmra.mrb[0].mxu0 %v328
      %v1290 = vpop.f32.mrb[0].mxu0
      %v1291 = vadd.f32 %v1061, %v1290
      %v1292 = vpop.f32.mrb[0].mxu0
      %v1293 = vadd.f32 %v1065, %v1292
      %1294 = vmatprep.mubr.f32.mxu0 %v659
      %1295 = vmatmul.mubr.f32.gmra.mrb[0].mxu0 %v329
      %v1296 = vpop.f32.mrb[0].mxu0
      %v1297 = vadd.f32 %v1061, %v1296
      %v1298 = vpop.f32.mrb[0].mxu0
      %v1299 = vadd.f32 %v1065, %v1298
      %1300 = vdwg.mxu0
      %1301 = vmatprep.subr.mxu0 %v794
      %1302 = vmatpush1.msra.mxu0 %v793
      %1303 = vmatprep.subr.mxu0 %v798
      %1304 = vmatpush1.msra.mxu0 %v797
      %1305 = vmatprep.subr.mxu0 %v802
      %1306 = vmatpush1.msra.mxu0 %v801
      %1307 = vmatprep.subr.mxu0 %v806
      %1308 = vmatpush1.msra.mxu0 %v805
      %1309 = vmatprep.subr.mxu0 %v810
      %1310 = vmatpush1.msra.mxu0 %v809
      %1311 = vmatprep.subr.mxu0 %v814
      %1312 = vmatpush1.msra.mxu0 %v813
      %1313 = vmatprep.subr.mxu0 %v818
      %1314 = vmatpush1.msra.mxu0 %v817
      %1315 = vmatprep.subr.mxu0 %v822
      %1316 = vmatpush1.msra.mxu0 %v821
      %1317 = vmatprep.subr.mxu0 %v826
      %1318 = vmatpush1.msra.mxu0 %v825
      %1319 = vmatprep.subr.mxu0 %v830
      %1320 = vmatpush1.msra.mxu0 %v829
      %1321 = vmatprep.subr.mxu0 %v834
      %1322 = vmatpush1.msra.mxu0 %v833
      %1323 = vmatprep.subr.mxu0 %v838
      %1324 = vmatpush1.msra.mxu0 %v837
      %1325 = vmatprep.subr.mxu0 %v842
      %1326 = vmatpush1.msra.mxu0 %v841
      %1327 = vmatprep.subr.mxu0 %v846
      %1328 = vmatpush1.msra.mxu0 %v845
      %1329 = vmatprep.subr.mxu0 %v850
      %1330 = vmatpush1.msra.mxu0 %v849
      %1331 = vmatprep.subr.mxu0 %v854
      %1332 = vmatpush1.msra.mxu0 %v853
      %1333 = vmatprep.subr.mxu0 0.0
      %1334 = vmatpush1.msra.mxu0 0.0
      %1335 = vmatprep.subr.mxu0 0.0
      %1336 = vmatpush1.msra.mxu0 0.0
      %1337 = vmatprep.subr.mxu0 0.0
      %1338 = vmatpush1.msra.mxu0 0.0
      %1339 = vmatprep.subr.mxu0 0.0
      %1340 = vmatpush1.msra.mxu0 0.0
      %1341 = vmatprep.subr.mxu0 0.0
      %1342 = vmatpush1.msra.mxu0 0.0
      %1343 = vmatprep.subr.mxu0 0.0
      %1344 = vmatpush1.msra.mxu0 0.0
      %1345 = vmatprep.subr.mxu0 0.0
      %1346 = vmatpush1.msra.mxu0 0.0
      %1347 = vmatprep.subr.mxu0 0.0
      %1348 = vmatpush1.msra.mxu0 0.0
      %1349 = vmatprep.subr.mxu0 0.0
      %1350 = vmatpush1.msra.mxu0 0.0
      %1351 = vmatprep.subr.mxu0 0.0
      %1352 = vmatpush1.msra.mxu0 0.0
      %1353 = vmatprep.subr.mxu0 0.0
      %1354 = vmatpush1.msra.mxu0 0.0
      %1355 = vmatprep.subr.mxu0 0.0
      %1356 = vmatpush1.msra.mxu0 0.0
      %1357 = vmatprep.subr.mxu0 0.0
      %1358 = vmatpush1.msra.mxu0 0.0
      %1359 = vmatprep.subr.mxu0 0.0
      %1360 = vmatpush1.msra.mxu0 0.0
      %1361 = vmatprep.subr.mxu0 0.0
      %1362 = vmatpush1.msra.mxu0 0.0
      %1363 = vmatprep.subr.mxu0 0.0
      %1364 = vmatpush1.msra.mxu0 0.0
      %1365 = vmatprep.mubr.f32.mxu0 0.0
      %1366 = vmatmul.mubr.f32.gmra.mrb[0].mxu0 %v655
      %v1367 = vpop.f32.mrb[0].mxu0
      %v1368 = vadd.f32 %v1291, %v1367
      %v1369 = vpop.f32.mrb[0].mxu0
      %v1370 = vadd.f32 %v1293, %v1369
      %1371 = vmatprep.mubr.f32.mxu0 0.0
      %1372 = vmatmul.mubr.f32.gmra.mrb[0].mxu0 %v661
      %v1373 = vpop.f32.mrb[0].mxu0
      %v1374 = vadd.f32 %v1297, %v1373
      %v1375 = vpop.f32.mrb[0].mxu0
      %v1376 = vadd.f32 %v1299, %v1375
      %1377 = vdwg.mxu0
      %1378 = vst [vmem:[#allocation2] sm:$0xff] %v1214
      %1379 = vst [vmem:[#allocation2 + $0x8] sm:$0xff] %v1216
      %1380 = vst [vmem:[#allocation2 + $0x10] sm:$0xff] %v1368
      %1381 = vst [vmem:[#allocation2 + $0x18] sm:$0xff] %v1370
      %1382 = vst [vmem:[#allocation2 + $0x20] sm:$0xff] %v1220
      %1383 = vst [vmem:[#allocation2 + $0x28] sm:$0xff] %v1222
      %1384 = vst [vmem:[#allocation2 + $0x30] sm:$0xff] %v1374
      %1385 = vst [vmem:[#allocation2 + $0x38] sm:$0xff] %v1376
      %v1387 = vlaneseq
      %v1388 = vshrl.u32 %v1387, 7
      %v1389 = vsub.s32 0, %v1388
      %v1390 = vrot.slane %v1048, %v1389
      %v1391 = vlaneseq
      %v1392 = vshrl.u32 %v1391, 7
      %v1393 = vsub.s32 1, %v1392
      %v1394 = vrot.slane %v1048, %v1393
      %v1395 = vlaneseq
      %v1396 = vshrl.u32 %v1395, 7
      %v1397 = vsub.s32 2, %v1396
      %v1398 = vrot.slane %v1048, %v1397
      %v1399 = vlaneseq
      %v1400 = vshrl.u32 %v1399, 7
      %v1401 = vsub.s32 3, %v1400
      %v1402 = vrot.slane %v1048, %v1401
      %1407 = vmatprep.subr.mxu0 %v856
      %1408 = vmatpush1.msra.mxu0 %v855
      %1409 = vmatprep.subr.mxu0 %v860
      %1410 = vmatpush1.msra.mxu0 %v859
      %1411 = vmatprep.subr.mxu0 %v864
      %1412 = vmatpush1.msra.mxu0 %v863
      %1413 = vmatprep.subr.mxu0 %v868
      %1414 = vmatpush1.msra.mxu0 %v867
      %1415 = vmatprep.subr.mxu0 %v872
      %1416 = vmatpush1.msra.mxu0 %v871
      %1417 = vmatprep.subr.mxu0 %v876
      %1418 = vmatpush1.msra.mxu0 %v875
      %1419 = vmatprep.subr.mxu0 %v880
      %1420 = vmatpush1.msra.mxu0 %v879
      %1421 = vmatprep.subr.mxu0 %v884
      %1422 = vmatpush1.msra.mxu0 %v883
      %1423 = vmatprep.subr.mxu0 %v888
      %1424 = vmatpush1.msra.mxu0 %v887
      %1425 = vmatprep.subr.mxu0 %v892
      %1426 = vmatpush1.msra.mxu0 %v891
      %1427 = vmatprep.subr.mxu0 %v896
      %1428 = vmatpush1.msra.mxu0 %v895
      %1429 = vmatprep.subr.mxu0 %v900
      %1430 = vmatpush1.msra.mxu0 %v899
      %1431 = vmatprep.subr.mxu0 %v904
      %1432 = vmatpush1.msra.mxu0 %v903
      %1433 = vmatprep.subr.mxu0 %v908
      %1434 = vmatpush1.msra.mxu0 %v907
      %1435 = vmatprep.subr.mxu0 %v912
      %1436 = vmatpush1.msra.mxu0 %v911
      %1437 = vmatprep.subr.mxu0 %v916
      %1438 = vmatpush1.msra.mxu0 %v915
      %1439 = vmatprep.subr.mxu0 %v920
      %1440 = vmatpush1.msra.mxu0 %v919
      %1441 = vmatprep.subr.mxu0 %v924
      %1442 = vmatpush1.msra.mxu0 %v923
      %1443 = vmatprep.subr.mxu0 %v928
      %1444 = vmatpush1.msra.mxu0 %v927
      %1445 = vmatprep.subr.mxu0 %v932
      %1446 = vmatpush1.msra.mxu0 %v931
      %1447 = vmatprep.subr.mxu0 %v936
      %1448 = vmatpush1.msra.mxu0 %v935
      %1449 = vmatprep.subr.mxu0 %v940
      %1450 = vmatpush1.msra.mxu0 %v939
      %1451 = vmatprep.subr.mxu0 %v944
      %1452 = vmatpush1.msra.mxu0 %v943
      %1453 = vmatprep.subr.mxu0 %v948
      %1454 = vmatpush1.msra.mxu0 %v947
      %1455 = vmatprep.subr.mxu0 %v952
      %1456 = vmatpush1.msra.mxu0 %v951
      %1457 = vmatprep.subr.mxu0 %v956
      %1458 = vmatpush1.msra.mxu0 %v955
      %1459 = vmatprep.subr.mxu0 %v960
      %1460 = vmatpush1.msra.mxu0 %v959
      %1461 = vmatprep.subr.mxu0 %v964
      %1462 = vmatpush1.msra.mxu0 %v963
      %1463 = vmatprep.subr.mxu0 %v968
      %1464 = vmatpush1.msra.mxu0 %v967
      %1465 = vmatprep.subr.mxu0 %v972
      %1466 = vmatpush1.msra.mxu0 %v971
      %1467 = vmatprep.subr.mxu0 %v976
      %1468 = vmatpush1.msra.mxu0 %v975
      %1469 = vmatprep.subr.mxu0 %v980
      %1470 = vmatpush1.msra.mxu0 %v979
      %1471 = vmatprep.mubr.f32.mxu0 %v653
      %1472 = vmatmul.mubr.f32.gmra.mrb[0].mxu0 %v328
      %v1473 = vpop.f32.mrb[0].mxu0
      %v1474 = vadd.f32 %v1390, %v1473
      %v1475 = vpop.f32.mrb[0].mxu0
      %v1476 = vadd.f32 %v1394, %v1475
      %1477 = vmatprep.mubr.f32.mxu0 %v659
      %1478 = vmatmul.mubr.f32.gmra.mrb[0].mxu0 %v329
      %v1479 = vpop.f32.mrb[0].mxu0
      %v1480 = vadd.f32 %v1390, %v1479
      %v1481 = vpop.f32.mrb[0].mxu0
      %v1482 = vadd.f32 %v1394, %v1481
      %1483 = vdwg.mxu0
      %1484 = vmatprep.subr.mxu0 %v984
      %1485 = vmatpush1.msra.mxu0 %v983
      %1486 = vmatprep.subr.mxu0 %v988
      %1487 = vmatpush1.msra.mxu0 %v987
      %1488 = vmatprep.subr.mxu0 %v992
      %1489 = vmatpush1.msra.mxu0 %v991
      %1490 = vmatprep.subr.mxu0 %v996
      %1491 = vmatpush1.msra.mxu0 %v995
      %1492 = vmatprep.subr.mxu0 %v1000
      %1493 = vmatpush1.msra.mxu0 %v999
      %1494 = vmatprep.subr.mxu0 %v1004
      %1495 = vmatpush1.msra.mxu0 %v1003
      %1496 = vmatprep.subr.mxu0 %v1008
      %1497 = vmatpush1.msra.mxu0 %v1007
      %1498 = vmatprep.subr.mxu0 %v1012
      %1499 = vmatpush1.msra.mxu0 %v1011
      %1500 = vmatprep.subr.mxu0 %v1016
      %1501 = vmatpush1.msra.mxu0 %v1015
      %1502 = vmatprep.subr.mxu0 %v1020
      %1503 = vmatpush1.msra.mxu0 %v1019
      %1504 = vmatprep.subr.mxu0 %v1024
      %1505 = vmatpush1.msra.mxu0 %v1023
      %1506 = vmatprep.subr.mxu0 %v1028
      %1507 = vmatpush1.msra.mxu0 %v1027
      %1508 = vmatprep.subr.mxu0 %v1032
      %1509 = vmatpush1.msra.mxu0 %v1031
      %1510 = vmatprep.subr.mxu0 %v1036
      %1511 = vmatpush1.msra.mxu0 %v1035
      %1512 = vmatprep.subr.mxu0 %v1040
      %1513 = vmatpush1.msra.mxu0 %v1039
      %1514 = vmatprep.subr.mxu0 %v1044
      %1515 = vmatpush1.msra.mxu0 %v1043
      %1516 = vmatprep.subr.mxu0 0.0
      %1517 = vmatpush1.msra.mxu0 0.0
      %1518 = vmatprep.subr.mxu0 0.0
      %1519 = vmatpush1.msra.mxu0 0.0
      %1520 = vmatprep.subr.mxu0 0.0
      %1521 = vmatpush1.msra.mxu0 0.0
      %1522 = vmatprep.subr.mxu0 0.0
      %1523 = vmatpush1.msra.mxu0 0.0
      %1524 = vmatprep.subr.mxu0 0.0
      %1525 = vmatpush1.msra.mxu0 0.0
      %1526 = vmatprep.subr.mxu0 0.0
      %1527 = vmatpush1.msra.mxu0 0.0
      %1528 = vmatprep.subr.mxu0 0.0
      %1529 = vmatpush1.msra.mxu0 0.0
      %1530 = vmatprep.subr.mxu0 0.0
      %1531 = vmatpush1.msra.mxu0 0.0
      %1532 = vmatprep.subr.mxu0 0.0
      %1533 = vmatpush1.msra.mxu0 0.0
      %1534 = vmatprep.subr.mxu0 0.0
      %1535 = vmatpush1.msra.mxu0 0.0
      %1536 = vmatprep.subr.mxu0 0.0
      %1537 = vmatpush1.msra.mxu0 0.0
      %1538 = vmatprep.subr.mxu0 0.0
      %1539 = vmatpush1.msra.mxu0 0.0
      %1540 = vmatprep.subr.mxu0 0.0
      %1541 = vmatpush1.msra.mxu0 0.0
      %1542 = vmatprep.subr.mxu0 0.0
      %1543 = vmatpush1.msra.mxu0 0.0
      %1544 = vmatprep.subr.mxu0 0.0
      %1545 = vmatpush1.msra.mxu0 0.0
      %1546 = vmatprep.subr.mxu0 0.0
      %1547 = vmatpush1.msra.mxu0 0.0
      %1548 = vmatprep.mubr.f32.mxu0 0.0
      %1549 = vmatmul.mubr.f32.gmra.mrb[0].mxu0 %v655
      %v1550 = vpop.f32.mrb[0].mxu0
      %v1551 = vadd.f32 %v1474, %v1550
      %v1552 = vpop.f32.mrb[0].mxu0
      %v1553 = vadd.f32 %v1476, %v1552
      %1554 = vmatprep.mubr.f32.mxu0 0.0
      %1555 = vmatmul.mubr.f32.gmra.mrb[0].mxu0 %v661
      %v1556 = vpop.f32.mrb[0].mxu0
      %v1557 = vadd.f32 %v1480, %v1556
      %v1558 = vpop.f32.mrb[0].mxu0
      %v1559 = vadd.f32 %v1482, %v1558
      %1560 = vdwg.mxu0
      %1561 = vmatprep.subr.mxu0 %v858
      %1562 = vmatpush1.msra.mxu0 %v857
      %1563 = vmatprep.subr.mxu0 %v862
      %1564 = vmatpush1.msra.mxu0 %v861
      %1565 = vmatprep.subr.mxu0 %v866
      %1566 = vmatpush1.msra.mxu0 %v865
      %1567 = vmatprep.subr.mxu0 %v870
      %1568 = vmatpush1.msra.mxu0 %v869
      %1569 = vmatprep.subr.mxu0 %v874
      %1570 = vmatpush1.msra.mxu0 %v873
      %1571 = vmatprep.subr.mxu0 %v878
      %1572 = vmatpush1.msra.mxu0 %v877
      %1573 = vmatprep.subr.mxu0 %v882
      %1574 = vmatpush1.msra.mxu0 %v881
      %1575 = vmatprep.subr.mxu0 %v886
      %1576 = vmatpush1.msra.mxu0 %v885
      %1577 = vmatprep.subr.mxu0 %v890
      %1578 = vmatpush1.msra.mxu0 %v889
      %1579 = vmatprep.subr.mxu0 %v894
      %1580 = vmatpush1.msra.mxu0 %v893
      %1581 = vmatprep.subr.mxu0 %v898
      %1582 = vmatpush1.msra.mxu0 %v897
      %1583 = vmatprep.subr.mxu0 %v902
      %1584 = vmatpush1.msra.mxu0 %v901
      %1585 = vmatprep.subr.mxu0 %v906
      %1586 = vmatpush1.msra.mxu0 %v905
      %1587 = vmatprep.subr.mxu0 %v910
      %1588 = vmatpush1.msra.mxu0 %v909
      %1589 = vmatprep.subr.mxu0 %v914
      %1590 = vmatpush1.msra.mxu0 %v913
      %1591 = vmatprep.subr.mxu0 %v918
      %1592 = vmatpush1.msra.mxu0 %v917
      %1593 = vmatprep.subr.mxu0 %v922
      %1594 = vmatpush1.msra.mxu0 %v921
      %1595 = vmatprep.subr.mxu0 %v926
      %1596 = vmatpush1.msra.mxu0 %v925
      %1597 = vmatprep.subr.mxu0 %v930
      %1598 = vmatpush1.msra.mxu0 %v929
      %1599 = vmatprep.subr.mxu0 %v934
      %1600 = vmatpush1.msra.mxu0 %v933
      %1601 = vmatprep.subr.mxu0 %v938
      %1602 = vmatpush1.msra.mxu0 %v937
      %1603 = vmatprep.subr.mxu0 %v942
      %1604 = vmatpush1.msra.mxu0 %v941
      %1605 = vmatprep.subr.mxu0 %v946
      %1606 = vmatpush1.msra.mxu0 %v945
      %1607 = vmatprep.subr.mxu0 %v950
      %1608 = vmatpush1.msra.mxu0 %v949
      %1609 = vmatprep.subr.mxu0 %v954
      %1610 = vmatpush1.msra.mxu0 %v953
      %1611 = vmatprep.subr.mxu0 %v958
      %1612 = vmatpush1.msra.mxu0 %v957
      %1613 = vmatprep.subr.mxu0 %v962
      %1614 = vmatpush1.msra.mxu0 %v961
      %1615 = vmatprep.subr.mxu0 %v966
      %1616 = vmatpush1.msra.mxu0 %v965
      %1617 = vmatprep.subr.mxu0 %v970
      %1618 = vmatpush1.msra.mxu0 %v969
      %1619 = vmatprep.subr.mxu0 %v974
      %1620 = vmatpush1.msra.mxu0 %v973
      %1621 = vmatprep.subr.mxu0 %v978
      %1622 = vmatpush1.msra.mxu0 %v977
      %1623 = vmatprep.subr.mxu0 %v982
      %1624 = vmatpush1.msra.mxu0 %v981
      %1625 = vmatprep.mubr.f32.mxu0 %v653
      %1626 = vmatmul.mubr.f32.gmra.mrb[0].mxu0 %v328
      %v1627 = vpop.f32.mrb[0].mxu0
      %v1628 = vadd.f32 %v1398, %v1627
      %v1629 = vpop.f32.mrb[0].mxu0
      %v1630 = vadd.f32 %v1402, %v1629
      %1631 = vmatprep.mubr.f32.mxu0 %v659
      %1632 = vmatmul.mubr.f32.gmra.mrb[0].mxu0 %v329
      %v1633 = vpop.f32.mrb[0].mxu0
      %v1634 = vadd.f32 %v1398, %v1633
      %v1635 = vpop.f32.mrb[0].mxu0
      %v1636 = vadd.f32 %v1402, %v1635
      %1637 = vdwg.mxu0
      %1638 = vmatprep.subr.mxu0 %v986
      %1639 = vmatpush1.msra.mxu0 %v985
      %1640 = vmatprep.subr.mxu0 %v990
      %1641 = vmatpush1.msra.mxu0 %v989
      %1642 = vmatprep.subr.mxu0 %v994
      %1643 = vmatpush1.msra.mxu0 %v993
      %1644 = vmatprep.subr.mxu0 %v998
      %1645 = vmatpush1.msra.mxu0 %v997
      %1646 = vmatprep.subr.mxu0 %v1002
      %1647 = vmatpush1.msra.mxu0 %v1001
      %1648 = vmatprep.subr.mxu0 %v1006
      %1649 = vmatpush1.msra.mxu0 %v1005
      %1650 = vmatprep.subr.mxu0 %v1010
      %1651 = vmatpush1.msra.mxu0 %v1009
      %1652 = vmatprep.subr.mxu0 %v1014
      %1653 = vmatpush1.msra.mxu0 %v1013
      %1654 = vmatprep.subr.mxu0 %v1018
      %1655 = vmatpush1.msra.mxu0 %v1017
      %1656 = vmatprep.subr.mxu0 %v1022
      %1657 = vmatpush1.msra.mxu0 %v1021
      %1658 = vmatprep.subr.mxu0 %v1026
      %1659 = vmatpush1.msra.mxu0 %v1025
      %1660 = vmatprep.subr.mxu0 %v1030
      %1661 = vmatpush1.msra.mxu0 %v1029
      %1662 = vmatprep.subr.mxu0 %v1034
      %1663 = vmatpush1.msra.mxu0 %v1033
      %1664 = vmatprep.subr.mxu0 %v1038
      %1665 = vmatpush1.msra.mxu0 %v1037
      %1666 = vmatprep.subr.mxu0 %v1042
      %1667 = vmatpush1.msra.mxu0 %v1041
      %1668 = vmatprep.subr.mxu0 %v1046
      %1669 = vmatpush1.msra.mxu0 %v1045
      %1670 = vmatprep.subr.mxu0 0.0
      %1671 = vmatpush1.msra.mxu0 0.0
      %1672 = vmatprep.subr.mxu0 0.0
      %1673 = vmatpush1.msra.mxu0 0.0
      %1674 = vmatprep.subr.mxu0 0.0
      %1675 = vmatpush1.msra.mxu0 0.0
      %1676 = vmatprep.subr.mxu0 0.0
      %1677 = vmatpush1.msra.mxu0 0.0
      %1678 = vmatprep.subr.mxu0 0.0
      %1679 = vmatpush1.msra.mxu0 0.0
      %1680 = vmatprep.subr.mxu0 0.0
      %1681 = vmatpush1.msra.mxu0 0.0
      %1682 = vmatprep.subr.mxu0 0.0
      %1683 = vmatpush1.msra.mxu0 0.0
      %1684 = vmatprep.subr.mxu0 0.0
      %1685 = vmatpush1.msra.mxu0 0.0
      %1686 = vmatprep.subr.mxu0 0.0
      %1687 = vmatpush1.msra.mxu0 0.0
      %1688 = vmatprep.subr.mxu0 0.0
      %1689 = vmatpush1.msra.mxu0 0.0
      %1690 = vmatprep.subr.mxu0 0.0
      %1691 = vmatpush1.msra.mxu0 0.0
      %1692 = vmatprep.subr.mxu0 0.0
      %1693 = vmatpush1.msra.mxu0 0.0
      %1694 = vmatprep.subr.mxu0 0.0
      %1695 = vmatpush1.msra.mxu0 0.0
      %1696 = vmatprep.subr.mxu0 0.0
      %1697 = vmatpush1.msra.mxu0 0.0
      %1698 = vmatprep.subr.mxu0 0.0
      %1699 = vmatpush1.msra.mxu0 0.0
      %1700 = vmatprep.subr.mxu0 0.0
      %1701 = vmatpush1.msra.mxu0 0.0
      %1702 = vmatprep.mubr.f32.mxu0 0.0
      %1703 = vmatmul.mubr.f32.gmra.mrb[0].mxu0 %v655
      %v1704 = vpop.f32.mrb[0].mxu0
      %v1705 = vadd.f32 %v1628, %v1704
      %v1706 = vpop.f32.mrb[0].mxu0
      %v1707 = vadd.f32 %v1630, %v1706
      %1708 = vmatprep.mubr.f32.mxu0 0.0
      %1709 = vmatmul.mubr.f32.gmra.mrb[0].mxu0 %v661
      %v1710 = vpop.f32.mrb[0].mxu0
      %v1711 = vadd.f32 %v1634, %v1710
      %v1712 = vpop.f32.mrb[0].mxu0
      %v1713 = vadd.f32 %v1636, %v1712
      %1714 = vdwg.mxu0
      %1715 = vst [vmem:[#allocation3] sm:$0xff] %v1551
      %1716 = vst [vmem:[#allocation3 + $0x8] sm:$0xff] %v1553
      %1717 = vst [vmem:[#allocation3 + $0x10] sm:$0xff] %v1705
      %1718 = vst [vmem:[#allocation3 + $0x18] sm:$0xff] %v1707
      %1719 = vst [vmem:[#allocation3 + $0x20] sm:$0xff] %v1557
      %1720 = vst [vmem:[#allocation3 + $0x28] sm:$0xff] %v1559
      %1721 = vst [vmem:[#allocation3 + $0x30] sm:$0xff] %v1711
      %1722 = vst [vmem:[#allocation3 + $0x38] sm:$0xff] %v1713
      %v1723 = vld [vmem:[%s3] sm:$0xff]
      %v1724 = vld [vmem:[%s3 + $0x8] sm:$0xff]
      %v1725 = vld [vmem:[%s3 + $0x10] sm:$0xff]
      %v1726 = vld [vmem:[%s3 + $0x18] sm:$0xff]
      %v1727 = vld [vmem:[%s3 + $0x20] sm:$0xff]
      %v1728 = vld [vmem:[%s3 + $0x28] sm:$0xff]
      %v1729 = vld [vmem:[%s3 + $0x30] sm:$0xff]
      %v1730 = vld [vmem:[%s3 + $0x38] sm:$0xff]
      %v1731 = vld [vmem:[%s3 + $0x40] sm:$0xff]
      %v1732 = vld [vmem:[%s3 + $0x48] sm:$0xff]
      %v1733 = vld [vmem:[%s3 + $0x50] sm:$0xff]
      %v1734 = vld [vmem:[%s3 + $0x58] sm:$0xff]
      %v1735 = vld [vmem:[%s3 + $0x60] sm:$0xff]
      %v1736 = vld [vmem:[%s3 + $0x68] sm:$0xff]
      %v1737 = vld [vmem:[%s3 + $0x70] sm:$0xff]
      %v1738 = vld [vmem:[%s3 + $0x78] sm:$0xff]
      %v1739 = vld [vmem:[%s3 + $0x80] sm:$0xff]
      %v1740 = vld [vmem:[%s3 + $0x88] sm:$0xff]
      %v1741 = vld [vmem:[%s3 + $0x90] sm:$0xff]
      %v1742 = vld [vmem:[%s3 + $0x98] sm:$0xff]
      %v1743 = vld [vmem:[%s3 + $0xa0] sm:$0xff]
      %v1744 = vld [vmem:[%s3 + $0xa8] sm:$0xff]
      %v1745 = vld [vmem:[%s3 + $0xb0] sm:$0xff]
      %v1746 = vld [vmem:[%s3 + $0xb8] sm:$0xff]
      %v1747 = vld [vmem:[%s3 + $0xc0] sm:$0xff]
      %v1748 = vld [vmem:[%s3 + $0xc8] sm:$0xff]
      %v1749 = vld [vmem:[%s3 + $0xd0] sm:$0xff]
      %v1750 = vld [vmem:[%s3 + $0xd8] sm:$0xff]
      %v1751 = vld [vmem:[%s3 + $0xe0] sm:$0xff]
      %v1752 = vld [vmem:[%s3 + $0xe8] sm:$0xff]
      %v1753 = vld [vmem:[%s3 + $0xf0] sm:$0xff]
      %v1754 = vld [vmem:[%s3 + $0xf8] sm:$0xff]
      %v1755 = vld [vmem:[%s3 + $0x100] sm:$0xff]
      %v1756 = vld [vmem:[%s3 + $0x108] sm:$0xff]
      %v1757 = vld [vmem:[%s3 + $0x110] sm:$0xff]
      %v1758 = vld [vmem:[%s3 + $0x118] sm:$0xff]
      %v1759 = vld [vmem:[%s3 + $0x120] sm:$0xff]
      %v1760 = vld [vmem:[%s3 + $0x128] sm:$0xff]
      %v1761 = vld [vmem:[%s3 + $0x130] sm:$0xff]
      %v1762 = vld [vmem:[%s3 + $0x138] sm:$0xff]
      %v1763 = vld [vmem:[%s3 + $0x140] sm:$0xff]
      %v1764 = vld [vmem:[%s3 + $0x148] sm:$0xff]
      %v1765 = vld [vmem:[%s3 + $0x150] sm:$0xff]
      %v1766 = vld [vmem:[%s3 + $0x158] sm:$0xff]
      %v1767 = vld [vmem:[%s3 + $0x160] sm:$0xff]
      %v1768 = vld [vmem:[%s3 + $0x168] sm:$0xff]
      %v1769 = vld [vmem:[%s3 + $0x170] sm:$0xff]
      %v1770 = vld [vmem:[%s3 + $0x178] sm:$0xff]
      %v1771 = vld [vmem:[%s3 + $0x180] sm:$0xff]
      %v1772 = vld [vmem:[%s3 + $0x188] sm:$0xff]
      %v1773 = vld [vmem:[%s3 + $0x190] sm:$0xff]
      %v1774 = vld [vmem:[%s3 + $0x198] sm:$0xff]
      %v1775 = vld [vmem:[%s3 + $0x1a0] sm:$0xff]
      %v1776 = vld [vmem:[%s3 + $0x1a8] sm:$0xff]
      %v1777 = vld [vmem:[%s3 + $0x1b0] sm:$0xff]
      %v1778 = vld [vmem:[%s3 + $0x1b8] sm:$0xff]
      %v1779 = vld [vmem:[%s3 + $0x1c0] sm:$0xff]
      %v1780 = vld [vmem:[%s3 + $0x1c8] sm:$0xff]
      %v1781 = vld [vmem:[%s3 + $0x1d0] sm:$0xff]
      %v1782 = vld [vmem:[%s3 + $0x1d8] sm:$0xff]
      %v1783 = vld [vmem:[%s3 + $0x1e0] sm:$0xff]
      %v1784 = vld [vmem:[%s3 + $0x1e8] sm:$0xff]
      %v1785 = vld [vmem:[%s3 + $0x1f0] sm:$0xff]
      %v1786 = vld [vmem:[%s3 + $0x1f8] sm:$0xff]
      %v1787 = vld [vmem:[%s6] sm:$0xff]
      %v1788 = vld [vmem:[%s6 + $0x8] sm:$0xff]
      %v1789 = vld [vmem:[%s6 + $0x10] sm:$0xff]
      %v1790 = vld [vmem:[%s6 + $0x18] sm:$0xff]
      %v1791 = vld [vmem:[%s6 + $0x20] sm:$0xff]
      %v1792 = vld [vmem:[%s6 + $0x28] sm:$0xff]
      %v1793 = vld [vmem:[%s6 + $0x30] sm:$0xff]
      %v1794 = vld [vmem:[%s6 + $0x38] sm:$0xff]
      %v1795 = vld [vmem:[%s6 + $0x40] sm:$0xff]
      %v1796 = vld [vmem:[%s6 + $0x48] sm:$0xff]
      %v1797 = vld [vmem:[%s6 + $0x50] sm:$0xff]
      %v1798 = vld [vmem:[%s6 + $0x58] sm:$0xff]
      %v1799 = vld [vmem:[%s6 + $0x60] sm:$0xff]
      %v1800 = vld [vmem:[%s6 + $0x68] sm:$0xff]
      %v1801 = vld [vmem:[%s6 + $0x70] sm:$0xff]
      %v1802 = vld [vmem:[%s6 + $0x78] sm:$0xff]
      %v1803 = vld [vmem:[%s6 + $0x80] sm:$0xff]
      %v1804 = vld [vmem:[%s6 + $0x88] sm:$0xff]
      %v1805 = vld [vmem:[%s6 + $0x90] sm:$0xff]
      %v1806 = vld [vmem:[%s6 + $0x98] sm:$0xff]
      %v1807 = vld [vmem:[%s6 + $0xa0] sm:$0xff]
      %v1808 = vld [vmem:[%s6 + $0xa8] sm:$0xff]
      %v1809 = vld [vmem:[%s6 + $0xb0] sm:$0xff]
      %v1810 = vld [vmem:[%s6 + $0xb8] sm:$0xff]
      %v1811 = vld [vmem:[%s6 + $0xc0] sm:$0xff]
      %v1812 = vld [vmem:[%s6 + $0xc8] sm:$0xff]
      %v1813 = vld [vmem:[%s6 + $0xd0] sm:$0xff]
      %v1814 = vld [vmem:[%s6 + $0xd8] sm:$0xff]
      %v1815 = vld [vmem:[%s6 + $0xe0] sm:$0xff]
      %v1816 = vld [vmem:[%s6 + $0xe8] sm:$0xff]
      %v1817 = vld [vmem:[%s6 + $0xf0] sm:$0xff]
      %v1818 = vld [vmem:[%s6 + $0xf8] sm:$0xff]
      %v1819 = vld [vmem:[%s6 + $0x100] sm:$0xff]
      %v1820 = vld [vmem:[%s6 + $0x108] sm:$0xff]
      %v1821 = vld [vmem:[%s6 + $0x110] sm:$0xff]
      %v1822 = vld [vmem:[%s6 + $0x118] sm:$0xff]
      %v1823 = vld [vmem:[%s6 + $0x120] sm:$0xff]
      %v1824 = vld [vmem:[%s6 + $0x128] sm:$0xff]
      %v1825 = vld [vmem:[%s6 + $0x130] sm:$0xff]
      %v1826 = vld [vmem:[%s6 + $0x138] sm:$0xff]
      %v1827 = vld [vmem:[%s6 + $0x140] sm:$0xff]
      %v1828 = vld [vmem:[%s6 + $0x148] sm:$0xff]
      %v1829 = vld [vmem:[%s6 + $0x150] sm:$0xff]
      %v1830 = vld [vmem:[%s6 + $0x158] sm:$0xff]
      %v1831 = vld [vmem:[%s6 + $0x160] sm:$0xff]
      %v1832 = vld [vmem:[%s6 + $0x168] sm:$0xff]
      %v1833 = vld [vmem:[%s6 + $0x170] sm:$0xff]
      %v1834 = vld [vmem:[%s6 + $0x178] sm:$0xff]
      %v1835 = vld [vmem:[%s6 + $0x180] sm:$0xff]
      %v1836 = vld [vmem:[%s6 + $0x188] sm:$0xff]
      %v1837 = vld [vmem:[%s6 + $0x190] sm:$0xff]
      %v1838 = vld [vmem:[%s6 + $0x198] sm:$0xff]
      %v1839 = vld [vmem:[%s6 + $0x1a0] sm:$0xff]
      %v1840 = vld [vmem:[%s6 + $0x1a8] sm:$0xff]
      %v1841 = vld [vmem:[%s6 + $0x1b0] sm:$0xff]
      %v1842 = vld [vmem:[%s6 + $0x1b8] sm:$0xff]
      %v1843 = vld [vmem:[%s6 + $0x1c0] sm:$0xff]
      %v1844 = vld [vmem:[%s6 + $0x1c8] sm:$0xff]
      %v1845 = vld [vmem:[%s6 + $0x1d0] sm:$0xff]
      %v1846 = vld [vmem:[%s6 + $0x1d8] sm:$0xff]
      %v1847 = vld [vmem:[%s6 + $0x1e0] sm:$0xff]
      %v1848 = vld [vmem:[%s6 + $0x1e8] sm:$0xff]
      %v1849 = vld [vmem:[%s6 + $0x1f0] sm:$0xff]
      %v1850 = vld [vmem:[%s6 + $0x1f8] sm:$0xff]
      %v1851 = vld [vmem:[#allocation2] ss:$8 sm:$0xf]
      %1852 = vmatprep.subr.mxu0 %v1724
      %1853 = vmatpush1.msra.mxu0 %v1723
      %1854 = vmatprep.subr.mxu0 %v1728
      %1855 = vmatpush1.msra.mxu0 %v1727
      %1856 = vmatprep.subr.mxu0 %v1732
      %1857 = vmatpush1.msra.mxu0 %v1731
      %1858 = vmatprep.subr.mxu0 %v1736
      %1859 = vmatpush1.msra.mxu0 %v1735
      %1860 = vmatprep.subr.mxu0 %v1740
      %1861 = vmatpush1.msra.mxu0 %v1739
      %1862 = vmatprep.subr.mxu0 %v1744
      %1863 = vmatpush1.msra.mxu0 %v1743
      %1864 = vmatprep.subr.mxu0 %v1748
      %1865 = vmatpush1.msra.mxu0 %v1747
      %1866 = vmatprep.subr.mxu0 %v1752
      %1867 = vmatpush1.msra.mxu0 %v1751
      %1868 = vmatprep.subr.mxu0 %v1756
      %1869 = vmatpush1.msra.mxu0 %v1755
      %1870 = vmatprep.subr.mxu0 %v1760
      %1871 = vmatpush1.msra.mxu0 %v1759
      %1872 = vmatprep.subr.mxu0 %v1764
      %1873 = vmatpush1.msra.mxu0 %v1763
      %1874 = vmatprep.subr.mxu0 %v1768
      %1875 = vmatpush1.msra.mxu0 %v1767
      %1876 = vmatprep.subr.mxu0 %v1772
      %1877 = vmatpush1.msra.mxu0 %v1771
      %1878 = vmatprep.subr.mxu0 %v1776
      %1879 = vmatpush1.msra.mxu0 %v1775
      %1880 = vmatprep.subr.mxu0 %v1780
      %1881 = vmatpush1.msra.mxu0 %v1779
      %1882 = vmatprep.subr.mxu0 %v1784
      %1883 = vmatpush1.msra.mxu0 %v1783
      %1884 = vmatprep.subr.mxu0 0.0
      %1885 = vmatpush1.msra.mxu0 0.0
      %1886 = vmatprep.subr.mxu0 0.0
      %1887 = vmatpush1.msra.mxu0 0.0
      %1888 = vmatprep.subr.mxu0 0.0
      %1889 = vmatpush1.msra.mxu0 0.0
      %1890 = vmatprep.subr.mxu0 0.0
      %1891 = vmatpush1.msra.mxu0 0.0
      %1892 = vmatprep.subr.mxu0 0.0
      %1893 = vmatpush1.msra.mxu0 0.0
      %1894 = vmatprep.subr.mxu0 0.0
      %1895 = vmatpush1.msra.mxu0 0.0
      %1896 = vmatprep.subr.mxu0 0.0
      %1897 = vmatpush1.msra.mxu0 0.0
      %1898 = vmatprep.subr.mxu0 0.0
      %1899 = vmatpush1.msra.mxu0 0.0
      %1900 = vmatprep.subr.mxu0 0.0
      %1901 = vmatpush1.msra.mxu0 0.0
      %1902 = vmatprep.subr.mxu0 0.0
      %1903 = vmatpush1.msra.mxu0 0.0
      %1904 = vmatprep.subr.mxu0 0.0
      %1905 = vmatpush1.msra.mxu0 0.0
      %1906 = vmatprep.subr.mxu0 0.0
      %1907 = vmatpush1.msra.mxu0 0.0
      %1908 = vmatprep.subr.mxu0 0.0
      %1909 = vmatpush1.msra.mxu0 0.0
      %1910 = vmatprep.subr.mxu0 0.0
      %1911 = vmatpush1.msra.mxu0 0.0
      %1912 = vmatprep.subr.mxu0 0.0
      %1913 = vmatpush1.msra.mxu0 0.0
      %1914 = vmatprep.subr.mxu0 0.0
      %1915 = vmatpush1.msra.mxu0 0.0
      %1916 = vmatprep.mubr.f32.mxu0 0.0
      %1917 = vmatmul.mubr.f32.gmra.mrb[0].mxu0 0.0
      %v1918 = vpop.f32.mrb[0].mxu0
      %v1919 = vadd.f32 0.0, %v1918
      %v1920 = vpop.f32.mrb[0].mxu0
      %v1921 = vadd.f32 0.0, %v1920
      %1922 = vdwg.mxu0
      %1923 = vmatprep.subr.mxu0 %v1726
      %1924 = vmatpush1.msra.mxu0 %v1725
      %1925 = vmatprep.subr.mxu0 %v1730
      %1926 = vmatpush1.msra.mxu0 %v1729
      %1927 = vmatprep.subr.mxu0 %v1734
      %1928 = vmatpush1.msra.mxu0 %v1733
      %1929 = vmatprep.subr.mxu0 %v1738
      %1930 = vmatpush1.msra.mxu0 %v1737
      %1931 = vmatprep.subr.mxu0 %v1742
      %1932 = vmatpush1.msra.mxu0 %v1741
      %1933 = vmatprep.subr.mxu0 %v1746
      %1934 = vmatpush1.msra.mxu0 %v1745
      %1935 = vmatprep.subr.mxu0 %v1750
      %1936 = vmatpush1.msra.mxu0 %v1749
      %1937 = vmatprep.subr.mxu0 %v1754
      %1938 = vmatpush1.msra.mxu0 %v1753
      %1939 = vmatprep.subr.mxu0 %v1758
      %1940 = vmatpush1.msra.mxu0 %v1757
      %1941 = vmatprep.subr.mxu0 %v1762
      %1942 = vmatpush1.msra.mxu0 %v1761
      %1943 = vmatprep.subr.mxu0 %v1766
      %1944 = vmatpush1.msra.mxu0 %v1765
      %1945 = vmatprep.subr.mxu0 %v1770
      %1946 = vmatpush1.msra.mxu0 %v1769
      %1947 = vmatprep.subr.mxu0 %v1774
      %1948 = vmatpush1.msra.mxu0 %v1773
      %1949 = vmatprep.subr.mxu0 %v1778
      %1950 = vmatpush1.msra.mxu0 %v1777
      %1951 = vmatprep.subr.mxu0 %v1782
      %1952 = vmatpush1.msra.mxu0 %v1781
      %1953 = vmatprep.subr.mxu0 %v1786
      %1954 = vmatpush1.msra.mxu0 %v1785
      %1955 = vmatprep.subr.mxu0 0.0
      %1956 = vmatpush1.msra.mxu0 0.0
      %1957 = vmatprep.subr.mxu0 0.0
      %1958 = vmatpush1.msra.mxu0 0.0
      %1959 = vmatprep.subr.mxu0 0.0
      %1960 = vmatpush1.msra.mxu0 0.0
      %1961 = vmatprep.subr.mxu0 0.0
      %1962 = vmatpush1.msra.mxu0 0.0
      %1963 = vmatprep.subr.mxu0 0.0
      %1964 = vmatpush1.msra.mxu0 0.0
      %1965 = vmatprep.subr.mxu0 0.0
      %1966 = vmatpush1.msra.mxu0 0.0
      %1967 = vmatprep.subr.mxu0 0.0
      %1968 = vmatpush1.msra.mxu0 0.0
      %1969 = vmatprep.subr.mxu0 0.0
      %1970 = vmatpush1.msra.mxu0 0.0
      %1971 = vmatprep.subr.mxu0 0.0
      %1972 = vmatpush1.msra.mxu0 0.0
      %1973 = vmatprep.subr.mxu0 0.0
      %1974 = vmatpush1.msra.mxu0 0.0
      %1975 = vmatprep.subr.mxu0 0.0
      %1976 = vmatpush1.msra.mxu0 0.0
      %1977 = vmatprep.subr.mxu0 0.0
      %1978 = vmatpush1.msra.mxu0 0.0
      %1979 = vmatprep.subr.mxu0 0.0
      %1980 = vmatpush1.msra.mxu0 0.0
      %1981 = vmatprep.subr.mxu0 0.0
      %1982 = vmatpush1.msra.mxu0 0.0
      %1983 = vmatprep.subr.mxu0 0.0
      %1984 = vmatpush1.msra.mxu0 0.0
      %1985 = vmatprep.subr.mxu0 0.0
      %1986 = vmatpush1.msra.mxu0 0.0
      %1987 = vmatprep.mubr.f32.mxu0 0.0
      %1988 = vmatmul.mubr.f32.gmra.mrb[0].mxu0 0.0
      %v1989 = vpop.f32.mrb[0].mxu0
      %v1990 = vadd.f32 0.0, %v1989
      %v1991 = vpop.f32.mrb[0].mxu0
      %v1992 = vadd.f32 0.0, %v1991
      %1993 = vdwg.mxu0
      %v1998 = vcombine.low %v1919, %v1921
      %v1999 = vcombine.low %v1990, %v1992
      %v2001 = vunpack.c.l.s4 1966171168
      %v2002 = vunpack.c.0.s8 %v2001
      %v2003 = vlaneseq
      %v2004 = vshrl.u32 %v2003, 7
      %v2005 = vsub.s32 %v2002, %v2004
      %v2006 = vrot.slane %v1998, %v2005
      %v2008 = vunpack.c.l.s4 1966171168
      %v2009 = vunpack.c.0.s8 %v2008
      %v2010 = vlaneseq
      %v2011 = vshrl.u32 %v2010, 7
      %v2012 = vsub.s32 %v2009, %v2011
      %v2013 = vrot.slane %v1999, %v2012
      %v2014 = vcombine.low %v2006, %v2013
      %v2016 = vunpack.c.l.s4 1966171168
      %v2017 = vunpack.c.0.s8 %v2016
      %v2018 = vlaneseq
      %v2019 = vshrl.u32 %v2018, 7
      %v2020 = vsub.s32 %v2017, %v2019
      %v2021 = vrot.slane %v2014, %v2020
      %v2023 = vadd.f32 %v1851, %v2021
      %s2024 = scalar_lea.vmem [#allocation3], 34
      %v2025 = vld [vmem:[%s2024] ss:$8 sm:$0xf]
      %2026 = vmatprep.subr.mxu0 %v1788
      %2027 = vmatpush1.msra.mxu0 %v1787
      %2028 = vmatprep.subr.mxu0 %v1792
      %2029 = vmatpush1.msra.mxu0 %v1791
      %2030 = vmatprep.subr.mxu0 %v1796
      %2031 = vmatpush1.msra.mxu0 %v1795
      %2032 = vmatprep.subr.mxu0 %v1800
      %2033 = vmatpush1.msra.mxu0 %v1799
      %2034 = vmatprep.subr.mxu0 %v1804
      %2035 = vmatpush1.msra.mxu0 %v1803
      %2036 = vmatprep.subr.mxu0 %v1808
      %2037 = vmatpush1.msra.mxu0 %v1807
      %2038 = vmatprep.subr.mxu0 %v1812
      %2039 = vmatpush1.msra.mxu0 %v1811
      %2040 = vmatprep.subr.mxu0 %v1816
      %2041 = vmatpush1.msra.mxu0 %v1815
      %2042 = vmatprep.subr.mxu0 %v1820
      %2043 = vmatpush1.msra.mxu0 %v1819
      %2044 = vmatprep.subr.mxu0 %v1824
      %2045 = vmatpush1.msra.mxu0 %v1823
      %2046 = vmatprep.subr.mxu0 %v1828
      %2047 = vmatpush1.msra.mxu0 %v1827
      %2048 = vmatprep.subr.mxu0 %v1832
      %2049 = vmatpush1.msra.mxu0 %v1831
      %2050 = vmatprep.subr.mxu0 %v1836
      %2051 = vmatpush1.msra.mxu0 %v1835
      %2052 = vmatprep.subr.mxu0 %v1840
      %2053 = vmatpush1.msra.mxu0 %v1839
      %2054 = vmatprep.subr.mxu0 %v1844
      %2055 = vmatpush1.msra.mxu0 %v1843
      %2056 = vmatprep.subr.mxu0 %v1848
      %2057 = vmatpush1.msra.mxu0 %v1847
      %2058 = vmatprep.subr.mxu0 0.0
      %2059 = vmatpush1.msra.mxu0 0.0
      %2060 = vmatprep.subr.mxu0 0.0
      %2061 = vmatpush1.msra.mxu0 0.0
      %2062 = vmatprep.subr.mxu0 0.0
      %2063 = vmatpush1.msra.mxu0 0.0
      %2064 = vmatprep.subr.mxu0 0.0
      %2065 = vmatpush1.msra.mxu0 0.0
      %2066 = vmatprep.subr.mxu0 0.0
      %2067 = vmatpush1.msra.mxu0 0.0
      %2068 = vmatprep.subr.mxu0 0.0
      %2069 = vmatpush1.msra.mxu0 0.0
      %2070 = vmatprep.subr.mxu0 0.0
      %2071 = vmatpush1.msra.mxu0 0.0
      %2072 = vmatprep.subr.mxu0 0.0
      %2073 = vmatpush1.msra.mxu0 0.0
      %2074 = vmatprep.subr.mxu0 0.0
      %2075 = vmatpush1.msra.mxu0 0.0
      %2076 = vmatprep.subr.mxu0 0.0
      %2077 = vmatpush1.msra.mxu0 0.0
      %2078 = vmatprep.subr.mxu0 0.0
      %2079 = vmatpush1.msra.mxu0 0.0
      %2080 = vmatprep.subr.mxu0 0.0
      %2081 = vmatpush1.msra.mxu0 0.0
      %2082 = vmatprep.subr.mxu0 0.0
      %2083 = vmatpush1.msra.mxu0 0.0
      %2084 = vmatprep.subr.mxu0 0.0
      %2085 = vmatpush1.msra.mxu0 0.0
      %2086 = vmatprep.subr.mxu0 0.0
      %2087 = vmatpush1.msra.mxu0 0.0
      %2088 = vmatprep.subr.mxu0 0.0
      %2089 = vmatpush1.msra.mxu0 0.0
      %2090 = vmatprep.mubr.f32.mxu0 0.0
      %2091 = vmatmul.mubr.f32.gmra.mrb[0].mxu0 0.0
      %v2092 = vpop.f32.mrb[0].mxu0
      %v2093 = vadd.f32 0.0, %v2092
      %v2094 = vpop.f32.mrb[0].mxu0
      %v2095 = vadd.f32 0.0, %v2094
      %2096 = vdwg.mxu0
      %2097 = vmatprep.subr.mxu0 %v1790
      %2098 = vmatpush1.msra.mxu0 %v1789
      %2099 = vmatprep.subr.mxu0 %v1794
      %2100 = vmatpush1.msra.mxu0 %v1793
      %2101 = vmatprep.subr.mxu0 %v1798
      %2102 = vmatpush1.msra.mxu0 %v1797
      %2103 = vmatprep.subr.mxu0 %v1802
      %2104 = vmatpush1.msra.mxu0 %v1801
      %2105 = vmatprep.subr.mxu0 %v1806
      %2106 = vmatpush1.msra.mxu0 %v1805
      %2107 = vmatprep.subr.mxu0 %v1810
      %2108 = vmatpush1.msra.mxu0 %v1809
      %2109 = vmatprep.subr.mxu0 %v1814
      %2110 = vmatpush1.msra.mxu0 %v1813
      %2111 = vmatprep.subr.mxu0 %v1818
      %2112 = vmatpush1.msra.mxu0 %v1817
      %2113 = vmatprep.subr.mxu0 %v1822
      %2114 = vmatpush1.msra.mxu0 %v1821
      %2115 = vmatprep.subr.mxu0 %v1826
      %2116 = vmatpush1.msra.mxu0 %v1825
      %2117 = vmatprep.subr.mxu0 %v1830
      %2118 = vmatpush1.msra.mxu0 %v1829
      %2119 = vmatprep.subr.mxu0 %v1834
      %2120 = vmatpush1.msra.mxu0 %v1833
      %2121 = vmatprep.subr.mxu0 %v1838
      %2122 = vmatpush1.msra.mxu0 %v1837
      %2123 = vmatprep.subr.mxu0 %v1842
      %2124 = vmatpush1.msra.mxu0 %v1841
      %2125 = vmatprep.subr.mxu0 %v1846
      %2126 = vmatpush1.msra.mxu0 %v1845
      %2127 = vmatprep.subr.mxu0 %v1850
      %2128 = vmatpush1.msra.mxu0 %v1849
      %2129 = vmatprep.subr.mxu0 0.0
      %2130 = vmatpush1.msra.mxu0 0.0
      %2131 = vmatprep.subr.mxu0 0.0
      %2132 = vmatpush1.msra.mxu0 0.0
      %2133 = vmatprep.subr.mxu0 0.0
      %2134 = vmatpush1.msra.mxu0 0.0
      %2135 = vmatprep.subr.mxu0 0.0
      %2136 = vmatpush1.msra.mxu0 0.0
      %2137 = vmatprep.subr.mxu0 0.0
      %2138 = vmatpush1.msra.mxu0 0.0
      %2139 = vmatprep.subr.mxu0 0.0
      %2140 = vmatpush1.msra.mxu0 0.0
      %2141 = vmatprep.subr.mxu0 0.0
      %2142 = vmatpush1.msra.mxu0 0.0
      %2143 = vmatprep.subr.mxu0 0.0
      %2144 = vmatpush1.msra.mxu0 0.0
      %2145 = vmatprep.subr.mxu0 0.0
      %2146 = vmatpush1.msra.mxu0 0.0
      %2147 = vmatprep.subr.mxu0 0.0
      %2148 = vmatpush1.msra.mxu0 0.0
      %2149 = vmatprep.subr.mxu0 0.0
      %2150 = vmatpush1.msra.mxu0 0.0
      %2151 = vmatprep.subr.mxu0 0.0
      %2152 = vmatpush1.msra.mxu0 0.0
      %2153 = vmatprep.subr.mxu0 0.0
      %2154 = vmatpush1.msra.mxu0 0.0
      %2155 = vmatprep.subr.mxu0 0.0
      %2156 = vmatpush1.msra.mxu0 0.0
      %2157 = vmatprep.subr.mxu0 0.0
      %2158 = vmatpush1.msra.mxu0 0.0
      %2159 = vmatprep.subr.mxu0 0.0
      %2160 = vmatpush1.msra.mxu0 0.0
      %2161 = vmatprep.mubr.f32.mxu0 0.0
      %2162 = vmatmul.mubr.f32.gmra.mrb[0].mxu0 0.0
      %v2163 = vpop.f32.mrb[0].mxu0
      %v2164 = vadd.f32 0.0, %v2163
      %v2165 = vpop.f32.mrb[0].mxu0
      %v2166 = vadd.f32 0.0, %v2165
      %2167 = vdwg.mxu0
      %v2172 = vcombine.low %v2093, %v2095
      %v2173 = vcombine.low %v2164, %v2166
      %v2175 = vunpack.c.l.s4 1966171168
      %v2176 = vunpack.c.0.s8 %v2175
      %v2177 = vlaneseq
      %v2178 = vshrl.u32 %v2177, 7
      %v2179 = vsub.s32 %v2176, %v2178
      %v2180 = vrot.slane %v2172, %v2179
      %v2182 = vunpack.c.l.s4 1966171168
      %v2183 = vunpack.c.0.s8 %v2182
      %v2184 = vlaneseq
      %v2185 = vshrl.u32 %v2184, 7
      %v2186 = vsub.s32 %v2183, %v2185
      %v2187 = vrot.slane %v2173, %v2186
      %v2188 = vcombine.low %v2180, %v2187
      %v2190 = vunpack.c.l.s4 1966171168
      %v2191 = vunpack.c.0.s8 %v2190
      %v2192 = vlaneseq
      %v2193 = vshrl.u32 %v2192, 7
      %v2194 = vsub.s32 %v2191, %v2193
      %v2195 = vrot.slane %v2188, %v2194
      %v2197 = vadd.f32 %v2025, %v2195
      %v2198 = vxor.u32 %v2023, 2147483648
      %v2199 = vmul.f32 %v2198, 1.442695
      %v2200 = vpow.pop %v2199
      %v2201 = vadd.f32 %v2200, 1.0
      %v2202 = vrcp.pop %v2201
      %v2203 = vmul.f32 1.0, %v2202
      %v2205 = vrot.slane %v2023, 1
      %v2207 = vxor.u32 %v2205, 2147483648
      %v2208 = vmul.f32 %v2207, 1.442695
      %v2209 = vpow.pop %v2208
      %v2210 = vadd.f32 %v2209, 1.0
      %v2211 = vrcp.pop %v2210
      %v2212 = vmul.f32 1.0, %v2211
      %v2213 = vrot.slane %v2023, 2
      %v2215 = vtanh.pop %v2213
      %v2216 = vrot.slane %v2023, 3
      %v2218 = vxor.u32 %v2216, 2147483648
      %v2219 = vmul.f32 %v2218, 1.442695
      %v2220 = vpow.pop %v2219
      %v2221 = vadd.f32 %v2220, 1.0
      %v2222 = vrcp.pop %v2221
      %v2223 = vmul.f32 1.0, %v2222
      %v2224 = vmul.f32 %v2212, 0.0
      %v2225 = vmul.f32 %v2203, %v2215
      %v2226 = vadd.f32 %v2224, %v2225
      %v2227 = vtanh.pop %v2226
      %v2228 = vmul.f32 %v2223, %v2227
      %v2229 = vxor.u32 %v2197, 2147483648
      %v2230 = vmul.f32 %v2229, 1.442695
      %v2231 = vpow.pop %v2230
      %v2232 = vadd.f32 %v2231, 1.0
      %v2233 = vrcp.pop %v2232
      %v2234 = vmul.f32 1.0, %v2233
      %v2236 = vrot.slane %v2197, 1
      %v2238 = vxor.u32 %v2236, 2147483648
      %v2239 = vmul.f32 %v2238, 1.442695
      %v2240 = vpow.pop %v2239
      %v2241 = vadd.f32 %v2240, 1.0
      %v2242 = vrcp.pop %v2241
      %v2243 = vmul.f32 1.0, %v2242
      %v2244 = vrot.slane %v2197, 2
      %v2246 = vtanh.pop %v2244
      %v2247 = vrot.slane %v2197, 3
      %v2249 = vxor.u32 %v2247, 2147483648
      %v2250 = vmul.f32 %v2249, 1.442695
      %v2251 = vpow.pop %v2250
      %v2252 = vadd.f32 %v2251, 1.0
      %v2253 = vrcp.pop %v2252
      %v2254 = vmul.f32 1.0, %v2253
      %v2255 = vmul.f32 %v2243, 0.0
      %v2256 = vmul.f32 %v2234, %v2246
      %v2257 = vadd.f32 %v2255, %v2256
      %v2258 = vtanh.pop %v2257
      %v2259 = vmul.f32 %v2254, %v2258
      %2260 = vst [vmem:[%s325] sm:$0x1] %v2228
      %2261 = vst [vmem:[%s325 + $0x1a] sm:$0x1] %v2259
      %s2262 = scalar_lea.vmem [#allocation2], 1
      %v2263 = vld [vmem:[%s2262] ss:$8 sm:$0xf]
      %2264 = vmatprep.subr.mxu0 %v1724
      %2265 = vmatpush1.msra.mxu0 %v1723
      %2266 = vmatprep.subr.mxu0 %v1728
      %2267 = vmatpush1.msra.mxu0 %v1727
      %2268 = vmatprep.subr.mxu0 %v1732
      %2269 = vmatpush1.msra.mxu0 %v1731
      %2270 = vmatprep.subr.mxu0 %v1736
      %2271 = vmatpush1.msra.mxu0 %v1735
      %2272 = vmatprep.subr.mxu0 %v1740
      %2273 = vmatpush1.msra.mxu0 %v1739
      %2274 = vmatprep.subr.mxu0 %v1744
      %2275 = vmatpush1.msra.mxu0 %v1743
      %2276 = vmatprep.subr.mxu0 %v1748
      %2277 = vmatpush1.msra.mxu0 %v1747
      %2278 = vmatprep.subr.mxu0 %v1752
      %2279 = vmatpush1.msra.mxu0 %v1751
      %2280 = vmatprep.subr.mxu0 %v1756
      %2281 = vmatpush1.msra.mxu0 %v1755
      %2282 = vmatprep.subr.mxu0 %v1760
      %2283 = vmatpush1.msra.mxu0 %v1759
      %2284 = vmatprep.subr.mxu0 %v1764
      %2285 = vmatpush1.msra.mxu0 %v1763
      %2286 = vmatprep.subr.mxu0 %v1768
      %2287 = vmatpush1.msra.mxu0 %v1767
      %2288 = vmatprep.subr.mxu0 %v1772
      %2289 = vmatpush1.msra.mxu0 %v1771
      %2290 = vmatprep.subr.mxu0 %v1776
      %2291 = vmatpush1.msra.mxu0 %v1775
      %2292 = vmatprep.subr.mxu0 %v1780
      %2293 = vmatpush1.msra.mxu0 %v1779
      %2294 = vmatprep.subr.mxu0 %v1784
      %2295 = vmatpush1.msra.mxu0 %v1783
      %2296 = vmatprep.subr.mxu0 0.0
      %2297 = vmatpush1.msra.mxu0 0.0
      %2298 = vmatprep.subr.mxu0 0.0
      %2299 = vmatpush1.msra.mxu0 0.0
      %2300 = vmatprep.subr.mxu0 0.0
      %2301 = vmatpush1.msra.mxu0 0.0
      %2302 = vmatprep.subr.mxu0 0.0
      %2303 = vmatpush1.msra.mxu0 0.0
      %2304 = vmatprep.subr.mxu0 0.0
      %2305 = vmatpush1.msra.mxu0 0.0
      %2306 = vmatprep.subr.mxu0 0.0
      %2307 = vmatpush1.msra.mxu0 0.0
      %2308 = vmatprep.subr.mxu0 0.0
      %2309 = vmatpush1.msra.mxu0 0.0
      %2310 = vmatprep.subr.mxu0 0.0
      %2311 = vmatpush1.msra.mxu0 0.0
      %2312 = vmatprep.subr.mxu0 0.0
      %2313 = vmatpush1.msra.mxu0 0.0
      %2314 = vmatprep.subr.mxu0 0.0
      %2315 = vmatpush1.msra.mxu0 0.0
      %2316 = vmatprep.subr.mxu0 0.0
      %2317 = vmatpush1.msra.mxu0 0.0
      %2318 = vmatprep.subr.mxu0 0.0
      %2319 = vmatpush1.msra.mxu0 0.0
      %2320 = vmatprep.subr.mxu0 0.0
      %2321 = vmatpush1.msra.mxu0 0.0
      %2322 = vmatprep.subr.mxu0 0.0
      %2323 = vmatpush1.msra.mxu0 0.0
      %2324 = vmatprep.subr.mxu0 0.0
      %2325 = vmatpush1.msra.mxu0 0.0
      %2326 = vmatprep.subr.mxu0 0.0
      %2327 = vmatpush1.msra.mxu0 0.0
      %2328 = vmatprep.mubr.f32.mxu0 0.0
      %2329 = vmatmul.mubr.f32.gmra.mrb[0].mxu0 %v2228
      %v2330 = vpop.f32.mrb[0].mxu0
      %v2331 = vadd.f32 0.0, %v2330
      %v2332 = vpop.f32.mrb[0].mxu0
      %v2333 = vadd.f32 0.0, %v2332
      %2334 = vdwg.mxu0
      %2335 = vmatprep.subr.mxu0 %v1726
      %2336 = vmatpush1.msra.mxu0 %v1725
      %2337 = vmatprep.subr.mxu0 %v1730
      %2338 = vmatpush1.msra.mxu0 %v1729
      %2339 = vmatprep.subr.mxu0 %v1734
      %2340 = vmatpush1.msra.mxu0 %v1733
      %2341 = vmatprep.subr.mxu0 %v1738
      %2342 = vmatpush1.msra.mxu0 %v1737
      %2343 = vmatprep.subr.mxu0 %v1742
      %2344 = vmatpush1.msra.mxu0 %v1741
      %2345 = vmatprep.subr.mxu0 %v1746
      %2346 = vmatpush1.msra.mxu0 %v1745
      %2347 = vmatprep.subr.mxu0 %v1750
      %2348 = vmatpush1.msra.mxu0 %v1749
      %2349 = vmatprep.subr.mxu0 %v1754
      %2350 = vmatpush1.msra.mxu0 %v1753
      %2351 = vmatprep.subr.mxu0 %v1758
      %2352 = vmatpush1.msra.mxu0 %v1757
      %2353 = vmatprep.subr.mxu0 %v1762
      %2354 = vmatpush1.msra.mxu0 %v1761
      %2355 = vmatprep.subr.mxu0 %v1766
      %2356 = vmatpush1.msra.mxu0 %v1765
      %2357 = vmatprep.subr.mxu0 %v1770
      %2358 = vmatpush1.msra.mxu0 %v1769
      %2359 = vmatprep.subr.mxu0 %v1774
      %2360 = vmatpush1.msra.mxu0 %v1773
      %2361 = vmatprep.subr.mxu0 %v1778
      %2362 = vmatpush1.msra.mxu0 %v1777
      %2363 = vmatprep.subr.mxu0 %v1782
      %2364 = vmatpush1.msra.mxu0 %v1781
      %2365 = vmatprep.subr.mxu0 %v1786
      %2366 = vmatpush1.msra.mxu0 %v1785
      %2367 = vmatprep.subr.mxu0 0.0
      %2368 = vmatpush1.msra.mxu0 0.0
      %2369 = vmatprep.subr.mxu0 0.0
      %2370 = vmatpush1.msra.mxu0 0.0
      %2371 = vmatprep.subr.mxu0 0.0
      %2372 = vmatpush1.msra.mxu0 0.0
      %2373 = vmatprep.subr.mxu0 0.0
      %2374 = vmatpush1.msra.mxu0 0.0
      %2375 = vmatprep.subr.mxu0 0.0
      %2376 = vmatpush1.msra.mxu0 0.0
      %2377 = vmatprep.subr.mxu0 0.0
      %2378 = vmatpush1.msra.mxu0 0.0
      %2379 = vmatprep.subr.mxu0 0.0
      %2380 = vmatpush1.msra.mxu0 0.0
      %2381 = vmatprep.subr.mxu0 0.0
      %2382 = vmatpush1.msra.mxu0 0.0
      %2383 = vmatprep.subr.mxu0 0.0
      %2384 = vmatpush1.msra.mxu0 0.0
      %2385 = vmatprep.subr.mxu0 0.0
      %2386 = vmatpush1.msra.mxu0 0.0
      %2387 = vmatprep.subr.mxu0 0.0
      %2388 = vmatpush1.msra.mxu0 0.0
      %2389 = vmatprep.subr.mxu0 0.0
      %2390 = vmatpush1.msra.mxu0 0.0
      %2391 = vmatprep.subr.mxu0 0.0
      %2392 = vmatpush1.msra.mxu0 0.0
      %2393 = vmatprep.subr.mxu0 0.0
      %2394 = vmatpush1.msra.mxu0 0.0
      %2395 = vmatprep.subr.mxu0 0.0
      %2396 = vmatpush1.msra.mxu0 0.0
      %2397 = vmatprep.subr.mxu0 0.0
      %2398 = vmatpush1.msra.mxu0 0.0
      %2399 = vmatprep.mubr.f32.mxu0 0.0
      %2400 = vmatmul.mubr.f32.gmra.mrb[0].mxu0 %v2228
      %v2401 = vpop.f32.mrb[0].mxu0
      %v2402 = vadd.f32 0.0, %v2401
      %v2403 = vpop.f32.mrb[0].mxu0
      %v2404 = vadd.f32 0.0, %v2403
      %2405 = vdwg.mxu0
      %v2410 = vcombine.low %v2331, %v2333
      %v2411 = vcombine.low %v2402, %v2404
      %v2413 = vunpack.c.l.s4 1966171168
      %v2414 = vunpack.c.0.s8 %v2413
      %v2415 = vlaneseq
      %v2416 = vshrl.u32 %v2415, 7
      %v2417 = vsub.s32 %v2414, %v2416
      %v2418 = vrot.slane %v2410, %v2417
      %v2420 = vunpack.c.l.s4 1966171168
      %v2421 = vunpack.c.0.s8 %v2420
      %v2422 = vlaneseq
      %v2423 = vshrl.u32 %v2422, 7
      %v2424 = vsub.s32 %v2421, %v2423
      %v2425 = vrot.slane %v2411, %v2424
      %v2426 = vcombine.low %v2418, %v2425
      %v2428 = vunpack.c.l.s4 1966171168
      %v2429 = vunpack.c.0.s8 %v2428
      %v2430 = vlaneseq
      %v2431 = vshrl.u32 %v2430, 7
      %v2432 = vsub.s32 %v2429, %v2431
      %v2433 = vrot.slane %v2426, %v2432
      %v2435 = vadd.f32 %v2263, %v2433
      %s2436 = scalar_lea.vmem [#allocation3], 33
      %v2437 = vld [vmem:[%s2436] ss:$8 sm:$0xf]
      %2438 = vmatprep.subr.mxu0 %v1788
      %2439 = vmatpush1.msra.mxu0 %v1787
      %2440 = vmatprep.subr.mxu0 %v1792
      %2441 = vmatpush1.msra.mxu0 %v1791
      %2442 = vmatprep.subr.mxu0 %v1796
      %2443 = vmatpush1.msra.mxu0 %v1795
      %2444 = vmatprep.subr.mxu0 %v1800
      %2445 = vmatpush1.msra.mxu0 %v1799
      %2446 = vmatprep.subr.mxu0 %v1804
      %2447 = vmatpush1.msra.mxu0 %v1803
      %2448 = vmatprep.subr.mxu0 %v1808
      %2449 = vmatpush1.msra.mxu0 %v1807
      %2450 = vmatprep.subr.mxu0 %v1812
      %2451 = vmatpush1.msra.mxu0 %v1811
      %2452 = vmatprep.subr.mxu0 %v1816
      %2453 = vmatpush1.msra.mxu0 %v1815
      %2454 = vmatprep.subr.mxu0 %v1820
      %2455 = vmatpush1.msra.mxu0 %v1819
      %2456 = vmatprep.subr.mxu0 %v1824
      %2457 = vmatpush1.msra.mxu0 %v1823
      %2458 = vmatprep.subr.mxu0 %v1828
      %2459 = vmatpush1.msra.mxu0 %v1827
      %2460 = vmatprep.subr.mxu0 %v1832
      %2461 = vmatpush1.msra.mxu0 %v1831
      %2462 = vmatprep.subr.mxu0 %v1836
      %2463 = vmatpush1.msra.mxu0 %v1835
      %2464 = vmatprep.subr.mxu0 %v1840
      %2465 = vmatpush1.msra.mxu0 %v1839
      %2466 = vmatprep.subr.mxu0 %v1844
      %2467 = vmatpush1.msra.mxu0 %v1843
      %2468 = vmatprep.subr.mxu0 %v1848
      %2469 = vmatpush1.msra.mxu0 %v1847
      %2470 = vmatprep.subr.mxu0 0.0
      %2471 = vmatpush1.msra.mxu0 0.0
      %2472 = vmatprep.subr.mxu0 0.0
      %2473 = vmatpush1.msra.mxu0 0.0
      %2474 = vmatprep.subr.mxu0 0.0
      %2475 = vmatpush1.msra.mxu0 0.0
      %2476 = vmatprep.subr.mxu0 0.0
      %2477 = vmatpush1.msra.mxu0 0.0
      %2478 = vmatprep.subr.mxu0 0.0
      %2479 = vmatpush1.msra.mxu0 0.0
      %2480 = vmatprep.subr.mxu0 0.0
      %2481 = vmatpush1.msra.mxu0 0.0
      %2482 = vmatprep.subr.mxu0 0.0
      %2483 = vmatpush1.msra.mxu0 0.0
      %2484 = vmatprep.subr.mxu0 0.0
      %2485 = vmatpush1.msra.mxu0 0.0
      %2486 = vmatprep.subr.mxu0 0.0
      %2487 = vmatpush1.msra.mxu0 0.0
      %2488 = vmatprep.subr.mxu0 0.0
      %2489 = vmatpush1.msra.mxu0 0.0
      %2490 = vmatprep.subr.mxu0 0.0
      %2491 = vmatpush1.msra.mxu0 0.0
      %2492 = vmatprep.subr.mxu0 0.0
      %2493 = vmatpush1.msra.mxu0 0.0
      %2494 = vmatprep.subr.mxu0 0.0
      %2495 = vmatpush1.msra.mxu0 0.0
      %2496 = vmatprep.subr.mxu0 0.0
      %2497 = vmatpush1.msra.mxu0 0.0
      %2498 = vmatprep.subr.mxu0 0.0
      %2499 = vmatpush1.msra.mxu0 0.0
      %2500 = vmatprep.subr.mxu0 0.0
      %2501 = vmatpush1.msra.mxu0 0.0
      %2502 = vmatprep.mubr.f32.mxu0 0.0
      %2503 = vmatmul.mubr.f32.gmra.mrb[0].mxu0 %v2259
      %v2504 = vpop.f32.mrb[0].mxu0
      %v2505 = vadd.f32 0.0, %v2504
      %v2506 = vpop.f32.mrb[0].mxu0
      %v2507 = vadd.f32 0.0, %v2506
      %2508 = vdwg.mxu0
      %2509 = vmatprep.subr.mxu0 %v1790
      %2510 = vmatpush1.msra.mxu0 %v1789
      %2511 = vmatprep.subr.mxu0 %v1794
      %2512 = vmatpush1.msra.mxu0 %v1793
      %2513 = vmatprep.subr.mxu0 %v1798
      %2514 = vmatpush1.msra.mxu0 %v1797
      %2515 = vmatprep.subr.mxu0 %v1802
      %2516 = vmatpush1.msra.mxu0 %v1801
      %2517 = vmatprep.subr.mxu0 %v1806
      %2518 = vmatpush1.msra.mxu0 %v1805
      %2519 = vmatprep.subr.mxu0 %v1810
      %2520 = vmatpush1.msra.mxu0 %v1809
      %2521 = vmatprep.subr.mxu0 %v1814
      %2522 = vmatpush1.msra.mxu0 %v1813
      %2523 = vmatprep.subr.mxu0 %v1818
      %2524 = vmatpush1.msra.mxu0 %v1817
      %2525 = vmatprep.subr.mxu0 %v1822
      %2526 = vmatpush1.msra.mxu0 %v1821
      %2527 = vmatprep.subr.mxu0 %v1826
      %2528 = vmatpush1.msra.mxu0 %v1825
      %2529 = vmatprep.subr.mxu0 %v1830
      %2530 = vmatpush1.msra.mxu0 %v1829
      %2531 = vmatprep.subr.mxu0 %v1834
      %2532 = vmatpush1.msra.mxu0 %v1833
      %2533 = vmatprep.subr.mxu0 %v1838
      %2534 = vmatpush1.msra.mxu0 %v1837
      %2535 = vmatprep.subr.mxu0 %v1842
      %2536 = vmatpush1.msra.mxu0 %v1841
      %2537 = vmatprep.subr.mxu0 %v1846
      %2538 = vmatpush1.msra.mxu0 %v1845
      %2539 = vmatprep.subr.mxu0 %v1850
      %2540 = vmatpush1.msra.mxu0 %v1849
      %2541 = vmatprep.subr.mxu0 0.0
      %2542 = vmatpush1.msra.mxu0 0.0
      %2543 = vmatprep.subr.mxu0 0.0
      %2544 = vmatpush1.msra.mxu0 0.0
      %2545 = vmatprep.subr.mxu0 0.0
      %2546 = vmatpush1.msra.mxu0 0.0
      %2547 = vmatprep.subr.mxu0 0.0
      %2548 = vmatpush1.msra.mxu0 0.0
      %2549 = vmatprep.subr.mxu0 0.0
      %2550 = vmatpush1.msra.mxu0 0.0
      %2551 = vmatprep.subr.mxu0 0.0
      %2552 = vmatpush1.msra.mxu0 0.0
      %2553 = vmatprep.subr.mxu0 0.0
      %2554 = vmatpush1.msra.mxu0 0.0
      %2555 = vmatprep.subr.mxu0 0.0
      %2556 = vmatpush1.msra.mxu0 0.0
      %2557 = vmatprep.subr.mxu0 0.0
      %2558 = vmatpush1.msra.mxu0 0.0
      %2559 = vmatprep.subr.mxu0 0.0
      %2560 = vmatpush1.msra.mxu0 0.0
      %2561 = vmatprep.subr.mxu0 0.0
      %2562 = vmatpush1.msra.mxu0 0.0
      %2563 = vmatprep.subr.mxu0 0.0
      %2564 = vmatpush1.msra.mxu0 0.0
      %2565 = vmatprep.subr.mxu0 0.0
      %2566 = vmatpush1.msra.mxu0 0.0
      %2567 = vmatprep.subr.mxu0 0.0
      %2568 = vmatpush1.msra.mxu0 0.0
      %2569 = vmatprep.subr.mxu0 0.0
      %2570 = vmatpush1.msra.mxu0 0.0
      %2571 = vmatprep.subr.mxu0 0.0
      %2572 = vmatpush1.msra.mxu0 0.0
      %2573 = vmatprep.mubr.f32.mxu0 0.0
      %2574 = vmatmul.mubr.f32.gmra.mrb[0].mxu0 %v2259
      %v2575 = vpop.f32.mrb[0].mxu0
      %v2576 = vadd.f32 0.0, %v2575
      %v2577 = vpop.f32.mrb[0].mxu0
      %v2578 = vadd.f32 0.0, %v2577
      %2579 = vdwg.mxu0
      %v2584 = vcombine.low %v2505, %v2507
      %v2585 = vcombine.low %v2576, %v2578
      %v2587 = vunpack.c.l.s4 1966171168
      %v2588 = vunpack.c.0.s8 %v2587
      %v2589 = vlaneseq
      %v2590 = vshrl.u32 %v2589, 7
      %v2591 = vsub.s32 %v2588, %v2590
      %v2592 = vrot.slane %v2584, %v2591
      %v2594 = vunpack.c.l.s4 1966171168
      %v2595 = vunpack.c.0.s8 %v2594
      %v2596 = vlaneseq
      %v2597 = vshrl.u32 %v2596, 7
      %v2598 = vsub.s32 %v2595, %v2597
      %v2599 = vrot.slane %v2585, %v2598
      %v2600 = vcombine.low %v2592, %v2599
      %v2602 = vunpack.c.l.s4 1966171168
      %v2603 = vunpack.c.0.s8 %v2602
      %v2604 = vlaneseq
      %v2605 = vshrl.u32 %v2604, 7
      %v2606 = vsub.s32 %v2603, %v2605
      %v2607 = vrot.slane %v2600, %v2606
      %v2609 = vadd.f32 %v2437, %v2607
      %v2610 = vxor.u32 %v2435, 2147483648
      %v2611 = vmul.f32 %v2610, 1.442695
      %v2612 = vpow.pop %v2611
      %v2613 = vadd.f32 %v2612, 1.0
      %v2614 = vrcp.pop %v2613
      %v2615 = vmul.f32 1.0, %v2614
      %v2617 = vrot.slane %v2435, 1
      %v2619 = vxor.u32 %v2617, 2147483648
      %v2620 = vmul.f32 %v2619, 1.442695
      %v2621 = vpow.pop %v2620
      %v2622 = vadd.f32 %v2621, 1.0
      %v2623 = vrcp.pop %v2622
      %v2624 = vmul.f32 1.0, %v2623
      %v2625 = vrot.slane %v2435, 2
      %v2627 = vtanh.pop %v2625
      %v2628 = vrot.slane %v2435, 3
      %v2630 = vxor.u32 %v2628, 2147483648
      %v2631 = vmul.f32 %v2630, 1.442695
      %v2632 = vpow.pop %v2631
      %v2633 = vadd.f32 %v2632, 1.0
      %v2634 = vrcp.pop %v2633
      %v2635 = vmul.f32 1.0, %v2634
      %v2636 = vmul.f32 %v2624, %v2226
      %v2637 = vmul.f32 %v2615, %v2627
      %v2638 = vadd.f32 %v2636, %v2637
      %v2639 = vtanh.pop %v2638
      %v2640 = vmul.f32 %v2635, %v2639
      %v2641 = vxor.u32 %v2609, 2147483648
      %v2642 = vmul.f32 %v2641, 1.442695
      %v2643 = vpow.pop %v2642
      %v2644 = vadd.f32 %v2643, 1.0
      %v2645 = vrcp.pop %v2644
      %v2646 = vmul.f32 1.0, %v2645
      %v2648 = vrot.slane %v2609, 1
      %v2650 = vxor.u32 %v2648, 2147483648
      %v2651 = vmul.f32 %v2650, 1.442695
      %v2652 = vpow.pop %v2651
      %v2653 = vadd.f32 %v2652, 1.0
      %v2654 = vrcp.pop %v2653
      %v2655 = vmul.f32 1.0, %v2654
      %v2656 = vrot.slane %v2609, 2
      %v2658 = vtanh.pop %v2656
      %v2659 = vrot.slane %v2609, 3
      %v2661 = vxor.u32 %v2659, 2147483648
      %v2662 = vmul.f32 %v2661, 1.442695
      %v2663 = vpow.pop %v2662
      %v2664 = vadd.f32 %v2663, 1.0
      %v2665 = vrcp.pop %v2664
      %v2666 = vmul.f32 1.0, %v2665
      %v2667 = vmul.f32 %v2655, %v2257
      %v2668 = vmul.f32 %v2646, %v2658
      %v2669 = vadd.f32 %v2667, %v2668
      %v2670 = vtanh.pop %v2669
      %v2671 = vmul.f32 %v2666, %v2670
      %2672 = vst [vmem:[%s325 + $0x1] sm:$0x1] %v2640
      %2673 = vst [vmem:[%s325 + $0x19] sm:$0x1] %v2671
      %s2674 = scalar_lea.vmem [#allocation2], 2
      %v2675 = vld [vmem:[%s2674] ss:$8 sm:$0xf]
      %2676 = vmatprep.subr.mxu0 %v1724
      %2677 = vmatpush1.msra.mxu0 %v1723
      %2678 = vmatprep.subr.mxu0 %v1728
      %2679 = vmatpush1.msra.mxu0 %v1727
      %2680 = vmatprep.subr.mxu0 %v1732
      %2681 = vmatpush1.msra.mxu0 %v1731
      %2682 = vmatprep.subr.mxu0 %v1736
      %2683 = vmatpush1.msra.mxu0 %v1735
      %2684 = vmatprep.subr.mxu0 %v1740
      %2685 = vmatpush1.msra.mxu0 %v1739
      %2686 = vmatprep.subr.mxu0 %v1744
      %2687 = vmatpush1.msra.mxu0 %v1743
      %2688 = vmatprep.subr.mxu0 %v1748
      %2689 = vmatpush1.msra.mxu0 %v1747
      %2690 = vmatprep.subr.mxu0 %v1752
      %2691 = vmatpush1.msra.mxu0 %v1751
      %2692 = vmatprep.subr.mxu0 %v1756
      %2693 = vmatpush1.msra.mxu0 %v1755
      %2694 = vmatprep.subr.mxu0 %v1760
      %2695 = vmatpush1.msra.mxu0 %v1759
      %2696 = vmatprep.subr.mxu0 %v1764
      %2697 = vmatpush1.msra.mxu0 %v1763
      %2698 = vmatprep.subr.mxu0 %v1768
      %2699 = vmatpush1.msra.mxu0 %v1767
      %2700 = vmatprep.subr.mxu0 %v1772
      %2701 = vmatpush1.msra.mxu0 %v1771
      %2702 = vmatprep.subr.mxu0 %v1776
      %2703 = vmatpush1.msra.mxu0 %v1775
      %2704 = vmatprep.subr.mxu0 %v1780
      %2705 = vmatpush1.msra.mxu0 %v1779
      %2706 = vmatprep.subr.mxu0 %v1784
      %2707 = vmatpush1.msra.mxu0 %v1783
      %2708 = vmatprep.subr.mxu0 0.0
      %2709 = vmatpush1.msra.mxu0 0.0
      %2710 = vmatprep.subr.mxu0 0.0
      %2711 = vmatpush1.msra.mxu0 0.0
      %2712 = vmatprep.subr.mxu0 0.0
      %2713 = vmatpush1.msra.mxu0 0.0
      %2714 = vmatprep.subr.mxu0 0.0
      %2715 = vmatpush1.msra.mxu0 0.0
      %2716 = vmatprep.subr.mxu0 0.0
      %2717 = vmatpush1.msra.mxu0 0.0
      %2718 = vmatprep.subr.mxu0 0.0
      %2719 = vmatpush1.msra.mxu0 0.0
      %2720 = vmatprep.subr.mxu0 0.0
      %2721 = vmatpush1.msra.mxu0 0.0
      %2722 = vmatprep.subr.mxu0 0.0
      %2723 = vmatpush1.msra.mxu0 0.0
      %2724 = vmatprep.subr.mxu0 0.0
      %2725 = vmatpush1.msra.mxu0 0.0
      %2726 = vmatprep.subr.mxu0 0.0
      %2727 = vmatpush1.msra.mxu0 0.0
      %2728 = vmatprep.subr.mxu0 0.0
      %2729 = vmatpush1.msra.mxu0 0.0
      %2730 = vmatprep.subr.mxu0 0.0
      %2731 = vmatpush1.msra.mxu0 0.0
      %2732 = vmatprep.subr.mxu0 0.0
      %2733 = vmatpush1.msra.mxu0 0.0
      %2734 = vmatprep.subr.mxu0 0.0
      %2735 = vmatpush1.msra.mxu0 0.0
      %2736 = vmatprep.subr.mxu0 0.0
      %2737 = vmatpush1.msra.mxu0 0.0
      %2738 = vmatprep.subr.mxu0 0.0
      %2739 = vmatpush1.msra.mxu0 0.0
      %2740 = vmatprep.mubr.f32.mxu0 0.0
      %2741 = vmatmul.mubr.f32.gmra.mrb[0].mxu0 %v2640
      %v2742 = vpop.f32.mrb[0].mxu0
      %v2743 = vadd.f32 0.0, %v2742
      %v2744 = vpop.f32.mrb[0].mxu0
      %v2745 = vadd.f32 0.0, %v2744
      %2746 = vdwg.mxu0
      %2747 = vmatprep.subr.mxu0 %v1726
      %2748 = vmatpush1.msra.mxu0 %v1725
      %2749 = vmatprep.subr.mxu0 %v1730
      %2750 = vmatpush1.msra.mxu0 %v1729
      %2751 = vmatprep.subr.mxu0 %v1734
      %2752 = vmatpush1.msra.mxu0 %v1733
      %2753 = vmatprep.subr.mxu0 %v1738
      %2754 = vmatpush1.msra.mxu0 %v1737
      %2755 = vmatprep.subr.mxu0 %v1742
      %2756 = vmatpush1.msra.mxu0 %v1741
      %2757 = vmatprep.subr.mxu0 %v1746
      %2758 = vmatpush1.msra.mxu0 %v1745
      %2759 = vmatprep.subr.mxu0 %v1750
      %2760 = vmatpush1.msra.mxu0 %v1749
      %2761 = vmatprep.subr.mxu0 %v1754
      %2762 = vmatpush1.msra.mxu0 %v1753
      %2763 = vmatprep.subr.mxu0 %v1758
      %2764 = vmatpush1.msra.mxu0 %v1757
      %2765 = vmatprep.subr.mxu0 %v1762
      %2766 = vmatpush1.msra.mxu0 %v1761
      %2767 = vmatprep.subr.mxu0 %v1766
      %2768 = vmatpush1.msra.mxu0 %v1765
      %2769 = vmatprep.subr.mxu0 %v1770
      %2770 = vmatpush1.msra.mxu0 %v1769
      %2771 = vmatprep.subr.mxu0 %v1774
      %2772 = vmatpush1.msra.mxu0 %v1773
      %2773 = vmatprep.subr.mxu0 %v1778
      %2774 = vmatpush1.msra.mxu0 %v1777
      %2775 = vmatprep.subr.mxu0 %v1782
      %2776 = vmatpush1.msra.mxu0 %v1781
      %2777 = vmatprep.subr.mxu0 %v1786
      %2778 = vmatpush1.msra.mxu0 %v1785
      %2779 = vmatprep.subr.mxu0 0.0
      %2780 = vmatpush1.msra.mxu0 0.0
      %2781 = vmatprep.subr.mxu0 0.0
      %2782 = vmatpush1.msra.mxu0 0.0
      %2783 = vmatprep.subr.mxu0 0.0
      %2784 = vmatpush1.msra.mxu0 0.0
      %2785 = vmatprep.subr.mxu0 0.0
      %2786 = vmatpush1.msra.mxu0 0.0
      %2787 = vmatprep.subr.mxu0 0.0
      %2788 = vmatpush1.msra.mxu0 0.0
      %2789 = vmatprep.subr.mxu0 0.0
      %2790 = vmatpush1.msra.mxu0 0.0
      %2791 = vmatprep.subr.mxu0 0.0
      %2792 = vmatpush1.msra.mxu0 0.0
      %2793 = vmatprep.subr.mxu0 0.0
      %2794 = vmatpush1.msra.mxu0 0.0
      %2795 = vmatprep.subr.mxu0 0.0
      %2796 = vmatpush1.msra.mxu0 0.0
      %2797 = vmatprep.subr.mxu0 0.0
      %2798 = vmatpush1.msra.mxu0 0.0
      %2799 = vmatprep.subr.mxu0 0.0
      %2800 = vmatpush1.msra.mxu0 0.0
      %2801 = vmatprep.subr.mxu0 0.0
      %2802 = vmatpush1.msra.mxu0 0.0
      %2803 = vmatprep.subr.mxu0 0.0
      %2804 = vmatpush1.msra.mxu0 0.0
      %2805 = vmatprep.subr.mxu0 0.0
      %2806 = vmatpush1.msra.mxu0 0.0
      %2807 = vmatprep.subr.mxu0 0.0
      %2808 = vmatpush1.msra.mxu0 0.0
      %2809 = vmatprep.subr.mxu0 0.0
      %2810 = vmatpush1.msra.mxu0 0.0
      %2811 = vmatprep.mubr.f32.mxu0 0.0
      %2812 = vmatmul.mubr.f32.gmra.mrb[0].mxu0 %v2640
      %v2813 = vpop.f32.mrb[0].mxu0
      %v2814 = vadd.f32 0.0, %v2813
      %v2815 = vpop.f32.mrb[0].mxu0
      %v2816 = vadd.f32 0.0, %v2815
      %2817 = vdwg.mxu0
      %v2822 = vcombine.low %v2743, %v2745
      %v2823 = vcombine.low %v2814, %v2816
      %v2825 = vunpack.c.l.s4 1966171168
      %v2826 = vunpack.c.0.s8 %v2825
      %v2827 = vlaneseq
      %v2828 = vshrl.u32 %v2827, 7
      %v2829 = vsub.s32 %v2826, %v2828
      %v2830 = vrot.slane %v2822, %v2829
      %v2832 = vunpack.c.l.s4 1966171168
      %v2833 = vunpack.c.0.s8 %v2832
      %v2834 = vlaneseq
      %v2835 = vshrl.u32 %v2834, 7
      %v2836 = vsub.s32 %v2833, %v2835
      %v2837 = vrot.slane %v2823, %v2836
      %v2838 = vcombine.low %v2830, %v2837
      %v2840 = vunpack.c.l.s4 1966171168
      %v2841 = vunpack.c.0.s8 %v2840
      %v2842 = vlaneseq
      %v2843 = vshrl.u32 %v2842, 7
      %v2844 = vsub.s32 %v2841, %v2843
      %v2845 = vrot.slane %v2838, %v2844
      %v2847 = vadd.f32 %v2675, %v2845
      %s2848 = scalar_lea.vmem [#allocation3], 32
      %v2849 = vld [vmem:[%s2848] ss:$8 sm:$0xf]
      %2850 = vmatprep.subr.mxu0 %v1788
      %2851 = vmatpush1.msra.mxu0 %v1787
      %2852 = vmatprep.subr.mxu0 %v1792
      %2853 = vmatpush1.msra.mxu0 %v1791
      %2854 = vmatprep.subr.mxu0 %v1796
      %2855 = vmatpush1.msra.mxu0 %v1795
      %2856 = vmatprep.subr.mxu0 %v1800
      %2857 = vmatpush1.msra.mxu0 %v1799
      %2858 = vmatprep.subr.mxu0 %v1804
      %2859 = vmatpush1.msra.mxu0 %v1803
      %2860 = vmatprep.subr.mxu0 %v1808
      %2861 = vmatpush1.msra.mxu0 %v1807
      %2862 = vmatprep.subr.mxu0 %v1812
      %2863 = vmatpush1.msra.mxu0 %v1811
      %2864 = vmatprep.subr.mxu0 %v1816
      %2865 = vmatpush1.msra.mxu0 %v1815
      %2866 = vmatprep.subr.mxu0 %v1820
      %2867 = vmatpush1.msra.mxu0 %v1819
      %2868 = vmatprep.subr.mxu0 %v1824
      %2869 = vmatpush1.msra.mxu0 %v1823
      %2870 = vmatprep.subr.mxu0 %v1828
      %2871 = vmatpush1.msra.mxu0 %v1827
      %2872 = vmatprep.subr.mxu0 %v1832
      %2873 = vmatpush1.msra.mxu0 %v1831
      %2874 = vmatprep.subr.mxu0 %v1836
      %2875 = vmatpush1.msra.mxu0 %v1835
      %2876 = vmatprep.subr.mxu0 %v1840
      %2877 = vmatpush1.msra.mxu0 %v1839
      %2878 = vmatprep.subr.mxu0 %v1844
      %2879 = vmatpush1.msra.mxu0 %v1843
      %2880 = vmatprep.subr.mxu0 %v1848
      %2881 = vmatpush1.msra.mxu0 %v1847
      %2882 = vmatprep.subr.mxu0 0.0
      %2883 = vmatpush1.msra.mxu0 0.0
      %2884 = vmatprep.subr.mxu0 0.0
      %2885 = vmatpush1.msra.mxu0 0.0
      %2886 = vmatprep.subr.mxu0 0.0
      %2887 = vmatpush1.msra.mxu0 0.0
      %2888 = vmatprep.subr.mxu0 0.0
      %2889 = vmatpush1.msra.mxu0 0.0
      %2890 = vmatprep.subr.mxu0 0.0
      %2891 = vmatpush1.msra.mxu0 0.0
      %2892 = vmatprep.subr.mxu0 0.0
      %2893 = vmatpush1.msra.mxu0 0.0
      %2894 = vmatprep.subr.mxu0 0.0
      %2895 = vmatpush1.msra.mxu0 0.0
      %2896 = vmatprep.subr.mxu0 0.0
      %2897 = vmatpush1.msra.mxu0 0.0
      %2898 = vmatprep.subr.mxu0 0.0
      %2899 = vmatpush1.msra.mxu0 0.0
      %2900 = vmatprep.subr.mxu0 0.0
      %2901 = vmatpush1.msra.mxu0 0.0
      %2902 = vmatprep.subr.mxu0 0.0
      %2903 = vmatpush1.msra.mxu0 0.0
      %2904 = vmatprep.subr.mxu0 0.0
      %2905 = vmatpush1.msra.mxu0 0.0
      %2906 = vmatprep.subr.mxu0 0.0
      %2907 = vmatpush1.msra.mxu0 0.0
      %2908 = vmatprep.subr.mxu0 0.0
      %2909 = vmatpush1.msra.mxu0 0.0
      %2910 = vmatprep.subr.mxu0 0.0
      %2911 = vmatpush1.msra.mxu0 0.0
      %2912 = vmatprep.subr.mxu0 0.0
      %2913 = vmatpush1.msra.mxu0 0.0
      %2914 = vmatprep.mubr.f32.mxu0 0.0
      %2915 = vmatmul.mubr.f32.gmra.mrb[0].mxu0 %v2671
      %v2916 = vpop.f32.mrb[0].mxu0
      %v2917 = vadd.f32 0.0, %v2916
      %v2918 = vpop.f32.mrb[0].mxu0
      %v2919 = vadd.f32 0.0, %v2918
      %2920 = vdwg.mxu0
      %2921 = vmatprep.subr.mxu0 %v1790
      %2922 = vmatpush1.msra.mxu0 %v1789
      %2923 = vmatprep.subr.mxu0 %v1794
      %2924 = vmatpush1.msra.mxu0 %v1793
      %2925 = vmatprep.subr.mxu0 %v1798
      %2926 = vmatpush1.msra.mxu0 %v1797
      %2927 = vmatprep.subr.mxu0 %v1802
      %2928 = vmatpush1.msra.mxu0 %v1801
      %2929 = vmatprep.subr.mxu0 %v1806
      %2930 = vmatpush1.msra.mxu0 %v1805
      %2931 = vmatprep.subr.mxu0 %v1810
      %2932 = vmatpush1.msra.mxu0 %v1809
      %2933 = vmatprep.subr.mxu0 %v1814
      %2934 = vmatpush1.msra.mxu0 %v1813
      %2935 = vmatprep.subr.mxu0 %v1818
      %2936 = vmatpush1.msra.mxu0 %v1817
      %2937 = vmatprep.subr.mxu0 %v1822
      %2938 = vmatpush1.msra.mxu0 %v1821
      %2939 = vmatprep.subr.mxu0 %v1826
      %2940 = vmatpush1.msra.mxu0 %v1825
      %2941 = vmatprep.subr.mxu0 %v1830
      %2942 = vmatpush1.msra.mxu0 %v1829
      %2943 = vmatprep.subr.mxu0 %v1834
      %2944 = vmatpush1.msra.mxu0 %v1833
      %2945 = vmatprep.subr.mxu0 %v1838
      %2946 = vmatpush1.msra.mxu0 %v1837
      %2947 = vmatprep.subr.mxu0 %v1842
      %2948 = vmatpush1.msra.mxu0 %v1841
      %2949 = vmatprep.subr.mxu0 %v1846
      %2950 = vmatpush1.msra.mxu0 %v1845
      %2951 = vmatprep.subr.mxu0 %v1850
      %2952 = vmatpush1.msra.mxu0 %v1849
      %2953 = vmatprep.subr.mxu0 0.0
      %2954 = vmatpush1.msra.mxu0 0.0
      %2955 = vmatprep.subr.mxu0 0.0
      %2956 = vmatpush1.msra.mxu0 0.0
      %2957 = vmatprep.subr.mxu0 0.0
      %2958 = vmatpush1.msra.mxu0 0.0
      %2959 = vmatprep.subr.mxu0 0.0
      %2960 = vmatpush1.msra.mxu0 0.0
      %2961 = vmatprep.subr.mxu0 0.0
      %2962 = vmatpush1.msra.mxu0 0.0
      %2963 = vmatprep.subr.mxu0 0.0
      %2964 = vmatpush1.msra.mxu0 0.0
      %2965 = vmatprep.subr.mxu0 0.0
      %2966 = vmatpush1.msra.mxu0 0.0
      %2967 = vmatprep.subr.mxu0 0.0
      %2968 = vmatpush1.msra.mxu0 0.0
      %2969 = vmatprep.subr.mxu0 0.0
      %2970 = vmatpush1.msra.mxu0 0.0
      %2971 = vmatprep.subr.mxu0 0.0
      %2972 = vmatpush1.msra.mxu0 0.0
      %2973 = vmatprep.subr.mxu0 0.0
      %2974 = vmatpush1.msra.mxu0 0.0
      %2975 = vmatprep.subr.mxu0 0.0
      %2976 = vmatpush1.msra.mxu0 0.0
      %2977 = vmatprep.subr.mxu0 0.0
      %2978 = vmatpush1.msra.mxu0 0.0
      %2979 = vmatprep.subr.mxu0 0.0
      %2980 = vmatpush1.msra.mxu0 0.0
      %2981 = vmatprep.subr.mxu0 0.0
      %2982 = vmatpush1.msra.mxu0 0.0
      %2983 = vmatprep.subr.mxu0 0.0
      %2984 = vmatpush1.msra.mxu0 0.0
      %2985 = vmatprep.mubr.f32.mxu0 0.0
      %2986 = vmatmul.mubr.f32.gmra.mrb[0].mxu0 %v2671
      %v2987 = vpop.f32.mrb[0].mxu0
      %v2988 = vadd.f32 0.0, %v2987
      %v2989 = vpop.f32.mrb[0].mxu0
      %v2990 = vadd.f32 0.0, %v2989
      %2991 = vdwg.mxu0
      %v2996 = vcombine.low %v2917, %v2919
      %v2997 = vcombine.low %v2988, %v2990
      %v2999 = vunpack.c.l.s4 1966171168
      %v3000 = vunpack.c.0.s8 %v2999
      %v3001 = vlaneseq
      %v3002 = vshrl.u32 %v3001, 7
      %v3003 = vsub.s32 %v3000, %v3002
      %v3004 = vrot.slane %v2996, %v3003
      %v3006 = vunpack.c.l.s4 1966171168
      %v3007 = vunpack.c.0.s8 %v3006
      %v3008 = vlaneseq
      %v3009 = vshrl.u32 %v3008, 7
      %v3010 = vsub.s32 %v3007, %v3009
      %v3011 = vrot.slane %v2997, %v3010
      %v3012 = vcombine.low %v3004, %v3011
      %v3014 = vunpack.c.l.s4 1966171168
      %v3015 = vunpack.c.0.s8 %v3014
      %v3016 = vlaneseq
      %v3017 = vshrl.u32 %v3016, 7
      %v3018 = vsub.s32 %v3015, %v3017
      %v3019 = vrot.slane %v3012, %v3018
      %v3021 = vadd.f32 %v2849, %v3019
      %v3022 = vxor.u32 %v2847, 2147483648
      %v3023 = vmul.f32 %v3022, 1.442695
      %v3024 = vpow.pop %v3023
      %v3025 = vadd.f32 %v3024, 1.0
      %v3026 = vrcp.pop %v3025
      %v3027 = vmul.f32 1.0, %v3026
      %v3029 = vrot.slane %v2847, 1
      %v3031 = vxor.u32 %v3029, 2147483648
      %v3032 = vmul.f32 %v3031, 1.442695
      %v3033 = vpow.pop %v3032
      %v3034 = vadd.f32 %v3033, 1.0
      %v3035 = vrcp.pop %v3034
      %v3036 = vmul.f32 1.0, %v3035
      %v3037 = vrot.slane %v2847, 2
      %v3039 = vtanh.pop %v3037
      %v3040 = vrot.slane %v2847, 3
      %v3042 = vxor.u32 %v3040, 2147483648
      %v3043 = vmul.f32 %v3042, 1.442695
      %v3044 = vpow.pop %v3043
      %v3045 = vadd.f32 %v3044, 1.0
      %v3046 = vrcp.pop %v3045
      %v3047 = vmul.f32 1.0, %v3046
      %v3048 = vmul.f32 %v3036, %v2638
      %v3049 = vmul.f32 %v3027, %v3039
      %v3050 = vadd.f32 %v3048, %v3049
      %v3051 = vtanh.pop %v3050
      %v3052 = vmul.f32 %v3047, %v3051
      %v3053 = vxor.u32 %v3021, 2147483648
      %v3054 = vmul.f32 %v3053, 1.442695
      %v3055 = vpow.pop %v3054
      %v3056 = vadd.f32 %v3055, 1.0
      %v3057 = vrcp.pop %v3056
      %v3058 = vmul.f32 1.0, %v3057
      %v3060 = vrot.slane %v3021, 1
      %v3062 = vxor.u32 %v3060, 2147483648
      %v3063 = vmul.f32 %v3062, 1.442695
      %v3064 = vpow.pop %v3063
      %v3065 = vadd.f32 %v3064, 1.0
      %v3066 = vrcp.pop %v3065
      %v3067 = vmul.f32 1.0, %v3066
      %v3068 = vrot.slane %v3021, 2
      %v3070 = vtanh.pop %v3068
      %v3071 = vrot.slane %v3021, 3
      %v3073 = vxor.u32 %v3071, 2147483648
      %v3074 = vmul.f32 %v3073, 1.442695
      %v3075 = vpow.pop %v3074
      %v3076 = vadd.f32 %v3075, 1.0
      %v3077 = vrcp.pop %v3076
      %v3078 = vmul.f32 1.0, %v3077
      %v3079 = vmul.f32 %v3067, %v2669
      %v3080 = vmul.f32 %v3058, %v3070
      %v3081 = vadd.f32 %v3079, %v3080
      %v3082 = vtanh.pop %v3081
      %v3083 = vmul.f32 %v3078, %v3082
      %3084 = vst [vmem:[%s325 + $0x2] sm:$0x1] %v3052
      %3085 = vst [vmem:[%s325 + $0x18] sm:$0x1] %v3083
      %s3086 = scalar_lea.vmem [#allocation2], 3
      %v3087 = vld [vmem:[%s3086] ss:$8 sm:$0xf]
      %3088 = vmatprep.subr.mxu0 %v1724
      %3089 = vmatpush1.msra.mxu0 %v1723
      %3090 = vmatprep.subr.mxu0 %v1728
      %3091 = vmatpush1.msra.mxu0 %v1727
      %3092 = vmatprep.subr.mxu0 %v1732
      %3093 = vmatpush1.msra.mxu0 %v1731
      %3094 = vmatprep.subr.mxu0 %v1736
      %3095 = vmatpush1.msra.mxu0 %v1735
      %3096 = vmatprep.subr.mxu0 %v1740
      %3097 = vmatpush1.msra.mxu0 %v1739
      %3098 = vmatprep.subr.mxu0 %v1744
      %3099 = vmatpush1.msra.mxu0 %v1743
      %3100 = vmatprep.subr.mxu0 %v1748
      %3101 = vmatpush1.msra.mxu0 %v1747
      %3102 = vmatprep.subr.mxu0 %v1752
      %3103 = vmatpush1.msra.mxu0 %v1751
      %3104 = vmatprep.subr.mxu0 %v1756
      %3105 = vmatpush1.msra.mxu0 %v1755
      %3106 = vmatprep.subr.mxu0 %v1760
      %3107 = vmatpush1.msra.mxu0 %v1759
      %3108 = vmatprep.subr.mxu0 %v1764
      %3109 = vmatpush1.msra.mxu0 %v1763
      %3110 = vmatprep.subr.mxu0 %v1768
      %3111 = vmatpush1.msra.mxu0 %v1767
      %3112 = vmatprep.subr.mxu0 %v1772
      %3113 = vmatpush1.msra.mxu0 %v1771
      %3114 = vmatprep.subr.mxu0 %v1776
      %3115 = vmatpush1.msra.mxu0 %v1775
      %3116 = vmatprep.subr.mxu0 %v1780
      %3117 = vmatpush1.msra.mxu0 %v1779
      %3118 = vmatprep.subr.mxu0 %v1784
      %3119 = vmatpush1.msra.mxu0 %v1783
      %3120 = vmatprep.subr.mxu0 0.0
      %3121 = vmatpush1.msra.mxu0 0.0
      %3122 = vmatprep.subr.mxu0 0.0
      %3123 = vmatpush1.msra.mxu0 0.0
      %3124 = vmatprep.subr.mxu0 0.0
      %3125 = vmatpush1.msra.mxu0 0.0
      %3126 = vmatprep.subr.mxu0 0.0
      %3127 = vmatpush1.msra.mxu0 0.0
      %3128 = vmatprep.subr.mxu0 0.0
      %3129 = vmatpush1.msra.mxu0 0.0
      %3130 = vmatprep.subr.mxu0 0.0
      %3131 = vmatpush1.msra.mxu0 0.0
      %3132 = vmatprep.subr.mxu0 0.0
      %3133 = vmatpush1.msra.mxu0 0.0
      %3134 = vmatprep.subr.mxu0 0.0
      %3135 = vmatpush1.msra.mxu0 0.0
      %3136 = vmatprep.subr.mxu0 0.0
      %3137 = vmatpush1.msra.mxu0 0.0
      %3138 = vmatprep.subr.mxu0 0.0
      %3139 = vmatpush1.msra.mxu0 0.0
      %3140 = vmatprep.subr.mxu0 0.0
      %3141 = vmatpush1.msra.mxu0 0.0
      %3142 = vmatprep.subr.mxu0 0.0
      %3143 = vmatpush1.msra.mxu0 0.0
      %3144 = vmatprep.subr.mxu0 0.0
      %3145 = vmatpush1.msra.mxu0 0.0
      %3146 = vmatprep.subr.mxu0 0.0
      %3147 = vmatpush1.msra.mxu0 0.0
      %3148 = vmatprep.subr.mxu0 0.0
      %3149 = vmatpush1.msra.mxu0 0.0
      %3150 = vmatprep.subr.mxu0 0.0
      %3151 = vmatpush1.msra.mxu0 0.0
      %3152 = vmatprep.mubr.f32.mxu0 0.0
      %3153 = vmatmul.mubr.f32.gmra.mrb[0].mxu0 %v3052
      %v3154 = vpop.f32.mrb[0].mxu0
      %v3155 = vadd.f32 0.0, %v3154
      %v3156 = vpop.f32.mrb[0].mxu0
      %v3157 = vadd.f32 0.0, %v3156
      %3158 = vdwg.mxu0
      %3159 = vmatprep.subr.mxu0 %v1726
      %3160 = vmatpush1.msra.mxu0 %v1725
      %3161 = vmatprep.subr.mxu0 %v1730
      %3162 = vmatpush1.msra.mxu0 %v1729
      %3163 = vmatprep.subr.mxu0 %v1734
      %3164 = vmatpush1.msra.mxu0 %v1733
      %3165 = vmatprep.subr.mxu0 %v1738
      %3166 = vmatpush1.msra.mxu0 %v1737
      %3167 = vmatprep.subr.mxu0 %v1742
      %3168 = vmatpush1.msra.mxu0 %v1741
      %3169 = vmatprep.subr.mxu0 %v1746
      %3170 = vmatpush1.msra.mxu0 %v1745
      %3171 = vmatprep.subr.mxu0 %v1750
      %3172 = vmatpush1.msra.mxu0 %v1749
      %3173 = vmatprep.subr.mxu0 %v1754
      %3174 = vmatpush1.msra.mxu0 %v1753
      %3175 = vmatprep.subr.mxu0 %v1758
      %3176 = vmatpush1.msra.mxu0 %v1757
      %3177 = vmatprep.subr.mxu0 %v1762
      %3178 = vmatpush1.msra.mxu0 %v1761
      %3179 = vmatprep.subr.mxu0 %v1766
      %3180 = vmatpush1.msra.mxu0 %v1765
      %3181 = vmatprep.subr.mxu0 %v1770
      %3182 = vmatpush1.msra.mxu0 %v1769
      %3183 = vmatprep.subr.mxu0 %v1774
      %3184 = vmatpush1.msra.mxu0 %v1773
      %3185 = vmatprep.subr.mxu0 %v1778
      %3186 = vmatpush1.msra.mxu0 %v1777
      %3187 = vmatprep.subr.mxu0 %v1782
      %3188 = vmatpush1.msra.mxu0 %v1781
      %3189 = vmatprep.subr.mxu0 %v1786
      %3190 = vmatpush1.msra.mxu0 %v1785
      %3191 = vmatprep.subr.mxu0 0.0
      %3192 = vmatpush1.msra.mxu0 0.0
      %3193 = vmatprep.subr.mxu0 0.0
      %3194 = vmatpush1.msra.mxu0 0.0
      %3195 = vmatprep.subr.mxu0 0.0
      %3196 = vmatpush1.msra.mxu0 0.0
      %3197 = vmatprep.subr.mxu0 0.0
      %3198 = vmatpush1.msra.mxu0 0.0
      %3199 = vmatprep.subr.mxu0 0.0
      %3200 = vmatpush1.msra.mxu0 0.0
      %3201 = vmatprep.subr.mxu0 0.0
      %3202 = vmatpush1.msra.mxu0 0.0
      %3203 = vmatprep.subr.mxu0 0.0
      %3204 = vmatpush1.msra.mxu0 0.0
      %3205 = vmatprep.subr.mxu0 0.0
      %3206 = vmatpush1.msra.mxu0 0.0
      %3207 = vmatprep.subr.mxu0 0.0
      %3208 = vmatpush1.msra.mxu0 0.0
      %3209 = vmatprep.subr.mxu0 0.0
      %3210 = vmatpush1.msra.mxu0 0.0
      %3211 = vmatprep.subr.mxu0 0.0
      %3212 = vmatpush1.msra.mxu0 0.0
      %3213 = vmatprep.subr.mxu0 0.0
      %3214 = vmatpush1.msra.mxu0 0.0
      %3215 = vmatprep.subr.mxu0 0.0
      %3216 = vmatpush1.msra.mxu0 0.0
      %3217 = vmatprep.subr.mxu0 0.0
      %3218 = vmatpush1.msra.mxu0 0.0
      %3219 = vmatprep.subr.mxu0 0.0
      %3220 = vmatpush1.msra.mxu0 0.0
      %3221 = vmatprep.subr.mxu0 0.0
      %3222 = vmatpush1.msra.mxu0 0.0
      %3223 = vmatprep.mubr.f32.mxu0 0.0
      %3224 = vmatmul.mubr.f32.gmra.mrb[0].mxu0 %v3052
      %v3225 = vpop.f32.mrb[0].mxu0
      %v3226 = vadd.f32 0.0, %v3225
      %v3227 = vpop.f32.mrb[0].mxu0
      %v3228 = vadd.f32 0.0, %v3227
      %3229 = vdwg.mxu0
      %v3234 = vcombine.low %v3155, %v3157
      %v3235 = vcombine.low %v3226, %v3228
      %v3237 = vunpack.c.l.s4 1966171168
      %v3238 = vunpack.c.0.s8 %v3237
      %v3239 = vlaneseq
      %v3240 = vshrl.u32 %v3239, 7
      %v3241 = vsub.s32 %v3238, %v3240
      %v3242 = vrot.slane %v3234, %v3241
      %v3244 = vunpack.c.l.s4 1966171168
      %v3245 = vunpack.c.0.s8 %v3244
      %v3246 = vlaneseq
      %v3247 = vshrl.u32 %v3246, 7
      %v3248 = vsub.s32 %v3245, %v3247
      %v3249 = vrot.slane %v3235, %v3248
      %v3250 = vcombine.low %v3242, %v3249
      %v3252 = vunpack.c.l.s4 1966171168
      %v3253 = vunpack.c.0.s8 %v3252
      %v3254 = vlaneseq
      %v3255 = vshrl.u32 %v3254, 7
      %v3256 = vsub.s32 %v3253, %v3255
      %v3257 = vrot.slane %v3250, %v3256
      %v3259 = vadd.f32 %v3087, %v3257
      %s3260 = scalar_lea.vmem [#allocation3], 7
      %v3261 = vld [vmem:[%s3260] ss:$8 sm:$0xf]
      %3262 = vmatprep.subr.mxu0 %v1788
      %3263 = vmatpush1.msra.mxu0 %v1787
      %3264 = vmatprep.subr.mxu0 %v1792
      %3265 = vmatpush1.msra.mxu0 %v1791
      %3266 = vmatprep.subr.mxu0 %v1796
      %3267 = vmatpush1.msra.mxu0 %v1795
      %3268 = vmatprep.subr.mxu0 %v1800
      %3269 = vmatpush1.msra.mxu0 %v1799
      %3270 = vmatprep.subr.mxu0 %v1804
      %3271 = vmatpush1.msra.mxu0 %v1803
      %3272 = vmatprep.subr.mxu0 %v1808
      %3273 = vmatpush1.msra.mxu0 %v1807
      %3274 = vmatprep.subr.mxu0 %v1812
      %3275 = vmatpush1.msra.mxu0 %v1811
      %3276 = vmatprep.subr.mxu0 %v1816
      %3277 = vmatpush1.msra.mxu0 %v1815
      %3278 = vmatprep.subr.mxu0 %v1820
      %3279 = vmatpush1.msra.mxu0 %v1819
      %3280 = vmatprep.subr.mxu0 %v1824
      %3281 = vmatpush1.msra.mxu0 %v1823
      %3282 = vmatprep.subr.mxu0 %v1828
      %3283 = vmatpush1.msra.mxu0 %v1827
      %3284 = vmatprep.subr.mxu0 %v1832
      %3285 = vmatpush1.msra.mxu0 %v1831
      %3286 = vmatprep.subr.mxu0 %v1836
      %3287 = vmatpush1.msra.mxu0 %v1835
      %3288 = vmatprep.subr.mxu0 %v1840
      %3289 = vmatpush1.msra.mxu0 %v1839
      %3290 = vmatprep.subr.mxu0 %v1844
      %3291 = vmatpush1.msra.mxu0 %v1843
      %3292 = vmatprep.subr.mxu0 %v1848
      %3293 = vmatpush1.msra.mxu0 %v1847
      %3294 = vmatprep.subr.mxu0 0.0
      %3295 = vmatpush1.msra.mxu0 0.0
      %3296 = vmatprep.subr.mxu0 0.0
      %3297 = vmatpush1.msra.mxu0 0.0
      %3298 = vmatprep.subr.mxu0 0.0
      %3299 = vmatpush1.msra.mxu0 0.0
      %3300 = vmatprep.subr.mxu0 0.0
      %3301 = vmatpush1.msra.mxu0 0.0
      %3302 = vmatprep.subr.mxu0 0.0
      %3303 = vmatpush1.msra.mxu0 0.0
      %3304 = vmatprep.subr.mxu0 0.0
      %3305 = vmatpush1.msra.mxu0 0.0
      %3306 = vmatprep.subr.mxu0 0.0
      %3307 = vmatpush1.msra.mxu0 0.0
      %3308 = vmatprep.subr.mxu0 0.0
      %3309 = vmatpush1.msra.mxu0 0.0
      %3310 = vmatprep.subr.mxu0 0.0
      %3311 = vmatpush1.msra.mxu0 0.0
      %3312 = vmatprep.subr.mxu0 0.0
      %3313 = vmatpush1.msra.mxu0 0.0
      %3314 = vmatprep.subr.mxu0 0.0
      %3315 = vmatpush1.msra.mxu0 0.0
      %3316 = vmatprep.subr.mxu0 0.0
      %3317 = vmatpush1.msra.mxu0 0.0
      %3318 = vmatprep.subr.mxu0 0.0
      %3319 = vmatpush1.msra.mxu0 0.0
      %3320 = vmatprep.subr.mxu0 0.0
      %3321 = vmatpush1.msra.mxu0 0.0
      %3322 = vmatprep.subr.mxu0 0.0
      %3323 = vmatpush1.msra.mxu0 0.0
      %3324 = vmatprep.subr.mxu0 0.0
      %3325 = vmatpush1.msra.mxu0 0.0
      %3326 = vmatprep.mubr.f32.mxu0 0.0
      %3327 = vmatmul.mubr.f32.gmra.mrb[0].mxu0 %v3083
      %v3328 = vpop.f32.mrb[0].mxu0
      %v3329 = vadd.f32 0.0, %v3328
      %v3330 = vpop.f32.mrb[0].mxu0
      %v3331 = vadd.f32 0.0, %v3330
      %3332 = vdwg.mxu0
      %3333 = vmatprep.subr.mxu0 %v1790
      %3334 = vmatpush1.msra.mxu0 %v1789
      %3335 = vmatprep.subr.mxu0 %v1794
      %3336 = vmatpush1.msra.mxu0 %v1793
      %3337 = vmatprep.subr.mxu0 %v1798
      %3338 = vmatpush1.msra.mxu0 %v1797
      %3339 = vmatprep.subr.mxu0 %v1802
      %3340 = vmatpush1.msra.mxu0 %v1801
      %3341 = vmatprep.subr.mxu0 %v1806
      %3342 = vmatpush1.msra.mxu0 %v1805
      %3343 = vmatprep.subr.mxu0 %v1810
      %3344 = vmatpush1.msra.mxu0 %v1809
      %3345 = vmatprep.subr.mxu0 %v1814
      %3346 = vmatpush1.msra.mxu0 %v1813
      %3347 = vmatprep.subr.mxu0 %v1818
      %3348 = vmatpush1.msra.mxu0 %v1817
      %3349 = vmatprep.subr.mxu0 %v1822
      %3350 = vmatpush1.msra.mxu0 %v1821
      %3351 = vmatprep.subr.mxu0 %v1826
      %3352 = vmatpush1.msra.mxu0 %v1825
      %3353 = vmatprep.subr.mxu0 %v1830
      %3354 = vmatpush1.msra.mxu0 %v1829
      %3355 = vmatprep.subr.mxu0 %v1834
      %3356 = vmatpush1.msra.mxu0 %v1833
      %3357 = vmatprep.subr.mxu0 %v1838
      %3358 = vmatpush1.msra.mxu0 %v1837
      %3359 = vmatprep.subr.mxu0 %v1842
      %3360 = vmatpush1.msra.mxu0 %v1841
      %3361 = vmatprep.subr.mxu0 %v1846
      %3362 = vmatpush1.msra.mxu0 %v1845
      %3363 = vmatprep.subr.mxu0 %v1850
      %3364 = vmatpush1.msra.mxu0 %v1849
      %3365 = vmatprep.subr.mxu0 0.0
      %3366 = vmatpush1.msra.mxu0 0.0
      %3367 = vmatprep.subr.mxu0 0.0
      %3368 = vmatpush1.msra.mxu0 0.0
      %3369 = vmatprep.subr.mxu0 0.0
      %3370 = vmatpush1.msra.mxu0 0.0
      %3371 = vmatprep.subr.mxu0 0.0
      %3372 = vmatpush1.msra.mxu0 0.0
      %3373 = vmatprep.subr.mxu0 0.0
      %3374 = vmatpush1.msra.mxu0 0.0
      %3375 = vmatprep.subr.mxu0 0.0
      %3376 = vmatpush1.msra.mxu0 0.0
      %3377 = vmatprep.subr.mxu0 0.0
      %3378 = vmatpush1.msra.mxu0 0.0
      %3379 = vmatprep.subr.mxu0 0.0
      %3380 = vmatpush1.msra.mxu0 0.0
      %3381 = vmatprep.subr.mxu0 0.0
      %3382 = vmatpush1.msra.mxu0 0.0
      %3383 = vmatprep.subr.mxu0 0.0
      %3384 = vmatpush1.msra.mxu0 0.0
      %3385 = vmatprep.subr.mxu0 0.0
      %3386 = vmatpush1.msra.mxu0 0.0
      %3387 = vmatprep.subr.mxu0 0.0
      %3388 = vmatpush1.msra.mxu0 0.0
      %3389 = vmatprep.subr.mxu0 0.0
      %3390 = vmatpush1.msra.mxu0 0.0
      %3391 = vmatprep.subr.mxu0 0.0
      %3392 = vmatpush1.msra.mxu0 0.0
      %3393 = vmatprep.subr.mxu0 0.0
      %3394 = vmatpush1.msra.mxu0 0.0
      %3395 = vmatprep.subr.mxu0 0.0
      %3396 = vmatpush1.msra.mxu0 0.0
      %3397 = vmatprep.mubr.f32.mxu0 0.0
      %3398 = vmatmul.mubr.f32.gmra.mrb[0].mxu0 %v3083
      %v3399 = vpop.f32.mrb[0].mxu0
      %v3400 = vadd.f32 0.0, %v3399
      %v3401 = vpop.f32.mrb[0].mxu0
      %v3402 = vadd.f32 0.0, %v3401
      %3403 = vdwg.mxu0
      %v3408 = vcombine.low %v3329, %v3331
      %v3409 = vcombine.low %v3400, %v3402
      %v3411 = vunpack.c.l.s4 1966171168
      %v3412 = vunpack.c.0.s8 %v3411
      %v3413 = vlaneseq
      %v3414 = vshrl.u32 %v3413, 7
      %v3415 = vsub.s32 %v3412, %v3414
      %v3416 = vrot.slane %v3408, %v3415
      %v3418 = vunpack.c.l.s4 1966171168
      %v3419 = vunpack.c.0.s8 %v3418
      %v3420 = vlaneseq
      %v3421 = vshrl.u32 %v3420, 7
      %v3422 = vsub.s32 %v3419, %v3421
      %v3423 = vrot.slane %v3409, %v3422
      %v3424 = vcombine.low %v3416, %v3423
      %v3426 = vunpack.c.l.s4 1966171168
      %v3427 = vunpack.c.0.s8 %v3426
      %v3428 = vlaneseq
      %v3429 = vshrl.u32 %v3428, 7
      %v3430 = vsub.s32 %v3427, %v3429
      %v3431 = vrot.slane %v3424, %v3430
      %v3433 = vadd.f32 %v3261, %v3431
      %v3434 = vxor.u32 %v3259, 2147483648
      %v3435 = vmul.f32 %v3434, 1.442695
      %v3436 = vpow.pop %v3435
      %v3437 = vadd.f32 %v3436, 1.0
      %v3438 = vrcp.pop %v3437
      %v3439 = vmul.f32 1.0, %v3438
      %v3441 = vrot.slane %v3259, 1
      %v3443 = vxor.u32 %v3441, 2147483648
      %v3444 = vmul.f32 %v3443, 1.442695
      %v3445 = vpow.pop %v3444
      %v3446 = vadd.f32 %v3445, 1.0
      %v3447 = vrcp.pop %v3446
      %v3448 = vmul.f32 1.0, %v3447
      %v3449 = vrot.slane %v3259, 2
      %v3451 = vtanh.pop %v3449
      %v3452 = vrot.slane %v3259, 3
      %v3454 = vxor.u32 %v3452, 2147483648
      %v3455 = vmul.f32 %v3454, 1.442695
      %v3456 = vpow.pop %v3455
      %v3457 = vadd.f32 %v3456, 1.0
      %v3458 = vrcp.pop %v3457
      %v3459 = vmul.f32 1.0, %v3458
      %v3460 = vmul.f32 %v3448, %v3050
      %v3461 = vmul.f32 %v3439, %v3451
      %v3462 = vadd.f32 %v3460, %v3461
      %v3463 = vtanh.pop %v3462
      %v3464 = vmul.f32 %v3459, %v3463
      %v3465 = vxor.u32 %v3433, 2147483648
      %v3466 = vmul.f32 %v3465, 1.442695
      %v3467 = vpow.pop %v3466
      %v3468 = vadd.f32 %v3467, 1.0
      %v3469 = vrcp.pop %v3468
      %v3470 = vmul.f32 1.0, %v3469
      %v3472 = vrot.slane %v3433, 1
      %v3474 = vxor.u32 %v3472, 2147483648
      %v3475 = vmul.f32 %v3474, 1.442695
      %v3476 = vpow.pop %v3475
      %v3477 = vadd.f32 %v3476, 1.0
      %v3478 = vrcp.pop %v3477
      %v3479 = vmul.f32 1.0, %v3478
      %v3480 = vrot.slane %v3433, 2
      %v3482 = vtanh.pop %v3480
      %v3483 = vrot.slane %v3433, 3
      %v3485 = vxor.u32 %v3483, 2147483648
      %v3486 = vmul.f32 %v3485, 1.442695
      %v3487 = vpow.pop %v3486
      %v3488 = vadd.f32 %v3487, 1.0
      %v3489 = vrcp.pop %v3488
      %v3490 = vmul.f32 1.0, %v3489
      %v3491 = vmul.f32 %v3479, %v3081
      %v3492 = vmul.f32 %v3470, %v3482
      %v3493 = vadd.f32 %v3491, %v3492
      %v3494 = vtanh.pop %v3493
      %v3495 = vmul.f32 %v3490, %v3494
      %3496 = vst [vmem:[%s325 + $0x3] sm:$0x1] %v3464
      %3497 = vst [vmem:[%s325 + $0xf] sm:$0x1] %v3495
      %s3498 = scalar_lea.vmem [#allocation2], 4
      %v3499 = vld [vmem:[%s3498] ss:$8 sm:$0xf]
      %3500 = vmatprep.subr.mxu0 %v1724
      %3501 = vmatpush1.msra.mxu0 %v1723
      %3502 = vmatprep.subr.mxu0 %v1728
      %3503 = vmatpush1.msra.mxu0 %v1727
      %3504 = vmatprep.subr.mxu0 %v1732
      %3505 = vmatpush1.msra.mxu0 %v1731
      %3506 = vmatprep.subr.mxu0 %v1736
      %3507 = vmatpush1.msra.mxu0 %v1735
      %3508 = vmatprep.subr.mxu0 %v1740
      %3509 = vmatpush1.msra.mxu0 %v1739
      %3510 = vmatprep.subr.mxu0 %v1744
      %3511 = vmatpush1.msra.mxu0 %v1743
      %3512 = vmatprep.subr.mxu0 %v1748
      %3513 = vmatpush1.msra.mxu0 %v1747
      %3514 = vmatprep.subr.mxu0 %v1752
      %3515 = vmatpush1.msra.mxu0 %v1751
      %3516 = vmatprep.subr.mxu0 %v1756
      %3517 = vmatpush1.msra.mxu0 %v1755
      %3518 = vmatprep.subr.mxu0 %v1760
      %3519 = vmatpush1.msra.mxu0 %v1759
      %3520 = vmatprep.subr.mxu0 %v1764
      %3521 = vmatpush1.msra.mxu0 %v1763
      %3522 = vmatprep.subr.mxu0 %v1768
      %3523 = vmatpush1.msra.mxu0 %v1767
      %3524 = vmatprep.subr.mxu0 %v1772
      %3525 = vmatpush1.msra.mxu0 %v1771
      %3526 = vmatprep.subr.mxu0 %v1776
      %3527 = vmatpush1.msra.mxu0 %v1775
      %3528 = vmatprep.subr.mxu0 %v1780
      %3529 = vmatpush1.msra.mxu0 %v1779
      %3530 = vmatprep.subr.mxu0 %v1784
      %3531 = vmatpush1.msra.mxu0 %v1783
      %3532 = vmatprep.subr.mxu0 0.0
      %3533 = vmatpush1.msra.mxu0 0.0
      %3534 = vmatprep.subr.mxu0 0.0
      %3535 = vmatpush1.msra.mxu0 0.0
      %3536 = vmatprep.subr.mxu0 0.0
      %3537 = vmatpush1.msra.mxu0 0.0
      %3538 = vmatprep.subr.mxu0 0.0
      %3539 = vmatpush1.msra.mxu0 0.0
      %3540 = vmatprep.subr.mxu0 0.0
      %3541 = vmatpush1.msra.mxu0 0.0
      %3542 = vmatprep.subr.mxu0 0.0
      %3543 = vmatpush1.msra.mxu0 0.0
      %3544 = vmatprep.subr.mxu0 0.0
      %3545 = vmatpush1.msra.mxu0 0.0
      %3546 = vmatprep.subr.mxu0 0.0
      %3547 = vmatpush1.msra.mxu0 0.0
      %3548 = vmatprep.subr.mxu0 0.0
      %3549 = vmatpush1.msra.mxu0 0.0
      %3550 = vmatprep.subr.mxu0 0.0
      %3551 = vmatpush1.msra.mxu0 0.0
      %3552 = vmatprep.subr.mxu0 0.0
      %3553 = vmatpush1.msra.mxu0 0.0
      %3554 = vmatprep.subr.mxu0 0.0
      %3555 = vmatpush1.msra.mxu0 0.0
      %3556 = vmatprep.subr.mxu0 0.0
      %3557 = vmatpush1.msra.mxu0 0.0
      %3558 = vmatprep.subr.mxu0 0.0
      %3559 = vmatpush1.msra.mxu0 0.0
      %3560 = vmatprep.subr.mxu0 0.0
      %3561 = vmatpush1.msra.mxu0 0.0
      %3562 = vmatprep.subr.mxu0 0.0
      %3563 = vmatpush1.msra.mxu0 0.0
      %3564 = vmatprep.mubr.f32.mxu0 0.0
      %3565 = vmatmul.mubr.f32.gmra.mrb[0].mxu0 %v3464
      %v3566 = vpop.f32.mrb[0].mxu0
      %v3567 = vadd.f32 0.0, %v3566
      %v3568 = vpop.f32.mrb[0].mxu0
      %v3569 = vadd.f32 0.0, %v3568
      %3570 = vdwg.mxu0
      %3571 = vmatprep.subr.mxu0 %v1726
      %3572 = vmatpush1.msra.mxu0 %v1725
      %3573 = vmatprep.subr.mxu0 %v1730
      %3574 = vmatpush1.msra.mxu0 %v1729
      %3575 = vmatprep.subr.mxu0 %v1734
      %3576 = vmatpush1.msra.mxu0 %v1733
      %3577 = vmatprep.subr.mxu0 %v1738
      %3578 = vmatpush1.msra.mxu0 %v1737
      %3579 = vmatprep.subr.mxu0 %v1742
      %3580 = vmatpush1.msra.mxu0 %v1741
      %3581 = vmatprep.subr.mxu0 %v1746
      %3582 = vmatpush1.msra.mxu0 %v1745
      %3583 = vmatprep.subr.mxu0 %v1750
      %3584 = vmatpush1.msra.mxu0 %v1749
      %3585 = vmatprep.subr.mxu0 %v1754
      %3586 = vmatpush1.msra.mxu0 %v1753
      %3587 = vmatprep.subr.mxu0 %v1758
      %3588 = vmatpush1.msra.mxu0 %v1757
      %3589 = vmatprep.subr.mxu0 %v1762
      %3590 = vmatpush1.msra.mxu0 %v1761
      %3591 = vmatprep.subr.mxu0 %v1766
      %3592 = vmatpush1.msra.mxu0 %v1765
      %3593 = vmatprep.subr.mxu0 %v1770
      %3594 = vmatpush1.msra.mxu0 %v1769
      %3595 = vmatprep.subr.mxu0 %v1774
      %3596 = vmatpush1.msra.mxu0 %v1773
      %3597 = vmatprep.subr.mxu0 %v1778
      %3598 = vmatpush1.msra.mxu0 %v1777
      %3599 = vmatprep.subr.mxu0 %v1782
      %3600 = vmatpush1.msra.mxu0 %v1781
      %3601 = vmatprep.subr.mxu0 %v1786
      %3602 = vmatpush1.msra.mxu0 %v1785
      %3603 = vmatprep.subr.mxu0 0.0
      %3604 = vmatpush1.msra.mxu0 0.0
      %3605 = vmatprep.subr.mxu0 0.0
      %3606 = vmatpush1.msra.mxu0 0.0
      %3607 = vmatprep.subr.mxu0 0.0
      %3608 = vmatpush1.msra.mxu0 0.0
      %3609 = vmatprep.subr.mxu0 0.0
      %3610 = vmatpush1.msra.mxu0 0.0
      %3611 = vmatprep.subr.mxu0 0.0
      %3612 = vmatpush1.msra.mxu0 0.0
      %3613 = vmatprep.subr.mxu0 0.0
      %3614 = vmatpush1.msra.mxu0 0.0
      %3615 = vmatprep.subr.mxu0 0.0
      %3616 = vmatpush1.msra.mxu0 0.0
      %3617 = vmatprep.subr.mxu0 0.0
      %3618 = vmatpush1.msra.mxu0 0.0
      %3619 = vmatprep.subr.mxu0 0.0
      %3620 = vmatpush1.msra.mxu0 0.0
      %3621 = vmatprep.subr.mxu0 0.0
      %3622 = vmatpush1.msra.mxu0 0.0
      %3623 = vmatprep.subr.mxu0 0.0
      %3624 = vmatpush1.msra.mxu0 0.0
      %3625 = vmatprep.subr.mxu0 0.0
      %3626 = vmatpush1.msra.mxu0 0.0
      %3627 = vmatprep.subr.mxu0 0.0
      %3628 = vmatpush1.msra.mxu0 0.0
      %3629 = vmatprep.subr.mxu0 0.0
      %3630 = vmatpush1.msra.mxu0 0.0
      %3631 = vmatprep.subr.mxu0 0.0
      %3632 = vmatpush1.msra.mxu0 0.0
      %3633 = vmatprep.subr.mxu0 0.0
      %3634 = vmatpush1.msra.mxu0 0.0
      %3635 = vmatprep.mubr.f32.mxu0 0.0
      %3636 = vmatmul.mubr.f32.gmra.mrb[0].mxu0 %v3464
      %v3637 = vpop.f32.mrb[0].mxu0
      %v3638 = vadd.f32 0.0, %v3637
      %v3639 = vpop.f32.mrb[0].mxu0
      %v3640 = vadd.f32 0.0, %v3639
      %3641 = vdwg.mxu0
      %v3646 = vcombine.low %v3567, %v3569
      %v3647 = vcombine.low %v3638, %v3640
      %v3649 = vunpack.c.l.s4 1966171168
      %v3650 = vunpack.c.0.s8 %v3649
      %v3651 = vlaneseq
      %v3652 = vshrl.u32 %v3651, 7
      %v3653 = vsub.s32 %v3650, %v3652
      %v3654 = vrot.slane %v3646, %v3653
      %v3656 = vunpack.c.l.s4 1966171168
      %v3657 = vunpack.c.0.s8 %v3656
      %v3658 = vlaneseq
      %v3659 = vshrl.u32 %v3658, 7
      %v3660 = vsub.s32 %v3657, %v3659
      %v3661 = vrot.slane %v3647, %v3660
      %v3662 = vcombine.low %v3654, %v3661
      %v3664 = vunpack.c.l.s4 1966171168
      %v3665 = vunpack.c.0.s8 %v3664
      %v3666 = vlaneseq
      %v3667 = vshrl.u32 %v3666, 7
      %v3668 = vsub.s32 %v3665, %v3667
      %v3669 = vrot.slane %v3662, %v3668
      %v3671 = vadd.f32 %v3499, %v3669
      %s3672 = scalar_lea.vmem [#allocation3], 6
      %v3673 = vld [vmem:[%s3672] ss:$8 sm:$0xf]
      %3674 = vmatprep.subr.mxu0 %v1788
      %3675 = vmatpush1.msra.mxu0 %v1787
      %3676 = vmatprep.subr.mxu0 %v1792
      %3677 = vmatpush1.msra.mxu0 %v1791
      %3678 = vmatprep.subr.mxu0 %v1796
      %3679 = vmatpush1.msra.mxu0 %v1795
      %3680 = vmatprep.subr.mxu0 %v1800
      %3681 = vmatpush1.msra.mxu0 %v1799
      %3682 = vmatprep.subr.mxu0 %v1804
      %3683 = vmatpush1.msra.mxu0 %v1803
      %3684 = vmatprep.subr.mxu0 %v1808
      %3685 = vmatpush1.msra.mxu0 %v1807
      %3686 = vmatprep.subr.mxu0 %v1812
      %3687 = vmatpush1.msra.mxu0 %v1811
      %3688 = vmatprep.subr.mxu0 %v1816
      %3689 = vmatpush1.msra.mxu0 %v1815
      %3690 = vmatprep.subr.mxu0 %v1820
      %3691 = vmatpush1.msra.mxu0 %v1819
      %3692 = vmatprep.subr.mxu0 %v1824
      %3693 = vmatpush1.msra.mxu0 %v1823
      %3694 = vmatprep.subr.mxu0 %v1828
      %3695 = vmatpush1.msra.mxu0 %v1827
      %3696 = vmatprep.subr.mxu0 %v1832
      %3697 = vmatpush1.msra.mxu0 %v1831
      %3698 = vmatprep.subr.mxu0 %v1836
      %3699 = vmatpush1.msra.mxu0 %v1835
      %3700 = vmatprep.subr.mxu0 %v1840
      %3701 = vmatpush1.msra.mxu0 %v1839
      %3702 = vmatprep.subr.mxu0 %v1844
      %3703 = vmatpush1.msra.mxu0 %v1843
      %3704 = vmatprep.subr.mxu0 %v1848
      %3705 = vmatpush1.msra.mxu0 %v1847
      %3706 = vmatprep.subr.mxu0 0.0
      %3707 = vmatpush1.msra.mxu0 0.0
      %3708 = vmatprep.subr.mxu0 0.0
      %3709 = vmatpush1.msra.mxu0 0.0
      %3710 = vmatprep.subr.mxu0 0.0
      %3711 = vmatpush1.msra.mxu0 0.0
      %3712 = vmatprep.subr.mxu0 0.0
      %3713 = vmatpush1.msra.mxu0 0.0
      %3714 = vmatprep.subr.mxu0 0.0
      %3715 = vmatpush1.msra.mxu0 0.0
      %3716 = vmatprep.subr.mxu0 0.0
      %3717 = vmatpush1.msra.mxu0 0.0
      %3718 = vmatprep.subr.mxu0 0.0
      %3719 = vmatpush1.msra.mxu0 0.0
      %3720 = vmatprep.subr.mxu0 0.0
      %3721 = vmatpush1.msra.mxu0 0.0
      %3722 = vmatprep.subr.mxu0 0.0
      %3723 = vmatpush1.msra.mxu0 0.0
      %3724 = vmatprep.subr.mxu0 0.0
      %3725 = vmatpush1.msra.mxu0 0.0
      %3726 = vmatprep.subr.mxu0 0.0
      %3727 = vmatpush1.msra.mxu0 0.0
      %3728 = vmatprep.subr.mxu0 0.0
      %3729 = vmatpush1.msra.mxu0 0.0
      %3730 = vmatprep.subr.mxu0 0.0
      %3731 = vmatpush1.msra.mxu0 0.0
      %3732 = vmatprep.subr.mxu0 0.0
      %3733 = vmatpush1.msra.mxu0 0.0
      %3734 = vmatprep.subr.mxu0 0.0
      %3735 = vmatpush1.msra.mxu0 0.0
      %3736 = vmatprep.subr.mxu0 0.0
      %3737 = vmatpush1.msra.mxu0 0.0
      %3738 = vmatprep.mubr.f32.mxu0 0.0
      %3739 = vmatmul.mubr.f32.gmra.mrb[0].mxu0 %v3495
      %v3740 = vpop.f32.mrb[0].mxu0
      %v3741 = vadd.f32 0.0, %v3740
      %v3742 = vpop.f32.mrb[0].mxu0
      %v3743 = vadd.f32 0.0, %v3742
      %3744 = vdwg.mxu0
      %3745 = vmatprep.subr.mxu0 %v1790
      %3746 = vmatpush1.msra.mxu0 %v1789
      %3747 = vmatprep.subr.mxu0 %v1794
      %3748 = vmatpush1.msra.mxu0 %v1793
      %3749 = vmatprep.subr.mxu0 %v1798
      %3750 = vmatpush1.msra.mxu0 %v1797
      %3751 = vmatprep.subr.mxu0 %v1802
      %3752 = vmatpush1.msra.mxu0 %v1801
      %3753 = vmatprep.subr.mxu0 %v1806
      %3754 = vmatpush1.msra.mxu0 %v1805
      %3755 = vmatprep.subr.mxu0 %v1810
      %3756 = vmatpush1.msra.mxu0 %v1809
      %3757 = vmatprep.subr.mxu0 %v1814
      %3758 = vmatpush1.msra.mxu0 %v1813
      %3759 = vmatprep.subr.mxu0 %v1818
      %3760 = vmatpush1.msra.mxu0 %v1817
      %3761 = vmatprep.subr.mxu0 %v1822
      %3762 = vmatpush1.msra.mxu0 %v1821
      %3763 = vmatprep.subr.mxu0 %v1826
      %3764 = vmatpush1.msra.mxu0 %v1825
      %3765 = vmatprep.subr.mxu0 %v1830
      %3766 = vmatpush1.msra.mxu0 %v1829
      %3767 = vmatprep.subr.mxu0 %v1834
      %3768 = vmatpush1.msra.mxu0 %v1833
      %3769 = vmatprep.subr.mxu0 %v1838
      %3770 = vmatpush1.msra.mxu0 %v1837
      %3771 = vmatprep.subr.mxu0 %v1842
      %3772 = vmatpush1.msra.mxu0 %v1841
      %3773 = vmatprep.subr.mxu0 %v1846
      %3774 = vmatpush1.msra.mxu0 %v1845
      %3775 = vmatprep.subr.mxu0 %v1850
      %3776 = vmatpush1.msra.mxu0 %v1849
      %3777 = vmatprep.subr.mxu0 0.0
      %3778 = vmatpush1.msra.mxu0 0.0
      %3779 = vmatprep.subr.mxu0 0.0
      %3780 = vmatpush1.msra.mxu0 0.0
      %3781 = vmatprep.subr.mxu0 0.0
      %3782 = vmatpush1.msra.mxu0 0.0
      %3783 = vmatprep.subr.mxu0 0.0
      %3784 = vmatpush1.msra.mxu0 0.0
      %3785 = vmatprep.subr.mxu0 0.0
      %3786 = vmatpush1.msra.mxu0 0.0
      %3787 = vmatprep.subr.mxu0 0.0
      %3788 = vmatpush1.msra.mxu0 0.0
      %3789 = vmatprep.subr.mxu0 0.0
      %3790 = vmatpush1.msra.mxu0 0.0
      %3791 = vmatprep.subr.mxu0 0.0
      %3792 = vmatpush1.msra.mxu0 0.0
      %3793 = vmatprep.subr.mxu0 0.0
      %3794 = vmatpush1.msra.mxu0 0.0
      %3795 = vmatprep.subr.mxu0 0.0
      %3796 = vmatpush1.msra.mxu0 0.0
      %3797 = vmatprep.subr.mxu0 0.0
      %3798 = vmatpush1.msra.mxu0 0.0
      %3799 = vmatprep.subr.mxu0 0.0
      %3800 = vmatpush1.msra.mxu0 0.0
      %3801 = vmatprep.subr.mxu0 0.0
      %3802 = vmatpush1.msra.mxu0 0.0
      %3803 = vmatprep.subr.mxu0 0.0
      %3804 = vmatpush1.msra.mxu0 0.0
      %3805 = vmatprep.subr.mxu0 0.0
      %3806 = vmatpush1.msra.mxu0 0.0
      %3807 = vmatprep.subr.mxu0 0.0
      %3808 = vmatpush1.msra.mxu0 0.0
      %3809 = vmatprep.mubr.f32.mxu0 0.0
      %3810 = vmatmul.mubr.f32.gmra.mrb[0].mxu0 %v3495
      %v3811 = vpop.f32.mrb[0].mxu0
      %v3812 = vadd.f32 0.0, %v3811
      %v3813 = vpop.f32.mrb[0].mxu0
      %v3814 = vadd.f32 0.0, %v3813
      %3815 = vdwg.mxu0
      %v3820 = vcombine.low %v3741, %v3743
      %v3821 = vcombine.low %v3812, %v3814
      %v3823 = vunpack.c.l.s4 1966171168
      %v3824 = vunpack.c.0.s8 %v3823
      %v3825 = vlaneseq
      %v3826 = vshrl.u32 %v3825, 7
      %v3827 = vsub.s32 %v3824, %v3826
      %v3828 = vrot.slane %v3820, %v3827
      %v3830 = vunpack.c.l.s4 1966171168
      %v3831 = vunpack.c.0.s8 %v3830
      %v3832 = vlaneseq
      %v3833 = vshrl.u32 %v3832, 7
      %v3834 = vsub.s32 %v3831, %v3833
      %v3835 = vrot.slane %v3821, %v3834
      %v3836 = vcombine.low %v3828, %v3835
      %v3838 = vunpack.c.l.s4 1966171168
      %v3839 = vunpack.c.0.s8 %v3838
      %v3840 = vlaneseq
      %v3841 = vshrl.u32 %v3840, 7
      %v3842 = vsub.s32 %v3839, %v3841
      %v3843 = vrot.slane %v3836, %v3842
      %v3845 = vadd.f32 %v3673, %v3843
      %v3846 = vxor.u32 %v3671, 2147483648
      %v3847 = vmul.f32 %v3846, 1.442695
      %v3848 = vpow.pop %v3847
      %v3849 = vadd.f32 %v3848, 1.0
      %v3850 = vrcp.pop %v3849
      %v3851 = vmul.f32 1.0, %v3850
      %v3853 = vrot.slane %v3671, 1
      %v3855 = vxor.u32 %v3853, 2147483648
      %v3856 = vmul.f32 %v3855, 1.442695
      %v3857 = vpow.pop %v3856
      %v3858 = vadd.f32 %v3857, 1.0
      %v3859 = vrcp.pop %v3858
      %v3860 = vmul.f32 1.0, %v3859
      %v3861 = vrot.slane %v3671, 2
      %v3863 = vtanh.pop %v3861
      %v3864 = vrot.slane %v3671, 3
      %v3866 = vxor.u32 %v3864, 2147483648
      %v3867 = vmul.f32 %v3866, 1.442695
      %v3868 = vpow.pop %v3867
      %v3869 = vadd.f32 %v3868, 1.0
      %v3870 = vrcp.pop %v3869
      %v3871 = vmul.f32 1.0, %v3870
      %v3872 = vmul.f32 %v3860, %v3462
      %v3873 = vmul.f32 %v3851, %v3863
      %v3874 = vadd.f32 %v3872, %v3873
      %v3875 = vtanh.pop %v3874
      %v3876 = vmul.f32 %v3871, %v3875
      %v3877 = vxor.u32 %v3845, 2147483648
      %v3878 = vmul.f32 %v3877, 1.442695
      %v3879 = vpow.pop %v3878
      %v3880 = vadd.f32 %v3879, 1.0
      %v3881 = vrcp.pop %v3880
      %v3882 = vmul.f32 1.0, %v3881
      %v3884 = vrot.slane %v3845, 1
      %v3886 = vxor.u32 %v3884, 2147483648
      %v3887 = vmul.f32 %v3886, 1.442695
      %v3888 = vpow.pop %v3887
      %v3889 = vadd.f32 %v3888, 1.0
      %v3890 = vrcp.pop %v3889
      %v3891 = vmul.f32 1.0, %v3890
      %v3892 = vrot.slane %v3845, 2
      %v3894 = vtanh.pop %v3892
      %v3895 = vrot.slane %v3845, 3
      %v3897 = vxor.u32 %v3895, 2147483648
      %v3898 = vmul.f32 %v3897, 1.442695
      %v3899 = vpow.pop %v3898
      %v3900 = vadd.f32 %v3899, 1.0
      %v3901 = vrcp.pop %v3900
      %v3902 = vmul.f32 1.0, %v3901
      %v3903 = vmul.f32 %v3891, %v3493
      %v3904 = vmul.f32 %v3882, %v3894
      %v3905 = vadd.f32 %v3903, %v3904
      %v3906 = vtanh.pop %v3905
      %v3907 = vmul.f32 %v3902, %v3906
      %3908 = vst [vmem:[%s325 + $0x4] sm:$0x1] %v3876
      %3909 = vst [vmem:[%s325 + $0xe] sm:$0x1] %v3907
      %s3910 = scalar_lea.vmem [#allocation2], 5
      %v3911 = vld [vmem:[%s3910] ss:$8 sm:$0xf]
      %3912 = vmatprep.subr.mxu0 %v1724
      %3913 = vmatpush1.msra.mxu0 %v1723
      %3914 = vmatprep.subr.mxu0 %v1728
      %3915 = vmatpush1.msra.mxu0 %v1727
      %3916 = vmatprep.subr.mxu0 %v1732
      %3917 = vmatpush1.msra.mxu0 %v1731
      %3918 = vmatprep.subr.mxu0 %v1736
      %3919 = vmatpush1.msra.mxu0 %v1735
      %3920 = vmatprep.subr.mxu0 %v1740
      %3921 = vmatpush1.msra.mxu0 %v1739
      %3922 = vmatprep.subr.mxu0 %v1744
      %3923 = vmatpush1.msra.mxu0 %v1743
      %3924 = vmatprep.subr.mxu0 %v1748
      %3925 = vmatpush1.msra.mxu0 %v1747
      %3926 = vmatprep.subr.mxu0 %v1752
      %3927 = vmatpush1.msra.mxu0 %v1751
      %3928 = vmatprep.subr.mxu0 %v1756
      %3929 = vmatpush1.msra.mxu0 %v1755
      %3930 = vmatprep.subr.mxu0 %v1760
      %3931 = vmatpush1.msra.mxu0 %v1759
      %3932 = vmatprep.subr.mxu0 %v1764
      %3933 = vmatpush1.msra.mxu0 %v1763
      %3934 = vmatprep.subr.mxu0 %v1768
      %3935 = vmatpush1.msra.mxu0 %v1767
      %3936 = vmatprep.subr.mxu0 %v1772
      %3937 = vmatpush1.msra.mxu0 %v1771
      %3938 = vmatprep.subr.mxu0 %v1776
      %3939 = vmatpush1.msra.mxu0 %v1775
      %3940 = vmatprep.subr.mxu0 %v1780
      %3941 = vmatpush1.msra.mxu0 %v1779
      %3942 = vmatprep.subr.mxu0 %v1784
      %3943 = vmatpush1.msra.mxu0 %v1783
      %3944 = vmatprep.subr.mxu0 0.0
      %3945 = vmatpush1.msra.mxu0 0.0
      %3946 = vmatprep.subr.mxu0 0.0
      %3947 = vmatpush1.msra.mxu0 0.0
      %3948 = vmatprep.subr.mxu0 0.0
      %3949 = vmatpush1.msra.mxu0 0.0
      %3950 = vmatprep.subr.mxu0 0.0
      %3951 = vmatpush1.msra.mxu0 0.0
      %3952 = vmatprep.subr.mxu0 0.0
      %3953 = vmatpush1.msra.mxu0 0.0
      %3954 = vmatprep.subr.mxu0 0.0
      %3955 = vmatpush1.msra.mxu0 0.0
      %3956 = vmatprep.subr.mxu0 0.0
      %3957 = vmatpush1.msra.mxu0 0.0
      %3958 = vmatprep.subr.mxu0 0.0
      %3959 = vmatpush1.msra.mxu0 0.0
      %3960 = vmatprep.subr.mxu0 0.0
      %3961 = vmatpush1.msra.mxu0 0.0
      %3962 = vmatprep.subr.mxu0 0.0
      %3963 = vmatpush1.msra.mxu0 0.0
      %3964 = vmatprep.subr.mxu0 0.0
      %3965 = vmatpush1.msra.mxu0 0.0
      %3966 = vmatprep.subr.mxu0 0.0
      %3967 = vmatpush1.msra.mxu0 0.0
      %3968 = vmatprep.subr.mxu0 0.0
      %3969 = vmatpush1.msra.mxu0 0.0
      %3970 = vmatprep.subr.mxu0 0.0
      %3971 = vmatpush1.msra.mxu0 0.0
      %3972 = vmatprep.subr.mxu0 0.0
      %3973 = vmatpush1.msra.mxu0 0.0
      %3974 = vmatprep.subr.mxu0 0.0
      %3975 = vmatpush1.msra.mxu0 0.0
      %3976 = vmatprep.mubr.f32.mxu0 0.0
      %3977 = vmatmul.mubr.f32.gmra.mrb[0].mxu0 %v3876
      %v3978 = vpop.f32.mrb[0].mxu0
      %v3979 = vadd.f32 0.0, %v3978
      %v3980 = vpop.f32.mrb[0].mxu0
      %v3981 = vadd.f32 0.0, %v3980
      %3982 = vdwg.mxu0
      %3983 = vmatprep.subr.mxu0 %v1726
      %3984 = vmatpush1.msra.mxu0 %v1725
      %3985 = vmatprep.subr.mxu0 %v1730
      %3986 = vmatpush1.msra.mxu0 %v1729
      %3987 = vmatprep.subr.mxu0 %v1734
      %3988 = vmatpush1.msra.mxu0 %v1733
      %3989 = vmatprep.subr.mxu0 %v1738
      %3990 = vmatpush1.msra.mxu0 %v1737
      %3991 = vmatprep.subr.mxu0 %v1742
      %3992 = vmatpush1.msra.mxu0 %v1741
      %3993 = vmatprep.subr.mxu0 %v1746
      %3994 = vmatpush1.msra.mxu0 %v1745
      %3995 = vmatprep.subr.mxu0 %v1750
      %3996 = vmatpush1.msra.mxu0 %v1749
      %3997 = vmatprep.subr.mxu0 %v1754
      %3998 = vmatpush1.msra.mxu0 %v1753
      %3999 = vmatprep.subr.mxu0 %v1758
      %4000 = vmatpush1.msra.mxu0 %v1757
      %4001 = vmatprep.subr.mxu0 %v1762
      %4002 = vmatpush1.msra.mxu0 %v1761
      %4003 = vmatprep.subr.mxu0 %v1766
      %4004 = vmatpush1.msra.mxu0 %v1765
      %4005 = vmatprep.subr.mxu0 %v1770
      %4006 = vmatpush1.msra.mxu0 %v1769
      %4007 = vmatprep.subr.mxu0 %v1774
      %4008 = vmatpush1.msra.mxu0 %v1773
      %4009 = vmatprep.subr.mxu0 %v1778
      %4010 = vmatpush1.msra.mxu0 %v1777
      %4011 = vmatprep.subr.mxu0 %v1782
      %4012 = vmatpush1.msra.mxu0 %v1781
      %4013 = vmatprep.subr.mxu0 %v1786
      %4014 = vmatpush1.msra.mxu0 %v1785
      %4015 = vmatprep.subr.mxu0 0.0
      %4016 = vmatpush1.msra.mxu0 0.0
      %4017 = vmatprep.subr.mxu0 0.0
      %4018 = vmatpush1.msra.mxu0 0.0
      %4019 = vmatprep.subr.mxu0 0.0
      %4020 = vmatpush1.msra.mxu0 0.0
      %4021 = vmatprep.subr.mxu0 0.0
      %4022 = vmatpush1.msra.mxu0 0.0
      %4023 = vmatprep.subr.mxu0 0.0
      %4024 = vmatpush1.msra.mxu0 0.0
      %4025 = vmatprep.subr.mxu0 0.0
      %4026 = vmatpush1.msra.mxu0 0.0
      %4027 = vmatprep.subr.mxu0 0.0
      %4028 = vmatpush1.msra.mxu0 0.0
      %4029 = vmatprep.subr.mxu0 0.0
      %4030 = vmatpush1.msra.mxu0 0.0
      %4031 = vmatprep.subr.mxu0 0.0
      %4032 = vmatpush1.msra.mxu0 0.0
      %4033 = vmatprep.subr.mxu0 0.0
      %4034 = vmatpush1.msra.mxu0 0.0
      %4035 = vmatprep.subr.mxu0 0.0
      %4036 = vmatpush1.msra.mxu0 0.0
      %4037 = vmatprep.subr.mxu0 0.0
      %4038 = vmatpush1.msra.mxu0 0.0
      %4039 = vmatprep.subr.mxu0 0.0
      %4040 = vmatpush1.msra.mxu0 0.0
      %4041 = vmatprep.subr.mxu0 0.0
      %4042 = vmatpush1.msra.mxu0 0.0
      %4043 = vmatprep.subr.mxu0 0.0
      %4044 = vmatpush1.msra.mxu0 0.0
      %4045 = vmatprep.subr.mxu0 0.0
      %4046 = vmatpush1.msra.mxu0 0.0
      %4047 = vmatprep.mubr.f32.mxu0 0.0
      %4048 = vmatmul.mubr.f32.gmra.mrb[0].mxu0 %v3876
      %v4049 = vpop.f32.mrb[0].mxu0
      %v4050 = vadd.f32 0.0, %v4049
      %v4051 = vpop.f32.mrb[0].mxu0
      %v4052 = vadd.f32 0.0, %v4051
      %4053 = vdwg.mxu0
      %v4058 = vcombine.low %v3979, %v3981
      %v4059 = vcombine.low %v4050, %v4052
      %v4061 = vunpack.c.l.s4 1966171168
      %v4062 = vunpack.c.0.s8 %v4061
      %v4063 = vlaneseq
      %v4064 = vshrl.u32 %v4063, 7
      %v4065 = vsub.s32 %v4062, %v4064
      %v4066 = vrot.slane %v4058, %v4065
      %v4068 = vunpack.c.l.s4 1966171168
      %v4069 = vunpack.c.0.s8 %v4068
      %v4070 = vlaneseq
      %v4071 = vshrl.u32 %v4070, 7
      %v4072 = vsub.s32 %v4069, %v4071
      %v4073 = vrot.slane %v4059, %v4072
      %v4074 = vcombine.low %v4066, %v4073
      %v4076 = vunpack.c.l.s4 1966171168
      %v4077 = vunpack.c.0.s8 %v4076
      %v4078 = vlaneseq
      %v4079 = vshrl.u32 %v4078, 7
      %v4080 = vsub.s32 %v4077, %v4079
      %v4081 = vrot.slane %v4074, %v4080
      %v4083 = vadd.f32 %v3911, %v4081
      %s4084 = scalar_lea.vmem [#allocation3], 5
      %v4085 = vld [vmem:[%s4084] ss:$8 sm:$0xf]
      %4086 = vmatprep.subr.mxu0 %v1788
      %4087 = vmatpush1.msra.mxu0 %v1787
      %4088 = vmatprep.subr.mxu0 %v1792
      %4089 = vmatpush1.msra.mxu0 %v1791
      %4090 = vmatprep.subr.mxu0 %v1796
      %4091 = vmatpush1.msra.mxu0 %v1795
      %4092 = vmatprep.subr.mxu0 %v1800
      %4093 = vmatpush1.msra.mxu0 %v1799
      %4094 = vmatprep.subr.mxu0 %v1804
      %4095 = vmatpush1.msra.mxu0 %v1803
      %4096 = vmatprep.subr.mxu0 %v1808
      %4097 = vmatpush1.msra.mxu0 %v1807
      %4098 = vmatprep.subr.mxu0 %v1812
      %4099 = vmatpush1.msra.mxu0 %v1811
      %4100 = vmatprep.subr.mxu0 %v1816
      %4101 = vmatpush1.msra.mxu0 %v1815
      %4102 = vmatprep.subr.mxu0 %v1820
      %4103 = vmatpush1.msra.mxu0 %v1819
      %4104 = vmatprep.subr.mxu0 %v1824
      %4105 = vmatpush1.msra.mxu0 %v1823
      %4106 = vmatprep.subr.mxu0 %v1828
      %4107 = vmatpush1.msra.mxu0 %v1827
      %4108 = vmatprep.subr.mxu0 %v1832
      %4109 = vmatpush1.msra.mxu0 %v1831
      %4110 = vmatprep.subr.mxu0 %v1836
      %4111 = vmatpush1.msra.mxu0 %v1835
      %4112 = vmatprep.subr.mxu0 %v1840
      %4113 = vmatpush1.msra.mxu0 %v1839
      %4114 = vmatprep.subr.mxu0 %v1844
      %4115 = vmatpush1.msra.mxu0 %v1843
      %4116 = vmatprep.subr.mxu0 %v1848
      %4117 = vmatpush1.msra.mxu0 %v1847
      %4118 = vmatprep.subr.mxu0 0.0
      %4119 = vmatpush1.msra.mxu0 0.0
      %4120 = vmatprep.subr.mxu0 0.0
      %4121 = vmatpush1.msra.mxu0 0.0
      %4122 = vmatprep.subr.mxu0 0.0
      %4123 = vmatpush1.msra.mxu0 0.0
      %4124 = vmatprep.subr.mxu0 0.0
      %4125 = vmatpush1.msra.mxu0 0.0
      %4126 = vmatprep.subr.mxu0 0.0
      %4127 = vmatpush1.msra.mxu0 0.0
      %4128 = vmatprep.subr.mxu0 0.0
      %4129 = vmatpush1.msra.mxu0 0.0
      %4130 = vmatprep.subr.mxu0 0.0
      %4131 = vmatpush1.msra.mxu0 0.0
      %4132 = vmatprep.subr.mxu0 0.0
      %4133 = vmatpush1.msra.mxu0 0.0
      %4134 = vmatprep.subr.mxu0 0.0
      %4135 = vmatpush1.msra.mxu0 0.0
      %4136 = vmatprep.subr.mxu0 0.0
      %4137 = vmatpush1.msra.mxu0 0.0
      %4138 = vmatprep.subr.mxu0 0.0
      %4139 = vmatpush1.msra.mxu0 0.0
      %4140 = vmatprep.subr.mxu0 0.0
      %4141 = vmatpush1.msra.mxu0 0.0
      %4142 = vmatprep.subr.mxu0 0.0
      %4143 = vmatpush1.msra.mxu0 0.0
      %4144 = vmatprep.subr.mxu0 0.0
      %4145 = vmatpush1.msra.mxu0 0.0
      %4146 = vmatprep.subr.mxu0 0.0
      %4147 = vmatpush1.msra.mxu0 0.0
      %4148 = vmatprep.subr.mxu0 0.0
      %4149 = vmatpush1.msra.mxu0 0.0
      %4150 = vmatprep.mubr.f32.mxu0 0.0
      %4151 = vmatmul.mubr.f32.gmra.mrb[0].mxu0 %v3907
      %v4152 = vpop.f32.mrb[0].mxu0
      %v4153 = vadd.f32 0.0, %v4152
      %v4154 = vpop.f32.mrb[0].mxu0
      %v4155 = vadd.f32 0.0, %v4154
      %4156 = vdwg.mxu0
      %4157 = vmatprep.subr.mxu0 %v1790
      %4158 = vmatpush1.msra.mxu0 %v1789
      %4159 = vmatprep.subr.mxu0 %v1794
      %4160 = vmatpush1.msra.mxu0 %v1793
      %4161 = vmatprep.subr.mxu0 %v1798
      %4162 = vmatpush1.msra.mxu0 %v1797
      %4163 = vmatprep.subr.mxu0 %v1802
      %4164 = vmatpush1.msra.mxu0 %v1801
      %4165 = vmatprep.subr.mxu0 %v1806
      %4166 = vmatpush1.msra.mxu0 %v1805
      %4167 = vmatprep.subr.mxu0 %v1810
      %4168 = vmatpush1.msra.mxu0 %v1809
      %4169 = vmatprep.subr.mxu0 %v1814
      %4170 = vmatpush1.msra.mxu0 %v1813
      %4171 = vmatprep.subr.mxu0 %v1818
      %4172 = vmatpush1.msra.mxu0 %v1817
      %4173 = vmatprep.subr.mxu0 %v1822
      %4174 = vmatpush1.msra.mxu0 %v1821
      %4175 = vmatprep.subr.mxu0 %v1826
      %4176 = vmatpush1.msra.mxu0 %v1825
      %4177 = vmatprep.subr.mxu0 %v1830
      %4178 = vmatpush1.msra.mxu0 %v1829
      %4179 = vmatprep.subr.mxu0 %v1834
      %4180 = vmatpush1.msra.mxu0 %v1833
      %4181 = vmatprep.subr.mxu0 %v1838
      %4182 = vmatpush1.msra.mxu0 %v1837
      %4183 = vmatprep.subr.mxu0 %v1842
      %4184 = vmatpush1.msra.mxu0 %v1841
      %4185 = vmatprep.subr.mxu0 %v1846
      %4186 = vmatpush1.msra.mxu0 %v1845
      %4187 = vmatprep.subr.mxu0 %v1850
      %4188 = vmatpush1.msra.mxu0 %v1849
      %4189 = vmatprep.subr.mxu0 0.0
      %4190 = vmatpush1.msra.mxu0 0.0
      %4191 = vmatprep.subr.mxu0 0.0
      %4192 = vmatpush1.msra.mxu0 0.0
      %4193 = vmatprep.subr.mxu0 0.0
      %4194 = vmatpush1.msra.mxu0 0.0
      %4195 = vmatprep.subr.mxu0 0.0
      %4196 = vmatpush1.msra.mxu0 0.0
      %4197 = vmatprep.subr.mxu0 0.0
      %4198 = vmatpush1.msra.mxu0 0.0
      %4199 = vmatprep.subr.mxu0 0.0
      %4200 = vmatpush1.msra.mxu0 0.0
      %4201 = vmatprep.subr.mxu0 0.0
      %4202 = vmatpush1.msra.mxu0 0.0
      %4203 = vmatprep.subr.mxu0 0.0
      %4204 = vmatpush1.msra.mxu0 0.0
      %4205 = vmatprep.subr.mxu0 0.0
      %4206 = vmatpush1.msra.mxu0 0.0
      %4207 = vmatprep.subr.mxu0 0.0
      %4208 = vmatpush1.msra.mxu0 0.0
      %4209 = vmatprep.subr.mxu0 0.0
      %4210 = vmatpush1.msra.mxu0 0.0
      %4211 = vmatprep.subr.mxu0 0.0
      %4212 = vmatpush1.msra.mxu0 0.0
      %4213 = vmatprep.subr.mxu0 0.0
      %4214 = vmatpush1.msra.mxu0 0.0
      %4215 = vmatprep.subr.mxu0 0.0
      %4216 = vmatpush1.msra.mxu0 0.0
      %4217 = vmatprep.subr.mxu0 0.0
      %4218 = vmatpush1.msra.mxu0 0.0
      %4219 = vmatprep.subr.mxu0 0.0
      %4220 = vmatpush1.msra.mxu0 0.0
      %4221 = vmatprep.mubr.f32.mxu0 0.0
      %4222 = vmatmul.mubr.f32.gmra.mrb[0].mxu0 %v3907
      %v4223 = vpop.f32.mrb[0].mxu0
      %v4224 = vadd.f32 0.0, %v4223
      %v4225 = vpop.f32.mrb[0].mxu0
      %v4226 = vadd.f32 0.0, %v4225
      %4227 = vdwg.mxu0
      %v4232 = vcombine.low %v4153, %v4155
      %v4233 = vcombine.low %v4224, %v4226
      %v4235 = vunpack.c.l.s4 1966171168
      %v4236 = vunpack.c.0.s8 %v4235
      %v4237 = vlaneseq
      %v4238 = vshrl.u32 %v4237, 7
      %v4239 = vsub.s32 %v4236, %v4238
      %v4240 = vrot.slane %v4232, %v4239
      %v4242 = vunpack.c.l.s4 1966171168
      %v4243 = vunpack.c.0.s8 %v4242
      %v4244 = vlaneseq
      %v4245 = vshrl.u32 %v4244, 7
      %v4246 = vsub.s32 %v4243, %v4245
      %v4247 = vrot.slane %v4233, %v4246
      %v4248 = vcombine.low %v4240, %v4247
      %v4250 = vunpack.c.l.s4 1966171168
      %v4251 = vunpack.c.0.s8 %v4250
      %v4252 = vlaneseq
      %v4253 = vshrl.u32 %v4252, 7
      %v4254 = vsub.s32 %v4251, %v4253
      %v4255 = vrot.slane %v4248, %v4254
      %v4257 = vadd.f32 %v4085, %v4255
      %v4258 = vxor.u32 %v4083, 2147483648
      %v4259 = vmul.f32 %v4258, 1.442695
      %v4260 = vpow.pop %v4259
      %v4261 = vadd.f32 %v4260, 1.0
      %v4262 = vrcp.pop %v4261
      %v4263 = vmul.f32 1.0, %v4262
      %v4265 = vrot.slane %v4083, 1
      %v4267 = vxor.u32 %v4265, 2147483648
      %v4268 = vmul.f32 %v4267, 1.442695
      %v4269 = vpow.pop %v4268
      %v4270 = vadd.f32 %v4269, 1.0
      %v4271 = vrcp.pop %v4270
      %v4272 = vmul.f32 1.0, %v4271
      %v4273 = vrot.slane %v4083, 2
      %v4275 = vtanh.pop %v4273
      %v4276 = vrot.slane %v4083, 3
      %v4278 = vxor.u32 %v4276, 2147483648
      %v4279 = vmul.f32 %v4278, 1.442695
      %v4280 = vpow.pop %v4279
      %v4281 = vadd.f32 %v4280, 1.0
      %v4282 = vrcp.pop %v4281
      %v4283 = vmul.f32 1.0, %v4282
      %v4284 = vmul.f32 %v4272, %v3874
      %v4285 = vmul.f32 %v4263, %v4275
      %v4286 = vadd.f32 %v4284, %v4285
      %v4287 = vtanh.pop %v4286
      %v4288 = vmul.f32 %v4283, %v4287
      %v4289 = vxor.u32 %v4257, 2147483648
      %v4290 = vmul.f32 %v4289, 1.442695
      %v4291 = vpow.pop %v4290
      %v4292 = vadd.f32 %v4291, 1.0
      %v4293 = vrcp.pop %v4292
      %v4294 = vmul.f32 1.0, %v4293
      %v4296 = vrot.slane %v4257, 1
      %v4298 = vxor.u32 %v4296, 2147483648
      %v4299 = vmul.f32 %v4298, 1.442695
      %v4300 = vpow.pop %v4299
      %v4301 = vadd.f32 %v4300, 1.0
      %v4302 = vrcp.pop %v4301
      %v4303 = vmul.f32 1.0, %v4302
      %v4304 = vrot.slane %v4257, 2
      %v4306 = vtanh.pop %v4304
      %v4307 = vrot.slane %v4257, 3
      %v4309 = vxor.u32 %v4307, 2147483648
      %v4310 = vmul.f32 %v4309, 1.442695
      %v4311 = vpow.pop %v4310
      %v4312 = vadd.f32 %v4311, 1.0
      %v4313 = vrcp.pop %v4312
      %v4314 = vmul.f32 1.0, %v4313
      %v4315 = vmul.f32 %v4303, %v3905
      %v4316 = vmul.f32 %v4294, %v4306
      %v4317 = vadd.f32 %v4315, %v4316
      %v4318 = vtanh.pop %v4317
      %v4319 = vmul.f32 %v4314, %v4318
      %4320 = vst [vmem:[%s325 + $0x5] sm:$0x1] %v4288
      %4321 = vst [vmem:[%s325 + $0xd] sm:$0x1] %v4319
      %s4322 = scalar_lea.vmem [#allocation2], 6
      %v4323 = vld [vmem:[%s4322] ss:$8 sm:$0xf]
      %4324 = vmatprep.subr.mxu0 %v1724
      %4325 = vmatpush1.msra.mxu0 %v1723
      %4326 = vmatprep.subr.mxu0 %v1728
      %4327 = vmatpush1.msra.mxu0 %v1727
      %4328 = vmatprep.subr.mxu0 %v1732
      %4329 = vmatpush1.msra.mxu0 %v1731
      %4330 = vmatprep.subr.mxu0 %v1736
      %4331 = vmatpush1.msra.mxu0 %v1735
      %4332 = vmatprep.subr.mxu0 %v1740
      %4333 = vmatpush1.msra.mxu0 %v1739
      %4334 = vmatprep.subr.mxu0 %v1744
      %4335 = vmatpush1.msra.mxu0 %v1743
      %4336 = vmatprep.subr.mxu0 %v1748
      %4337 = vmatpush1.msra.mxu0 %v1747
      %4338 = vmatprep.subr.mxu0 %v1752
      %4339 = vmatpush1.msra.mxu0 %v1751
      %4340 = vmatprep.subr.mxu0 %v1756
      %4341 = vmatpush1.msra.mxu0 %v1755
      %4342 = vmatprep.subr.mxu0 %v1760
      %4343 = vmatpush1.msra.mxu0 %v1759
      %4344 = vmatprep.subr.mxu0 %v1764
      %4345 = vmatpush1.msra.mxu0 %v1763
      %4346 = vmatprep.subr.mxu0 %v1768
      %4347 = vmatpush1.msra.mxu0 %v1767
      %4348 = vmatprep.subr.mxu0 %v1772
      %4349 = vmatpush1.msra.mxu0 %v1771
      %4350 = vmatprep.subr.mxu0 %v1776
      %4351 = vmatpush1.msra.mxu0 %v1775
      %4352 = vmatprep.subr.mxu0 %v1780
      %4353 = vmatpush1.msra.mxu0 %v1779
      %4354 = vmatprep.subr.mxu0 %v1784
      %4355 = vmatpush1.msra.mxu0 %v1783
      %4356 = vmatprep.subr.mxu0 0.0
      %4357 = vmatpush1.msra.mxu0 0.0
      %4358 = vmatprep.subr.mxu0 0.0
      %4359 = vmatpush1.msra.mxu0 0.0
      %4360 = vmatprep.subr.mxu0 0.0
      %4361 = vmatpush1.msra.mxu0 0.0
      %4362 = vmatprep.subr.mxu0 0.0
      %4363 = vmatpush1.msra.mxu0 0.0
      %4364 = vmatprep.subr.mxu0 0.0
      %4365 = vmatpush1.msra.mxu0 0.0
      %4366 = vmatprep.subr.mxu0 0.0
      %4367 = vmatpush1.msra.mxu0 0.0
      %4368 = vmatprep.subr.mxu0 0.0
      %4369 = vmatpush1.msra.mxu0 0.0
      %4370 = vmatprep.subr.mxu0 0.0
      %4371 = vmatpush1.msra.mxu0 0.0
      %4372 = vmatprep.subr.mxu0 0.0
      %4373 = vmatpush1.msra.mxu0 0.0
      %4374 = vmatprep.subr.mxu0 0.0
      %4375 = vmatpush1.msra.mxu0 0.0
      %4376 = vmatprep.subr.mxu0 0.0
      %4377 = vmatpush1.msra.mxu0 0.0
      %4378 = vmatprep.subr.mxu0 0.0
      %4379 = vmatpush1.msra.mxu0 0.0
      %4380 = vmatprep.subr.mxu0 0.0
      %4381 = vmatpush1.msra.mxu0 0.0
      %4382 = vmatprep.subr.mxu0 0.0
      %4383 = vmatpush1.msra.mxu0 0.0
      %4384 = vmatprep.subr.mxu0 0.0
      %4385 = vmatpush1.msra.mxu0 0.0
      %4386 = vmatprep.subr.mxu0 0.0
      %4387 = vmatpush1.msra.mxu0 0.0
      %4388 = vmatprep.mubr.f32.mxu0 0.0
      %4389 = vmatmul.mubr.f32.gmra.mrb[0].mxu0 %v4288
      %v4390 = vpop.f32.mrb[0].mxu0
      %v4391 = vadd.f32 0.0, %v4390
      %v4392 = vpop.f32.mrb[0].mxu0
      %v4393 = vadd.f32 0.0, %v4392
      %4394 = vdwg.mxu0
      %4395 = vmatprep.subr.mxu0 %v1726
      %4396 = vmatpush1.msra.mxu0 %v1725
      %4397 = vmatprep.subr.mxu0 %v1730
      %4398 = vmatpush1.msra.mxu0 %v1729
      %4399 = vmatprep.subr.mxu0 %v1734
      %4400 = vmatpush1.msra.mxu0 %v1733
      %4401 = vmatprep.subr.mxu0 %v1738
      %4402 = vmatpush1.msra.mxu0 %v1737
      %4403 = vmatprep.subr.mxu0 %v1742
      %4404 = vmatpush1.msra.mxu0 %v1741
      %4405 = vmatprep.subr.mxu0 %v1746
      %4406 = vmatpush1.msra.mxu0 %v1745
      %4407 = vmatprep.subr.mxu0 %v1750
      %4408 = vmatpush1.msra.mxu0 %v1749
      %4409 = vmatprep.subr.mxu0 %v1754
      %4410 = vmatpush1.msra.mxu0 %v1753
      %4411 = vmatprep.subr.mxu0 %v1758
      %4412 = vmatpush1.msra.mxu0 %v1757
      %4413 = vmatprep.subr.mxu0 %v1762
      %4414 = vmatpush1.msra.mxu0 %v1761
      %4415 = vmatprep.subr.mxu0 %v1766
      %4416 = vmatpush1.msra.mxu0 %v1765
      %4417 = vmatprep.subr.mxu0 %v1770
      %4418 = vmatpush1.msra.mxu0 %v1769
      %4419 = vmatprep.subr.mxu0 %v1774
      %4420 = vmatpush1.msra.mxu0 %v1773
      %4421 = vmatprep.subr.mxu0 %v1778
      %4422 = vmatpush1.msra.mxu0 %v1777
      %4423 = vmatprep.subr.mxu0 %v1782
      %4424 = vmatpush1.msra.mxu0 %v1781
      %4425 = vmatprep.subr.mxu0 %v1786
      %4426 = vmatpush1.msra.mxu0 %v1785
      %4427 = vmatprep.subr.mxu0 0.0
      %4428 = vmatpush1.msra.mxu0 0.0
      %4429 = vmatprep.subr.mxu0 0.0
      %4430 = vmatpush1.msra.mxu0 0.0
      %4431 = vmatprep.subr.mxu0 0.0
      %4432 = vmatpush1.msra.mxu0 0.0
      %4433 = vmatprep.subr.mxu0 0.0
      %4434 = vmatpush1.msra.mxu0 0.0
      %4435 = vmatprep.subr.mxu0 0.0
      %4436 = vmatpush1.msra.mxu0 0.0
      %4437 = vmatprep.subr.mxu0 0.0
      %4438 = vmatpush1.msra.mxu0 0.0
      %4439 = vmatprep.subr.mxu0 0.0
      %4440 = vmatpush1.msra.mxu0 0.0
      %4441 = vmatprep.subr.mxu0 0.0
      %4442 = vmatpush1.msra.mxu0 0.0
      %4443 = vmatprep.subr.mxu0 0.0
      %4444 = vmatpush1.msra.mxu0 0.0
      %4445 = vmatprep.subr.mxu0 0.0
      %4446 = vmatpush1.msra.mxu0 0.0
      %4447 = vmatprep.subr.mxu0 0.0
      %4448 = vmatpush1.msra.mxu0 0.0
      %4449 = vmatprep.subr.mxu0 0.0
      %4450 = vmatpush1.msra.mxu0 0.0
      %4451 = vmatprep.subr.mxu0 0.0
      %4452 = vmatpush1.msra.mxu0 0.0
      %4453 = vmatprep.subr.mxu0 0.0
      %4454 = vmatpush1.msra.mxu0 0.0
      %4455 = vmatprep.subr.mxu0 0.0
      %4456 = vmatpush1.msra.mxu0 0.0
      %4457 = vmatprep.subr.mxu0 0.0
      %4458 = vmatpush1.msra.mxu0 0.0
      %4459 = vmatprep.mubr.f32.mxu0 0.0
      %4460 = vmatmul.mubr.f32.gmra.mrb[0].mxu0 %v4288
      %v4461 = vpop.f32.mrb[0].mxu0
      %v4462 = vadd.f32 0.0, %v4461
      %v4463 = vpop.f32.mrb[0].mxu0
      %v4464 = vadd.f32 0.0, %v4463
      %4465 = vdwg.mxu0
      %v4470 = vcombine.low %v4391, %v4393
      %v4471 = vcombine.low %v4462, %v4464
      %v4473 = vunpack.c.l.s4 1966171168
      %v4474 = vunpack.c.0.s8 %v4473
      %v4475 = vlaneseq
      %v4476 = vshrl.u32 %v4475, 7
      %v4477 = vsub.s32 %v4474, %v4476
      %v4478 = vrot.slane %v4470, %v4477
      %v4480 = vunpack.c.l.s4 1966171168
      %v4481 = vunpack.c.0.s8 %v4480
      %v4482 = vlaneseq
      %v4483 = vshrl.u32 %v4482, 7
      %v4484 = vsub.s32 %v4481, %v4483
      %v4485 = vrot.slane %v4471, %v4484
      %v4486 = vcombine.low %v4478, %v4485
      %v4488 = vunpack.c.l.s4 1966171168
      %v4489 = vunpack.c.0.s8 %v4488
      %v4490 = vlaneseq
      %v4491 = vshrl.u32 %v4490, 7
      %v4492 = vsub.s32 %v4489, %v4491
      %v4493 = vrot.slane %v4486, %v4492
      %v4495 = vadd.f32 %v4323, %v4493
      %s4496 = scalar_lea.vmem [#allocation3], 4
      %v4497 = vld [vmem:[%s4496] ss:$8 sm:$0xf]
      %4498 = vmatprep.subr.mxu0 %v1788
      %4499 = vmatpush1.msra.mxu0 %v1787
      %4500 = vmatprep.subr.mxu0 %v1792
      %4501 = vmatpush1.msra.mxu0 %v1791
      %4502 = vmatprep.subr.mxu0 %v1796
      %4503 = vmatpush1.msra.mxu0 %v1795
      %4504 = vmatprep.subr.mxu0 %v1800
      %4505 = vmatpush1.msra.mxu0 %v1799
      %4506 = vmatprep.subr.mxu0 %v1804
      %4507 = vmatpush1.msra.mxu0 %v1803
      %4508 = vmatprep.subr.mxu0 %v1808
      %4509 = vmatpush1.msra.mxu0 %v1807
      %4510 = vmatprep.subr.mxu0 %v1812
      %4511 = vmatpush1.msra.mxu0 %v1811
      %4512 = vmatprep.subr.mxu0 %v1816
      %4513 = vmatpush1.msra.mxu0 %v1815
      %4514 = vmatprep.subr.mxu0 %v1820
      %4515 = vmatpush1.msra.mxu0 %v1819
      %4516 = vmatprep.subr.mxu0 %v1824
      %4517 = vmatpush1.msra.mxu0 %v1823
      %4518 = vmatprep.subr.mxu0 %v1828
      %4519 = vmatpush1.msra.mxu0 %v1827
      %4520 = vmatprep.subr.mxu0 %v1832
      %4521 = vmatpush1.msra.mxu0 %v1831
      %4522 = vmatprep.subr.mxu0 %v1836
      %4523 = vmatpush1.msra.mxu0 %v1835
      %4524 = vmatprep.subr.mxu0 %v1840
      %4525 = vmatpush1.msra.mxu0 %v1839
      %4526 = vmatprep.subr.mxu0 %v1844
      %4527 = vmatpush1.msra.mxu0 %v1843
      %4528 = vmatprep.subr.mxu0 %v1848
      %4529 = vmatpush1.msra.mxu0 %v1847
      %4530 = vmatprep.subr.mxu0 0.0
      %4531 = vmatpush1.msra.mxu0 0.0
      %4532 = vmatprep.subr.mxu0 0.0
      %4533 = vmatpush1.msra.mxu0 0.0
      %4534 = vmatprep.subr.mxu0 0.0
      %4535 = vmatpush1.msra.mxu0 0.0
      %4536 = vmatprep.subr.mxu0 0.0
      %4537 = vmatpush1.msra.mxu0 0.0
      %4538 = vmatprep.subr.mxu0 0.0
      %4539 = vmatpush1.msra.mxu0 0.0
      %4540 = vmatprep.subr.mxu0 0.0
      %4541 = vmatpush1.msra.mxu0 0.0
      %4542 = vmatprep.subr.mxu0 0.0
      %4543 = vmatpush1.msra.mxu0 0.0
      %4544 = vmatprep.subr.mxu0 0.0
      %4545 = vmatpush1.msra.mxu0 0.0
      %4546 = vmatprep.subr.mxu0 0.0
      %4547 = vmatpush1.msra.mxu0 0.0
      %4548 = vmatprep.subr.mxu0 0.0
      %4549 = vmatpush1.msra.mxu0 0.0
      %4550 = vmatprep.subr.mxu0 0.0
      %4551 = vmatpush1.msra.mxu0 0.0
      %4552 = vmatprep.subr.mxu0 0.0
      %4553 = vmatpush1.msra.mxu0 0.0
      %4554 = vmatprep.subr.mxu0 0.0
      %4555 = vmatpush1.msra.mxu0 0.0
      %4556 = vmatprep.subr.mxu0 0.0
      %4557 = vmatpush1.msra.mxu0 0.0
      %4558 = vmatprep.subr.mxu0 0.0
      %4559 = vmatpush1.msra.mxu0 0.0
      %4560 = vmatprep.subr.mxu0 0.0
      %4561 = vmatpush1.msra.mxu0 0.0
      %4562 = vmatprep.mubr.f32.mxu0 0.0
      %4563 = vmatmul.mubr.f32.gmra.mrb[0].mxu0 %v4319
      %v4564 = vpop.f32.mrb[0].mxu0
      %v4565 = vadd.f32 0.0, %v4564
      %v4566 = vpop.f32.mrb[0].mxu0
      %v4567 = vadd.f32 0.0, %v4566
      %4568 = vdwg.mxu0
      %4569 = vmatprep.subr.mxu0 %v1790
      %4570 = vmatpush1.msra.mxu0 %v1789
      %4571 = vmatprep.subr.mxu0 %v1794
      %4572 = vmatpush1.msra.mxu0 %v1793
      %4573 = vmatprep.subr.mxu0 %v1798
      %4574 = vmatpush1.msra.mxu0 %v1797
      %4575 = vmatprep.subr.mxu0 %v1802
      %4576 = vmatpush1.msra.mxu0 %v1801
      %4577 = vmatprep.subr.mxu0 %v1806
      %4578 = vmatpush1.msra.mxu0 %v1805
      %4579 = vmatprep.subr.mxu0 %v1810
      %4580 = vmatpush1.msra.mxu0 %v1809
      %4581 = vmatprep.subr.mxu0 %v1814
      %4582 = vmatpush1.msra.mxu0 %v1813
      %4583 = vmatprep.subr.mxu0 %v1818
      %4584 = vmatpush1.msra.mxu0 %v1817
      %4585 = vmatprep.subr.mxu0 %v1822
      %4586 = vmatpush1.msra.mxu0 %v1821
      %4587 = vmatprep.subr.mxu0 %v1826
      %4588 = vmatpush1.msra.mxu0 %v1825
      %4589 = vmatprep.subr.mxu0 %v1830
      %4590 = vmatpush1.msra.mxu0 %v1829
      %4591 = vmatprep.subr.mxu0 %v1834
      %4592 = vmatpush1.msra.mxu0 %v1833
      %4593 = vmatprep.subr.mxu0 %v1838
      %4594 = vmatpush1.msra.mxu0 %v1837
      %4595 = vmatprep.subr.mxu0 %v1842
      %4596 = vmatpush1.msra.mxu0 %v1841
      %4597 = vmatprep.subr.mxu0 %v1846
      %4598 = vmatpush1.msra.mxu0 %v1845
      %4599 = vmatprep.subr.mxu0 %v1850
      %4600 = vmatpush1.msra.mxu0 %v1849
      %4601 = vmatprep.subr.mxu0 0.0
      %4602 = vmatpush1.msra.mxu0 0.0
      %4603 = vmatprep.subr.mxu0 0.0
      %4604 = vmatpush1.msra.mxu0 0.0
      %4605 = vmatprep.subr.mxu0 0.0
      %4606 = vmatpush1.msra.mxu0 0.0
      %4607 = vmatprep.subr.mxu0 0.0
      %4608 = vmatpush1.msra.mxu0 0.0
      %4609 = vmatprep.subr.mxu0 0.0
      %4610 = vmatpush1.msra.mxu0 0.0
      %4611 = vmatprep.subr.mxu0 0.0
      %4612 = vmatpush1.msra.mxu0 0.0
      %4613 = vmatprep.subr.mxu0 0.0
      %4614 = vmatpush1.msra.mxu0 0.0
      %4615 = vmatprep.subr.mxu0 0.0
      %4616 = vmatpush1.msra.mxu0 0.0
      %4617 = vmatprep.subr.mxu0 0.0
      %4618 = vmatpush1.msra.mxu0 0.0
      %4619 = vmatprep.subr.mxu0 0.0
      %4620 = vmatpush1.msra.mxu0 0.0
      %4621 = vmatprep.subr.mxu0 0.0
      %4622 = vmatpush1.msra.mxu0 0.0
      %4623 = vmatprep.subr.mxu0 0.0
      %4624 = vmatpush1.msra.mxu0 0.0
      %4625 = vmatprep.subr.mxu0 0.0
      %4626 = vmatpush1.msra.mxu0 0.0
      %4627 = vmatprep.subr.mxu0 0.0
      %4628 = vmatpush1.msra.mxu0 0.0
      %4629 = vmatprep.subr.mxu0 0.0
      %4630 = vmatpush1.msra.mxu0 0.0
      %4631 = vmatprep.subr.mxu0 0.0
      %4632 = vmatpush1.msra.mxu0 0.0
      %4633 = vmatprep.mubr.f32.mxu0 0.0
      %4634 = vmatmul.mubr.f32.gmra.mrb[0].mxu0 %v4319
      %v4635 = vpop.f32.mrb[0].mxu0
      %v4636 = vadd.f32 0.0, %v4635
      %v4637 = vpop.f32.mrb[0].mxu0
      %v4638 = vadd.f32 0.0, %v4637
      %4639 = vdwg.mxu0
      %v4644 = vcombine.low %v4565, %v4567
      %v4645 = vcombine.low %v4636, %v4638
      %v4647 = vunpack.c.l.s4 1966171168
      %v4648 = vunpack.c.0.s8 %v4647
      %v4649 = vlaneseq
      %v4650 = vshrl.u32 %v4649, 7
      %v4651 = vsub.s32 %v4648, %v4650
      %v4652 = vrot.slane %v4644, %v4651
      %v4654 = vunpack.c.l.s4 1966171168
      %v4655 = vunpack.c.0.s8 %v4654
      %v4656 = vlaneseq
      %v4657 = vshrl.u32 %v4656, 7
      %v4658 = vsub.s32 %v4655, %v4657
      %v4659 = vrot.slane %v4645, %v4658
      %v4660 = vcombine.low %v4652, %v4659
      %v4662 = vunpack.c.l.s4 1966171168
      %v4663 = vunpack.c.0.s8 %v4662
      %v4664 = vlaneseq
      %v4665 = vshrl.u32 %v4664, 7
      %v4666 = vsub.s32 %v4663, %v4665
      %v4667 = vrot.slane %v4660, %v4666
      %v4669 = vadd.f32 %v4497, %v4667
      %v4670 = vxor.u32 %v4495, 2147483648
      %v4671 = vmul.f32 %v4670, 1.442695
      %v4672 = vpow.pop %v4671
      %v4673 = vadd.f32 %v4672, 1.0
      %v4674 = vrcp.pop %v4673
      %v4675 = vmul.f32 1.0, %v4674
      %v4677 = vrot.slane %v4495, 1
      %v4679 = vxor.u32 %v4677, 2147483648
      %v4680 = vmul.f32 %v4679, 1.442695
      %v4681 = vpow.pop %v4680
      %v4682 = vadd.f32 %v4681, 1.0
      %v4683 = vrcp.pop %v4682
      %v4684 = vmul.f32 1.0, %v4683
      %v4685 = vrot.slane %v4495, 2
      %v4687 = vtanh.pop %v4685
      %v4688 = vrot.slane %v4495, 3
      %v4690 = vxor.u32 %v4688, 2147483648
      %v4691 = vmul.f32 %v4690, 1.442695
      %v4692 = vpow.pop %v4691
      %v4693 = vadd.f32 %v4692, 1.0
      %v4694 = vrcp.pop %v4693
      %v4695 = vmul.f32 1.0, %v4694
      %v4696 = vmul.f32 %v4684, %v4286
      %v4697 = vmul.f32 %v4675, %v4687
      %v4698 = vadd.f32 %v4696, %v4697
      %v4699 = vtanh.pop %v4698
      %v4700 = vmul.f32 %v4695, %v4699
      %v4701 = vxor.u32 %v4669, 2147483648
      %v4702 = vmul.f32 %v4701, 1.442695
      %v4703 = vpow.pop %v4702
      %v4704 = vadd.f32 %v4703, 1.0
      %v4705 = vrcp.pop %v4704
      %v4706 = vmul.f32 1.0, %v4705
      %v4708 = vrot.slane %v4669, 1
      %v4710 = vxor.u32 %v4708, 2147483648
      %v4711 = vmul.f32 %v4710, 1.442695
      %v4712 = vpow.pop %v4711
      %v4713 = vadd.f32 %v4712, 1.0
      %v4714 = vrcp.pop %v4713
      %v4715 = vmul.f32 1.0, %v4714
      %v4716 = vrot.slane %v4669, 2
      %v4718 = vtanh.pop %v4716
      %v4719 = vrot.slane %v4669, 3
      %v4721 = vxor.u32 %v4719, 2147483648
      %v4722 = vmul.f32 %v4721, 1.442695
      %v4723 = vpow.pop %v4722
      %v4724 = vadd.f32 %v4723, 1.0
      %v4725 = vrcp.pop %v4724
      %v4726 = vmul.f32 1.0, %v4725
      %v4727 = vmul.f32 %v4715, %v4317
      %v4728 = vmul.f32 %v4706, %v4718
      %v4729 = vadd.f32 %v4727, %v4728
      %v4730 = vtanh.pop %v4729
      %v4731 = vmul.f32 %v4726, %v4730
      %4732 = vst [vmem:[%s325 + $0x6] sm:$0x1] %v4700
      %4733 = vst [vmem:[%s325 + $0xc] sm:$0x1] %v4731
      %s4734 = scalar_lea.vmem [#allocation2], 7
      %v4735 = vld [vmem:[%s4734] ss:$8 sm:$0xf]
      %4736 = vmatprep.subr.mxu0 %v1724
      %4737 = vmatpush1.msra.mxu0 %v1723
      %4738 = vmatprep.subr.mxu0 %v1728
      %4739 = vmatpush1.msra.mxu0 %v1727
      %4740 = vmatprep.subr.mxu0 %v1732
      %4741 = vmatpush1.msra.mxu0 %v1731
      %4742 = vmatprep.subr.mxu0 %v1736
      %4743 = vmatpush1.msra.mxu0 %v1735
      %4744 = vmatprep.subr.mxu0 %v1740
      %4745 = vmatpush1.msra.mxu0 %v1739
      %4746 = vmatprep.subr.mxu0 %v1744
      %4747 = vmatpush1.msra.mxu0 %v1743
      %4748 = vmatprep.subr.mxu0 %v1748
      %4749 = vmatpush1.msra.mxu0 %v1747
      %4750 = vmatprep.subr.mxu0 %v1752
      %4751 = vmatpush1.msra.mxu0 %v1751
      %4752 = vmatprep.subr.mxu0 %v1756
      %4753 = vmatpush1.msra.mxu0 %v1755
      %4754 = vmatprep.subr.mxu0 %v1760
      %4755 = vmatpush1.msra.mxu0 %v1759
      %4756 = vmatprep.subr.mxu0 %v1764
      %4757 = vmatpush1.msra.mxu0 %v1763
      %4758 = vmatprep.subr.mxu0 %v1768
      %4759 = vmatpush1.msra.mxu0 %v1767
      %4760 = vmatprep.subr.mxu0 %v1772
      %4761 = vmatpush1.msra.mxu0 %v1771
      %4762 = vmatprep.subr.mxu0 %v1776
      %4763 = vmatpush1.msra.mxu0 %v1775
      %4764 = vmatprep.subr.mxu0 %v1780
      %4765 = vmatpush1.msra.mxu0 %v1779
      %4766 = vmatprep.subr.mxu0 %v1784
      %4767 = vmatpush1.msra.mxu0 %v1783
      %4768 = vmatprep.subr.mxu0 0.0
      %4769 = vmatpush1.msra.mxu0 0.0
      %4770 = vmatprep.subr.mxu0 0.0
      %4771 = vmatpush1.msra.mxu0 0.0
      %4772 = vmatprep.subr.mxu0 0.0
      %4773 = vmatpush1.msra.mxu0 0.0
      %4774 = vmatprep.subr.mxu0 0.0
      %4775 = vmatpush1.msra.mxu0 0.0
      %4776 = vmatprep.subr.mxu0 0.0
      %4777 = vmatpush1.msra.mxu0 0.0
      %4778 = vmatprep.subr.mxu0 0.0
      %4779 = vmatpush1.msra.mxu0 0.0
      %4780 = vmatprep.subr.mxu0 0.0
      %4781 = vmatpush1.msra.mxu0 0.0
      %4782 = vmatprep.subr.mxu0 0.0
      %4783 = vmatpush1.msra.mxu0 0.0
      %4784 = vmatprep.subr.mxu0 0.0
      %4785 = vmatpush1.msra.mxu0 0.0
      %4786 = vmatprep.subr.mxu0 0.0
      %4787 = vmatpush1.msra.mxu0 0.0
      %4788 = vmatprep.subr.mxu0 0.0
      %4789 = vmatpush1.msra.mxu0 0.0
      %4790 = vmatprep.subr.mxu0 0.0
      %4791 = vmatpush1.msra.mxu0 0.0
      %4792 = vmatprep.subr.mxu0 0.0
      %4793 = vmatpush1.msra.mxu0 0.0
      %4794 = vmatprep.subr.mxu0 0.0
      %4795 = vmatpush1.msra.mxu0 0.0
      %4796 = vmatprep.subr.mxu0 0.0
      %4797 = vmatpush1.msra.mxu0 0.0
      %4798 = vmatprep.subr.mxu0 0.0
      %4799 = vmatpush1.msra.mxu0 0.0
      %4800 = vmatprep.mubr.f32.mxu0 0.0
      %4801 = vmatmul.mubr.f32.gmra.mrb[0].mxu0 %v4700
      %v4802 = vpop.f32.mrb[0].mxu0
      %v4803 = vadd.f32 0.0, %v4802
      %v4804 = vpop.f32.mrb[0].mxu0
      %v4805 = vadd.f32 0.0, %v4804
      %4806 = vdwg.mxu0
      %4807 = vmatprep.subr.mxu0 %v1726
      %4808 = vmatpush1.msra.mxu0 %v1725
      %4809 = vmatprep.subr.mxu0 %v1730
      %4810 = vmatpush1.msra.mxu0 %v1729
      %4811 = vmatprep.subr.mxu0 %v1734
      %4812 = vmatpush1.msra.mxu0 %v1733
      %4813 = vmatprep.subr.mxu0 %v1738
      %4814 = vmatpush1.msra.mxu0 %v1737
      %4815 = vmatprep.subr.mxu0 %v1742
      %4816 = vmatpush1.msra.mxu0 %v1741
      %4817 = vmatprep.subr.mxu0 %v1746
      %4818 = vmatpush1.msra.mxu0 %v1745
      %4819 = vmatprep.subr.mxu0 %v1750
      %4820 = vmatpush1.msra.mxu0 %v1749
      %4821 = vmatprep.subr.mxu0 %v1754
      %4822 = vmatpush1.msra.mxu0 %v1753
      %4823 = vmatprep.subr.mxu0 %v1758
      %4824 = vmatpush1.msra.mxu0 %v1757
      %4825 = vmatprep.subr.mxu0 %v1762
      %4826 = vmatpush1.msra.mxu0 %v1761
      %4827 = vmatprep.subr.mxu0 %v1766
      %4828 = vmatpush1.msra.mxu0 %v1765
      %4829 = vmatprep.subr.mxu0 %v1770
      %4830 = vmatpush1.msra.mxu0 %v1769
      %4831 = vmatprep.subr.mxu0 %v1774
      %4832 = vmatpush1.msra.mxu0 %v1773
      %4833 = vmatprep.subr.mxu0 %v1778
      %4834 = vmatpush1.msra.mxu0 %v1777
      %4835 = vmatprep.subr.mxu0 %v1782
      %4836 = vmatpush1.msra.mxu0 %v1781
      %4837 = vmatprep.subr.mxu0 %v1786
      %4838 = vmatpush1.msra.mxu0 %v1785
      %4839 = vmatprep.subr.mxu0 0.0
      %4840 = vmatpush1.msra.mxu0 0.0
      %4841 = vmatprep.subr.mxu0 0.0
      %4842 = vmatpush1.msra.mxu0 0.0
      %4843 = vmatprep.subr.mxu0 0.0
      %4844 = vmatpush1.msra.mxu0 0.0
      %4845 = vmatprep.subr.mxu0 0.0
      %4846 = vmatpush1.msra.mxu0 0.0
      %4847 = vmatprep.subr.mxu0 0.0
      %4848 = vmatpush1.msra.mxu0 0.0
      %4849 = vmatprep.subr.mxu0 0.0
      %4850 = vmatpush1.msra.mxu0 0.0
      %4851 = vmatprep.subr.mxu0 0.0
      %4852 = vmatpush1.msra.mxu0 0.0
      %4853 = vmatprep.subr.mxu0 0.0
      %4854 = vmatpush1.msra.mxu0 0.0
      %4855 = vmatprep.subr.mxu0 0.0
      %4856 = vmatpush1.msra.mxu0 0.0
      %4857 = vmatprep.subr.mxu0 0.0
      %4858 = vmatpush1.msra.mxu0 0.0
      %4859 = vmatprep.subr.mxu0 0.0
      %4860 = vmatpush1.msra.mxu0 0.0
      %4861 = vmatprep.subr.mxu0 0.0
      %4862 = vmatpush1.msra.mxu0 0.0
      %4863 = vmatprep.subr.mxu0 0.0
      %4864 = vmatpush1.msra.mxu0 0.0
      %4865 = vmatprep.subr.mxu0 0.0
      %4866 = vmatpush1.msra.mxu0 0.0
      %4867 = vmatprep.subr.mxu0 0.0
      %4868 = vmatpush1.msra.mxu0 0.0
      %4869 = vmatprep.subr.mxu0 0.0
      %4870 = vmatpush1.msra.mxu0 0.0
      %4871 = vmatprep.mubr.f32.mxu0 0.0
      %4872 = vmatmul.mubr.f32.gmra.mrb[0].mxu0 %v4700
      %v4873 = vpop.f32.mrb[0].mxu0
      %v4874 = vadd.f32 0.0, %v4873
      %v4875 = vpop.f32.mrb[0].mxu0
      %v4876 = vadd.f32 0.0, %v4875
      %4877 = vdwg.mxu0
      %v4882 = vcombine.low %v4803, %v4805
      %v4883 = vcombine.low %v4874, %v4876
      %v4885 = vunpack.c.l.s4 1966171168
      %v4886 = vunpack.c.0.s8 %v4885
      %v4887 = vlaneseq
      %v4888 = vshrl.u32 %v4887, 7
      %v4889 = vsub.s32 %v4886, %v4888
      %v4890 = vrot.slane %v4882, %v4889
      %v4892 = vunpack.c.l.s4 1966171168
      %v4893 = vunpack.c.0.s8 %v4892
      %v4894 = vlaneseq
      %v4895 = vshrl.u32 %v4894, 7
      %v4896 = vsub.s32 %v4893, %v4895
      %v4897 = vrot.slane %v4883, %v4896
      %v4898 = vcombine.low %v4890, %v4897
      %v4900 = vunpack.c.l.s4 1966171168
      %v4901 = vunpack.c.0.s8 %v4900
      %v4902 = vlaneseq
      %v4903 = vshrl.u32 %v4902, 7
      %v4904 = vsub.s32 %v4901, %v4903
      %v4905 = vrot.slane %v4898, %v4904
      %v4907 = vadd.f32 %v4735, %v4905
      %s4908 = scalar_lea.vmem [#allocation3], 3
      %v4909 = vld [vmem:[%s4908] ss:$8 sm:$0xf]
      %4910 = vmatprep.subr.mxu0 %v1788
      %4911 = vmatpush1.msra.mxu0 %v1787
      %4912 = vmatprep.subr.mxu0 %v1792
      %4913 = vmatpush1.msra.mxu0 %v1791
      %4914 = vmatprep.subr.mxu0 %v1796
      %4915 = vmatpush1.msra.mxu0 %v1795
      %4916 = vmatprep.subr.mxu0 %v1800
      %4917 = vmatpush1.msra.mxu0 %v1799
      %4918 = vmatprep.subr.mxu0 %v1804
      %4919 = vmatpush1.msra.mxu0 %v1803
      %4920 = vmatprep.subr.mxu0 %v1808
      %4921 = vmatpush1.msra.mxu0 %v1807
      %4922 = vmatprep.subr.mxu0 %v1812
      %4923 = vmatpush1.msra.mxu0 %v1811
      %4924 = vmatprep.subr.mxu0 %v1816
      %4925 = vmatpush1.msra.mxu0 %v1815
      %4926 = vmatprep.subr.mxu0 %v1820
      %4927 = vmatpush1.msra.mxu0 %v1819
      %4928 = vmatprep.subr.mxu0 %v1824
      %4929 = vmatpush1.msra.mxu0 %v1823
      %4930 = vmatprep.subr.mxu0 %v1828
      %4931 = vmatpush1.msra.mxu0 %v1827
      %4932 = vmatprep.subr.mxu0 %v1832
      %4933 = vmatpush1.msra.mxu0 %v1831
      %4934 = vmatprep.subr.mxu0 %v1836
      %4935 = vmatpush1.msra.mxu0 %v1835
      %4936 = vmatprep.subr.mxu0 %v1840
      %4937 = vmatpush1.msra.mxu0 %v1839
      %4938 = vmatprep.subr.mxu0 %v1844
      %4939 = vmatpush1.msra.mxu0 %v1843
      %4940 = vmatprep.subr.mxu0 %v1848
      %4941 = vmatpush1.msra.mxu0 %v1847
      %4942 = vmatprep.subr.mxu0 0.0
      %4943 = vmatpush1.msra.mxu0 0.0
      %4944 = vmatprep.subr.mxu0 0.0
      %4945 = vmatpush1.msra.mxu0 0.0
      %4946 = vmatprep.subr.mxu0 0.0
      %4947 = vmatpush1.msra.mxu0 0.0
      %4948 = vmatprep.subr.mxu0 0.0
      %4949 = vmatpush1.msra.mxu0 0.0
      %4950 = vmatprep.subr.mxu0 0.0
      %4951 = vmatpush1.msra.mxu0 0.0
      %4952 = vmatprep.subr.mxu0 0.0
      %4953 = vmatpush1.msra.mxu0 0.0
      %4954 = vmatprep.subr.mxu0 0.0
      %4955 = vmatpush1.msra.mxu0 0.0
      %4956 = vmatprep.subr.mxu0 0.0
      %4957 = vmatpush1.msra.mxu0 0.0
      %4958 = vmatprep.subr.mxu0 0.0
      %4959 = vmatpush1.msra.mxu0 0.0
      %4960 = vmatprep.subr.mxu0 0.0
      %4961 = vmatpush1.msra.mxu0 0.0
      %4962 = vmatprep.subr.mxu0 0.0
      %4963 = vmatpush1.msra.mxu0 0.0
      %4964 = vmatprep.subr.mxu0 0.0
      %4965 = vmatpush1.msra.mxu0 0.0
      %4966 = vmatprep.subr.mxu0 0.0
      %4967 = vmatpush1.msra.mxu0 0.0
      %4968 = vmatprep.subr.mxu0 0.0
      %4969 = vmatpush1.msra.mxu0 0.0
      %4970 = vmatprep.subr.mxu0 0.0
      %4971 = vmatpush1.msra.mxu0 0.0
      %4972 = vmatprep.subr.mxu0 0.0
      %4973 = vmatpush1.msra.mxu0 0.0
      %4974 = vmatprep.mubr.f32.mxu0 0.0
      %4975 = vmatmul.mubr.f32.gmra.mrb[0].mxu0 %v4731
      %v4976 = vpop.f32.mrb[0].mxu0
      %v4977 = vadd.f32 0.0, %v4976
      %v4978 = vpop.f32.mrb[0].mxu0
      %v4979 = vadd.f32 0.0, %v4978
      %4980 = vdwg.mxu0
      %4981 = vmatprep.subr.mxu0 %v1790
      %4982 = vmatpush1.msra.mxu0 %v1789
      %4983 = vmatprep.subr.mxu0 %v1794
      %4984 = vmatpush1.msra.mxu0 %v1793
      %4985 = vmatprep.subr.mxu0 %v1798
      %4986 = vmatpush1.msra.mxu0 %v1797
      %4987 = vmatprep.subr.mxu0 %v1802
      %4988 = vmatpush1.msra.mxu0 %v1801
      %4989 = vmatprep.subr.mxu0 %v1806
      %4990 = vmatpush1.msra.mxu0 %v1805
      %4991 = vmatprep.subr.mxu0 %v1810
      %4992 = vmatpush1.msra.mxu0 %v1809
      %4993 = vmatprep.subr.mxu0 %v1814
      %4994 = vmatpush1.msra.mxu0 %v1813
      %4995 = vmatprep.subr.mxu0 %v1818
      %4996 = vmatpush1.msra.mxu0 %v1817
      %4997 = vmatprep.subr.mxu0 %v1822
      %4998 = vmatpush1.msra.mxu0 %v1821
      %4999 = vmatprep.subr.mxu0 %v1826
      %5000 = vmatpush1.msra.mxu0 %v1825
      %5001 = vmatprep.subr.mxu0 %v1830
      %5002 = vmatpush1.msra.mxu0 %v1829
      %5003 = vmatprep.subr.mxu0 %v1834
      %5004 = vmatpush1.msra.mxu0 %v1833
      %5005 = vmatprep.subr.mxu0 %v1838
      %5006 = vmatpush1.msra.mxu0 %v1837
      %5007 = vmatprep.subr.mxu0 %v1842
      %5008 = vmatpush1.msra.mxu0 %v1841
      %5009 = vmatprep.subr.mxu0 %v1846
      %5010 = vmatpush1.msra.mxu0 %v1845
      %5011 = vmatprep.subr.mxu0 %v1850
      %5012 = vmatpush1.msra.mxu0 %v1849
      %5013 = vmatprep.subr.mxu0 0.0
      %5014 = vmatpush1.msra.mxu0 0.0
      %5015 = vmatprep.subr.mxu0 0.0
      %5016 = vmatpush1.msra.mxu0 0.0
      %5017 = vmatprep.subr.mxu0 0.0
      %5018 = vmatpush1.msra.mxu0 0.0
      %5019 = vmatprep.subr.mxu0 0.0
      %5020 = vmatpush1.msra.mxu0 0.0
      %5021 = vmatprep.subr.mxu0 0.0
      %5022 = vmatpush1.msra.mxu0 0.0
      %5023 = vmatprep.subr.mxu0 0.0
      %5024 = vmatpush1.msra.mxu0 0.0
      %5025 = vmatprep.subr.mxu0 0.0
      %5026 = vmatpush1.msra.mxu0 0.0
      %5027 = vmatprep.subr.mxu0 0.0
      %5028 = vmatpush1.msra.mxu0 0.0
      %5029 = vmatprep.subr.mxu0 0.0
      %5030 = vmatpush1.msra.mxu0 0.0
      %5031 = vmatprep.subr.mxu0 0.0
      %5032 = vmatpush1.msra.mxu0 0.0
      %5033 = vmatprep.subr.mxu0 0.0
      %5034 = vmatpush1.msra.mxu0 0.0
      %5035 = vmatprep.subr.mxu0 0.0
      %5036 = vmatpush1.msra.mxu0 0.0
      %5037 = vmatprep.subr.mxu0 0.0
      %5038 = vmatpush1.msra.mxu0 0.0
      %5039 = vmatprep.subr.mxu0 0.0
      %5040 = vmatpush1.msra.mxu0 0.0
      %5041 = vmatprep.subr.mxu0 0.0
      %5042 = vmatpush1.msra.mxu0 0.0
      %5043 = vmatprep.subr.mxu0 0.0
      %5044 = vmatpush1.msra.mxu0 0.0
      %5045 = vmatprep.mubr.f32.mxu0 0.0
      %5046 = vmatmul.mubr.f32.gmra.mrb[0].mxu0 %v4731
      %v5047 = vpop.f32.mrb[0].mxu0
      %v5048 = vadd.f32 0.0, %v5047
      %v5049 = vpop.f32.mrb[0].mxu0
      %v5050 = vadd.f32 0.0, %v5049
      %5051 = vdwg.mxu0
      %v5056 = vcombine.low %v4977, %v4979
      %v5057 = vcombine.low %v5048, %v5050
      %v5059 = vunpack.c.l.s4 1966171168
      %v5060 = vunpack.c.0.s8 %v5059
      %v5061 = vlaneseq
      %v5062 = vshrl.u32 %v5061, 7
      %v5063 = vsub.s32 %v5060, %v5062
      %v5064 = vrot.slane %v5056, %v5063
      %v5066 = vunpack.c.l.s4 1966171168
      %v5067 = vunpack.c.0.s8 %v5066
      %v5068 = vlaneseq
      %v5069 = vshrl.u32 %v5068, 7
      %v5070 = vsub.s32 %v5067, %v5069
      %v5071 = vrot.slane %v5057, %v5070
      %v5072 = vcombine.low %v5064, %v5071
      %v5074 = vunpack.c.l.s4 1966171168
      %v5075 = vunpack.c.0.s8 %v5074
      %v5076 = vlaneseq
      %v5077 = vshrl.u32 %v5076, 7
      %v5078 = vsub.s32 %v5075, %v5077
      %v5079 = vrot.slane %v5072, %v5078
      %v5081 = vadd.f32 %v4909, %v5079
      %v5082 = vxor.u32 %v4907, 2147483648
      %v5083 = vmul.f32 %v5082, 1.442695
      %v5084 = vpow.pop %v5083
      %v5085 = vadd.f32 %v5084, 1.0
      %v5086 = vrcp.pop %v5085
      %v5087 = vmul.f32 1.0, %v5086
      %v5089 = vrot.slane %v4907, 1
      %v5091 = vxor.u32 %v5089, 2147483648
      %v5092 = vmul.f32 %v5091, 1.442695
      %v5093 = vpow.pop %v5092
      %v5094 = vadd.f32 %v5093, 1.0
      %v5095 = vrcp.pop %v5094
      %v5096 = vmul.f32 1.0, %v5095
      %v5097 = vrot.slane %v4907, 2
      %v5099 = vtanh.pop %v5097
      %v5100 = vrot.slane %v4907, 3
      %v5102 = vxor.u32 %v5100, 2147483648
      %v5103 = vmul.f32 %v5102, 1.442695
      %v5104 = vpow.pop %v5103
      %v5105 = vadd.f32 %v5104, 1.0
      %v5106 = vrcp.pop %v5105
      %v5107 = vmul.f32 1.0, %v5106
      %v5108 = vmul.f32 %v5096, %v4698
      %v5109 = vmul.f32 %v5087, %v5099
      %v5110 = vadd.f32 %v5108, %v5109
      %v5111 = vtanh.pop %v5110
      %v5112 = vmul.f32 %v5107, %v5111
      %v5113 = vxor.u32 %v5081, 2147483648
      %v5114 = vmul.f32 %v5113, 1.442695
      %v5115 = vpow.pop %v5114
      %v5116 = vadd.f32 %v5115, 1.0
      %v5117 = vrcp.pop %v5116
      %v5118 = vmul.f32 1.0, %v5117
      %v5120 = vrot.slane %v5081, 1
      %v5122 = vxor.u32 %v5120, 2147483648
      %v5123 = vmul.f32 %v5122, 1.442695
      %v5124 = vpow.pop %v5123
      %v5125 = vadd.f32 %v5124, 1.0
      %v5126 = vrcp.pop %v5125
      %v5127 = vmul.f32 1.0, %v5126
      %v5128 = vrot.slane %v5081, 2
      %v5130 = vtanh.pop %v5128
      %v5131 = vrot.slane %v5081, 3
      %v5133 = vxor.u32 %v5131, 2147483648
      %v5134 = vmul.f32 %v5133, 1.442695
      %v5135 = vpow.pop %v5134
      %v5136 = vadd.f32 %v5135, 1.0
      %v5137 = vrcp.pop %v5136
      %v5138 = vmul.f32 1.0, %v5137
      %v5139 = vmul.f32 %v5127, %v4729
      %v5140 = vmul.f32 %v5118, %v5130
      %v5141 = vadd.f32 %v5139, %v5140
      %v5142 = vtanh.pop %v5141
      %v5143 = vmul.f32 %v5138, %v5142
      %5144 = vst [vmem:[%s325 + $0x7] sm:$0x1] %v5112
      %5145 = vst [vmem:[%s325 + $0xb] sm:$0x1] %v5143
      %s5146 = scalar_lea.vmem [#allocation2], 32
      %v5147 = vld [vmem:[%s5146] ss:$8 sm:$0xf]
      %5148 = vmatprep.subr.mxu0 %v1724
      %5149 = vmatpush1.msra.mxu0 %v1723
      %5150 = vmatprep.subr.mxu0 %v1728
      %5151 = vmatpush1.msra.mxu0 %v1727
      %5152 = vmatprep.subr.mxu0 %v1732
      %5153 = vmatpush1.msra.mxu0 %v1731
      %5154 = vmatprep.subr.mxu0 %v1736
      %5155 = vmatpush1.msra.mxu0 %v1735
      %5156 = vmatprep.subr.mxu0 %v1740
      %5157 = vmatpush1.msra.mxu0 %v1739
      %5158 = vmatprep.subr.mxu0 %v1744
      %5159 = vmatpush1.msra.mxu0 %v1743
      %5160 = vmatprep.subr.mxu0 %v1748
      %5161 = vmatpush1.msra.mxu0 %v1747
      %5162 = vmatprep.subr.mxu0 %v1752
      %5163 = vmatpush1.msra.mxu0 %v1751
      %5164 = vmatprep.subr.mxu0 %v1756
      %5165 = vmatpush1.msra.mxu0 %v1755
      %5166 = vmatprep.subr.mxu0 %v1760
      %5167 = vmatpush1.msra.mxu0 %v1759
      %5168 = vmatprep.subr.mxu0 %v1764
      %5169 = vmatpush1.msra.mxu0 %v1763
      %5170 = vmatprep.subr.mxu0 %v1768
      %5171 = vmatpush1.msra.mxu0 %v1767
      %5172 = vmatprep.subr.mxu0 %v1772
      %5173 = vmatpush1.msra.mxu0 %v1771
      %5174 = vmatprep.subr.mxu0 %v1776
      %5175 = vmatpush1.msra.mxu0 %v1775
      %5176 = vmatprep.subr.mxu0 %v1780
      %5177 = vmatpush1.msra.mxu0 %v1779
      %5178 = vmatprep.subr.mxu0 %v1784
      %5179 = vmatpush1.msra.mxu0 %v1783
      %5180 = vmatprep.subr.mxu0 0.0
      %5181 = vmatpush1.msra.mxu0 0.0
      %5182 = vmatprep.subr.mxu0 0.0
      %5183 = vmatpush1.msra.mxu0 0.0
      %5184 = vmatprep.subr.mxu0 0.0
      %5185 = vmatpush1.msra.mxu0 0.0
      %5186 = vmatprep.subr.mxu0 0.0
      %5187 = vmatpush1.msra.mxu0 0.0
      %5188 = vmatprep.subr.mxu0 0.0
      %5189 = vmatpush1.msra.mxu0 0.0
      %5190 = vmatprep.subr.mxu0 0.0
      %5191 = vmatpush1.msra.mxu0 0.0
      %5192 = vmatprep.subr.mxu0 0.0
      %5193 = vmatpush1.msra.mxu0 0.0
      %5194 = vmatprep.subr.mxu0 0.0
      %5195 = vmatpush1.msra.mxu0 0.0
      %5196 = vmatprep.subr.mxu0 0.0
      %5197 = vmatpush1.msra.mxu0 0.0
      %5198 = vmatprep.subr.mxu0 0.0
      %5199 = vmatpush1.msra.mxu0 0.0
      %5200 = vmatprep.subr.mxu0 0.0
      %5201 = vmatpush1.msra.mxu0 0.0
      %5202 = vmatprep.subr.mxu0 0.0
      %5203 = vmatpush1.msra.mxu0 0.0
      %5204 = vmatprep.subr.mxu0 0.0
      %5205 = vmatpush1.msra.mxu0 0.0
      %5206 = vmatprep.subr.mxu0 0.0
      %5207 = vmatpush1.msra.mxu0 0.0
      %5208 = vmatprep.subr.mxu0 0.0
      %5209 = vmatpush1.msra.mxu0 0.0
      %5210 = vmatprep.subr.mxu0 0.0
      %5211 = vmatpush1.msra.mxu0 0.0
      %5212 = vmatprep.mubr.f32.mxu0 0.0
      %5213 = vmatmul.mubr.f32.gmra.mrb[0].mxu0 %v5112
      %v5214 = vpop.f32.mrb[0].mxu0
      %v5215 = vadd.f32 0.0, %v5214
      %v5216 = vpop.f32.mrb[0].mxu0
      %v5217 = vadd.f32 0.0, %v5216
      %5218 = vdwg.mxu0
      %5219 = vmatprep.subr.mxu0 %v1726
      %5220 = vmatpush1.msra.mxu0 %v1725
      %5221 = vmatprep.subr.mxu0 %v1730
      %5222 = vmatpush1.msra.mxu0 %v1729
      %5223 = vmatprep.subr.mxu0 %v1734
      %5224 = vmatpush1.msra.mxu0 %v1733
      %5225 = vmatprep.subr.mxu0 %v1738
      %5226 = vmatpush1.msra.mxu0 %v1737
      %5227 = vmatprep.subr.mxu0 %v1742
      %5228 = vmatpush1.msra.mxu0 %v1741
      %5229 = vmatprep.subr.mxu0 %v1746
      %5230 = vmatpush1.msra.mxu0 %v1745
      %5231 = vmatprep.subr.mxu0 %v1750
      %5232 = vmatpush1.msra.mxu0 %v1749
      %5233 = vmatprep.subr.mxu0 %v1754
      %5234 = vmatpush1.msra.mxu0 %v1753
      %5235 = vmatprep.subr.mxu0 %v1758
      %5236 = vmatpush1.msra.mxu0 %v1757
      %5237 = vmatprep.subr.mxu0 %v1762
      %5238 = vmatpush1.msra.mxu0 %v1761
      %5239 = vmatprep.subr.mxu0 %v1766
      %5240 = vmatpush1.msra.mxu0 %v1765
      %5241 = vmatprep.subr.mxu0 %v1770
      %5242 = vmatpush1.msra.mxu0 %v1769
      %5243 = vmatprep.subr.mxu0 %v1774
      %5244 = vmatpush1.msra.mxu0 %v1773
      %5245 = vmatprep.subr.mxu0 %v1778
      %5246 = vmatpush1.msra.mxu0 %v1777
      %5247 = vmatprep.subr.mxu0 %v1782
      %5248 = vmatpush1.msra.mxu0 %v1781
      %5249 = vmatprep.subr.mxu0 %v1786
      %5250 = vmatpush1.msra.mxu0 %v1785
      %5251 = vmatprep.subr.mxu0 0.0
      %5252 = vmatpush1.msra.mxu0 0.0
      %5253 = vmatprep.subr.mxu0 0.0
      %5254 = vmatpush1.msra.mxu0 0.0
      %5255 = vmatprep.subr.mxu0 0.0
      %5256 = vmatpush1.msra.mxu0 0.0
      %5257 = vmatprep.subr.mxu0 0.0
      %5258 = vmatpush1.msra.mxu0 0.0
      %5259 = vmatprep.subr.mxu0 0.0
      %5260 = vmatpush1.msra.mxu0 0.0
      %5261 = vmatprep.subr.mxu0 0.0
      %5262 = vmatpush1.msra.mxu0 0.0
      %5263 = vmatprep.subr.mxu0 0.0
      %5264 = vmatpush1.msra.mxu0 0.0
      %5265 = vmatprep.subr.mxu0 0.0
      %5266 = vmatpush1.msra.mxu0 0.0
      %5267 = vmatprep.subr.mxu0 0.0
      %5268 = vmatpush1.msra.mxu0 0.0
      %5269 = vmatprep.subr.mxu0 0.0
      %5270 = vmatpush1.msra.mxu0 0.0
      %5271 = vmatprep.subr.mxu0 0.0
      %5272 = vmatpush1.msra.mxu0 0.0
      %5273 = vmatprep.subr.mxu0 0.0
      %5274 = vmatpush1.msra.mxu0 0.0
      %5275 = vmatprep.subr.mxu0 0.0
      %5276 = vmatpush1.msra.mxu0 0.0
      %5277 = vmatprep.subr.mxu0 0.0
      %5278 = vmatpush1.msra.mxu0 0.0
      %5279 = vmatprep.subr.mxu0 0.0
      %5280 = vmatpush1.msra.mxu0 0.0
      %5281 = vmatprep.subr.mxu0 0.0
      %5282 = vmatpush1.msra.mxu0 0.0
      %5283 = vmatprep.mubr.f32.mxu0 0.0
      %5284 = vmatmul.mubr.f32.gmra.mrb[0].mxu0 %v5112
      %v5285 = vpop.f32.mrb[0].mxu0
      %v5286 = vadd.f32 0.0, %v5285
      %v5287 = vpop.f32.mrb[0].mxu0
      %v5288 = vadd.f32 0.0, %v5287
      %5289 = vdwg.mxu0
      %v5294 = vcombine.low %v5215, %v5217
      %v5295 = vcombine.low %v5286, %v5288
      %v5297 = vunpack.c.l.s4 1966171168
      %v5298 = vunpack.c.0.s8 %v5297
      %v5299 = vlaneseq
      %v5300 = vshrl.u32 %v5299, 7
      %v5301 = vsub.s32 %v5298, %v5300
      %v5302 = vrot.slane %v5294, %v5301
      %v5304 = vunpack.c.l.s4 1966171168
      %v5305 = vunpack.c.0.s8 %v5304
      %v5306 = vlaneseq
      %v5307 = vshrl.u32 %v5306, 7
      %v5308 = vsub.s32 %v5305, %v5307
      %v5309 = vrot.slane %v5295, %v5308
      %v5310 = vcombine.low %v5302, %v5309
      %v5312 = vunpack.c.l.s4 1966171168
      %v5313 = vunpack.c.0.s8 %v5312
      %v5314 = vlaneseq
      %v5315 = vshrl.u32 %v5314, 7
      %v5316 = vsub.s32 %v5313, %v5315
      %v5317 = vrot.slane %v5310, %v5316
      %v5319 = vadd.f32 %v5147, %v5317
      %s5320 = scalar_lea.vmem [#allocation3], 2
      %v5321 = vld [vmem:[%s5320] ss:$8 sm:$0xf]
      %5322 = vmatprep.subr.mxu0 %v1788
      %5323 = vmatpush1.msra.mxu0 %v1787
      %5324 = vmatprep.subr.mxu0 %v1792
      %5325 = vmatpush1.msra.mxu0 %v1791
      %5326 = vmatprep.subr.mxu0 %v1796
      %5327 = vmatpush1.msra.mxu0 %v1795
      %5328 = vmatprep.subr.mxu0 %v1800
      %5329 = vmatpush1.msra.mxu0 %v1799
      %5330 = vmatprep.subr.mxu0 %v1804
      %5331 = vmatpush1.msra.mxu0 %v1803
      %5332 = vmatprep.subr.mxu0 %v1808
      %5333 = vmatpush1.msra.mxu0 %v1807
      %5334 = vmatprep.subr.mxu0 %v1812
      %5335 = vmatpush1.msra.mxu0 %v1811
      %5336 = vmatprep.subr.mxu0 %v1816
      %5337 = vmatpush1.msra.mxu0 %v1815
      %5338 = vmatprep.subr.mxu0 %v1820
      %5339 = vmatpush1.msra.mxu0 %v1819
      %5340 = vmatprep.subr.mxu0 %v1824
      %5341 = vmatpush1.msra.mxu0 %v1823
      %5342 = vmatprep.subr.mxu0 %v1828
      %5343 = vmatpush1.msra.mxu0 %v1827
      %5344 = vmatprep.subr.mxu0 %v1832
      %5345 = vmatpush1.msra.mxu0 %v1831
      %5346 = vmatprep.subr.mxu0 %v1836
      %5347 = vmatpush1.msra.mxu0 %v1835
      %5348 = vmatprep.subr.mxu0 %v1840
      %5349 = vmatpush1.msra.mxu0 %v1839
      %5350 = vmatprep.subr.mxu0 %v1844
      %5351 = vmatpush1.msra.mxu0 %v1843
      %5352 = vmatprep.subr.mxu0 %v1848
      %5353 = vmatpush1.msra.mxu0 %v1847
      %5354 = vmatprep.subr.mxu0 0.0
      %5355 = vmatpush1.msra.mxu0 0.0
      %5356 = vmatprep.subr.mxu0 0.0
      %5357 = vmatpush1.msra.mxu0 0.0
      %5358 = vmatprep.subr.mxu0 0.0
      %5359 = vmatpush1.msra.mxu0 0.0
      %5360 = vmatprep.subr.mxu0 0.0
      %5361 = vmatpush1.msra.mxu0 0.0
      %5362 = vmatprep.subr.mxu0 0.0
      %5363 = vmatpush1.msra.mxu0 0.0
      %5364 = vmatprep.subr.mxu0 0.0
      %5365 = vmatpush1.msra.mxu0 0.0
      %5366 = vmatprep.subr.mxu0 0.0
      %5367 = vmatpush1.msra.mxu0 0.0
      %5368 = vmatprep.subr.mxu0 0.0
      %5369 = vmatpush1.msra.mxu0 0.0
      %5370 = vmatprep.subr.mxu0 0.0
      %5371 = vmatpush1.msra.mxu0 0.0
      %5372 = vmatprep.subr.mxu0 0.0
      %5373 = vmatpush1.msra.mxu0 0.0
      %5374 = vmatprep.subr.mxu0 0.0
      %5375 = vmatpush1.msra.mxu0 0.0
      %5376 = vmatprep.subr.mxu0 0.0
      %5377 = vmatpush1.msra.mxu0 0.0
      %5378 = vmatprep.subr.mxu0 0.0
      %5379 = vmatpush1.msra.mxu0 0.0
      %5380 = vmatprep.subr.mxu0 0.0
      %5381 = vmatpush1.msra.mxu0 0.0
      %5382 = vmatprep.subr.mxu0 0.0
      %5383 = vmatpush1.msra.mxu0 0.0
      %5384 = vmatprep.subr.mxu0 0.0
      %5385 = vmatpush1.msra.mxu0 0.0
      %5386 = vmatprep.mubr.f32.mxu0 0.0
      %5387 = vmatmul.mubr.f32.gmra.mrb[0].mxu0 %v5143
      %v5388 = vpop.f32.mrb[0].mxu0
      %v5389 = vadd.f32 0.0, %v5388
      %v5390 = vpop.f32.mrb[0].mxu0
      %v5391 = vadd.f32 0.0, %v5390
      %5392 = vdwg.mxu0
      %5393 = vmatprep.subr.mxu0 %v1790
      %5394 = vmatpush1.msra.mxu0 %v1789
      %5395 = vmatprep.subr.mxu0 %v1794
      %5396 = vmatpush1.msra.mxu0 %v1793
      %5397 = vmatprep.subr.mxu0 %v1798
      %5398 = vmatpush1.msra.mxu0 %v1797
      %5399 = vmatprep.subr.mxu0 %v1802
      %5400 = vmatpush1.msra.mxu0 %v1801
      %5401 = vmatprep.subr.mxu0 %v1806
      %5402 = vmatpush1.msra.mxu0 %v1805
      %5403 = vmatprep.subr.mxu0 %v1810
      %5404 = vmatpush1.msra.mxu0 %v1809
      %5405 = vmatprep.subr.mxu0 %v1814
      %5406 = vmatpush1.msra.mxu0 %v1813
      %5407 = vmatprep.subr.mxu0 %v1818
      %5408 = vmatpush1.msra.mxu0 %v1817
      %5409 = vmatprep.subr.mxu0 %v1822
      %5410 = vmatpush1.msra.mxu0 %v1821
      %5411 = vmatprep.subr.mxu0 %v1826
      %5412 = vmatpush1.msra.mxu0 %v1825
      %5413 = vmatprep.subr.mxu0 %v1830
      %5414 = vmatpush1.msra.mxu0 %v1829
      %5415 = vmatprep.subr.mxu0 %v1834
      %5416 = vmatpush1.msra.mxu0 %v1833
      %5417 = vmatprep.subr.mxu0 %v1838
      %5418 = vmatpush1.msra.mxu0 %v1837
      %5419 = vmatprep.subr.mxu0 %v1842
      %5420 = vmatpush1.msra.mxu0 %v1841
      %5421 = vmatprep.subr.mxu0 %v1846
      %5422 = vmatpush1.msra.mxu0 %v1845
      %5423 = vmatprep.subr.mxu0 %v1850
      %5424 = vmatpush1.msra.mxu0 %v1849
      %5425 = vmatprep.subr.mxu0 0.0
      %5426 = vmatpush1.msra.mxu0 0.0
      %5427 = vmatprep.subr.mxu0 0.0
      %5428 = vmatpush1.msra.mxu0 0.0
      %5429 = vmatprep.subr.mxu0 0.0
      %5430 = vmatpush1.msra.mxu0 0.0
      %5431 = vmatprep.subr.mxu0 0.0
      %5432 = vmatpush1.msra.mxu0 0.0
      %5433 = vmatprep.subr.mxu0 0.0
      %5434 = vmatpush1.msra.mxu0 0.0
      %5435 = vmatprep.subr.mxu0 0.0
      %5436 = vmatpush1.msra.mxu0 0.0
      %5437 = vmatprep.subr.mxu0 0.0
      %5438 = vmatpush1.msra.mxu0 0.0
      %5439 = vmatprep.subr.mxu0 0.0
      %5440 = vmatpush1.msra.mxu0 0.0
      %5441 = vmatprep.subr.mxu0 0.0
      %5442 = vmatpush1.msra.mxu0 0.0
      %5443 = vmatprep.subr.mxu0 0.0
      %5444 = vmatpush1.msra.mxu0 0.0
      %5445 = vmatprep.subr.mxu0 0.0
      %5446 = vmatpush1.msra.mxu0 0.0
      %5447 = vmatprep.subr.mxu0 0.0
      %5448 = vmatpush1.msra.mxu0 0.0
      %5449 = vmatprep.subr.mxu0 0.0
      %5450 = vmatpush1.msra.mxu0 0.0
      %5451 = vmatprep.subr.mxu0 0.0
      %5452 = vmatpush1.msra.mxu0 0.0
      %5453 = vmatprep.subr.mxu0 0.0
      %5454 = vmatpush1.msra.mxu0 0.0
      %5455 = vmatprep.subr.mxu0 0.0
      %5456 = vmatpush1.msra.mxu0 0.0
      %5457 = vmatprep.mubr.f32.mxu0 0.0
      %5458 = vmatmul.mubr.f32.gmra.mrb[0].mxu0 %v5143
      %v5459 = vpop.f32.mrb[0].mxu0
      %v5460 = vadd.f32 0.0, %v5459
      %v5461 = vpop.f32.mrb[0].mxu0
      %v5462 = vadd.f32 0.0, %v5461
      %5463 = vdwg.mxu0
      %v5468 = vcombine.low %v5389, %v5391
      %v5469 = vcombine.low %v5460, %v5462
      %v5471 = vunpack.c.l.s4 1966171168
      %v5472 = vunpack.c.0.s8 %v5471
      %v5473 = vlaneseq
      %v5474 = vshrl.u32 %v5473, 7
      %v5475 = vsub.s32 %v5472, %v5474
      %v5476 = vrot.slane %v5468, %v5475
      %v5478 = vunpack.c.l.s4 1966171168
      %v5479 = vunpack.c.0.s8 %v5478
      %v5480 = vlaneseq
      %v5481 = vshrl.u32 %v5480, 7
      %v5482 = vsub.s32 %v5479, %v5481
      %v5483 = vrot.slane %v5469, %v5482
      %v5484 = vcombine.low %v5476, %v5483
      %v5486 = vunpack.c.l.s4 1966171168
      %v5487 = vunpack.c.0.s8 %v5486
      %v5488 = vlaneseq
      %v5489 = vshrl.u32 %v5488, 7
      %v5490 = vsub.s32 %v5487, %v5489
      %v5491 = vrot.slane %v5484, %v5490
      %v5493 = vadd.f32 %v5321, %v5491
      %v5494 = vxor.u32 %v5319, 2147483648
      %v5495 = vmul.f32 %v5494, 1.442695
      %v5496 = vpow.pop %v5495
      %v5497 = vadd.f32 %v5496, 1.0
      %v5498 = vrcp.pop %v5497
      %v5499 = vmul.f32 1.0, %v5498
      %v5501 = vrot.slane %v5319, 1
      %v5503 = vxor.u32 %v5501, 2147483648
      %v5504 = vmul.f32 %v5503, 1.442695
      %v5505 = vpow.pop %v5504
      %v5506 = vadd.f32 %v5505, 1.0
      %v5507 = vrcp.pop %v5506
      %v5508 = vmul.f32 1.0, %v5507
      %v5509 = vrot.slane %v5319, 2
      %v5511 = vtanh.pop %v5509
      %v5512 = vrot.slane %v5319, 3
      %v5514 = vxor.u32 %v5512, 2147483648
      %v5515 = vmul.f32 %v5514, 1.442695
      %v5516 = vpow.pop %v5515
      %v5517 = vadd.f32 %v5516, 1.0
      %v5518 = vrcp.pop %v5517
      %v5519 = vmul.f32 1.0, %v5518
      %v5520 = vmul.f32 %v5508, %v5110
      %v5521 = vmul.f32 %v5499, %v5511
      %v5522 = vadd.f32 %v5520, %v5521
      %v5523 = vtanh.pop %v5522
      %v5524 = vmul.f32 %v5519, %v5523
      %v5525 = vxor.u32 %v5493, 2147483648
      %v5526 = vmul.f32 %v5525, 1.442695
      %v5527 = vpow.pop %v5526
      %v5528 = vadd.f32 %v5527, 1.0
      %v5529 = vrcp.pop %v5528
      %v5530 = vmul.f32 1.0, %v5529
      %v5532 = vrot.slane %v5493, 1
      %v5534 = vxor.u32 %v5532, 2147483648
      %v5535 = vmul.f32 %v5534, 1.442695
      %v5536 = vpow.pop %v5535
      %v5537 = vadd.f32 %v5536, 1.0
      %v5538 = vrcp.pop %v5537
      %v5539 = vmul.f32 1.0, %v5538
      %v5540 = vrot.slane %v5493, 2
      %v5542 = vtanh.pop %v5540
      %v5543 = vrot.slane %v5493, 3
      %v5545 = vxor.u32 %v5543, 2147483648
      %v5546 = vmul.f32 %v5545, 1.442695
      %v5547 = vpow.pop %v5546
      %v5548 = vadd.f32 %v5547, 1.0
      %v5549 = vrcp.pop %v5548
      %v5550 = vmul.f32 1.0, %v5549
      %v5551 = vmul.f32 %v5539, %v5141
      %v5552 = vmul.f32 %v5530, %v5542
      %v5553 = vadd.f32 %v5551, %v5552
      %v5554 = vtanh.pop %v5553
      %v5555 = vmul.f32 %v5550, %v5554
      %5556 = vst [vmem:[%s325 + $0x10] sm:$0x1] %v5524
      %5557 = vst [vmem:[%s325 + $0xa] sm:$0x1] %v5555
      %s5558 = scalar_lea.vmem [#allocation2], 33
      %v5559 = vld [vmem:[%s5558] ss:$8 sm:$0xf]
      %5560 = vmatprep.subr.mxu0 %v1724
      %5561 = vmatpush1.msra.mxu0 %v1723
      %5562 = vmatprep.subr.mxu0 %v1728
      %5563 = vmatpush1.msra.mxu0 %v1727
      %5564 = vmatprep.subr.mxu0 %v1732
      %5565 = vmatpush1.msra.mxu0 %v1731
      %5566 = vmatprep.subr.mxu0 %v1736
      %5567 = vmatpush1.msra.mxu0 %v1735
      %5568 = vmatprep.subr.mxu0 %v1740
      %5569 = vmatpush1.msra.mxu0 %v1739
      %5570 = vmatprep.subr.mxu0 %v1744
      %5571 = vmatpush1.msra.mxu0 %v1743
      %5572 = vmatprep.subr.mxu0 %v1748
      %5573 = vmatpush1.msra.mxu0 %v1747
      %5574 = vmatprep.subr.mxu0 %v1752
      %5575 = vmatpush1.msra.mxu0 %v1751
      %5576 = vmatprep.subr.mxu0 %v1756
      %5577 = vmatpush1.msra.mxu0 %v1755
      %5578 = vmatprep.subr.mxu0 %v1760
      %5579 = vmatpush1.msra.mxu0 %v1759
      %5580 = vmatprep.subr.mxu0 %v1764
      %5581 = vmatpush1.msra.mxu0 %v1763
      %5582 = vmatprep.subr.mxu0 %v1768
      %5583 = vmatpush1.msra.mxu0 %v1767
      %5584 = vmatprep.subr.mxu0 %v1772
      %5585 = vmatpush1.msra.mxu0 %v1771
      %5586 = vmatprep.subr.mxu0 %v1776
      %5587 = vmatpush1.msra.mxu0 %v1775
      %5588 = vmatprep.subr.mxu0 %v1780
      %5589 = vmatpush1.msra.mxu0 %v1779
      %5590 = vmatprep.subr.mxu0 %v1784
      %5591 = vmatpush1.msra.mxu0 %v1783
      %5592 = vmatprep.subr.mxu0 0.0
      %5593 = vmatpush1.msra.mxu0 0.0
      %5594 = vmatprep.subr.mxu0 0.0
      %5595 = vmatpush1.msra.mxu0 0.0
      %5596 = vmatprep.subr.mxu0 0.0
      %5597 = vmatpush1.msra.mxu0 0.0
      %5598 = vmatprep.subr.mxu0 0.0
      %5599 = vmatpush1.msra.mxu0 0.0
      %5600 = vmatprep.subr.mxu0 0.0
      %5601 = vmatpush1.msra.mxu0 0.0
      %5602 = vmatprep.subr.mxu0 0.0
      %5603 = vmatpush1.msra.mxu0 0.0
      %5604 = vmatprep.subr.mxu0 0.0
      %5605 = vmatpush1.msra.mxu0 0.0
      %5606 = vmatprep.subr.mxu0 0.0
      %5607 = vmatpush1.msra.mxu0 0.0
      %5608 = vmatprep.subr.mxu0 0.0
      %5609 = vmatpush1.msra.mxu0 0.0
      %5610 = vmatprep.subr.mxu0 0.0
      %5611 = vmatpush1.msra.mxu0 0.0
      %5612 = vmatprep.subr.mxu0 0.0
      %5613 = vmatpush1.msra.mxu0 0.0
      %5614 = vmatprep.subr.mxu0 0.0
      %5615 = vmatpush1.msra.mxu0 0.0
      %5616 = vmatprep.subr.mxu0 0.0
      %5617 = vmatpush1.msra.mxu0 0.0
      %5618 = vmatprep.subr.mxu0 0.0
      %5619 = vmatpush1.msra.mxu0 0.0
      %5620 = vmatprep.subr.mxu0 0.0
      %5621 = vmatpush1.msra.mxu0 0.0
      %5622 = vmatprep.subr.mxu0 0.0
      %5623 = vmatpush1.msra.mxu0 0.0
      %5624 = vmatprep.mubr.f32.mxu0 0.0
      %5625 = vmatmul.mubr.f32.gmra.mrb[0].mxu0 %v5524
      %v5626 = vpop.f32.mrb[0].mxu0
      %v5627 = vadd.f32 0.0, %v5626
      %v5628 = vpop.f32.mrb[0].mxu0
      %v5629 = vadd.f32 0.0, %v5628
      %5630 = vdwg.mxu0
      %5631 = vmatprep.subr.mxu0 %v1726
      %5632 = vmatpush1.msra.mxu0 %v1725
      %5633 = vmatprep.subr.mxu0 %v1730
      %5634 = vmatpush1.msra.mxu0 %v1729
      %5635 = vmatprep.subr.mxu0 %v1734
      %5636 = vmatpush1.msra.mxu0 %v1733
      %5637 = vmatprep.subr.mxu0 %v1738
      %5638 = vmatpush1.msra.mxu0 %v1737
      %5639 = vmatprep.subr.mxu0 %v1742
      %5640 = vmatpush1.msra.mxu0 %v1741
      %5641 = vmatprep.subr.mxu0 %v1746
      %5642 = vmatpush1.msra.mxu0 %v1745
      %5643 = vmatprep.subr.mxu0 %v1750
      %5644 = vmatpush1.msra.mxu0 %v1749
      %5645 = vmatprep.subr.mxu0 %v1754
      %5646 = vmatpush1.msra.mxu0 %v1753
      %5647 = vmatprep.subr.mxu0 %v1758
      %5648 = vmatpush1.msra.mxu0 %v1757
      %5649 = vmatprep.subr.mxu0 %v1762
      %5650 = vmatpush1.msra.mxu0 %v1761
      %5651 = vmatprep.subr.mxu0 %v1766
      %5652 = vmatpush1.msra.mxu0 %v1765
      %5653 = vmatprep.subr.mxu0 %v1770
      %5654 = vmatpush1.msra.mxu0 %v1769
      %5655 = vmatprep.subr.mxu0 %v1774
      %5656 = vmatpush1.msra.mxu0 %v1773
      %5657 = vmatprep.subr.mxu0 %v1778
      %5658 = vmatpush1.msra.mxu0 %v1777
      %5659 = vmatprep.subr.mxu0 %v1782
      %5660 = vmatpush1.msra.mxu0 %v1781
      %5661 = vmatprep.subr.mxu0 %v1786
      %5662 = vmatpush1.msra.mxu0 %v1785
      %5663 = vmatprep.subr.mxu0 0.0
      %5664 = vmatpush1.msra.mxu0 0.0
      %5665 = vmatprep.subr.mxu0 0.0
      %5666 = vmatpush1.msra.mxu0 0.0
      %5667 = vmatprep.subr.mxu0 0.0
      %5668 = vmatpush1.msra.mxu0 0.0
      %5669 = vmatprep.subr.mxu0 0.0
      %5670 = vmatpush1.msra.mxu0 0.0
      %5671 = vmatprep.subr.mxu0 0.0
      %5672 = vmatpush1.msra.mxu0 0.0
      %5673 = vmatprep.subr.mxu0 0.0
      %5674 = vmatpush1.msra.mxu0 0.0
      %5675 = vmatprep.subr.mxu0 0.0
      %5676 = vmatpush1.msra.mxu0 0.0
      %5677 = vmatprep.subr.mxu0 0.0
      %5678 = vmatpush1.msra.mxu0 0.0
      %5679 = vmatprep.subr.mxu0 0.0
      %5680 = vmatpush1.msra.mxu0 0.0
      %5681 = vmatprep.subr.mxu0 0.0
      %5682 = vmatpush1.msra.mxu0 0.0
      %5683 = vmatprep.subr.mxu0 0.0
      %5684 = vmatpush1.msra.mxu0 0.0
      %5685 = vmatprep.subr.mxu0 0.0
      %5686 = vmatpush1.msra.mxu0 0.0
      %5687 = vmatprep.subr.mxu0 0.0
      %5688 = vmatpush1.msra.mxu0 0.0
      %5689 = vmatprep.subr.mxu0 0.0
      %5690 = vmatpush1.msra.mxu0 0.0
      %5691 = vmatprep.subr.mxu0 0.0
      %5692 = vmatpush1.msra.mxu0 0.0
      %5693 = vmatprep.subr.mxu0 0.0
      %5694 = vmatpush1.msra.mxu0 0.0
      %5695 = vmatprep.mubr.f32.mxu0 0.0
      %5696 = vmatmul.mubr.f32.gmra.mrb[0].mxu0 %v5524
      %v5697 = vpop.f32.mrb[0].mxu0
      %v5698 = vadd.f32 0.0, %v5697
      %v5699 = vpop.f32.mrb[0].mxu0
      %v5700 = vadd.f32 0.0, %v5699
      %5701 = vdwg.mxu0
      %v5706 = vcombine.low %v5627, %v5629
      %v5707 = vcombine.low %v5698, %v5700
      %v5709 = vunpack.c.l.s4 1966171168
      %v5710 = vunpack.c.0.s8 %v5709
      %v5711 = vlaneseq
      %v5712 = vshrl.u32 %v5711, 7
      %v5713 = vsub.s32 %v5710, %v5712
      %v5714 = vrot.slane %v5706, %v5713
      %v5716 = vunpack.c.l.s4 1966171168
      %v5717 = vunpack.c.0.s8 %v5716
      %v5718 = vlaneseq
      %v5719 = vshrl.u32 %v5718, 7
      %v5720 = vsub.s32 %v5717, %v5719
      %v5721 = vrot.slane %v5707, %v5720
      %v5722 = vcombine.low %v5714, %v5721
      %v5724 = vunpack.c.l.s4 1966171168
      %v5725 = vunpack.c.0.s8 %v5724
      %v5726 = vlaneseq
      %v5727 = vshrl.u32 %v5726, 7
      %v5728 = vsub.s32 %v5725, %v5727
      %v5729 = vrot.slane %v5722, %v5728
      %v5731 = vadd.f32 %v5559, %v5729
      %s5732 = scalar_lea.vmem [#allocation3], 1
      %v5733 = vld [vmem:[%s5732] ss:$8 sm:$0xf]
      %5734 = vmatprep.subr.mxu0 %v1788
      %5735 = vmatpush1.msra.mxu0 %v1787
      %5736 = vmatprep.subr.mxu0 %v1792
      %5737 = vmatpush1.msra.mxu0 %v1791
      %5738 = vmatprep.subr.mxu0 %v1796
      %5739 = vmatpush1.msra.mxu0 %v1795
      %5740 = vmatprep.subr.mxu0 %v1800
      %5741 = vmatpush1.msra.mxu0 %v1799
      %5742 = vmatprep.subr.mxu0 %v1804
      %5743 = vmatpush1.msra.mxu0 %v1803
      %5744 = vmatprep.subr.mxu0 %v1808
      %5745 = vmatpush1.msra.mxu0 %v1807
      %5746 = vmatprep.subr.mxu0 %v1812
      %5747 = vmatpush1.msra.mxu0 %v1811
      %5748 = vmatprep.subr.mxu0 %v1816
      %5749 = vmatpush1.msra.mxu0 %v1815
      %5750 = vmatprep.subr.mxu0 %v1820
      %5751 = vmatpush1.msra.mxu0 %v1819
      %5752 = vmatprep.subr.mxu0 %v1824
      %5753 = vmatpush1.msra.mxu0 %v1823
      %5754 = vmatprep.subr.mxu0 %v1828
      %5755 = vmatpush1.msra.mxu0 %v1827
      %5756 = vmatprep.subr.mxu0 %v1832
      %5757 = vmatpush1.msra.mxu0 %v1831
      %5758 = vmatprep.subr.mxu0 %v1836
      %5759 = vmatpush1.msra.mxu0 %v1835
      %5760 = vmatprep.subr.mxu0 %v1840
      %5761 = vmatpush1.msra.mxu0 %v1839
      %5762 = vmatprep.subr.mxu0 %v1844
      %5763 = vmatpush1.msra.mxu0 %v1843
      %5764 = vmatprep.subr.mxu0 %v1848
      %5765 = vmatpush1.msra.mxu0 %v1847
      %5766 = vmatprep.subr.mxu0 0.0
      %5767 = vmatpush1.msra.mxu0 0.0
      %5768 = vmatprep.subr.mxu0 0.0
      %5769 = vmatpush1.msra.mxu0 0.0
      %5770 = vmatprep.subr.mxu0 0.0
      %5771 = vmatpush1.msra.mxu0 0.0
      %5772 = vmatprep.subr.mxu0 0.0
      %5773 = vmatpush1.msra.mxu0 0.0
      %5774 = vmatprep.subr.mxu0 0.0
      %5775 = vmatpush1.msra.mxu0 0.0
      %5776 = vmatprep.subr.mxu0 0.0
      %5777 = vmatpush1.msra.mxu0 0.0
      %5778 = vmatprep.subr.mxu0 0.0
      %5779 = vmatpush1.msra.mxu0 0.0
      %5780 = vmatprep.subr.mxu0 0.0
      %5781 = vmatpush1.msra.mxu0 0.0
      %5782 = vmatprep.subr.mxu0 0.0
      %5783 = vmatpush1.msra.mxu0 0.0
      %5784 = vmatprep.subr.mxu0 0.0
      %5785 = vmatpush1.msra.mxu0 0.0
      %5786 = vmatprep.subr.mxu0 0.0
      %5787 = vmatpush1.msra.mxu0 0.0
      %5788 = vmatprep.subr.mxu0 0.0
      %5789 = vmatpush1.msra.mxu0 0.0
      %5790 = vmatprep.subr.mxu0 0.0
      %5791 = vmatpush1.msra.mxu0 0.0
      %5792 = vmatprep.subr.mxu0 0.0
      %5793 = vmatpush1.msra.mxu0 0.0
      %5794 = vmatprep.subr.mxu0 0.0
      %5795 = vmatpush1.msra.mxu0 0.0
      %5796 = vmatprep.subr.mxu0 0.0
      %5797 = vmatpush1.msra.mxu0 0.0
      %5798 = vmatprep.mubr.f32.mxu0 0.0
      %5799 = vmatmul.mubr.f32.gmra.mrb[0].mxu0 %v5555
      %v5800 = vpop.f32.mrb[0].mxu0
      %v5801 = vadd.f32 0.0, %v5800
      %v5802 = vpop.f32.mrb[0].mxu0
      %v5803 = vadd.f32 0.0, %v5802
      %5804 = vdwg.mxu0
      %5805 = vmatprep.subr.mxu0 %v1790
      %5806 = vmatpush1.msra.mxu0 %v1789
      %5807 = vmatprep.subr.mxu0 %v1794
      %5808 = vmatpush1.msra.mxu0 %v1793
      %5809 = vmatprep.subr.mxu0 %v1798
      %5810 = vmatpush1.msra.mxu0 %v1797
      %5811 = vmatprep.subr.mxu0 %v1802
      %5812 = vmatpush1.msra.mxu0 %v1801
      %5813 = vmatprep.subr.mxu0 %v1806
      %5814 = vmatpush1.msra.mxu0 %v1805
      %5815 = vmatprep.subr.mxu0 %v1810
      %5816 = vmatpush1.msra.mxu0 %v1809
      %5817 = vmatprep.subr.mxu0 %v1814
      %5818 = vmatpush1.msra.mxu0 %v1813
      %5819 = vmatprep.subr.mxu0 %v1818
      %5820 = vmatpush1.msra.mxu0 %v1817
      %5821 = vmatprep.subr.mxu0 %v1822
      %5822 = vmatpush1.msra.mxu0 %v1821
      %5823 = vmatprep.subr.mxu0 %v1826
      %5824 = vmatpush1.msra.mxu0 %v1825
      %5825 = vmatprep.subr.mxu0 %v1830
      %5826 = vmatpush1.msra.mxu0 %v1829
      %5827 = vmatprep.subr.mxu0 %v1834
      %5828 = vmatpush1.msra.mxu0 %v1833
      %5829 = vmatprep.subr.mxu0 %v1838
      %5830 = vmatpush1.msra.mxu0 %v1837
      %5831 = vmatprep.subr.mxu0 %v1842
      %5832 = vmatpush1.msra.mxu0 %v1841
      %5833 = vmatprep.subr.mxu0 %v1846
      %5834 = vmatpush1.msra.mxu0 %v1845
      %5835 = vmatprep.subr.mxu0 %v1850
      %5836 = vmatpush1.msra.mxu0 %v1849
      %5837 = vmatprep.subr.mxu0 0.0
      %5838 = vmatpush1.msra.mxu0 0.0
      %5839 = vmatprep.subr.mxu0 0.0
      %5840 = vmatpush1.msra.mxu0 0.0
      %5841 = vmatprep.subr.mxu0 0.0
      %5842 = vmatpush1.msra.mxu0 0.0
      %5843 = vmatprep.subr.mxu0 0.0
      %5844 = vmatpush1.msra.mxu0 0.0
      %5845 = vmatprep.subr.mxu0 0.0
      %5846 = vmatpush1.msra.mxu0 0.0
      %5847 = vmatprep.subr.mxu0 0.0
      %5848 = vmatpush1.msra.mxu0 0.0
      %5849 = vmatprep.subr.mxu0 0.0
      %5850 = vmatpush1.msra.mxu0 0.0
      %5851 = vmatprep.subr.mxu0 0.0
      %5852 = vmatpush1.msra.mxu0 0.0
      %5853 = vmatprep.subr.mxu0 0.0
      %5854 = vmatpush1.msra.mxu0 0.0
      %5855 = vmatprep.subr.mxu0 0.0
      %5856 = vmatpush1.msra.mxu0 0.0
      %5857 = vmatprep.subr.mxu0 0.0
      %5858 = vmatpush1.msra.mxu0 0.0
      %5859 = vmatprep.subr.mxu0 0.0
      %5860 = vmatpush1.msra.mxu0 0.0
      %5861 = vmatprep.subr.mxu0 0.0
      %5862 = vmatpush1.msra.mxu0 0.0
      %5863 = vmatprep.subr.mxu0 0.0
      %5864 = vmatpush1.msra.mxu0 0.0
      %5865 = vmatprep.subr.mxu0 0.0
      %5866 = vmatpush1.msra.mxu0 0.0
      %5867 = vmatprep.subr.mxu0 0.0
      %5868 = vmatpush1.msra.mxu0 0.0
      %5869 = vmatprep.mubr.f32.mxu0 0.0
      %5870 = vmatmul.mubr.f32.gmra.mrb[0].mxu0 %v5555
      %v5871 = vpop.f32.mrb[0].mxu0
      %v5872 = vadd.f32 0.0, %v5871
      %v5873 = vpop.f32.mrb[0].mxu0
      %v5874 = vadd.f32 0.0, %v5873
      %5875 = vdwg.mxu0
      %v5880 = vcombine.low %v5801, %v5803
      %v5881 = vcombine.low %v5872, %v5874
      %v5883 = vunpack.c.l.s4 1966171168
      %v5884 = vunpack.c.0.s8 %v5883
      %v5885 = vlaneseq
      %v5886 = vshrl.u32 %v5885, 7
      %v5887 = vsub.s32 %v5884, %v5886
      %v5888 = vrot.slane %v5880, %v5887
      %v5890 = vunpack.c.l.s4 1966171168
      %v5891 = vunpack.c.0.s8 %v5890
      %v5892 = vlaneseq
      %v5893 = vshrl.u32 %v5892, 7
      %v5894 = vsub.s32 %v5891, %v5893
      %v5895 = vrot.slane %v5881, %v5894
      %v5896 = vcombine.low %v5888, %v5895
      %v5898 = vunpack.c.l.s4 1966171168
      %v5899 = vunpack.c.0.s8 %v5898
      %v5900 = vlaneseq
      %v5901 = vshrl.u32 %v5900, 7
      %v5902 = vsub.s32 %v5899, %v5901
      %v5903 = vrot.slane %v5896, %v5902
      %v5905 = vadd.f32 %v5733, %v5903
      %v5906 = vxor.u32 %v5731, 2147483648
      %v5907 = vmul.f32 %v5906, 1.442695
      %v5908 = vpow.pop %v5907
      %v5909 = vadd.f32 %v5908, 1.0
      %v5910 = vrcp.pop %v5909
      %v5911 = vmul.f32 1.0, %v5910
      %v5913 = vrot.slane %v5731, 1
      %v5915 = vxor.u32 %v5913, 2147483648
      %v5916 = vmul.f32 %v5915, 1.442695
      %v5917 = vpow.pop %v5916
      %v5918 = vadd.f32 %v5917, 1.0
      %v5919 = vrcp.pop %v5918
      %v5920 = vmul.f32 1.0, %v5919
      %v5921 = vrot.slane %v5731, 2
      %v5923 = vtanh.pop %v5921
      %v5924 = vrot.slane %v5731, 3
      %v5926 = vxor.u32 %v5924, 2147483648
      %v5927 = vmul.f32 %v5926, 1.442695
      %v5928 = vpow.pop %v5927
      %v5929 = vadd.f32 %v5928, 1.0
      %v5930 = vrcp.pop %v5929
      %v5931 = vmul.f32 1.0, %v5930
      %v5932 = vmul.f32 %v5920, %v5522
      %v5933 = vmul.f32 %v5911, %v5923
      %v5934 = vadd.f32 %v5932, %v5933
      %v5935 = vtanh.pop %v5934
      %v5936 = vmul.f32 %v5931, %v5935
      %v5937 = vxor.u32 %v5905, 2147483648
      %v5938 = vmul.f32 %v5937, 1.442695
      %v5939 = vpow.pop %v5938
      %v5940 = vadd.f32 %v5939, 1.0
      %v5941 = vrcp.pop %v5940
      %v5942 = vmul.f32 1.0, %v5941
      %v5944 = vrot.slane %v5905, 1
      %v5946 = vxor.u32 %v5944, 2147483648
      %v5947 = vmul.f32 %v5946, 1.442695
      %v5948 = vpow.pop %v5947
      %v5949 = vadd.f32 %v5948, 1.0
      %v5950 = vrcp.pop %v5949
      %v5951 = vmul.f32 1.0, %v5950
      %v5952 = vrot.slane %v5905, 2
      %v5954 = vtanh.pop %v5952
      %v5955 = vrot.slane %v5905, 3
      %v5957 = vxor.u32 %v5955, 2147483648
      %v5958 = vmul.f32 %v5957, 1.442695
      %v5959 = vpow.pop %v5958
      %v5960 = vadd.f32 %v5959, 1.0
      %v5961 = vrcp.pop %v5960
      %v5962 = vmul.f32 1.0, %v5961
      %v5963 = vmul.f32 %v5951, %v5553
      %v5964 = vmul.f32 %v5942, %v5954
      %v5965 = vadd.f32 %v5963, %v5964
      %v5966 = vtanh.pop %v5965
      %v5967 = vmul.f32 %v5962, %v5966
      %5968 = vst [vmem:[%s325 + $0x11] sm:$0x1] %v5936
      %5969 = vst [vmem:[%s325 + $0x9] sm:$0x1] %v5967
      %s5970 = scalar_lea.vmem [#allocation2], 34
      %v5971 = vld [vmem:[%s5970] ss:$8 sm:$0xf]
      %5972 = vmatprep.subr.mxu0 %v1724
      %5973 = vmatpush1.msra.mxu0 %v1723
      %5974 = vmatprep.subr.mxu0 %v1728
      %5975 = vmatpush1.msra.mxu0 %v1727
      %5976 = vmatprep.subr.mxu0 %v1732
      %5977 = vmatpush1.msra.mxu0 %v1731
      %5978 = vmatprep.subr.mxu0 %v1736
      %5979 = vmatpush1.msra.mxu0 %v1735
      %5980 = vmatprep.subr.mxu0 %v1740
      %5981 = vmatpush1.msra.mxu0 %v1739
      %5982 = vmatprep.subr.mxu0 %v1744
      %5983 = vmatpush1.msra.mxu0 %v1743
      %5984 = vmatprep.subr.mxu0 %v1748
      %5985 = vmatpush1.msra.mxu0 %v1747
      %5986 = vmatprep.subr.mxu0 %v1752
      %5987 = vmatpush1.msra.mxu0 %v1751
      %5988 = vmatprep.subr.mxu0 %v1756
      %5989 = vmatpush1.msra.mxu0 %v1755
      %5990 = vmatprep.subr.mxu0 %v1760
      %5991 = vmatpush1.msra.mxu0 %v1759
      %5992 = vmatprep.subr.mxu0 %v1764
      %5993 = vmatpush1.msra.mxu0 %v1763
      %5994 = vmatprep.subr.mxu0 %v1768
      %5995 = vmatpush1.msra.mxu0 %v1767
      %5996 = vmatprep.subr.mxu0 %v1772
      %5997 = vmatpush1.msra.mxu0 %v1771
      %5998 = vmatprep.subr.mxu0 %v1776
      %5999 = vmatpush1.msra.mxu0 %v1775
      %6000 = vmatprep.subr.mxu0 %v1780
      %6001 = vmatpush1.msra.mxu0 %v1779
      %6002 = vmatprep.subr.mxu0 %v1784
      %6003 = vmatpush1.msra.mxu0 %v1783
      %6004 = vmatprep.subr.mxu0 0.0
      %6005 = vmatpush1.msra.mxu0 0.0
      %6006 = vmatprep.subr.mxu0 0.0
      %6007 = vmatpush1.msra.mxu0 0.0
      %6008 = vmatprep.subr.mxu0 0.0
      %6009 = vmatpush1.msra.mxu0 0.0
      %6010 = vmatprep.subr.mxu0 0.0
      %6011 = vmatpush1.msra.mxu0 0.0
      %6012 = vmatprep.subr.mxu0 0.0
      %6013 = vmatpush1.msra.mxu0 0.0
      %6014 = vmatprep.subr.mxu0 0.0
      %6015 = vmatpush1.msra.mxu0 0.0
      %6016 = vmatprep.subr.mxu0 0.0
      %6017 = vmatpush1.msra.mxu0 0.0
      %6018 = vmatprep.subr.mxu0 0.0
      %6019 = vmatpush1.msra.mxu0 0.0
      %6020 = vmatprep.subr.mxu0 0.0
      %6021 = vmatpush1.msra.mxu0 0.0
      %6022 = vmatprep.subr.mxu0 0.0
      %6023 = vmatpush1.msra.mxu0 0.0
      %6024 = vmatprep.subr.mxu0 0.0
      %6025 = vmatpush1.msra.mxu0 0.0
      %6026 = vmatprep.subr.mxu0 0.0
      %6027 = vmatpush1.msra.mxu0 0.0
      %6028 = vmatprep.subr.mxu0 0.0
      %6029 = vmatpush1.msra.mxu0 0.0
      %6030 = vmatprep.subr.mxu0 0.0
      %6031 = vmatpush1.msra.mxu0 0.0
      %6032 = vmatprep.subr.mxu0 0.0
      %6033 = vmatpush1.msra.mxu0 0.0
      %6034 = vmatprep.subr.mxu0 0.0
      %6035 = vmatpush1.msra.mxu0 0.0
      %6036 = vmatprep.mubr.f32.mxu0 0.0
      %6037 = vmatmul.mubr.f32.gmra.mrb[0].mxu0 %v5936
      %v6038 = vpop.f32.mrb[0].mxu0
      %v6039 = vadd.f32 0.0, %v6038
      %v6040 = vpop.f32.mrb[0].mxu0
      %v6041 = vadd.f32 0.0, %v6040
      %6042 = vdwg.mxu0
      %6043 = vmatprep.subr.mxu0 %v1726
      %6044 = vmatpush1.msra.mxu0 %v1725
      %6045 = vmatprep.subr.mxu0 %v1730
      %6046 = vmatpush1.msra.mxu0 %v1729
      %6047 = vmatprep.subr.mxu0 %v1734
      %6048 = vmatpush1.msra.mxu0 %v1733
      %6049 = vmatprep.subr.mxu0 %v1738
      %6050 = vmatpush1.msra.mxu0 %v1737
      %6051 = vmatprep.subr.mxu0 %v1742
      %6052 = vmatpush1.msra.mxu0 %v1741
      %6053 = vmatprep.subr.mxu0 %v1746
      %6054 = vmatpush1.msra.mxu0 %v1745
      %6055 = vmatprep.subr.mxu0 %v1750
      %6056 = vmatpush1.msra.mxu0 %v1749
      %6057 = vmatprep.subr.mxu0 %v1754
      %6058 = vmatpush1.msra.mxu0 %v1753
      %6059 = vmatprep.subr.mxu0 %v1758
      %6060 = vmatpush1.msra.mxu0 %v1757
      %6061 = vmatprep.subr.mxu0 %v1762
      %6062 = vmatpush1.msra.mxu0 %v1761
      %6063 = vmatprep.subr.mxu0 %v1766
      %6064 = vmatpush1.msra.mxu0 %v1765
      %6065 = vmatprep.subr.mxu0 %v1770
      %6066 = vmatpush1.msra.mxu0 %v1769
      %6067 = vmatprep.subr.mxu0 %v1774
      %6068 = vmatpush1.msra.mxu0 %v1773
      %6069 = vmatprep.subr.mxu0 %v1778
      %6070 = vmatpush1.msra.mxu0 %v1777
      %6071 = vmatprep.subr.mxu0 %v1782
      %6072 = vmatpush1.msra.mxu0 %v1781
      %6073 = vmatprep.subr.mxu0 %v1786
      %6074 = vmatpush1.msra.mxu0 %v1785
      %6075 = vmatprep.subr.mxu0 0.0
      %6076 = vmatpush1.msra.mxu0 0.0
      %6077 = vmatprep.subr.mxu0 0.0
      %6078 = vmatpush1.msra.mxu0 0.0
      %6079 = vmatprep.subr.mxu0 0.0
      %6080 = vmatpush1.msra.mxu0 0.0
      %6081 = vmatprep.subr.mxu0 0.0
      %6082 = vmatpush1.msra.mxu0 0.0
      %6083 = vmatprep.subr.mxu0 0.0
      %6084 = vmatpush1.msra.mxu0 0.0
      %6085 = vmatprep.subr.mxu0 0.0
      %6086 = vmatpush1.msra.mxu0 0.0
      %6087 = vmatprep.subr.mxu0 0.0
      %6088 = vmatpush1.msra.mxu0 0.0
      %6089 = vmatprep.subr.mxu0 0.0
      %6090 = vmatpush1.msra.mxu0 0.0
      %6091 = vmatprep.subr.mxu0 0.0
      %6092 = vmatpush1.msra.mxu0 0.0
      %6093 = vmatprep.subr.mxu0 0.0
      %6094 = vmatpush1.msra.mxu0 0.0
      %6095 = vmatprep.subr.mxu0 0.0
      %6096 = vmatpush1.msra.mxu0 0.0
      %6097 = vmatprep.subr.mxu0 0.0
      %6098 = vmatpush1.msra.mxu0 0.0
      %6099 = vmatprep.subr.mxu0 0.0
      %6100 = vmatpush1.msra.mxu0 0.0
      %6101 = vmatprep.subr.mxu0 0.0
      %6102 = vmatpush1.msra.mxu0 0.0
      %6103 = vmatprep.subr.mxu0 0.0
      %6104 = vmatpush1.msra.mxu0 0.0
      %6105 = vmatprep.subr.mxu0 0.0
      %6106 = vmatpush1.msra.mxu0 0.0
      %6107 = vmatprep.mubr.f32.mxu0 0.0
      %6108 = vmatmul.mubr.f32.gmra.mrb[0].mxu0 %v5936
      %v6109 = vpop.f32.mrb[0].mxu0
      %v6110 = vadd.f32 0.0, %v6109
      %v6111 = vpop.f32.mrb[0].mxu0
      %v6112 = vadd.f32 0.0, %v6111
      %6113 = vdwg.mxu0
      %v6118 = vcombine.low %v6039, %v6041
      %v6119 = vcombine.low %v6110, %v6112
      %v6121 = vunpack.c.l.s4 1966171168
      %v6122 = vunpack.c.0.s8 %v6121
      %v6123 = vlaneseq
      %v6124 = vshrl.u32 %v6123, 7
      %v6125 = vsub.s32 %v6122, %v6124
      %v6126 = vrot.slane %v6118, %v6125
      %v6128 = vunpack.c.l.s4 1966171168
      %v6129 = vunpack.c.0.s8 %v6128
      %v6130 = vlaneseq
      %v6131 = vshrl.u32 %v6130, 7
      %v6132 = vsub.s32 %v6129, %v6131
      %v6133 = vrot.slane %v6119, %v6132
      %v6134 = vcombine.low %v6126, %v6133
      %v6136 = vunpack.c.l.s4 1966171168
      %v6137 = vunpack.c.0.s8 %v6136
      %v6138 = vlaneseq
      %v6139 = vshrl.u32 %v6138, 7
      %v6140 = vsub.s32 %v6137, %v6139
      %v6141 = vrot.slane %v6134, %v6140
      %v6143 = vadd.f32 %v5971, %v6141
      %v6144 = vld [vmem:[#allocation3] ss:$8 sm:$0xf]
      %6145 = vmatprep.subr.mxu0 %v1788
      %6146 = vmatpush1.msra.mxu0 %v1787
      %6147 = vmatprep.subr.mxu0 %v1792
      %6148 = vmatpush1.msra.mxu0 %v1791
      %6149 = vmatprep.subr.mxu0 %v1796
      %6150 = vmatpush1.msra.mxu0 %v1795
      %6151 = vmatprep.subr.mxu0 %v1800
      %6152 = vmatpush1.msra.mxu0 %v1799
      %6153 = vmatprep.subr.mxu0 %v1804
      %6154 = vmatpush1.msra.mxu0 %v1803
      %6155 = vmatprep.subr.mxu0 %v1808
      %6156 = vmatpush1.msra.mxu0 %v1807
      %6157 = vmatprep.subr.mxu0 %v1812
      %6158 = vmatpush1.msra.mxu0 %v1811
      %6159 = vmatprep.subr.mxu0 %v1816
      %6160 = vmatpush1.msra.mxu0 %v1815
      %6161 = vmatprep.subr.mxu0 %v1820
      %6162 = vmatpush1.msra.mxu0 %v1819
      %6163 = vmatprep.subr.mxu0 %v1824
      %6164 = vmatpush1.msra.mxu0 %v1823
      %6165 = vmatprep.subr.mxu0 %v1828
      %6166 = vmatpush1.msra.mxu0 %v1827
      %6167 = vmatprep.subr.mxu0 %v1832
      %6168 = vmatpush1.msra.mxu0 %v1831
      %6169 = vmatprep.subr.mxu0 %v1836
      %6170 = vmatpush1.msra.mxu0 %v1835
      %6171 = vmatprep.subr.mxu0 %v1840
      %6172 = vmatpush1.msra.mxu0 %v1839
      %6173 = vmatprep.subr.mxu0 %v1844
      %6174 = vmatpush1.msra.mxu0 %v1843
      %6175 = vmatprep.subr.mxu0 %v1848
      %6176 = vmatpush1.msra.mxu0 %v1847
      %6177 = vmatprep.subr.mxu0 0.0
      %6178 = vmatpush1.msra.mxu0 0.0
      %6179 = vmatprep.subr.mxu0 0.0
      %6180 = vmatpush1.msra.mxu0 0.0
      %6181 = vmatprep.subr.mxu0 0.0
      %6182 = vmatpush1.msra.mxu0 0.0
      %6183 = vmatprep.subr.mxu0 0.0
      %6184 = vmatpush1.msra.mxu0 0.0
      %6185 = vmatprep.subr.mxu0 0.0
      %6186 = vmatpush1.msra.mxu0 0.0
      %6187 = vmatprep.subr.mxu0 0.0
      %6188 = vmatpush1.msra.mxu0 0.0
      %6189 = vmatprep.subr.mxu0 0.0
      %6190 = vmatpush1.msra.mxu0 0.0
      %6191 = vmatprep.subr.mxu0 0.0
      %6192 = vmatpush1.msra.mxu0 0.0
      %6193 = vmatprep.subr.mxu0 0.0
      %6194 = vmatpush1.msra.mxu0 0.0
      %6195 = vmatprep.subr.mxu0 0.0
      %6196 = vmatpush1.msra.mxu0 0.0
      %6197 = vmatprep.subr.mxu0 0.0
      %6198 = vmatpush1.msra.mxu0 0.0
      %6199 = vmatprep.subr.mxu0 0.0
      %6200 = vmatpush1.msra.mxu0 0.0
      %6201 = vmatprep.subr.mxu0 0.0
      %6202 = vmatpush1.msra.mxu0 0.0
      %6203 = vmatprep.subr.mxu0 0.0
      %6204 = vmatpush1.msra.mxu0 0.0
      %6205 = vmatprep.subr.mxu0 0.0
      %6206 = vmatpush1.msra.mxu0 0.0
      %6207 = vmatprep.subr.mxu0 0.0
      %6208 = vmatpush1.msra.mxu0 0.0
      %6209 = vmatprep.mubr.f32.mxu0 0.0
      %6210 = vmatmul.mubr.f32.gmra.mrb[0].mxu0 %v5967
      %v6211 = vpop.f32.mrb[0].mxu0
      %v6212 = vadd.f32 0.0, %v6211
      %v6213 = vpop.f32.mrb[0].mxu0
      %v6214 = vadd.f32 0.0, %v6213
      %6215 = vdwg.mxu0
      %6216 = vmatprep.subr.mxu0 %v1790
      %6217 = vmatpush1.msra.mxu0 %v1789
      %6218 = vmatprep.subr.mxu0 %v1794
      %6219 = vmatpush1.msra.mxu0 %v1793
      %6220 = vmatprep.subr.mxu0 %v1798
      %6221 = vmatpush1.msra.mxu0 %v1797
      %6222 = vmatprep.subr.mxu0 %v1802
      %6223 = vmatpush1.msra.mxu0 %v1801
      %6224 = vmatprep.subr.mxu0 %v1806
      %6225 = vmatpush1.msra.mxu0 %v1805
      %6226 = vmatprep.subr.mxu0 %v1810
      %6227 = vmatpush1.msra.mxu0 %v1809
      %6228 = vmatprep.subr.mxu0 %v1814
      %6229 = vmatpush1.msra.mxu0 %v1813
      %6230 = vmatprep.subr.mxu0 %v1818
      %6231 = vmatpush1.msra.mxu0 %v1817
      %6232 = vmatprep.subr.mxu0 %v1822
      %6233 = vmatpush1.msra.mxu0 %v1821
      %6234 = vmatprep.subr.mxu0 %v1826
      %6235 = vmatpush1.msra.mxu0 %v1825
      %6236 = vmatprep.subr.mxu0 %v1830
      %6237 = vmatpush1.msra.mxu0 %v1829
      %6238 = vmatprep.subr.mxu0 %v1834
      %6239 = vmatpush1.msra.mxu0 %v1833
      %6240 = vmatprep.subr.mxu0 %v1838
      %6241 = vmatpush1.msra.mxu0 %v1837
      %6242 = vmatprep.subr.mxu0 %v1842
      %6243 = vmatpush1.msra.mxu0 %v1841
      %6244 = vmatprep.subr.mxu0 %v1846
      %6245 = vmatpush1.msra.mxu0 %v1845
      %6246 = vmatprep.subr.mxu0 %v1850
      %6247 = vmatpush1.msra.mxu0 %v1849
      %6248 = vmatprep.subr.mxu0 0.0
      %6249 = vmatpush1.msra.mxu0 0.0
      %6250 = vmatprep.subr.mxu0 0.0
      %6251 = vmatpush1.msra.mxu0 0.0
      %6252 = vmatprep.subr.mxu0 0.0
      %6253 = vmatpush1.msra.mxu0 0.0
      %6254 = vmatprep.subr.mxu0 0.0
      %6255 = vmatpush1.msra.mxu0 0.0
      %6256 = vmatprep.subr.mxu0 0.0
      %6257 = vmatpush1.msra.mxu0 0.0
      %6258 = vmatprep.subr.mxu0 0.0
      %6259 = vmatpush1.msra.mxu0 0.0
      %6260 = vmatprep.subr.mxu0 0.0
      %6261 = vmatpush1.msra.mxu0 0.0
      %6262 = vmatprep.subr.mxu0 0.0
      %6263 = vmatpush1.msra.mxu0 0.0
      %6264 = vmatprep.subr.mxu0 0.0
      %6265 = vmatpush1.msra.mxu0 0.0
      %6266 = vmatprep.subr.mxu0 0.0
      %6267 = vmatpush1.msra.mxu0 0.0
      %6268 = vmatprep.subr.mxu0 0.0
      %6269 = vmatpush1.msra.mxu0 0.0
      %6270 = vmatprep.subr.mxu0 0.0
      %6271 = vmatpush1.msra.mxu0 0.0
      %6272 = vmatprep.subr.mxu0 0.0
      %6273 = vmatpush1.msra.mxu0 0.0
      %6274 = vmatprep.subr.mxu0 0.0
      %6275 = vmatpush1.msra.mxu0 0.0
      %6276 = vmatprep.subr.mxu0 0.0
      %6277 = vmatpush1.msra.mxu0 0.0
      %6278 = vmatprep.subr.mxu0 0.0
      %6279 = vmatpush1.msra.mxu0 0.0
      %6280 = vmatprep.mubr.f32.mxu0 0.0
      %6281 = vmatmul.mubr.f32.gmra.mrb[0].mxu0 %v5967
      %v6282 = vpop.f32.mrb[0].mxu0
      %v6283 = vadd.f32 0.0, %v6282
      %v6284 = vpop.f32.mrb[0].mxu0
      %v6285 = vadd.f32 0.0, %v6284
      %6286 = vdwg.mxu0
      %v6291 = vcombine.low %v6212, %v6214
      %v6292 = vcombine.low %v6283, %v6285
      %v6294 = vunpack.c.l.s4 1966171168
      %v6295 = vunpack.c.0.s8 %v6294
      %v6296 = vlaneseq
      %v6297 = vshrl.u32 %v6296, 7
      %v6298 = vsub.s32 %v6295, %v6297
      %v6299 = vrot.slane %v6291, %v6298
      %v6301 = vunpack.c.l.s4 1966171168
      %v6302 = vunpack.c.0.s8 %v6301
      %v6303 = vlaneseq
      %v6304 = vshrl.u32 %v6303, 7
      %v6305 = vsub.s32 %v6302, %v6304
      %v6306 = vrot.slane %v6292, %v6305
      %v6307 = vcombine.low %v6299, %v6306
      %v6309 = vunpack.c.l.s4 1966171168
      %v6310 = vunpack.c.0.s8 %v6309
      %v6311 = vlaneseq
      %v6312 = vshrl.u32 %v6311, 7
      %v6313 = vsub.s32 %v6310, %v6312
      %v6314 = vrot.slane %v6307, %v6313
      %v6316 = vadd.f32 %v6144, %v6314
      %v6317 = vxor.u32 %v6143, 2147483648
      %v6318 = vmul.f32 %v6317, 1.442695
      %v6319 = vpow.pop %v6318
      %v6320 = vadd.f32 %v6319, 1.0
      %v6321 = vrcp.pop %v6320
      %v6322 = vmul.f32 1.0, %v6321
      %v6324 = vrot.slane %v6143, 1
      %v6326 = vxor.u32 %v6324, 2147483648
      %v6327 = vmul.f32 %v6326, 1.442695
      %v6328 = vpow.pop %v6327
      %v6329 = vadd.f32 %v6328, 1.0
      %v6330 = vrcp.pop %v6329
      %v6331 = vmul.f32 1.0, %v6330
      %v6332 = vrot.slane %v6143, 2
      %v6334 = vtanh.pop %v6332
      %v6335 = vrot.slane %v6143, 3
      %v6337 = vxor.u32 %v6335, 2147483648
      %v6338 = vmul.f32 %v6337, 1.442695
      %v6339 = vpow.pop %v6338
      %v6340 = vadd.f32 %v6339, 1.0
      %v6341 = vrcp.pop %v6340
      %v6342 = vmul.f32 1.0, %v6341
      %v6343 = vmul.f32 %v6331, %v5934
      %v6344 = vmul.f32 %v6322, %v6334
      %v6345 = vadd.f32 %v6343, %v6344
      %v6346 = vtanh.pop %v6345
      %v6347 = vmul.f32 %v6342, %v6346
      %v6348 = vxor.u32 %v6316, 2147483648
      %v6349 = vmul.f32 %v6348, 1.442695
      %v6350 = vpow.pop %v6349
      %v6351 = vadd.f32 %v6350, 1.0
      %v6352 = vrcp.pop %v6351
      %v6353 = vmul.f32 1.0, %v6352
      %v6355 = vrot.slane %v6316, 1
      %v6357 = vxor.u32 %v6355, 2147483648
      %v6358 = vmul.f32 %v6357, 1.442695
      %v6359 = vpow.pop %v6358
      %v6360 = vadd.f32 %v6359, 1.0
      %v6361 = vrcp.pop %v6360
      %v6362 = vmul.f32 1.0, %v6361
      %v6363 = vrot.slane %v6316, 2
      %v6365 = vtanh.pop %v6363
      %v6366 = vrot.slane %v6316, 3
      %v6368 = vxor.u32 %v6366, 2147483648
      %v6369 = vmul.f32 %v6368, 1.442695
      %v6370 = vpow.pop %v6369
      %v6371 = vadd.f32 %v6370, 1.0
      %v6372 = vrcp.pop %v6371
      %v6373 = vmul.f32 1.0, %v6372
      %v6374 = vmul.f32 %v6362, %v5965
      %v6375 = vmul.f32 %v6353, %v6365
      %v6376 = vadd.f32 %v6374, %v6375
      %v6377 = vtanh.pop %v6376
      %v6378 = vmul.f32 %v6373, %v6377
      %6379 = vst [vmem:[%s325 + $0x12] sm:$0x1] %v6347
      %6380 = vst [vmem:[%s325 + $0x8] sm:$0x1] %v6378
      %p6381 = scmp.lt.s32.totalorder %s19, 1
      %s6382 = scalar_select %p6381, %s19, 1
      %s6383 = smul.addr %s6382, 4
      %s6384 = smul.addr %s6383, 8
      %s6385 = scalar_lea.vmem %s8, %s6384
      // Predicated region
      $region53: #{co_attention_forward.1} parent=51 // pred_check
        %p6386 = pneg %p215
      $region54: #{co_attention_forward.1} parent=51 // pred_check_branch
        %6388 = sbr.rel (%p6386) target = $region56
      $region55: #{co_attention_forward.1} parent=51 // pred_region
        _
      $region56: #{co_attention_forward.1} parent=51 // pred_fallthru
        _
    $region52: #{co_attention_forward.1} parent=5 // pred_fallthru
      _
    %p6389 = scmp.le.s32.totalorder 2, %s14
    // Predicated region
    $region57: #{co_attention_forward.1} parent=5 // pred_check
      %p6390 = pneg %p6389
    $region58: #{co_attention_forward.1} parent=5 // pred_check_branch
      %6392 = sbr.rel (%p6390) target = $region60
    $region59: #{co_attention_forward.1} parent=5 // pred_region
      %s6393 = ssub.s32 %s14, 2
      // Predicated region
      $region61: #{co_attention_forward.1} parent=59 // pred_check
        %p6394 = pneg %p221
      $region62: #{co_attention_forward.1} parent=59 // pred_check_branch
        %6396 = sbr.rel (%p6394) target = $region64
      $region63: #{co_attention_forward.1} parent=59 // pred_region
        %p6397 = scmp.lt.s32.totalorder %s20, 1
        %s6398 = scalar_select %p6397, %s20, 1
        %s6399 = smul.addr %s6398, 4
        %s6400 = smul.addr %s6399, 8
        %s6401 = scalar_lea.vmem %s8, %s6400
      $region64: #{co_attention_forward.1} parent=59 // pred_fallthru
        _
    $region60: #{co_attention_forward.1} parent=5 // pred_fallthru
      _
  $region6: #{co_attention_forward.1} parent=0 // loop_footer
    %s18 = sadd.s32 1, %s14
  $region7: #{co_attention_forward.1} parent=0 // loop_footer_branch
    %13 = sbr.rel target = $region3
  $region8: #{co_attention_forward.1} parent=0 // loop_exit
    _

</llo_original>
